<compile_context>
chip_gen: v5e
topology: v5e:2x2
jax: 0.10.0
libtpu: 0.0.40
codegen_flags: <defaults>
</compile_context>

<pallas_src>
import functools

import jax
import jax.numpy as jnp
from jax.experimental import pallas as pl
from jax.experimental.pallas import tpu as pltpu

# f32 matmuls everywhere (kernel trace and reference) for a tight check.
jax.config.update("jax_default_matmul_precision", "highest")

BN_EPS = 1e-5

# --------------- packed per-feature vector bank: row layout -----------------
(R_CHEB_B, R_N1_S, R_N1_T, R_Q_B, R_K_B, R_V_B, R_O_B,
 R_N2_S, R_N2_T, R_MLP_B1, R_MLP_B2, R_N3_S, R_N3_T) = range(13)
ROWS_PER_GPS = 13
R_TOP_BN1_S = 2 * ROWS_PER_GPS + 0      # shift is the next row
R_TOP_BN2_S = 2 * ROWS_PER_GPS + 2
R_LIN_B = 2 * ROWS_PER_GPS + 4
BANK_ROWS = 32                          # 31 used, padded to a multiple of 8


# ------------------------------- Pallas kernel ------------------------------
def make_gpst_kernel(c, out_f, k_order, heads1, heads2):
    """One fused kernel for the whole GPST forward (eval mode)."""

    def vec(bank, row, width=None):
        w = c if width is None else width
        return bank[row:row + 1, :w]                     # (1, w), static slice

    def bn(h, bank, srow):
        # folded BatchNorm1d: scale at row `srow`, shift at row `srow + 1`.
        return h * vec(bank, srow) + vec(bank, srow + 1)

    def cheb(x, l_hat, slab_ref, b):
        # ChebConv ('sym', lambda_max=2):  sum_k T_k(L_hat) @ x @ W_k^T + b
        # slab rows 0..K-1 hold the pre-transposed W_k.
        t0 = x
        out = jnp.dot(t0, slab_ref[0], preferred_element_type=jnp.float32)
        if k_order > 1:
            t1 = jnp.dot(l_hat, t0, preferred_element_type=jnp.float32)
            out = out + jnp.dot(t1, slab_ref[1], preferred_element_type=jnp.float32)
            for kk in range(2, k_order):
                t2 = 2.0 * jnp.dot(l_hat, t1, preferred_element_type=jnp.float32) - t0
                out = out + jnp.dot(t2, slab_ref[kk], preferred_element_type=jnp.float32)
                t0, t1 = t1, t2
        return out + b

    def mha(x, slab_ref, bank, base, heads):
        # slab rows K..K+2 = Wq^T, Wk^T, Wv^T; row K+3 = Wo^T.
        q = jnp.dot(x, slab_ref[k_order + 0], preferred_element_type=jnp.float32) \
            + vec(bank, base + R_Q_B)
        k = jnp.dot(x, slab_ref[k_order + 1], preferred_element_type=jnp.float32) \
            + vec(bank, base + R_K_B)
        v = jnp.dot(x, slab_ref[k_order + 2], preferred_element_type=jnp.float32) \
            + vec(bank, base + R_V_B)
        d = c // heads
        scale = 1.0 / float(d) ** 0.5
        col = jax.lax.broadcasted_iota(jnp.int32, (1, c), 1)
        acc = jnp.zeros_like(q)
        for hh in range(heads):                          # static unroll over heads
            # Per-head contraction via a lane mask (keeps all matmuls full-width
            # instead of narrow head-dim slices; heads occupy disjoint columns,
            # so summing the masked outputs reproduces the head concatenation).
            m = ((col >= hh * d) & (col < (hh + 1) * d)).astype(jnp.float32)
            s = jax.lax.dot_general(q * m, k, (((1,), (1,)), ((), ())),
                                    preferred_element_type=jnp.float32) * scale
            s = s - jnp.max(s, axis=-1, keepdims=True)
            e = jnp.exp(s)
            p = e / jnp.sum(e, axis=-1, keepdims=True)
            acc = acc + jnp.dot(p, v * m, preferred_element_type=jnp.float32)
        return jnp.dot(acc, slab_ref[k_order + 3],
                       preferred_element_type=jnp.float32) + vec(bank, base + R_O_B)

    def gps_block(x, l_hat, slab_ref, mlpa_ref, mlpb_ref, bank, base, heads):
        # local ChebConv branch (+ residual, BatchNorm)
        h_loc = cheb(x, l_hat, slab_ref, vec(bank, base + R_CHEB_B)) + x
        h_loc = bn(h_loc, bank, base + R_N1_S)
        # global attention branch (+ residual, BatchNorm)
        h_att = mha(x, slab_ref, bank, base, heads) + x
        h_att = bn(h_att, bank, base + R_N2_S)
        out = h_loc + h_att
        # feed-forward MLP (+ residual, BatchNorm); dropouts identity in eval.
        m = jnp.dot(out, mlpa_ref[...], preferred_element_type=jnp.float32) \
            + vec(bank, base + R_MLP_B1, width=2 * c)
        m = jnp.maximum(m, 0.0)
        m = jnp.dot(m, mlpb_ref[...], preferred_element_type=jnp.float32) \
            + vec(bank, base + R_MLP_B2)
        return bn(out + m, bank, base + R_N3_S)

    def kernel(l_ref, x_ref,
               slab1_ref, mlp1a_ref, mlp1b_ref,
               slab2_ref, mlp2a_ref, mlp2b_ref,
               lin_ref, bank_ref, o_ref):
        l_hat = l_ref[...]
        bank = bank_ref[...]
        h = gps_block(x_ref[...], l_hat, slab1_ref, mlp1a_ref, mlp1b_ref,
                      bank, 0, heads1)
        h = jnp.maximum(bn(h, bank, R_TOP_BN1_S), 0.0)   # dropout: identity (eval)
        h = gps_block(h, l_hat, slab2_ref, mlp2a_ref, mlp2b_ref,
                      bank, ROWS_PER_GPS, heads2)
        h = jnp.maximum(bn(h, bank, R_TOP_BN2_S), 0.0)   # dropout: identity (eval)
        # Final linear projection -- the single sub-128-lane (masked) store.
        o_ref[...] = (jnp.dot(h, lin_ref[...], preferred_element_type=jnp.float32)
                      + vec(bank, R_LIN_B, width=out_f))

    return kernel


# --------------------------------- JAX glue ---------------------------------
def fold_bn(g, b, m, v):
    s = g * jax.lax.rsqrt(v + BN_EPS)
    return s, b - m * s


def build_cheb_laplacian(edge_index, num_nodes):
    """Dense L_hat = 2/lambda_max*(I - D^-1/2 A D^-1/2) - I (lambda_max=2, unit
    edge weights) = -D^-1/2 A D^-1/2, matching PyG ChebConv 'sym' norm."""
    src, dst = edge_index[0], edge_index[1]
    a = jnp.zeros((num_nodes, num_nodes), jnp.float32).at[dst, src].add(1.0)
    deg = a.sum(axis=0)                       # degree scattered over source nodes
    dis = jnp.where(deg > 0, jax.lax.rsqrt(deg), 0.0)
    return -(dis[:, None] * a * dis[None, :])


def pack_vector_bank(p1, p2, top, c):
    """All per-feature vectors (biases + folded BN scale/shift) packed into one
    lane-dense (32, 2C) operand -- one DMA instead of ~30 tiny (1, F) refs."""
    def padc(vv):
        return jnp.concatenate([vv, jnp.zeros((2 * c - vv.shape[0],), jnp.float32)])
    rows = []
    for p in (p1, p2):
        n1 = fold_bn(p["n1_g"], p["n1_b"], p["n1_m"], p["n1_v"])
        n2 = fold_bn(p["n2_g"], p["n2_b"], p["n2_m"], p["n2_v"])
        n3 = fold_bn(p["n3_g"], p["n3_b"], p["n3_m"], p["n3_v"])
        qb, kb, vb = jnp.split(p["attn_in_b"], 3)
        rows += [padc(p["cheb_b"]), padc(n1[0]), padc(n1[1]),
                 padc(qb), padc(kb), padc(vb), padc(p["attn_out_b"]),
                 padc(n2[0]), padc(n2[1]),
                 p["mlp_b1"],                               # full 2C-wide row
                 padc(p["mlp_b2"]), padc(n3[0]), padc(n3[1])]
    b1 = fold_bn(top["bn1_g"], top["bn1_b"], top["bn1_m"], top["bn1_v"])
    b2 = fold_bn(top["bn2_g"], top["bn2_b"], top["bn2_m"], top["bn2_v"])
    rows += [padc(b1[0]), padc(b1[1]), padc(b2[0]), padc(b2[1]), padc(top["lin_b"])]
    assert len(rows) <= BANK_ROWS
    bank = jnp.stack(rows)
    return jnp.pad(bank, ((0, BANK_ROWS - bank.shape[0]), (0, 0)))


def pack_weight_slab(p, c):
    """Stack all (C,C)-shaped weights of one GPS block (pre-transposed to
    [in,out]) into one (K+4, C, C) slab: K Cheb mats, Wq, Wk, Wv, Wo."""
    cheb_t = jnp.transpose(p["cheb_w"], (0, 2, 1))                  # (K, C, C)
    qkv_t = jnp.transpose(p["attn_in_w"].reshape(3, c, c), (0, 2, 1))
    wo_t = p["attn_out_w"].T[None]                                  # (1, C, C)
    return jnp.concatenate([cheb_t, qkv_t, wo_t], axis=0)


@functools.partial(jax.jit, static_argnames=("heads", "k_order"))
def gpst_forward(params, x, edge_index, *, heads, k_order):
    n, c = x.shape
    out_f = params["top"]["lin_w"].shape[0]
    l_hat = build_cheb_laplacian(edge_index, n)
    bank = pack_vector_bank(params["gps1"], params["gps2"], params["top"], c)

    def block_ops(p):
        return (pack_weight_slab(p, c), p["mlp_w1"].T, p["mlp_w2"].T)

    kernel = make_gpst_kernel(c, out_f, k_order, heads, 1)   # gps2 has 1 head
    vmem = pl.BlockSpec(memory_space=pltpu.MemorySpace.VMEM)
    return pl.pallas_call(
        kernel,
        out_shape=jax.ShapeDtypeStruct((n, out_f), jnp.float32),
        in_specs=[vmem] * 10,
        out_specs=vmem,
    )(l_hat, x, *block_ops(params["gps1"]), *block_ops(params["gps2"]),
      params["top"]["lin_w"].T, bank)


def gpst_forward_ref(params, x, edge_index, *, heads, k_order):
    """Pure-JAX implementation of the same eval-mode forward, computed from the
    raw (un-folded, un-packed) parameters -- correctness cross-check."""
    n, c = x.shape
    l_hat = build_cheb_laplacian(edge_index, n)

    def bn_ref(h, g, b, m, v):
        return (h - m) * jax.lax.rsqrt(v + BN_EPS) * g + b

    def gps_ref(xx, p, hds):
        t0 = xx
        out = t0 @ p["cheb_w"][0].T
        if k_order > 1:
            t1 = l_hat @ t0
            out = out + t1 @ p["cheb_w"][1].T
            for kk in range(2, k_order):
                t2 = 2.0 * (l_hat @ t1) - t0
                out = out + t2 @ p["cheb_w"][kk].T
                t0, t1 = t1, t2
        h_loc = bn_ref(out + p["cheb_b"] + xx,
                       p["n1_g"], p["n1_b"], p["n1_m"], p["n1_v"])

        qkv = xx @ p["attn_in_w"].T + p["attn_in_b"]
        q, k, v = jnp.split(qkv, 3, axis=1)
        d = c // hds
        outs = []
        for hh in range(hds):
            sl = slice(hh * d, (hh + 1) * d)
            s = (q[:, sl] @ k[:, sl].T) / jnp.sqrt(jnp.float32(d))
            outs.append(jax.nn.softmax(s, axis=-1) @ v[:, sl])
        a = jnp.concatenate(outs, axis=1)
        h_att = bn_ref(a @ p["attn_out_w"].T + p["attn_out_b"] + xx,
                       p["n2_g"], p["n2_b"], p["n2_m"], p["n2_v"])

        out = h_loc + h_att
        m = jnp.maximum(out @ p["mlp_w1"].T + p["mlp_b1"], 0.0)
        m = m @ p["mlp_w2"].T + p["mlp_b2"]
        return bn_ref(out + m, p["n3_g"], p["n3_b"], p["n3_m"], p["n3_v"])

    t = params["top"]
    h = gps_ref(x, params["gps1"], heads)
    h = jnp.maximum(bn_ref(h, t["bn1_g"], t["bn1_b"], t["bn1_m"], t["bn1_v"]), 0.0)
    h = gps_ref(h, params["gps2"], 1)
    h = jnp.maximum(bn_ref(h, t["bn2_g"], t["bn2_b"], t["bn2_m"], t["bn2_v"]), 0.0)
    return h @ t["lin_w"].T + t["lin_b"]


# ----------------------------------- main ------------------------------------
if __name__ == "__main__":
    IN_F, HEADS, OUT_F, K_ORDER, N = 16, 4, 4, 3, 12

    key = jax.random.PRNGKey(0)
    k_gps1, k_gps2, k_top, k_x = jax.random.split(key, 4)

    def nrm(k, shape, scl):
        return jax.random.normal(k, shape, jnp.float32) * scl

    def bn_raw(k, c):
        ka, kb, kc, kd = jax.random.split(k, 4)
        return {"g": nrm(ka, (c,), 0.1) + 1.0, "b": nrm(kb, (c,), 0.1),
                "m": nrm(kc, (c,), 0.1),
                "v": jnp.abs(jax.random.normal(kd, (c,), jnp.float32)) + 0.5}

    def make_gps_params(k, c, k_order):
        ks = jax.random.split(k, 13)
        p = {"cheb_w": nrm(ks[0], (k_order, c, c), 0.2),      # lins[k].weight (out,in)
             "cheb_b": nrm(ks[1], (c,), 0.1),
             "attn_in_w": nrm(ks[2], (3 * c, c), 0.2),        # MHA in_proj_weight
             "attn_in_b": nrm(ks[3], (3 * c,), 0.1),
             "attn_out_w": nrm(ks[4], (c, c), 0.2),           # MHA out_proj
             "attn_out_b": nrm(ks[5], (c,), 0.1),
             "mlp_w1": nrm(ks[6], (2 * c, c), 0.2),
             "mlp_b1": nrm(ks[7], (2 * c,), 0.1),
             "mlp_w2": nrm(ks[8], (c, 2 * c), 0.2),
             "mlp_b2": nrm(ks[9], (c,), 0.1)}
        for name, kk in (("n1", ks[10]), ("n2", ks[11]), ("n3", ks[12])):
            for suf, val in bn_raw(kk, c).items():
                p[f"{name}_{suf}"] = val
        return p

    kt = jax.random.split(k_top, 4)
    top = {"lin_w": nrm(kt[2], (OUT_F, IN_F), 0.2),           # nn.Linear weight (out,in)
           "lin_b": nrm(kt[3], (OUT_F,), 0.1)}
    for name, kk in (("bn1", kt[0]), ("bn2", kt[1])):
        for suf, val in bn_raw(kk, IN_F).items():
            top[f"{name}_{suf}"] = val

    params = {"gps1": make_gps_params(k_gps1, IN_F, K_ORDER),
              "gps2": make_gps_params(k_gps2, IN_F, K_ORDER),
              "top": top}

    # Node features and a bidirectional ring graph.
    x = jax.random.normal(k_x, (N, IN_F), jnp.float32)
    src = jnp.concatenate([jnp.arange(N), (jnp.arange(N) + 1) % N])
    dst = jnp.concatenate([(jnp.arange(N) + 1) % N, jnp.arange(N)])
    edge_index = jnp.stack([src, dst]).astype(jnp.int32)      # (2, 2N)

    out = gpst_forward(params, x, edge_index, heads=HEADS, k_order=K_ORDER)
    out = jax.block_until_ready(out)

    ref = gpst_forward_ref(params, x, edge_index, heads=HEADS, k_order=K_ORDER)
    assert out.shape == (N, OUT_F)
    assert jnp.allclose(out, ref, atol=1e-3, rtol=1e-3), (
        f"mismatch vs reference: max abs err {jnp.max(jnp.abs(out - ref))}")

    # TODO(synk): training-mode dropout (top-level, attention and MLP dropout)
    # is omitted (eval-mode identity); it would need pltpu.prng_random_bits.
    print("KERNEL_OK")
</pallas_src>

<mosaic_0001>
module attributes {stable_mosaic.version = 11 : i64} {
  func.func @kernel(%arg0: memref<12x12xf32, #tpu.memory_space<vmem>>, %arg1: memref<12x16xf32, #tpu.memory_space<vmem>>, %arg2: memref<7x16x16xf32, #tpu.memory_space<vmem>>, %arg3: memref<16x32xf32, #tpu.memory_space<vmem>>, %arg4: memref<32x16xf32, #tpu.memory_space<vmem>>, %arg5: memref<7x16x16xf32, #tpu.memory_space<vmem>>, %arg6: memref<16x32xf32, #tpu.memory_space<vmem>>, %arg7: memref<32x16xf32, #tpu.memory_space<vmem>>, %arg8: memref<16x4xf32, #tpu.memory_space<vmem>>, %arg9: memref<32x32xf32, #tpu.memory_space<vmem>>, %arg10: memref<12x4xf32, #tpu.memory_space<vmem>>) attributes {dimension_semantics = [], scalar_prefetch = 0 : i64, scratch_operands = 0 : i64, tpu.core_type = #tpu.core_type<tc>} {
    %c0 = arith.constant 0 : index
    %c0_0 = arith.constant 0 : index
    %0 = vector.load %arg0[%c0, %c0_0] : memref<12x12xf32, #tpu.memory_space<vmem>>, vector<12x12xf32>
    %c0_1 = arith.constant 0 : index
    %c0_2 = arith.constant 0 : index
    %1 = vector.load %arg9[%c0_1, %c0_2] : memref<32x32xf32, #tpu.memory_space<vmem>>, vector<32x32xf32>
    %c0_3 = arith.constant 0 : index
    %c0_4 = arith.constant 0 : index
    %2 = vector.load %arg1[%c0_3, %c0_4] : memref<12x16xf32, #tpu.memory_space<vmem>>, vector<12x16xf32>
    %3 = vector.extract_strided_slice %1 {offsets = [0, 0], sizes = [1, 16], strides = [1, 1]} : vector<32x32xf32> to vector<1x16xf32>
    %c0_5 = arith.constant 0 : index
    %c0_6 = arith.constant 0 : index
    %c0_7 = arith.constant 0 : index
    %4 = vector.load %arg2[%c0_5, %c0_6, %c0_7] : memref<7x16x16xf32, #tpu.memory_space<vmem>>, vector<1x16x16xf32>
    %5 = vector.shape_cast %4 : vector<1x16x16xf32> to vector<16x16xf32>
    %cst = arith.constant dense<0.000000e+00> : vector<12x16xf32>
    %6 = tpu.matmul %2, %5, %cst {dimension_numbers = #tpu.dot_dimension_numbers<[1], [0], [0], [1], [0, 0, 1, 1], [], []>, precision = #tpu.contract_precision<fp32>} : vector<12x16xf32>, vector<16x16xf32>, vector<12x16xf32> -> vector<12x16xf32>
    %cst_8 = arith.constant dense<0.000000e+00> : vector<12x16xf32>
    %7 = tpu.matmul %0, %2, %cst_8 {dimension_numbers = #tpu.dot_dimension_numbers<[1], [0], [0], [1], [0, 0, 1, 1], [], []>, precision = #tpu.contract_precision<fp32>} : vector<12x12xf32>, vector<12x16xf32>, vector<12x16xf32> -> vector<12x16xf32>
    %c1 = arith.constant 1 : index
    %c0_9 = arith.constant 0 : index
    %c0_10 = arith.constant 0 : index
    %8 = vector.load %arg2[%c1, %c0_9, %c0_10] : memref<7x16x16xf32, #tpu.memory_space<vmem>>, vector<1x16x16xf32>
    %9 = vector.shape_cast %8 : vector<1x16x16xf32> to vector<16x16xf32>
    %cst_11 = arith.constant dense<0.000000e+00> : vector<12x16xf32>
    %10 = tpu.matmul %7, %9, %cst_11 {dimension_numbers = #tpu.dot_dimension_numbers<[1], [0], [0], [1], [0, 0, 1, 1], [], []>, precision = #tpu.contract_precision<fp32>} : vector<12x16xf32>, vector<16x16xf32>, vector<12x16xf32> -> vector<12x16xf32>
    %11 = arith.addf %6, %10 : vector<12x16xf32>
    %cst_12 = arith.constant dense<0.000000e+00> : vector<12x16xf32>
    %12 = tpu.matmul %0, %7, %cst_12 {dimension_numbers = #tpu.dot_dimension_numbers<[1], [0], [0], [1], [0, 0, 1, 1], [], []>, precision = #tpu.contract_precision<fp32>} : vector<12x12xf32>, vector<12x16xf32>, vector<12x16xf32> -> vector<12x16xf32>
    %cst_13 = arith.constant 2.000000e+00 : f32
    %13 = vector.broadcast %cst_13 : f32 to vector<12x16xf32>
    %14 = arith.mulf %13, %12 : vector<12x16xf32>
    %15 = arith.subf %14, %2 : vector<12x16xf32>
    %c2 = arith.constant 2 : index
    %c0_14 = arith.constant 0 : index
    %c0_15 = arith.constant 0 : index
    %16 = vector.load %arg2[%c2, %c0_14, %c0_15] : memref<7x16x16xf32, #tpu.memory_space<vmem>>, vector<1x16x16xf32>
    %17 = vector.shape_cast %16 : vector<1x16x16xf32> to vector<16x16xf32>
    %cst_16 = arith.constant dense<0.000000e+00> : vector<12x16xf32>
    %18 = tpu.matmul %15, %17, %cst_16 {dimension_numbers = #tpu.dot_dimension_numbers<[1], [0], [0], [1], [0, 0, 1, 1], [], []>, precision = #tpu.contract_precision<fp32>} : vector<12x16xf32>, vector<16x16xf32>, vector<12x16xf32> -> vector<12x16xf32>
    %19 = arith.addf %11, %18 : vector<12x16xf32>
    %20 = vector.broadcast %3 : vector<1x16xf32> to vector<12x16xf32>
    %21 = arith.addf %19, %20 : vector<12x16xf32>
    %22 = arith.addf %21, %2 : vector<12x16xf32>
    %23 = vector.extract_strided_slice %1 {offsets = [1, 0], sizes = [1, 16], strides = [1, 1]} : vector<32x32xf32> to vector<1x16xf32>
    %24 = vector.broadcast %23 : vector<1x16xf32> to vector<12x16xf32>
    %25 = arith.mulf %22, %24 : vector<12x16xf32>
    %26 = vector.extract_strided_slice %1 {offsets = [2, 0], sizes = [1, 16], strides = [1, 1]} : vector<32x32xf32> to vector<1x16xf32>
    %27 = vector.broadcast %26 : vector<1x16xf32> to vector<12x16xf32>
    %28 = arith.addf %25, %27 : vector<12x16xf32>
    %c3 = arith.constant 3 : index
    %c0_17 = arith.constant 0 : index
    %c0_18 = arith.constant 0 : index
    %29 = vector.load %arg2[%c3, %c0_17, %c0_18] : memref<7x16x16xf32, #tpu.memory_space<vmem>>, vector<1x16x16xf32>
    %30 = vector.shape_cast %29 : vector<1x16x16xf32> to vector<16x16xf32>
    %cst_19 = arith.constant dense<0.000000e+00> : vector<12x16xf32>
    %31 = tpu.matmul %2, %30, %cst_19 {dimension_numbers = #tpu.dot_dimension_numbers<[1], [0], [0], [1], [0, 0, 1, 1], [], []>, precision = #tpu.contract_precision<fp32>} : vector<12x16xf32>, vector<16x16xf32>, vector<12x16xf32> -> vector<12x16xf32>
    %32 = vector.extract_strided_slice %1 {offsets = [3, 0], sizes = [1, 16], strides = [1, 1]} : vector<32x32xf32> to vector<1x16xf32>
    %33 = vector.broadcast %32 : vector<1x16xf32> to vector<12x16xf32>
    %34 = arith.addf %31, %33 : vector<12x16xf32>
    %c4 = arith.constant 4 : index
    %c0_20 = arith.constant 0 : index
    %c0_21 = arith.constant 0 : index
    %35 = vector.load %arg2[%c4, %c0_20, %c0_21] : memref<7x16x16xf32, #tpu.memory_space<vmem>>, vector<1x16x16xf32>
    %36 = vector.shape_cast %35 : vector<1x16x16xf32> to vector<16x16xf32>
    %cst_22 = arith.constant dense<0.000000e+00> : vector<12x16xf32>
    %37 = tpu.matmul %2, %36, %cst_22 {dimension_numbers = #tpu.dot_dimension_numbers<[1], [0], [0], [1], [0, 0, 1, 1], [], []>, precision = #tpu.contract_precision<fp32>} : vector<12x16xf32>, vector<16x16xf32>, vector<12x16xf32> -> vector<12x16xf32>
    %38 = vector.extract_strided_slice %1 {offsets = [4, 0], sizes = [1, 16], strides = [1, 1]} : vector<32x32xf32> to vector<1x16xf32>
    %39 = vector.broadcast %38 : vector<1x16xf32> to vector<12x16xf32>
    %40 = arith.addf %37, %39 : vector<12x16xf32>
    %c5 = arith.constant 5 : index
    %c0_23 = arith.constant 0 : index
    %c0_24 = arith.constant 0 : index
    %41 = vector.load %arg2[%c5, %c0_23, %c0_24] : memref<7x16x16xf32, #tpu.memory_space<vmem>>, vector<1x16x16xf32>
    %42 = vector.shape_cast %41 : vector<1x16x16xf32> to vector<16x16xf32>
    %cst_25 = arith.constant dense<0.000000e+00> : vector<12x16xf32>
    %43 = tpu.matmul %2, %42, %cst_25 {dimension_numbers = #tpu.dot_dimension_numbers<[1], [0], [0], [1], [0, 0, 1, 1], [], []>, precision = #tpu.contract_precision<fp32>} : vector<12x16xf32>, vector<16x16xf32>, vector<12x16xf32> -> vector<12x16xf32>
    %44 = vector.extract_strided_slice %1 {offsets = [5, 0], sizes = [1, 16], strides = [1, 1]} : vector<32x32xf32> to vector<1x16xf32>
    %45 = vector.broadcast %44 : vector<1x16xf32> to vector<12x16xf32>
    %46 = arith.addf %43, %45 : vector<12x16xf32>
    %47 = tpu.iota {dimensions = array<i32: 1>} : vector<1x16xi32>
    %cst_26 = arith.constant 0.000000e+00 : f32
    %48 = vector.broadcast %cst_26 : f32 to vector<12x16xf32>
    %c0_i32 = arith.constant 0 : i32
    %49 = vector.broadcast %c0_i32 : i32 to vector<1x16xi32>
    %50 = arith.cmpi sge, %47, %49 : vector<1x16xi32>
    %c4_i32 = arith.constant 4 : i32
    %51 = vector.broadcast %c4_i32 : i32 to vector<1x16xi32>
    %52 = arith.cmpi slt, %47, %51 : vector<1x16xi32>
    %53 = arith.andi %50, %52 : vector<1x16xi1>
    %54 = arith.extui %53 : vector<1x16xi1> to vector<1x16xi32>
    %55 = arith.sitofp %54 : vector<1x16xi32> to vector<1x16xf32>
    %56 = vector.broadcast %55 : vector<1x16xf32> to vector<12x16xf32>
    %57 = arith.mulf %34, %56 : vector<12x16xf32>
    %cst_27 = arith.constant dense<0.000000e+00> : vector<12x12xf32>
    %58 = tpu.matmul %57, %40, %cst_27 {dimension_numbers = #tpu.dot_dimension_numbers<[1], [1], [0], [0], [0, 0, 1, 0], [], []>, precision = #tpu.contract_precision<fp32>} : vector<12x16xf32>, vector<12x16xf32>, vector<12x12xf32> -> vector<12x12xf32>
    %cst_28 = arith.constant 5.000000e-01 : f32
    %59 = vector.broadcast %cst_28 : f32 to vector<12x12xf32>
    %60 = arith.mulf %58, %59 : vector<12x12xf32>
    %cst_29 = arith.constant dense<0xFF800000> : vector<12xf32>
    %61 = vector.multi_reduction <maximumf>, %60, %cst_29 [1] : vector<12x12xf32> to vector<12xf32>
    %62 = vector.shape_cast %61 : vector<12xf32> to vector<12x1xf32>
    %63 = vector.broadcast %62 : vector<12x1xf32> to vector<12x12xf32>
    %64 = arith.subf %60, %63 : vector<12x12xf32>
    %65 = math.exp %64 : vector<12x12xf32>
    %cst_30 = arith.constant dense<0.000000e+00> : vector<12xf32>
    %66 = vector.multi_reduction <add>, %65, %cst_30 [1] : vector<12x12xf32> to vector<12xf32>
    %67 = vector.shape_cast %66 : vector<12xf32> to vector<12x1xf32>
    %68 = vector.broadcast %67 : vector<12x1xf32> to vector<12x12xf32>
    %69 = arith.divf %65, %68 : vector<12x12xf32>
    %70 = vector.broadcast %55 : vector<1x16xf32> to vector<12x16xf32>
    %71 = arith.mulf %46, %70 : vector<12x16xf32>
    %cst_31 = arith.constant dense<0.000000e+00> : vector<12x16xf32>
    %72 = tpu.matmul %69, %71, %cst_31 {dimension_numbers = #tpu.dot_dimension_numbers<[1], [0], [0], [1], [0, 0, 1, 1], [], []>, precision = #tpu.contract_precision<fp32>} : vector<12x12xf32>, vector<12x16xf32>, vector<12x16xf32> -> vector<12x16xf32>
    %73 = arith.addf %48, %72 : vector<12x16xf32>
    %c4_i32_32 = arith.constant 4 : i32
    %74 = vector.broadcast %c4_i32_32 : i32 to vector<1x16xi32>
    %75 = arith.cmpi sge, %47, %74 : vector<1x16xi32>
    %c8_i32 = arith.constant 8 : i32
    %76 = vector.broadcast %c8_i32 : i32 to vector<1x16xi32>
    %77 = arith.cmpi slt, %47, %76 : vector<1x16xi32>
    %78 = arith.andi %75, %77 : vector<1x16xi1>
    %79 = arith.extui %78 : vector<1x16xi1> to vector<1x16xi32>
    %80 = arith.sitofp %79 : vector<1x16xi32> to vector<1x16xf32>
    %81 = vector.broadcast %80 : vector<1x16xf32> to vector<12x16xf32>
    %82 = arith.mulf %34, %81 : vector<12x16xf32>
    %cst_33 = arith.constant dense<0.000000e+00> : vector<12x12xf32>
    %83 = tpu.matmul %82, %40, %cst_33 {dimension_numbers = #tpu.dot_dimension_numbers<[1], [1], [0], [0], [0, 0, 1, 0], [], []>, precision = #tpu.contract_precision<fp32>} : vector<12x16xf32>, vector<12x16xf32>, vector<12x12xf32> -> vector<12x12xf32>
    %cst_34 = arith.constant 5.000000e-01 : f32
    %84 = vector.broadcast %cst_34 : f32 to vector<12x12xf32>
    %85 = arith.mulf %83, %84 : vector<12x12xf32>
    %cst_35 = arith.constant dense<0xFF800000> : vector<12xf32>
    %86 = vector.multi_reduction <maximumf>, %85, %cst_35 [1] : vector<12x12xf32> to vector<12xf32>
    %87 = vector.shape_cast %86 : vector<12xf32> to vector<12x1xf32>
    %88 = vector.broadcast %87 : vector<12x1xf32> to vector<12x12xf32>
    %89 = arith.subf %85, %88 : vector<12x12xf32>
    %90 = math.exp %89 : vector<12x12xf32>
    %cst_36 = arith.constant dense<0.000000e+00> : vector<12xf32>
    %91 = vector.multi_reduction <add>, %90, %cst_36 [1] : vector<12x12xf32> to vector<12xf32>
    %92 = vector.shape_cast %91 : vector<12xf32> to vector<12x1xf32>
    %93 = vector.broadcast %92 : vector<12x1xf32> to vector<12x12xf32>
    %94 = arith.divf %90, %93 : vector<12x12xf32>
    %95 = vector.broadcast %80 : vector<1x16xf32> to vector<12x16xf32>
    %96 = arith.mulf %46, %95 : vector<12x16xf32>
    %cst_37 = arith.constant dense<0.000000e+00> : vector<12x16xf32>
    %97 = tpu.matmul %94, %96, %cst_37 {dimension_numbers = #tpu.dot_dimension_numbers<[1], [0], [0], [1], [0, 0, 1, 1], [], []>, precision = #tpu.contract_precision<fp32>} : vector<12x12xf32>, vector<12x16xf32>, vector<12x16xf32> -> vector<12x16xf32>
    %98 = arith.addf %73, %97 : vector<12x16xf32>
    %c8_i32_38 = arith.constant 8 : i32
    %99 = vector.broadcast %c8_i32_38 : i32 to vector<1x16xi32>
    %100 = arith.cmpi sge, %47, %99 : vector<1x16xi32>
    %c12_i32 = arith.constant 12 : i32
    %101 = vector.broadcast %c12_i32 : i32 to vector<1x16xi32>
    %102 = arith.cmpi slt, %47, %101 : vector<1x16xi32>
    %103 = arith.andi %100, %102 : vector<1x16xi1>
    %104 = arith.extui %103 : vector<1x16xi1> to vector<1x16xi32>
    %105 = arith.sitofp %104 : vector<1x16xi32> to vector<1x16xf32>
    %106 = vector.broadcast %105 : vector<1x16xf32> to vector<12x16xf32>
    %107 = arith.mulf %34, %106 : vector<12x16xf32>
    %cst_39 = arith.constant dense<0.000000e+00> : vector<12x12xf32>
    %108 = tpu.matmul %107, %40, %cst_39 {dimension_numbers = #tpu.dot_dimension_numbers<[1], [1], [0], [0], [0, 0, 1, 0], [], []>, precision = #tpu.contract_precision<fp32>} : vector<12x16xf32>, vector<12x16xf32>, vector<12x12xf32> -> vector<12x12xf32>
    %cst_40 = arith.constant 5.000000e-01 : f32
    %109 = vector.broadcast %cst_40 : f32 to vector<12x12xf32>
    %110 = arith.mulf %108, %109 : vector<12x12xf32>
    %cst_41 = arith.constant dense<0xFF800000> : vector<12xf32>
    %111 = vector.multi_reduction <maximumf>, %110, %cst_41 [1] : vector<12x12xf32> to vector<12xf32>
    %112 = vector.shape_cast %111 : vector<12xf32> to vector<12x1xf32>
    %113 = vector.broadcast %112 : vector<12x1xf32> to vector<12x12xf32>
    %114 = arith.subf %110, %113 : vector<12x12xf32>
    %115 = math.exp %114 : vector<12x12xf32>
    %cst_42 = arith.constant dense<0.000000e+00> : vector<12xf32>
    %116 = vector.multi_reduction <add>, %115, %cst_42 [1] : vector<12x12xf32> to vector<12xf32>
    %117 = vector.shape_cast %116 : vector<12xf32> to vector<12x1xf32>
    %118 = vector.broadcast %117 : vector<12x1xf32> to vector<12x12xf32>
    %119 = arith.divf %115, %118 : vector<12x12xf32>
    %120 = vector.broadcast %105 : vector<1x16xf32> to vector<12x16xf32>
    %121 = arith.mulf %46, %120 : vector<12x16xf32>
    %cst_43 = arith.constant dense<0.000000e+00> : vector<12x16xf32>
    %122 = tpu.matmul %119, %121, %cst_43 {dimension_numbers = #tpu.dot_dimension_numbers<[1], [0], [0], [1], [0, 0, 1, 1], [], []>, precision = #tpu.contract_precision<fp32>} : vector<12x12xf32>, vector<12x16xf32>, vector<12x16xf32> -> vector<12x16xf32>
    %123 = arith.addf %98, %122 : vector<12x16xf32>
    %c12_i32_44 = arith.constant 12 : i32
    %124 = vector.broadcast %c12_i32_44 : i32 to vector<1x16xi32>
    %125 = arith.cmpi sge, %47, %124 : vector<1x16xi32>
    %c16_i32 = arith.constant 16 : i32
    %126 = vector.broadcast %c16_i32 : i32 to vector<1x16xi32>
    %127 = arith.cmpi slt, %47, %126 : vector<1x16xi32>
    %128 = arith.andi %125, %127 : vector<1x16xi1>
    %129 = arith.extui %128 : vector<1x16xi1> to vector<1x16xi32>
    %130 = arith.sitofp %129 : vector<1x16xi32> to vector<1x16xf32>
    %131 = vector.broadcast %130 : vector<1x16xf32> to vector<12x16xf32>
    %132 = arith.mulf %34, %131 : vector<12x16xf32>
    %cst_45 = arith.constant dense<0.000000e+00> : vector<12x12xf32>
    %133 = tpu.matmul %132, %40, %cst_45 {dimension_numbers = #tpu.dot_dimension_numbers<[1], [1], [0], [0], [0, 0, 1, 0], [], []>, precision = #tpu.contract_precision<fp32>} : vector<12x16xf32>, vector<12x16xf32>, vector<12x12xf32> -> vector<12x12xf32>
    %cst_46 = arith.constant 5.000000e-01 : f32
    %134 = vector.broadcast %cst_46 : f32 to vector<12x12xf32>
    %135 = arith.mulf %133, %134 : vector<12x12xf32>
    %cst_47 = arith.constant dense<0xFF800000> : vector<12xf32>
    %136 = vector.multi_reduction <maximumf>, %135, %cst_47 [1] : vector<12x12xf32> to vector<12xf32>
    %137 = vector.shape_cast %136 : vector<12xf32> to vector<12x1xf32>
    %138 = vector.broadcast %137 : vector<12x1xf32> to vector<12x12xf32>
    %139 = arith.subf %135, %138 : vector<12x12xf32>
    %140 = math.exp %139 : vector<12x12xf32>
    %cst_48 = arith.constant dense<0.000000e+00> : vector<12xf32>
    %141 = vector.multi_reduction <add>, %140, %cst_48 [1] : vector<12x12xf32> to vector<12xf32>
    %142 = vector.shape_cast %141 : vector<12xf32> to vector<12x1xf32>
    %143 = vector.broadcast %142 : vector<12x1xf32> to vector<12x12xf32>
    %144 = arith.divf %140, %143 : vector<12x12xf32>
    %145 = vector.broadcast %130 : vector<1x16xf32> to vector<12x16xf32>
    %146 = arith.mulf %46, %145 : vector<12x16xf32>
    %cst_49 = arith.constant dense<0.000000e+00> : vector<12x16xf32>
    %147 = tpu.matmul %144, %146, %cst_49 {dimension_numbers = #tpu.dot_dimension_numbers<[1], [0], [0], [1], [0, 0, 1, 1], [], []>, precision = #tpu.contract_precision<fp32>} : vector<12x12xf32>, vector<12x16xf32>, vector<12x16xf32> -> vector<12x16xf32>
    %148 = arith.addf %123, %147 : vector<12x16xf32>
    %c6 = arith.constant 6 : index
    %c0_50 = arith.constant 0 : index
    %c0_51 = arith.constant 0 : index
    %149 = vector.load %arg2[%c6, %c0_50, %c0_51] : memref<7x16x16xf32, #tpu.memory_space<vmem>>, vector<1x16x16xf32>
    %150 = vector.shape_cast %149 : vector<1x16x16xf32> to vector<16x16xf32>
    %cst_52 = arith.constant dense<0.000000e+00> : vector<12x16xf32>
    %151 = tpu.matmul %148, %150, %cst_52 {dimension_numbers = #tpu.dot_dimension_numbers<[1], [0], [0], [1], [0, 0, 1, 1], [], []>, precision = #tpu.contract_precision<fp32>} : vector<12x16xf32>, vector<16x16xf32>, vector<12x16xf32> -> vector<12x16xf32>
    %152 = vector.extract_strided_slice %1 {offsets = [6, 0], sizes = [1, 16], strides = [1, 1]} : vector<32x32xf32> to vector<1x16xf32>
    %153 = vector.broadcast %152 : vector<1x16xf32> to vector<12x16xf32>
    %154 = arith.addf %151, %153 : vector<12x16xf32>
    %155 = arith.addf %154, %2 : vector<12x16xf32>
    %156 = vector.extract_strided_slice %1 {offsets = [7, 0], sizes = [1, 16], strides = [1, 1]} : vector<32x32xf32> to vector<1x16xf32>
    %157 = vector.broadcast %156 : vector<1x16xf32> to vector<12x16xf32>
    %158 = arith.mulf %155, %157 : vector<12x16xf32>
    %159 = vector.extract_strided_slice %1 {offsets = [8, 0], sizes = [1, 16], strides = [1, 1]} : vector<32x32xf32> to vector<1x16xf32>
    %160 = vector.broadcast %159 : vector<1x16xf32> to vector<12x16xf32>
    %161 = arith.addf %158, %160 : vector<12x16xf32>
    %162 = arith.addf %28, %161 : vector<12x16xf32>
    %c0_53 = arith.constant 0 : index
    %c0_54 = arith.constant 0 : index
    %163 = vector.load %arg3[%c0_53, %c0_54] : memref<16x32xf32, #tpu.memory_space<vmem>>, vector<16x32xf32>
    %cst_55 = arith.constant dense<0.000000e+00> : vector<12x32xf32>
    %164 = tpu.matmul %162, %163, %cst_55 {dimension_numbers = #tpu.dot_dimension_numbers<[1], [0], [0], [1], [0, 0, 1, 1], [], []>, precision = #tpu.contract_precision<fp32>} : vector<12x16xf32>, vector<16x32xf32>, vector<12x32xf32> -> vector<12x32xf32>
    %165 = vector.extract_strided_slice %1 {offsets = [9, 0], sizes = [1, 32], strides = [1, 1]} : vector<32x32xf32> to vector<1x32xf32>
    %166 = vector.broadcast %165 : vector<1x32xf32> to vector<12x32xf32>
    %167 = arith.addf %164, %166 : vector<12x32xf32>
    %cst_56 = arith.constant 0.000000e+00 : f32
    %168 = vector.broadcast %cst_56 : f32 to vector<12x32xf32>
    %169 = arith.maximumf %167, %168 : vector<12x32xf32>
    %c0_57 = arith.constant 0 : index
    %c0_58 = arith.constant 0 : index
    %170 = vector.load %arg4[%c0_57, %c0_58] : memref<32x16xf32, #tpu.memory_space<vmem>>, vector<32x16xf32>
    %cst_59 = arith.constant dense<0.000000e+00> : vector<12x16xf32>
    %171 = tpu.matmul %169, %170, %cst_59 {dimension_numbers = #tpu.dot_dimension_numbers<[1], [0], [0], [1], [0, 0, 1, 1], [], []>, precision = #tpu.contract_precision<fp32>} : vector<12x32xf32>, vector<32x16xf32>, vector<12x16xf32> -> vector<12x16xf32>
    %172 = vector.extract_strided_slice %1 {offsets = [10, 0], sizes = [1, 16], strides = [1, 1]} : vector<32x32xf32> to vector<1x16xf32>
    %173 = vector.broadcast %172 : vector<1x16xf32> to vector<12x16xf32>
    %174 = arith.addf %171, %173 : vector<12x16xf32>
    %175 = arith.addf %162, %174 : vector<12x16xf32>
    %176 = vector.extract_strided_slice %1 {offsets = [11, 0], sizes = [1, 16], strides = [1, 1]} : vector<32x32xf32> to vector<1x16xf32>
    %177 = vector.broadcast %176 : vector<1x16xf32> to vector<12x16xf32>
    %178 = arith.mulf %175, %177 : vector<12x16xf32>
    %179 = vector.extract_strided_slice %1 {offsets = [12, 0], sizes = [1, 16], strides = [1, 1]} : vector<32x32xf32> to vector<1x16xf32>
    %180 = vector.broadcast %179 : vector<1x16xf32> to vector<12x16xf32>
    %181 = arith.addf %178, %180 : vector<12x16xf32>
    %182 = vector.extract_strided_slice %1 {offsets = [26, 0], sizes = [1, 16], strides = [1, 1]} : vector<32x32xf32> to vector<1x16xf32>
    %183 = vector.broadcast %182 : vector<1x16xf32> to vector<12x16xf32>
    %184 = arith.mulf %181, %183 : vector<12x16xf32>
    %185 = vector.extract_strided_slice %1 {offsets = [27, 0], sizes = [1, 16], strides = [1, 1]} : vector<32x32xf32> to vector<1x16xf32>
    %186 = vector.broadcast %185 : vector<1x16xf32> to vector<12x16xf32>
    %187 = arith.addf %184, %186 : vector<12x16xf32>
    %cst_60 = arith.constant 0.000000e+00 : f32
    %188 = vector.broadcast %cst_60 : f32 to vector<12x16xf32>
    %189 = arith.maximumf %187, %188 : vector<12x16xf32>
    %190 = vector.extract_strided_slice %1 {offsets = [13, 0], sizes = [1, 16], strides = [1, 1]} : vector<32x32xf32> to vector<1x16xf32>
    %c0_61 = arith.constant 0 : index
    %c0_62 = arith.constant 0 : index
    %c0_63 = arith.constant 0 : index
    %191 = vector.load %arg5[%c0_61, %c0_62, %c0_63] : memref<7x16x16xf32, #tpu.memory_space<vmem>>, vector<1x16x16xf32>
    %192 = vector.shape_cast %191 : vector<1x16x16xf32> to vector<16x16xf32>
    %cst_64 = arith.constant dense<0.000000e+00> : vector<12x16xf32>
    %193 = tpu.matmul %189, %192, %cst_64 {dimension_numbers = #tpu.dot_dimension_numbers<[1], [0], [0], [1], [0, 0, 1, 1], [], []>, precision = #tpu.contract_precision<fp32>} : vector<12x16xf32>, vector<16x16xf32>, vector<12x16xf32> -> vector<12x16xf32>
    %cst_65 = arith.constant dense<0.000000e+00> : vector<12x16xf32>
    %194 = tpu.matmul %0, %189, %cst_65 {dimension_numbers = #tpu.dot_dimension_numbers<[1], [0], [0], [1], [0, 0, 1, 1], [], []>, precision = #tpu.contract_precision<fp32>} : vector<12x12xf32>, vector<12x16xf32>, vector<12x16xf32> -> vector<12x16xf32>
    %c1_66 = arith.constant 1 : index
    %c0_67 = arith.constant 0 : index
    %c0_68 = arith.constant 0 : index
    %195 = vector.load %arg5[%c1_66, %c0_67, %c0_68] : memref<7x16x16xf32, #tpu.memory_space<vmem>>, vector<1x16x16xf32>
    %196 = vector.shape_cast %195 : vector<1x16x16xf32> to vector<16x16xf32>
    %cst_69 = arith.constant dense<0.000000e+00> : vector<12x16xf32>
    %197 = tpu.matmul %194, %196, %cst_69 {dimension_numbers = #tpu.dot_dimension_numbers<[1], [0], [0], [1], [0, 0, 1, 1], [], []>, precision = #tpu.contract_precision<fp32>} : vector<12x16xf32>, vector<16x16xf32>, vector<12x16xf32> -> vector<12x16xf32>
    %198 = arith.addf %193, %197 : vector<12x16xf32>
    %cst_70 = arith.constant dense<0.000000e+00> : vector<12x16xf32>
    %199 = tpu.matmul %0, %194, %cst_70 {dimension_numbers = #tpu.dot_dimension_numbers<[1], [0], [0], [1], [0, 0, 1, 1], [], []>, precision = #tpu.contract_precision<fp32>} : vector<12x12xf32>, vector<12x16xf32>, vector<12x16xf32> -> vector<12x16xf32>
    %cst_71 = arith.constant 2.000000e+00 : f32
    %200 = vector.broadcast %cst_71 : f32 to vector<12x16xf32>
    %201 = arith.mulf %200, %199 : vector<12x16xf32>
    %202 = arith.subf %201, %189 : vector<12x16xf32>
    %c2_72 = arith.constant 2 : index
    %c0_73 = arith.constant 0 : index
    %c0_74 = arith.constant 0 : index
    %203 = vector.load %arg5[%c2_72, %c0_73, %c0_74] : memref<7x16x16xf32, #tpu.memory_space<vmem>>, vector<1x16x16xf32>
    %204 = vector.shape_cast %203 : vector<1x16x16xf32> to vector<16x16xf32>
    %cst_75 = arith.constant dense<0.000000e+00> : vector<12x16xf32>
    %205 = tpu.matmul %202, %204, %cst_75 {dimension_numbers = #tpu.dot_dimension_numbers<[1], [0], [0], [1], [0, 0, 1, 1], [], []>, precision = #tpu.contract_precision<fp32>} : vector<12x16xf32>, vector<16x16xf32>, vector<12x16xf32> -> vector<12x16xf32>
    %206 = arith.addf %198, %205 : vector<12x16xf32>
    %207 = vector.broadcast %190 : vector<1x16xf32> to vector<12x16xf32>
    %208 = arith.addf %206, %207 : vector<12x16xf32>
    %209 = arith.addf %208, %189 : vector<12x16xf32>
    %210 = vector.extract_strided_slice %1 {offsets = [14, 0], sizes = [1, 16], strides = [1, 1]} : vector<32x32xf32> to vector<1x16xf32>
    %211 = vector.broadcast %210 : vector<1x16xf32> to vector<12x16xf32>
    %212 = arith.mulf %209, %211 : vector<12x16xf32>
    %213 = vector.extract_strided_slice %1 {offsets = [15, 0], sizes = [1, 16], strides = [1, 1]} : vector<32x32xf32> to vector<1x16xf32>
    %214 = vector.broadcast %213 : vector<1x16xf32> to vector<12x16xf32>
    %215 = arith.addf %212, %214 : vector<12x16xf32>
    %c3_76 = arith.constant 3 : index
    %c0_77 = arith.constant 0 : index
    %c0_78 = arith.constant 0 : index
    %216 = vector.load %arg5[%c3_76, %c0_77, %c0_78] : memref<7x16x16xf32, #tpu.memory_space<vmem>>, vector<1x16x16xf32>
    %217 = vector.shape_cast %216 : vector<1x16x16xf32> to vector<16x16xf32>
    %cst_79 = arith.constant dense<0.000000e+00> : vector<12x16xf32>
    %218 = tpu.matmul %189, %217, %cst_79 {dimension_numbers = #tpu.dot_dimension_numbers<[1], [0], [0], [1], [0, 0, 1, 1], [], []>, precision = #tpu.contract_precision<fp32>} : vector<12x16xf32>, vector<16x16xf32>, vector<12x16xf32> -> vector<12x16xf32>
    %219 = vector.extract_strided_slice %1 {offsets = [16, 0], sizes = [1, 16], strides = [1, 1]} : vector<32x32xf32> to vector<1x16xf32>
    %220 = vector.broadcast %219 : vector<1x16xf32> to vector<12x16xf32>
    %221 = arith.addf %218, %220 : vector<12x16xf32>
    %c4_80 = arith.constant 4 : index
    %c0_81 = arith.constant 0 : index
    %c0_82 = arith.constant 0 : index
    %222 = vector.load %arg5[%c4_80, %c0_81, %c0_82] : memref<7x16x16xf32, #tpu.memory_space<vmem>>, vector<1x16x16xf32>
    %223 = vector.shape_cast %222 : vector<1x16x16xf32> to vector<16x16xf32>
    %cst_83 = arith.constant dense<0.000000e+00> : vector<12x16xf32>
    %224 = tpu.matmul %189, %223, %cst_83 {dimension_numbers = #tpu.dot_dimension_numbers<[1], [0], [0], [1], [0, 0, 1, 1], [], []>, precision = #tpu.contract_precision<fp32>} : vector<12x16xf32>, vector<16x16xf32>, vector<12x16xf32> -> vector<12x16xf32>
    %225 = vector.extract_strided_slice %1 {offsets = [17, 0], sizes = [1, 16], strides = [1, 1]} : vector<32x32xf32> to vector<1x16xf32>
    %226 = vector.broadcast %225 : vector<1x16xf32> to vector<12x16xf32>
    %227 = arith.addf %224, %226 : vector<12x16xf32>
    %c5_84 = arith.constant 5 : index
    %c0_85 = arith.constant 0 : index
    %c0_86 = arith.constant 0 : index
    %228 = vector.load %arg5[%c5_84, %c0_85, %c0_86] : memref<7x16x16xf32, #tpu.memory_space<vmem>>, vector<1x16x16xf32>
    %229 = vector.shape_cast %228 : vector<1x16x16xf32> to vector<16x16xf32>
    %cst_87 = arith.constant dense<0.000000e+00> : vector<12x16xf32>
    %230 = tpu.matmul %189, %229, %cst_87 {dimension_numbers = #tpu.dot_dimension_numbers<[1], [0], [0], [1], [0, 0, 1, 1], [], []>, precision = #tpu.contract_precision<fp32>} : vector<12x16xf32>, vector<16x16xf32>, vector<12x16xf32> -> vector<12x16xf32>
    %231 = vector.extract_strided_slice %1 {offsets = [18, 0], sizes = [1, 16], strides = [1, 1]} : vector<32x32xf32> to vector<1x16xf32>
    %232 = vector.broadcast %231 : vector<1x16xf32> to vector<12x16xf32>
    %233 = arith.addf %230, %232 : vector<12x16xf32>
    %234 = tpu.iota {dimensions = array<i32: 1>} : vector<1x16xi32>
    %cst_88 = arith.constant 0.000000e+00 : f32
    %235 = vector.broadcast %cst_88 : f32 to vector<12x16xf32>
    %c0_i32_89 = arith.constant 0 : i32
    %236 = vector.broadcast %c0_i32_89 : i32 to vector<1x16xi32>
    %237 = arith.cmpi sge, %234, %236 : vector<1x16xi32>
    %c16_i32_90 = arith.constant 16 : i32
    %238 = vector.broadcast %c16_i32_90 : i32 to vector<1x16xi32>
    %239 = arith.cmpi slt, %234, %238 : vector<1x16xi32>
    %240 = arith.andi %237, %239 : vector<1x16xi1>
    %241 = arith.extui %240 : vector<1x16xi1> to vector<1x16xi32>
    %242 = arith.sitofp %241 : vector<1x16xi32> to vector<1x16xf32>
    %243 = vector.broadcast %242 : vector<1x16xf32> to vector<12x16xf32>
    %244 = arith.mulf %221, %243 : vector<12x16xf32>
    %cst_91 = arith.constant dense<0.000000e+00> : vector<12x12xf32>
    %245 = tpu.matmul %244, %227, %cst_91 {dimension_numbers = #tpu.dot_dimension_numbers<[1], [1], [0], [0], [0, 0, 1, 0], [], []>, precision = #tpu.contract_precision<fp32>} : vector<12x16xf32>, vector<12x16xf32>, vector<12x12xf32> -> vector<12x12xf32>
    %cst_92 = arith.constant 2.500000e-01 : f32
    %246 = vector.broadcast %cst_92 : f32 to vector<12x12xf32>
    %247 = arith.mulf %245, %246 : vector<12x12xf32>
    %cst_93 = arith.constant dense<0xFF800000> : vector<12xf32>
    %248 = vector.multi_reduction <maximumf>, %247, %cst_93 [1] : vector<12x12xf32> to vector<12xf32>
    %249 = vector.shape_cast %248 : vector<12xf32> to vector<12x1xf32>
    %250 = vector.broadcast %249 : vector<12x1xf32> to vector<12x12xf32>
    %251 = arith.subf %247, %250 : vector<12x12xf32>
    %252 = math.exp %251 : vector<12x12xf32>
    %cst_94 = arith.constant dense<0.000000e+00> : vector<12xf32>
    %253 = vector.multi_reduction <add>, %252, %cst_94 [1] : vector<12x12xf32> to vector<12xf32>
    %254 = vector.shape_cast %253 : vector<12xf32> to vector<12x1xf32>
    %255 = vector.broadcast %254 : vector<12x1xf32> to vector<12x12xf32>
    %256 = arith.divf %252, %255 : vector<12x12xf32>
    %257 = vector.broadcast %242 : vector<1x16xf32> to vector<12x16xf32>
    %258 = arith.mulf %233, %257 : vector<12x16xf32>
    %cst_95 = arith.constant dense<0.000000e+00> : vector<12x16xf32>
    %259 = tpu.matmul %256, %258, %cst_95 {dimension_numbers = #tpu.dot_dimension_numbers<[1], [0], [0], [1], [0, 0, 1, 1], [], []>, precision = #tpu.contract_precision<fp32>} : vector<12x12xf32>, vector<12x16xf32>, vector<12x16xf32> -> vector<12x16xf32>
    %260 = arith.addf %235, %259 : vector<12x16xf32>
    %c6_96 = arith.constant 6 : index
    %c0_97 = arith.constant 0 : index
    %c0_98 = arith.constant 0 : index
    %261 = vector.load %arg5[%c6_96, %c0_97, %c0_98] : memref<7x16x16xf32, #tpu.memory_space<vmem>>, vector<1x16x16xf32>
    %262 = vector.shape_cast %261 : vector<1x16x16xf32> to vector<16x16xf32>
    %cst_99 = arith.constant dense<0.000000e+00> : vector<12x16xf32>
    %263 = tpu.matmul %260, %262, %cst_99 {dimension_numbers = #tpu.dot_dimension_numbers<[1], [0], [0], [1], [0, 0, 1, 1], [], []>, precision = #tpu.contract_precision<fp32>} : vector<12x16xf32>, vector<16x16xf32>, vector<12x16xf32> -> vector<12x16xf32>
    %264 = vector.extract_strided_slice %1 {offsets = [19, 0], sizes = [1, 16], strides = [1, 1]} : vector<32x32xf32> to vector<1x16xf32>
    %265 = vector.broadcast %264 : vector<1x16xf32> to vector<12x16xf32>
    %266 = arith.addf %263, %265 : vector<12x16xf32>
    %267 = arith.addf %266, %189 : vector<12x16xf32>
    %268 = vector.extract_strided_slice %1 {offsets = [20, 0], sizes = [1, 16], strides = [1, 1]} : vector<32x32xf32> to vector<1x16xf32>
    %269 = vector.broadcast %268 : vector<1x16xf32> to vector<12x16xf32>
    %270 = arith.mulf %267, %269 : vector<12x16xf32>
    %271 = vector.extract_strided_slice %1 {offsets = [21, 0], sizes = [1, 16], strides = [1, 1]} : vector<32x32xf32> to vector<1x16xf32>
    %272 = vector.broadcast %271 : vector<1x16xf32> to vector<12x16xf32>
    %273 = arith.addf %270, %272 : vector<12x16xf32>
    %274 = arith.addf %215, %273 : vector<12x16xf32>
    %c0_100 = arith.constant 0 : index
    %c0_101 = arith.constant 0 : index
    %275 = vector.load %arg6[%c0_100, %c0_101] : memref<16x32xf32, #tpu.memory_space<vmem>>, vector<16x32xf32>
    %cst_102 = arith.constant dense<0.000000e+00> : vector<12x32xf32>
    %276 = tpu.matmul %274, %275, %cst_102 {dimension_numbers = #tpu.dot_dimension_numbers<[1], [0], [0], [1], [0, 0, 1, 1], [], []>, precision = #tpu.contract_precision<fp32>} : vector<12x16xf32>, vector<16x32xf32>, vector<12x32xf32> -> vector<12x32xf32>
    %277 = vector.extract_strided_slice %1 {offsets = [22, 0], sizes = [1, 32], strides = [1, 1]} : vector<32x32xf32> to vector<1x32xf32>
    %278 = vector.broadcast %277 : vector<1x32xf32> to vector<12x32xf32>
    %279 = arith.addf %276, %278 : vector<12x32xf32>
    %cst_103 = arith.constant 0.000000e+00 : f32
    %280 = vector.broadcast %cst_103 : f32 to vector<12x32xf32>
    %281 = arith.maximumf %279, %280 : vector<12x32xf32>
    %c0_104 = arith.constant 0 : index
    %c0_105 = arith.constant 0 : index
    %282 = vector.load %arg7[%c0_104, %c0_105] : memref<32x16xf32, #tpu.memory_space<vmem>>, vector<32x16xf32>
    %cst_106 = arith.constant dense<0.000000e+00> : vector<12x16xf32>
    %283 = tpu.matmul %281, %282, %cst_106 {dimension_numbers = #tpu.dot_dimension_numbers<[1], [0], [0], [1], [0, 0, 1, 1], [], []>, precision = #tpu.contract_precision<fp32>} : vector<12x32xf32>, vector<32x16xf32>, vector<12x16xf32> -> vector<12x16xf32>
    %284 = vector.extract_strided_slice %1 {offsets = [23, 0], sizes = [1, 16], strides = [1, 1]} : vector<32x32xf32> to vector<1x16xf32>
    %285 = vector.broadcast %284 : vector<1x16xf32> to vector<12x16xf32>
    %286 = arith.addf %283, %285 : vector<12x16xf32>
    %287 = arith.addf %274, %286 : vector<12x16xf32>
    %288 = vector.extract_strided_slice %1 {offsets = [24, 0], sizes = [1, 16], strides = [1, 1]} : vector<32x32xf32> to vector<1x16xf32>
    %289 = vector.broadcast %288 : vector<1x16xf32> to vector<12x16xf32>
    %290 = arith.mulf %287, %289 : vector<12x16xf32>
    %291 = vector.extract_strided_slice %1 {offsets = [25, 0], sizes = [1, 16], strides = [1, 1]} : vector<32x32xf32> to vector<1x16xf32>
    %292 = vector.broadcast %291 : vector<1x16xf32> to vector<12x16xf32>
    %293 = arith.addf %290, %292 : vector<12x16xf32>
    %294 = vector.extract_strided_slice %1 {offsets = [28, 0], sizes = [1, 16], strides = [1, 1]} : vector<32x32xf32> to vector<1x16xf32>
    %295 = vector.broadcast %294 : vector<1x16xf32> to vector<12x16xf32>
    %296 = arith.mulf %293, %295 : vector<12x16xf32>
    %297 = vector.extract_strided_slice %1 {offsets = [29, 0], sizes = [1, 16], strides = [1, 1]} : vector<32x32xf32> to vector<1x16xf32>
    %298 = vector.broadcast %297 : vector<1x16xf32> to vector<12x16xf32>
    %299 = arith.addf %296, %298 : vector<12x16xf32>
    %cst_107 = arith.constant 0.000000e+00 : f32
    %300 = vector.broadcast %cst_107 : f32 to vector<12x16xf32>
    %301 = arith.maximumf %299, %300 : vector<12x16xf32>
    %c0_108 = arith.constant 0 : index
    %c0_109 = arith.constant 0 : index
    %302 = vector.load %arg8[%c0_108, %c0_109] : memref<16x4xf32, #tpu.memory_space<vmem>>, vector<16x4xf32>
    %cst_110 = arith.constant dense<0.000000e+00> : vector<12x4xf32>
    %303 = tpu.matmul %301, %302, %cst_110 {dimension_numbers = #tpu.dot_dimension_numbers<[1], [0], [0], [1], [0, 0, 1, 1], [], []>, precision = #tpu.contract_precision<fp32>} : vector<12x16xf32>, vector<16x4xf32>, vector<12x4xf32> -> vector<12x4xf32>
    %304 = vector.extract_strided_slice %1 {offsets = [30, 0], sizes = [1, 4], strides = [1, 1]} : vector<32x32xf32> to vector<1x4xf32>
    %305 = vector.broadcast %304 : vector<1x4xf32> to vector<12x4xf32>
    %306 = arith.addf %303, %305 : vector<12x4xf32>
    %c0_111 = arith.constant 0 : index
    %c0_112 = arith.constant 0 : index
    %307 = vector.load %arg10[%c0_111, %c0_112] : memref<12x4xf32, #tpu.memory_space<vmem>>, vector<12x4xf32>
    tpu.vector_store %arg10[%c0_111, %c0_112], %306 {strides = array<i32>} : memref<12x4xf32, #tpu.memory_space<vmem>>, vector<12x4xf32>,
    return
  }
}

</mosaic_0001>

<llo_original>
// kernel: gpst_forward.1
$region0: #{gpst_forward.1}
  #allocation0 [shape = 'u32[]', space=smem, size = 0x4, offset = 0x4, fixed_abs, tag = 'smem constant byte address 0x4 - core index']
  #allocation1 [shape = 'u32[72,128]{1,0:T(1,128)}', space=vmem, size = 0x9000, scoped, tag = 'internal scratch']
  %s0 = inlined_call_operand.vmem [shape: f32[12,12], index: 0, kind: input, shape index: {}]
  %s1 = inlined_call_operand.vmem [shape: f32[12,16], index: 1, kind: input, shape index: {}]
  %s2 = inlined_call_operand.vmem [shape: f32[7,16,16], index: 2, kind: input, shape index: {}]
  %s3 = inlined_call_operand.vmem [shape: f32[16,32], index: 3, kind: input, shape index: {}]
  %s4 = inlined_call_operand.vmem [shape: f32[32,16], index: 4, kind: input, shape index: {}]
  %s5 = inlined_call_operand.vmem [shape: f32[7,16,16], index: 5, kind: input, shape index: {}]
  %s6 = inlined_call_operand.vmem [shape: f32[16,32], index: 6, kind: input, shape index: {}]
  %s7 = inlined_call_operand.vmem [shape: f32[32,16], index: 7, kind: input, shape index: {}]
  %s8 = inlined_call_operand.vmem [shape: f32[16,4], index: 8, kind: input, shape index: {}]
  %s9 = inlined_call_operand.vmem [shape: f32[32,32], index: 9, kind: input, shape index: {}]
  %s10 = inlined_call_operand.vmem [shape: f32[12,4], index: 10, kind: output, shape index: {}]
  %s11 = sld [smem:[#allocation0]]
  $region50: #{gpst_forward.1} parent=0
    _
  %s13 = ssub.s32 1, %s11
  %s14 = scalar_select 0, %s13, %s11
  // Predicated region
  $region2: #{gpst_forward.1} parent=0 // pred_check
    _
  $region3: #{gpst_forward.1} parent=0 // pred_check_branch
    %16 = sbr.rel (0) target = $region5
  $region4: #{gpst_forward.1} parent=0 // pred_region
    _
  $region5: #{gpst_forward.1} parent=0 // pred_fallthru
    _
  // Predicated region
  $region6: #{gpst_forward.1} parent=0 // pred_check
    _
  $region7: #{gpst_forward.1} parent=0 // pred_check_branch
    %18 = sbr.rel (0) target = $region9
  $region8: #{gpst_forward.1} parent=0 // pred_region
    _
  $region9: #{gpst_forward.1} parent=0 // pred_fallthru
    _
  // Predicated region
  $region10: #{gpst_forward.1} parent=0 // pred_check
    _
  $region11: #{gpst_forward.1} parent=0 // pred_check_branch
    %20 = sbr.rel (0) target = $region13
  $region12: #{gpst_forward.1} parent=0 // pred_region
    _
  $region13: #{gpst_forward.1} parent=0 // pred_fallthru
    _
  // Predicated region
  $region14: #{gpst_forward.1} parent=0 // pred_check
    _
  $region15: #{gpst_forward.1} parent=0 // pred_check_branch
    %22 = sbr.rel (0) target = $region17
  $region16: #{gpst_forward.1} parent=0 // pred_region
    _
  $region17: #{gpst_forward.1} parent=0 // pred_fallthru
    _
  // Predicated region
  $region18: #{gpst_forward.1} parent=0 // pred_check
    _
  $region19: #{gpst_forward.1} parent=0 // pred_check_branch
    %24 = sbr.rel (0) target = $region21
  $region20: #{gpst_forward.1} parent=0 // pred_region
    _
  $region21: #{gpst_forward.1} parent=0 // pred_fallthru
    _
  // Predicated region
  $region22: #{gpst_forward.1} parent=0 // pred_check
    _
  $region23: #{gpst_forward.1} parent=0 // pred_check_branch
    %26 = sbr.rel (0) target = $region25
  $region24: #{gpst_forward.1} parent=0 // pred_region
    _
  $region25: #{gpst_forward.1} parent=0 // pred_fallthru
    _
  // Predicated region
  $region26: #{gpst_forward.1} parent=0 // pred_check
    _
  $region27: #{gpst_forward.1} parent=0 // pred_check_branch
    %28 = sbr.rel (0) target = $region29
  $region28: #{gpst_forward.1} parent=0 // pred_region
    _
  $region29: #{gpst_forward.1} parent=0 // pred_fallthru
    _
  // Predicated region
  $region30: #{gpst_forward.1} parent=0 // pred_check
    _
  $region31: #{gpst_forward.1} parent=0 // pred_check_branch
    %30 = sbr.rel (0) target = $region33
  $region32: #{gpst_forward.1} parent=0 // pred_region
    _
  $region33: #{gpst_forward.1} parent=0 // pred_fallthru
    _
  // Predicated region
  $region34: #{gpst_forward.1} parent=0 // pred_check
    _
  $region35: #{gpst_forward.1} parent=0 // pred_check_branch
    %32 = sbr.rel (0) target = $region37
  $region36: #{gpst_forward.1} parent=0 // pred_region
    _
  $region37: #{gpst_forward.1} parent=0 // pred_fallthru
    _
  // Predicated region
  $region38: #{gpst_forward.1} parent=0 // pred_check
    _
  $region39: #{gpst_forward.1} parent=0 // pred_check_branch
    %34 = sbr.rel (0) target = $region41
  $region40: #{gpst_forward.1} parent=0 // pred_region
    _
  $region41: #{gpst_forward.1} parent=0 // pred_fallthru
    _
  %v35 = vld [vmem:[%s0] sm:$0xff]
  %v36 = vld [vmem:[%s0 + $0x8] sm:$0xf]
  %v37 = vld [vmem:[%s9] sm:$0xff]
  %v38 = vld [vmem:[%s9 + $0x8] sm:$0xff]
  %v39 = vld [vmem:[%s9 + $0x10] sm:$0xff]
  %v40 = vld [vmem:[%s9 + $0x18] sm:$0xff]
  %v41 = vld [vmem:[%s1] sm:$0xff]
  %v42 = vld [vmem:[%s1 + $0x8] sm:$0xf]
  %v43 = vld [vmem:[%s2] sm:$0xff]
  %v44 = vld [vmem:[%s2 + $0x8] sm:$0xff]
  %vm45 = vcmask 97280
  %v47 = vsel %vm45, %v35, 0
  %v50 = vsel %vm45, %v36, 0
  %vm52 = vcmask 1043456
  %v54 = vsel %vm52, %v42, 0
  %56 = vmatpush.msra.mxu0 0.0
  %57 = vmatpush.msra.mxu0 0.0
  %58 = vmatpush.msra.mxu0 0.0
  %59 = vmatpush.msra.mxu0 0.0
  %60 = vmatpush.msra.mxu0 0.0
  %61 = vmatpush.msra.mxu0 0.0
  %62 = vmatpush.msra.mxu0 0.0
  %63 = vmatpush.msra.mxu0 0.0
  %64 = vmatpush.msra.mxu0 0.0
  %65 = vmatpush.msra.mxu0 0.0
  %66 = vmatpush.msra.mxu0 0.0
  %67 = vmatpush.msra.mxu0 0.0
  %68 = vmatpush.msra.mxu0 0.0
  %69 = vmatpush.msra.mxu0 0.0
  %v70 = vand.u32 %v54, 4294901760
  %71 = vmatpush.msra.mxu0 %v70
  %v72 = vand.u32 %v41, 4294901760
  %73 = vmatpush.msra.mxu0 %v72
  %v74 = vand.u32 %v47, 4294901760
  %v75 = vsub.f32 %v47, %v74
  %v76 = vand.u32 %v75, 4294901760
  %v77 = vsub.f32 %v75, %v76
  %v78 = vand.u32 %v77, 4294901760
  %79 = vmatmul.f32.gmra.mxu0 %v78
  %v80 = vpop.f32.mrf.mxu0
  %v81 = vadd.f32 0.0, %v80
  %v82 = vand.u32 %v50, 4294901760
  %v83 = vsub.f32 %v50, %v82
  %v84 = vand.u32 %v83, 4294901760
  %v85 = vsub.f32 %v83, %v84
  %v86 = vand.u32 %v85, 4294901760
  %87 = vmatmul.f32.gmra.mxu0 %v86
  %v88 = vpop.f32.mrf.mxu0
  %v89 = vadd.f32 0.0, %v88
  %90 = vdwg.mxu0
  %91 = vmatpush.msra.mxu0 0.0
  %92 = vmatpush.msra.mxu0 0.0
  %93 = vmatpush.msra.mxu0 0.0
  %94 = vmatpush.msra.mxu0 0.0
  %95 = vmatpush.msra.mxu0 0.0
  %96 = vmatpush.msra.mxu0 0.0
  %97 = vmatpush.msra.mxu0 0.0
  %98 = vmatpush.msra.mxu0 0.0
  %99 = vmatpush.msra.mxu0 0.0
  %100 = vmatpush.msra.mxu0 0.0
  %101 = vmatpush.msra.mxu0 0.0
  %102 = vmatpush.msra.mxu0 0.0
  %103 = vmatpush.msra.mxu0 0.0
  %104 = vmatpush.msra.mxu0 0.0
  %v105 = vand.u32 %v54, 4294901760
  %v106 = vsub.f32 %v54, %v105
  %v107 = vand.u32 %v106, 4294901760
  %v108 = vsub.f32 %v106, %v107
  %v109 = vand.u32 %v108, 4294901760
  %110 = vmatpush.msra.mxu0 %v109
  %v111 = vand.u32 %v41, 4294901760
  %v112 = vsub.f32 %v41, %v111
  %v113 = vand.u32 %v112, 4294901760
  %v114 = vsub.f32 %v112, %v113
  %v115 = vand.u32 %v114, 4294901760
  %116 = vmatpush.msra.mxu0 %v115
  %v117 = vand.u32 %v47, 4294901760
  %118 = vmatmul.f32.gmra.mxu0 %v117
  %v119 = vpop.f32.mrf.mxu0
  %v120 = vadd.f32 %v81, %v119
  %v121 = vand.u32 %v50, 4294901760
  %122 = vmatmul.f32.gmra.mxu0 %v121
  %v123 = vpop.f32.mrf.mxu0
  %v124 = vadd.f32 %v89, %v123
  %125 = vdwg.mxu0
  %126 = vmatpush.msra.mxu0 0.0
  %127 = vmatpush.msra.mxu0 0.0
  %128 = vmatpush.msra.mxu0 0.0
  %129 = vmatpush.msra.mxu0 0.0
  %130 = vmatpush.msra.mxu0 0.0
  %131 = vmatpush.msra.mxu0 0.0
  %132 = vmatpush.msra.mxu0 0.0
  %133 = vmatpush.msra.mxu0 0.0
  %134 = vmatpush.msra.mxu0 0.0
  %135 = vmatpush.msra.mxu0 0.0
  %136 = vmatpush.msra.mxu0 0.0
  %137 = vmatpush.msra.mxu0 0.0
  %138 = vmatpush.msra.mxu0 0.0
  %139 = vmatpush.msra.mxu0 0.0
  %v140 = vand.u32 %v54, 4294901760
  %v141 = vsub.f32 %v54, %v140
  %142 = vmatpush.msra.mxu0 %v141
  %v143 = vand.u32 %v41, 4294901760
  %v144 = vsub.f32 %v41, %v143
  %145 = vmatpush.msra.mxu0 %v144
  %v146 = vand.u32 %v47, 4294901760
  %v147 = vsub.f32 %v47, %v146
  %148 = vmatmul.f32.gmra.mxu0 %v147
  %v149 = vpop.f32.mrf.mxu0
  %v150 = vadd.f32 %v120, %v149
  %v151 = vand.u32 %v50, 4294901760
  %v152 = vsub.f32 %v50, %v151
  %153 = vmatmul.f32.gmra.mxu0 %v152
  %v154 = vpop.f32.mrf.mxu0
  %v155 = vadd.f32 %v124, %v154
  %156 = vdwg.mxu0
  %157 = vmatpush.msra.mxu0 0.0
  %158 = vmatpush.msra.mxu0 0.0
  %159 = vmatpush.msra.mxu0 0.0
  %160 = vmatpush.msra.mxu0 0.0
  %161 = vmatpush.msra.mxu0 0.0
  %162 = vmatpush.msra.mxu0 0.0
  %163 = vmatpush.msra.mxu0 0.0
  %164 = vmatpush.msra.mxu0 0.0
  %165 = vmatpush.msra.mxu0 0.0
  %166 = vmatpush.msra.mxu0 0.0
  %167 = vmatpush.msra.mxu0 0.0
  %168 = vmatpush.msra.mxu0 0.0
  %169 = vmatpush.msra.mxu0 0.0
  %170 = vmatpush.msra.mxu0 0.0
  %v171 = vand.u32 %v54, 4294901760
  %172 = vmatpush.msra.mxu0 %v171
  %v173 = vand.u32 %v41, 4294901760
  %174 = vmatpush.msra.mxu0 %v173
  %v175 = vand.u32 %v47, 4294901760
  %v176 = vsub.f32 %v47, %v175
  %v177 = vand.u32 %v176, 4294901760
  %178 = vmatmul.f32.gmra.mxu0 %v177
  %v179 = vpop.f32.mrf.mxu0
  %v180 = vadd.f32 %v150, %v179
  %v181 = vand.u32 %v50, 4294901760
  %v182 = vsub.f32 %v50, %v181
  %v183 = vand.u32 %v182, 4294901760
  %184 = vmatmul.f32.gmra.mxu0 %v183
  %v185 = vpop.f32.mrf.mxu0
  %v186 = vadd.f32 %v155, %v185
  %187 = vdwg.mxu0
  %188 = vmatpush.msra.mxu0 0.0
  %189 = vmatpush.msra.mxu0 0.0
  %190 = vmatpush.msra.mxu0 0.0
  %191 = vmatpush.msra.mxu0 0.0
  %192 = vmatpush.msra.mxu0 0.0
  %193 = vmatpush.msra.mxu0 0.0
  %194 = vmatpush.msra.mxu0 0.0
  %195 = vmatpush.msra.mxu0 0.0
  %196 = vmatpush.msra.mxu0 0.0
  %197 = vmatpush.msra.mxu0 0.0
  %198 = vmatpush.msra.mxu0 0.0
  %199 = vmatpush.msra.mxu0 0.0
  %200 = vmatpush.msra.mxu0 0.0
  %201 = vmatpush.msra.mxu0 0.0
  %v202 = vand.u32 %v54, 4294901760
  %v203 = vsub.f32 %v54, %v202
  %v204 = vand.u32 %v203, 4294901760
  %205 = vmatpush.msra.mxu0 %v204
  %v206 = vand.u32 %v41, 4294901760
  %v207 = vsub.f32 %v41, %v206
  %v208 = vand.u32 %v207, 4294901760
  %209 = vmatpush.msra.mxu0 %v208
  %v210 = vand.u32 %v47, 4294901760
  %211 = vmatmul.f32.gmra.mxu0 %v210
  %v212 = vpop.f32.mrf.mxu0
  %v213 = vadd.f32 %v180, %v212
  %v214 = vand.u32 %v50, 4294901760
  %215 = vmatmul.f32.gmra.mxu0 %v214
  %v216 = vpop.f32.mrf.mxu0
  %v217 = vadd.f32 %v186, %v216
  %218 = vdwg.mxu0
  %219 = vmatpush.msra.mxu0 0.0
  %220 = vmatpush.msra.mxu0 0.0
  %221 = vmatpush.msra.mxu0 0.0
  %222 = vmatpush.msra.mxu0 0.0
  %223 = vmatpush.msra.mxu0 0.0
  %224 = vmatpush.msra.mxu0 0.0
  %225 = vmatpush.msra.mxu0 0.0
  %226 = vmatpush.msra.mxu0 0.0
  %227 = vmatpush.msra.mxu0 0.0
  %228 = vmatpush.msra.mxu0 0.0
  %229 = vmatpush.msra.mxu0 0.0
  %230 = vmatpush.msra.mxu0 0.0
  %231 = vmatpush.msra.mxu0 0.0
  %232 = vmatpush.msra.mxu0 0.0
  %v233 = vand.u32 %v54, 4294901760
  %234 = vmatpush.msra.mxu0 %v233
  %v235 = vand.u32 %v41, 4294901760
  %236 = vmatpush.msra.mxu0 %v235
  %v237 = vand.u32 %v47, 4294901760
  %238 = vmatmul.f32.gmra.mxu0 %v237
  %v239 = vpop.f32.mrf.mxu0
  %v240 = vadd.f32 %v213, %v239
  %v241 = vand.u32 %v50, 4294901760
  %242 = vmatmul.f32.gmra.mxu0 %v241
  %v243 = vpop.f32.mrf.mxu0
  %v244 = vadd.f32 %v217, %v243
  %245 = vdwg.mxu0
  %s246 = scalar_lea.vmem %s2, 16
  %v247 = vld [vmem:[%s246] sm:$0xff]
  %v248 = vld [vmem:[%s246 + $0x8] sm:$0xff]
  %vm249 = vcmask 130048
  %v251 = vsel %vm249, %v240, 0
  %v254 = vsel %vm249, %v244, 0
  %256 = vmatpush.msra.mxu0 0.0
  %257 = vmatpush.msra.mxu0 0.0
  %258 = vmatpush.msra.mxu0 0.0
  %259 = vmatpush.msra.mxu0 0.0
  %260 = vmatpush.msra.mxu0 0.0
  %261 = vmatpush.msra.mxu0 0.0
  %262 = vmatpush.msra.mxu0 0.0
  %263 = vmatpush.msra.mxu0 0.0
  %264 = vmatpush.msra.mxu0 0.0
  %265 = vmatpush.msra.mxu0 0.0
  %266 = vmatpush.msra.mxu0 0.0
  %267 = vmatpush.msra.mxu0 0.0
  %268 = vmatpush.msra.mxu0 0.0
  %269 = vmatpush.msra.mxu0 0.0
  %v270 = vand.u32 %v248, 4294901760
  %271 = vmatpush.msra.mxu0 %v270
  %v272 = vand.u32 %v247, 4294901760
  %273 = vmatpush.msra.mxu0 %v272
  %v274 = vand.u32 %v251, 4294901760
  %v275 = vsub.f32 %v251, %v274
  %v276 = vand.u32 %v275, 4294901760
  %v277 = vsub.f32 %v275, %v276
  %v278 = vand.u32 %v277, 4294901760
  %279 = vmatmul.f32.gmra.mxu0 %v278
  %v280 = vpop.f32.mrf.mxu0
  %v281 = vadd.f32 0.0, %v280
  %v282 = vand.u32 %v254, 4294901760
  %v283 = vsub.f32 %v254, %v282
  %v284 = vand.u32 %v283, 4294901760
  %v285 = vsub.f32 %v283, %v284
  %v286 = vand.u32 %v285, 4294901760
  %287 = vmatmul.f32.gmra.mxu0 %v286
  %v288 = vpop.f32.mrf.mxu0
  %v289 = vadd.f32 0.0, %v288
  %290 = vdwg.mxu0
  %291 = vmatpush.msra.mxu0 0.0
  %292 = vmatpush.msra.mxu0 0.0
  %293 = vmatpush.msra.mxu0 0.0
  %294 = vmatpush.msra.mxu0 0.0
  %295 = vmatpush.msra.mxu0 0.0
  %296 = vmatpush.msra.mxu0 0.0
  %297 = vmatpush.msra.mxu0 0.0
  %298 = vmatpush.msra.mxu0 0.0
  %299 = vmatpush.msra.mxu0 0.0
  %300 = vmatpush.msra.mxu0 0.0
  %301 = vmatpush.msra.mxu0 0.0
  %302 = vmatpush.msra.mxu0 0.0
  %303 = vmatpush.msra.mxu0 0.0
  %304 = vmatpush.msra.mxu0 0.0
  %v305 = vand.u32 %v248, 4294901760
  %v306 = vsub.f32 %v248, %v305
  %v307 = vand.u32 %v306, 4294901760
  %v308 = vsub.f32 %v306, %v307
  %v309 = vand.u32 %v308, 4294901760
  %310 = vmatpush.msra.mxu0 %v309
  %v311 = vand.u32 %v247, 4294901760
  %v312 = vsub.f32 %v247, %v311
  %v313 = vand.u32 %v312, 4294901760
  %v314 = vsub.f32 %v312, %v313
  %v315 = vand.u32 %v314, 4294901760
  %316 = vmatpush.msra.mxu0 %v315
  %v317 = vand.u32 %v251, 4294901760
  %318 = vmatmul.f32.gmra.mxu0 %v317
  %v319 = vpop.f32.mrf.mxu0
  %v320 = vadd.f32 %v281, %v319
  %v321 = vand.u32 %v254, 4294901760
  %322 = vmatmul.f32.gmra.mxu0 %v321
  %v323 = vpop.f32.mrf.mxu0
  %v324 = vadd.f32 %v289, %v323
  %325 = vdwg.mxu0
  %326 = vmatpush.msra.mxu0 0.0
  %327 = vmatpush.msra.mxu0 0.0
  %328 = vmatpush.msra.mxu0 0.0
  %329 = vmatpush.msra.mxu0 0.0
  %330 = vmatpush.msra.mxu0 0.0
  %331 = vmatpush.msra.mxu0 0.0
  %332 = vmatpush.msra.mxu0 0.0
  %333 = vmatpush.msra.mxu0 0.0
  %334 = vmatpush.msra.mxu0 0.0
  %335 = vmatpush.msra.mxu0 0.0
  %336 = vmatpush.msra.mxu0 0.0
  %337 = vmatpush.msra.mxu0 0.0
  %338 = vmatpush.msra.mxu0 0.0
  %339 = vmatpush.msra.mxu0 0.0
  %v340 = vand.u32 %v248, 4294901760
  %v341 = vsub.f32 %v248, %v340
  %342 = vmatpush.msra.mxu0 %v341
  %v343 = vand.u32 %v247, 4294901760
  %v344 = vsub.f32 %v247, %v343
  %345 = vmatpush.msra.mxu0 %v344
  %v346 = vand.u32 %v251, 4294901760
  %v347 = vsub.f32 %v251, %v346
  %348 = vmatmul.f32.gmra.mxu0 %v347
  %v349 = vpop.f32.mrf.mxu0
  %v350 = vadd.f32 %v320, %v349
  %v351 = vand.u32 %v254, 4294901760
  %v352 = vsub.f32 %v254, %v351
  %353 = vmatmul.f32.gmra.mxu0 %v352
  %v354 = vpop.f32.mrf.mxu0
  %v355 = vadd.f32 %v324, %v354
  %356 = vdwg.mxu0
  %357 = vmatpush.msra.mxu0 0.0
  %358 = vmatpush.msra.mxu0 0.0
  %359 = vmatpush.msra.mxu0 0.0
  %360 = vmatpush.msra.mxu0 0.0
  %361 = vmatpush.msra.mxu0 0.0
  %362 = vmatpush.msra.mxu0 0.0
  %363 = vmatpush.msra.mxu0 0.0
  %364 = vmatpush.msra.mxu0 0.0
  %365 = vmatpush.msra.mxu0 0.0
  %366 = vmatpush.msra.mxu0 0.0
  %367 = vmatpush.msra.mxu0 0.0
  %368 = vmatpush.msra.mxu0 0.0
  %369 = vmatpush.msra.mxu0 0.0
  %370 = vmatpush.msra.mxu0 0.0
  %v371 = vand.u32 %v248, 4294901760
  %372 = vmatpush.msra.mxu0 %v371
  %v373 = vand.u32 %v247, 4294901760
  %374 = vmatpush.msra.mxu0 %v373
  %v375 = vand.u32 %v251, 4294901760
  %v376 = vsub.f32 %v251, %v375
  %v377 = vand.u32 %v376, 4294901760
  %378 = vmatmul.f32.gmra.mxu0 %v377
  %v379 = vpop.f32.mrf.mxu0
  %v380 = vadd.f32 %v350, %v379
  %v381 = vand.u32 %v254, 4294901760
  %v382 = vsub.f32 %v254, %v381
  %v383 = vand.u32 %v382, 4294901760
  %384 = vmatmul.f32.gmra.mxu0 %v383
  %v385 = vpop.f32.mrf.mxu0
  %v386 = vadd.f32 %v355, %v385
  %387 = vdwg.mxu0
  %388 = vmatpush.msra.mxu0 0.0
  %389 = vmatpush.msra.mxu0 0.0
  %390 = vmatpush.msra.mxu0 0.0
  %391 = vmatpush.msra.mxu0 0.0
  %392 = vmatpush.msra.mxu0 0.0
  %393 = vmatpush.msra.mxu0 0.0
  %394 = vmatpush.msra.mxu0 0.0
  %395 = vmatpush.msra.mxu0 0.0
  %396 = vmatpush.msra.mxu0 0.0
  %397 = vmatpush.msra.mxu0 0.0
  %398 = vmatpush.msra.mxu0 0.0
  %399 = vmatpush.msra.mxu0 0.0
  %400 = vmatpush.msra.mxu0 0.0
  %401 = vmatpush.msra.mxu0 0.0
  %v402 = vand.u32 %v248, 4294901760
  %v403 = vsub.f32 %v248, %v402
  %v404 = vand.u32 %v403, 4294901760
  %405 = vmatpush.msra.mxu0 %v404
  %v406 = vand.u32 %v247, 4294901760
  %v407 = vsub.f32 %v247, %v406
  %v408 = vand.u32 %v407, 4294901760
  %409 = vmatpush.msra.mxu0 %v408
  %v410 = vand.u32 %v251, 4294901760
  %411 = vmatmul.f32.gmra.mxu0 %v410
  %v412 = vpop.f32.mrf.mxu0
  %v413 = vadd.f32 %v380, %v412
  %v414 = vand.u32 %v254, 4294901760
  %415 = vmatmul.f32.gmra.mxu0 %v414
  %v416 = vpop.f32.mrf.mxu0
  %v417 = vadd.f32 %v386, %v416
  %418 = vdwg.mxu0
  %419 = vmatpush.msra.mxu0 0.0
  %420 = vmatpush.msra.mxu0 0.0
  %421 = vmatpush.msra.mxu0 0.0
  %422 = vmatpush.msra.mxu0 0.0
  %423 = vmatpush.msra.mxu0 0.0
  %424 = vmatpush.msra.mxu0 0.0
  %425 = vmatpush.msra.mxu0 0.0
  %426 = vmatpush.msra.mxu0 0.0
  %427 = vmatpush.msra.mxu0 0.0
  %428 = vmatpush.msra.mxu0 0.0
  %429 = vmatpush.msra.mxu0 0.0
  %430 = vmatpush.msra.mxu0 0.0
  %431 = vmatpush.msra.mxu0 0.0
  %432 = vmatpush.msra.mxu0 0.0
  %v433 = vand.u32 %v248, 4294901760
  %434 = vmatpush.msra.mxu0 %v433
  %v435 = vand.u32 %v247, 4294901760
  %436 = vmatpush.msra.mxu0 %v435
  %v437 = vand.u32 %v251, 4294901760
  %438 = vmatmul.f32.gmra.mxu0 %v437
  %v439 = vpop.f32.mrf.mxu0
  %v440 = vadd.f32 %v413, %v439
  %v441 = vand.u32 %v254, 4294901760
  %442 = vmatmul.f32.gmra.mxu0 %v441
  %v443 = vpop.f32.mrf.mxu0
  %v444 = vadd.f32 %v417, %v443
  %445 = vdwg.mxu0
  %v447 = vsel %vm249, %v41, 0
  %v449 = vsel %vm249, %v42, 0
  %451 = vmatpush.msra.mxu0 0.0
  %452 = vmatpush.msra.mxu0 0.0
  %453 = vmatpush.msra.mxu0 0.0
  %454 = vmatpush.msra.mxu0 0.0
  %455 = vmatpush.msra.mxu0 0.0
  %456 = vmatpush.msra.mxu0 0.0
  %457 = vmatpush.msra.mxu0 0.0
  %458 = vmatpush.msra.mxu0 0.0
  %459 = vmatpush.msra.mxu0 0.0
  %460 = vmatpush.msra.mxu0 0.0
  %461 = vmatpush.msra.mxu0 0.0
  %462 = vmatpush.msra.mxu0 0.0
  %463 = vmatpush.msra.mxu0 0.0
  %464 = vmatpush.msra.mxu0 0.0
  %v465 = vand.u32 %v44, 4294901760
  %466 = vmatpush.msra.mxu0 %v465
  %v467 = vand.u32 %v43, 4294901760
  %468 = vmatpush.msra.mxu0 %v467
  %v469 = vand.u32 %v447, 4294901760
  %v470 = vsub.f32 %v447, %v469
  %v471 = vand.u32 %v470, 4294901760
  %v472 = vsub.f32 %v470, %v471
  %v473 = vand.u32 %v472, 4294901760
  %474 = vmatmul.f32.gmra.mxu0 %v473
  %v475 = vpop.f32.mrf.mxu0
  %v476 = vadd.f32 %v440, %v475
  %v477 = vand.u32 %v449, 4294901760
  %v478 = vsub.f32 %v449, %v477
  %v479 = vand.u32 %v478, 4294901760
  %v480 = vsub.f32 %v478, %v479
  %v481 = vand.u32 %v480, 4294901760
  %482 = vmatmul.f32.gmra.mxu0 %v481
  %v483 = vpop.f32.mrf.mxu0
  %v484 = vadd.f32 %v444, %v483
  %485 = vdwg.mxu0
  %486 = vmatpush.msra.mxu0 0.0
  %487 = vmatpush.msra.mxu0 0.0
  %488 = vmatpush.msra.mxu0 0.0
  %489 = vmatpush.msra.mxu0 0.0
  %490 = vmatpush.msra.mxu0 0.0
  %491 = vmatpush.msra.mxu0 0.0
  %492 = vmatpush.msra.mxu0 0.0
  %493 = vmatpush.msra.mxu0 0.0
  %494 = vmatpush.msra.mxu0 0.0
  %495 = vmatpush.msra.mxu0 0.0
  %496 = vmatpush.msra.mxu0 0.0
  %497 = vmatpush.msra.mxu0 0.0
  %498 = vmatpush.msra.mxu0 0.0
  %499 = vmatpush.msra.mxu0 0.0
  %v500 = vand.u32 %v44, 4294901760
  %v501 = vsub.f32 %v44, %v500
  %v502 = vand.u32 %v501, 4294901760
  %v503 = vsub.f32 %v501, %v502
  %v504 = vand.u32 %v503, 4294901760
  %505 = vmatpush.msra.mxu0 %v504
  %v506 = vand.u32 %v43, 4294901760
  %v507 = vsub.f32 %v43, %v506
  %v508 = vand.u32 %v507, 4294901760
  %v509 = vsub.f32 %v507, %v508
  %v510 = vand.u32 %v509, 4294901760
  %511 = vmatpush.msra.mxu0 %v510
  %v512 = vand.u32 %v447, 4294901760
  %513 = vmatmul.f32.gmra.mxu0 %v512
  %v514 = vpop.f32.mrf.mxu0
  %v515 = vadd.f32 %v476, %v514
  %v516 = vand.u32 %v449, 4294901760
  %517 = vmatmul.f32.gmra.mxu0 %v516
  %v518 = vpop.f32.mrf.mxu0
  %v519 = vadd.f32 %v484, %v518
  %520 = vdwg.mxu0
  %521 = vmatpush.msra.mxu0 0.0
  %522 = vmatpush.msra.mxu0 0.0
  %523 = vmatpush.msra.mxu0 0.0
  %524 = vmatpush.msra.mxu0 0.0
  %525 = vmatpush.msra.mxu0 0.0
  %526 = vmatpush.msra.mxu0 0.0
  %527 = vmatpush.msra.mxu0 0.0
  %528 = vmatpush.msra.mxu0 0.0
  %529 = vmatpush.msra.mxu0 0.0
  %530 = vmatpush.msra.mxu0 0.0
  %531 = vmatpush.msra.mxu0 0.0
  %532 = vmatpush.msra.mxu0 0.0
  %533 = vmatpush.msra.mxu0 0.0
  %534 = vmatpush.msra.mxu0 0.0
  %v535 = vand.u32 %v44, 4294901760
  %v536 = vsub.f32 %v44, %v535
  %537 = vmatpush.msra.mxu0 %v536
  %v538 = vand.u32 %v43, 4294901760
  %v539 = vsub.f32 %v43, %v538
  %540 = vmatpush.msra.mxu0 %v539
  %v541 = vand.u32 %v447, 4294901760
  %v542 = vsub.f32 %v447, %v541
  %543 = vmatmul.f32.gmra.mxu0 %v542
  %v544 = vpop.f32.mrf.mxu0
  %v545 = vadd.f32 %v515, %v544
  %v546 = vand.u32 %v449, 4294901760
  %v547 = vsub.f32 %v449, %v546
  %548 = vmatmul.f32.gmra.mxu0 %v547
  %v549 = vpop.f32.mrf.mxu0
  %v550 = vadd.f32 %v519, %v549
  %551 = vdwg.mxu0
  %552 = vmatpush.msra.mxu0 0.0
  %553 = vmatpush.msra.mxu0 0.0
  %554 = vmatpush.msra.mxu0 0.0
  %555 = vmatpush.msra.mxu0 0.0
  %556 = vmatpush.msra.mxu0 0.0
  %557 = vmatpush.msra.mxu0 0.0
  %558 = vmatpush.msra.mxu0 0.0
  %559 = vmatpush.msra.mxu0 0.0
  %560 = vmatpush.msra.mxu0 0.0
  %561 = vmatpush.msra.mxu0 0.0
  %562 = vmatpush.msra.mxu0 0.0
  %563 = vmatpush.msra.mxu0 0.0
  %564 = vmatpush.msra.mxu0 0.0
  %565 = vmatpush.msra.mxu0 0.0
  %v566 = vand.u32 %v44, 4294901760
  %567 = vmatpush.msra.mxu0 %v566
  %v568 = vand.u32 %v43, 4294901760
  %569 = vmatpush.msra.mxu0 %v568
  %v570 = vand.u32 %v447, 4294901760
  %v571 = vsub.f32 %v447, %v570
  %v572 = vand.u32 %v571, 4294901760
  %573 = vmatmul.f32.gmra.mxu0 %v572
  %v574 = vpop.f32.mrf.mxu0
  %v575 = vadd.f32 %v545, %v574
  %v576 = vand.u32 %v449, 4294901760
  %v577 = vsub.f32 %v449, %v576
  %v578 = vand.u32 %v577, 4294901760
  %579 = vmatmul.f32.gmra.mxu0 %v578
  %v580 = vpop.f32.mrf.mxu0
  %v581 = vadd.f32 %v550, %v580
  %582 = vdwg.mxu0
  %583 = vmatpush.msra.mxu0 0.0
  %584 = vmatpush.msra.mxu0 0.0
  %585 = vmatpush.msra.mxu0 0.0
  %586 = vmatpush.msra.mxu0 0.0
  %587 = vmatpush.msra.mxu0 0.0
  %588 = vmatpush.msra.mxu0 0.0
  %589 = vmatpush.msra.mxu0 0.0
  %590 = vmatpush.msra.mxu0 0.0
  %591 = vmatpush.msra.mxu0 0.0
  %592 = vmatpush.msra.mxu0 0.0
  %593 = vmatpush.msra.mxu0 0.0
  %594 = vmatpush.msra.mxu0 0.0
  %595 = vmatpush.msra.mxu0 0.0
  %596 = vmatpush.msra.mxu0 0.0
  %v597 = vand.u32 %v44, 4294901760
  %v598 = vsub.f32 %v44, %v597
  %v599 = vand.u32 %v598, 4294901760
  %600 = vmatpush.msra.mxu0 %v599
  %v601 = vand.u32 %v43, 4294901760
  %v602 = vsub.f32 %v43, %v601
  %v603 = vand.u32 %v602, 4294901760
  %604 = vmatpush.msra.mxu0 %v603
  %v605 = vand.u32 %v447, 4294901760
  %606 = vmatmul.f32.gmra.mxu0 %v605
  %v607 = vpop.f32.mrf.mxu0
  %v608 = vadd.f32 %v575, %v607
  %v609 = vand.u32 %v449, 4294901760
  %610 = vmatmul.f32.gmra.mxu0 %v609
  %v611 = vpop.f32.mrf.mxu0
  %v612 = vadd.f32 %v581, %v611
  %613 = vdwg.mxu0
  %614 = vmatpush.msra.mxu0 0.0
  %615 = vmatpush.msra.mxu0 0.0
  %616 = vmatpush.msra.mxu0 0.0
  %617 = vmatpush.msra.mxu0 0.0
  %618 = vmatpush.msra.mxu0 0.0
  %619 = vmatpush.msra.mxu0 0.0
  %620 = vmatpush.msra.mxu0 0.0
  %621 = vmatpush.msra.mxu0 0.0
  %622 = vmatpush.msra.mxu0 0.0
  %623 = vmatpush.msra.mxu0 0.0
  %624 = vmatpush.msra.mxu0 0.0
  %625 = vmatpush.msra.mxu0 0.0
  %626 = vmatpush.msra.mxu0 0.0
  %627 = vmatpush.msra.mxu0 0.0
  %v628 = vand.u32 %v44, 4294901760
  %629 = vmatpush.msra.mxu0 %v628
  %v630 = vand.u32 %v43, 4294901760
  %631 = vmatpush.msra.mxu0 %v630
  %v632 = vand.u32 %v447, 4294901760
  %633 = vmatmul.f32.gmra.mxu0 %v632
  %v634 = vpop.f32.mrf.mxu0
  %v635 = vadd.f32 %v608, %v634
  %v636 = vand.u32 %v449, 4294901760
  %637 = vmatmul.f32.gmra.mxu0 %v636
  %v638 = vpop.f32.mrf.mxu0
  %v639 = vadd.f32 %v612, %v638
  %640 = vdwg.mxu0
  %v641 = vsel %vm52, %v244, 0
  %643 = vmatpush.msra.mxu0 0.0
  %644 = vmatpush.msra.mxu0 0.0
  %645 = vmatpush.msra.mxu0 0.0
  %646 = vmatpush.msra.mxu0 0.0
  %647 = vmatpush.msra.mxu0 0.0
  %648 = vmatpush.msra.mxu0 0.0
  %649 = vmatpush.msra.mxu0 0.0
  %650 = vmatpush.msra.mxu0 0.0
  %651 = vmatpush.msra.mxu0 0.0
  %652 = vmatpush.msra.mxu0 0.0
  %653 = vmatpush.msra.mxu0 0.0
  %654 = vmatpush.msra.mxu0 0.0
  %655 = vmatpush.msra.mxu0 0.0
  %656 = vmatpush.msra.mxu0 0.0
  %v657 = vand.u32 %v641, 4294901760
  %658 = vmatpush.msra.mxu0 %v657
  %v659 = vand.u32 %v240, 4294901760
  %660 = vmatpush.msra.mxu0 %v659
  %v661 = vand.u32 %v47, 4294901760
  %v662 = vsub.f32 %v47, %v661
  %v663 = vand.u32 %v662, 4294901760
  %v664 = vsub.f32 %v662, %v663
  %v665 = vand.u32 %v664, 4294901760
  %666 = vmatmul.f32.gmra.mxu0 %v665
  %v667 = vpop.f32.mrf.mxu0
  %v668 = vadd.f32 0.0, %v667
  %v669 = vand.u32 %v50, 4294901760
  %v670 = vsub.f32 %v50, %v669
  %v671 = vand.u32 %v670, 4294901760
  %v672 = vsub.f32 %v670, %v671
  %v673 = vand.u32 %v672, 4294901760
  %674 = vmatmul.f32.gmra.mxu0 %v673
  %v675 = vpop.f32.mrf.mxu0
  %v676 = vadd.f32 0.0, %v675
  %677 = vdwg.mxu0
  %678 = vmatpush.msra.mxu0 0.0
  %679 = vmatpush.msra.mxu0 0.0
  %680 = vmatpush.msra.mxu0 0.0
  %681 = vmatpush.msra.mxu0 0.0
  %682 = vmatpush.msra.mxu0 0.0
  %683 = vmatpush.msra.mxu0 0.0
  %684 = vmatpush.msra.mxu0 0.0
  %685 = vmatpush.msra.mxu0 0.0
  %686 = vmatpush.msra.mxu0 0.0
  %687 = vmatpush.msra.mxu0 0.0
  %688 = vmatpush.msra.mxu0 0.0
  %689 = vmatpush.msra.mxu0 0.0
  %690 = vmatpush.msra.mxu0 0.0
  %691 = vmatpush.msra.mxu0 0.0
  %v692 = vand.u32 %v641, 4294901760
  %v693 = vsub.f32 %v641, %v692
  %v694 = vand.u32 %v693, 4294901760
  %v695 = vsub.f32 %v693, %v694
  %v696 = vand.u32 %v695, 4294901760
  %697 = vmatpush.msra.mxu0 %v696
  %v698 = vand.u32 %v240, 4294901760
  %v699 = vsub.f32 %v240, %v698
  %v700 = vand.u32 %v699, 4294901760
  %v701 = vsub.f32 %v699, %v700
  %v702 = vand.u32 %v701, 4294901760
  %703 = vmatpush.msra.mxu0 %v702
  %v704 = vand.u32 %v47, 4294901760
  %705 = vmatmul.f32.gmra.mxu0 %v704
  %v706 = vpop.f32.mrf.mxu0
  %v707 = vadd.f32 %v668, %v706
  %v708 = vand.u32 %v50, 4294901760
  %709 = vmatmul.f32.gmra.mxu0 %v708
  %v710 = vpop.f32.mrf.mxu0
  %v711 = vadd.f32 %v676, %v710
  %712 = vdwg.mxu0
  %713 = vmatpush.msra.mxu0 0.0
  %714 = vmatpush.msra.mxu0 0.0
  %715 = vmatpush.msra.mxu0 0.0
  %716 = vmatpush.msra.mxu0 0.0
  %717 = vmatpush.msra.mxu0 0.0
  %718 = vmatpush.msra.mxu0 0.0
  %719 = vmatpush.msra.mxu0 0.0
  %720 = vmatpush.msra.mxu0 0.0
  %721 = vmatpush.msra.mxu0 0.0
  %722 = vmatpush.msra.mxu0 0.0
  %723 = vmatpush.msra.mxu0 0.0
  %724 = vmatpush.msra.mxu0 0.0
  %725 = vmatpush.msra.mxu0 0.0
  %726 = vmatpush.msra.mxu0 0.0
  %v727 = vand.u32 %v641, 4294901760
  %v728 = vsub.f32 %v641, %v727
  %729 = vmatpush.msra.mxu0 %v728
  %v730 = vand.u32 %v240, 4294901760
  %v731 = vsub.f32 %v240, %v730
  %732 = vmatpush.msra.mxu0 %v731
  %v733 = vand.u32 %v47, 4294901760
  %v734 = vsub.f32 %v47, %v733
  %735 = vmatmul.f32.gmra.mxu0 %v734
  %v736 = vpop.f32.mrf.mxu0
  %v737 = vadd.f32 %v707, %v736
  %v738 = vand.u32 %v50, 4294901760
  %v739 = vsub.f32 %v50, %v738
  %740 = vmatmul.f32.gmra.mxu0 %v739
  %v741 = vpop.f32.mrf.mxu0
  %v742 = vadd.f32 %v711, %v741
  %743 = vdwg.mxu0
  %744 = vmatpush.msra.mxu0 0.0
  %745 = vmatpush.msra.mxu0 0.0
  %746 = vmatpush.msra.mxu0 0.0
  %747 = vmatpush.msra.mxu0 0.0
  %748 = vmatpush.msra.mxu0 0.0
  %749 = vmatpush.msra.mxu0 0.0
  %750 = vmatpush.msra.mxu0 0.0
  %751 = vmatpush.msra.mxu0 0.0
  %752 = vmatpush.msra.mxu0 0.0
  %753 = vmatpush.msra.mxu0 0.0
  %754 = vmatpush.msra.mxu0 0.0
  %755 = vmatpush.msra.mxu0 0.0
  %756 = vmatpush.msra.mxu0 0.0
  %757 = vmatpush.msra.mxu0 0.0
  %v758 = vand.u32 %v641, 4294901760
  %759 = vmatpush.msra.mxu0 %v758
  %v760 = vand.u32 %v240, 4294901760
  %761 = vmatpush.msra.mxu0 %v760
  %v762 = vand.u32 %v47, 4294901760
  %v763 = vsub.f32 %v47, %v762
  %v764 = vand.u32 %v763, 4294901760
  %765 = vmatmul.f32.gmra.mxu0 %v764
  %v766 = vpop.f32.mrf.mxu0
  %v767 = vadd.f32 %v737, %v766
  %v768 = vand.u32 %v50, 4294901760
  %v769 = vsub.f32 %v50, %v768
  %v770 = vand.u32 %v769, 4294901760
  %771 = vmatmul.f32.gmra.mxu0 %v770
  %v772 = vpop.f32.mrf.mxu0
  %v773 = vadd.f32 %v742, %v772
  %774 = vdwg.mxu0
  %775 = vmatpush.msra.mxu0 0.0
  %776 = vmatpush.msra.mxu0 0.0
  %777 = vmatpush.msra.mxu0 0.0
  %778 = vmatpush.msra.mxu0 0.0
  %779 = vmatpush.msra.mxu0 0.0
  %780 = vmatpush.msra.mxu0 0.0
  %781 = vmatpush.msra.mxu0 0.0
  %782 = vmatpush.msra.mxu0 0.0
  %783 = vmatpush.msra.mxu0 0.0
  %784 = vmatpush.msra.mxu0 0.0
  %785 = vmatpush.msra.mxu0 0.0
  %786 = vmatpush.msra.mxu0 0.0
  %787 = vmatpush.msra.mxu0 0.0
  %788 = vmatpush.msra.mxu0 0.0
  %v789 = vand.u32 %v641, 4294901760
  %v790 = vsub.f32 %v641, %v789
  %v791 = vand.u32 %v790, 4294901760
  %792 = vmatpush.msra.mxu0 %v791
  %v793 = vand.u32 %v240, 4294901760
  %v794 = vsub.f32 %v240, %v793
  %v795 = vand.u32 %v794, 4294901760
  %796 = vmatpush.msra.mxu0 %v795
  %v797 = vand.u32 %v47, 4294901760
  %798 = vmatmul.f32.gmra.mxu0 %v797
  %v799 = vpop.f32.mrf.mxu0
  %v800 = vadd.f32 %v767, %v799
  %v801 = vand.u32 %v50, 4294901760
  %802 = vmatmul.f32.gmra.mxu0 %v801
  %v803 = vpop.f32.mrf.mxu0
  %v804 = vadd.f32 %v773, %v803
  %805 = vdwg.mxu0
  %806 = vmatpush.msra.mxu0 0.0
  %807 = vmatpush.msra.mxu0 0.0
  %808 = vmatpush.msra.mxu0 0.0
  %809 = vmatpush.msra.mxu0 0.0
  %810 = vmatpush.msra.mxu0 0.0
  %811 = vmatpush.msra.mxu0 0.0
  %812 = vmatpush.msra.mxu0 0.0
  %813 = vmatpush.msra.mxu0 0.0
  %814 = vmatpush.msra.mxu0 0.0
  %815 = vmatpush.msra.mxu0 0.0
  %816 = vmatpush.msra.mxu0 0.0
  %817 = vmatpush.msra.mxu0 0.0
  %818 = vmatpush.msra.mxu0 0.0
  %819 = vmatpush.msra.mxu0 0.0
  %v820 = vand.u32 %v641, 4294901760
  %821 = vmatpush.msra.mxu0 %v820
  %v822 = vand.u32 %v240, 4294901760
  %823 = vmatpush.msra.mxu0 %v822
  %v824 = vand.u32 %v47, 4294901760
  %825 = vmatmul.f32.gmra.mxu0 %v824
  %v826 = vpop.f32.mrf.mxu0
  %v827 = vadd.f32 %v800, %v826
  %v828 = vand.u32 %v50, 4294901760
  %829 = vmatmul.f32.gmra.mxu0 %v828
  %v830 = vpop.f32.mrf.mxu0
  %v831 = vadd.f32 %v804, %v830
  %832 = vdwg.mxu0
  %v833 = vmul.f32 %v827, 2.0
  %v834 = vmul.f32 %v831, 2.0
  %v835 = vsub.f32 %v833, %v41
  %v836 = vsub.f32 %v834, %v42
  %s837 = scalar_lea.vmem %s2, 32
  %v838 = vld [vmem:[%s837] sm:$0xff]
  %v839 = vld [vmem:[%s837 + $0x8] sm:$0xff]
  %v841 = vsel %vm249, %v835, 0
  %v844 = vsel %vm249, %v836, 0
  %846 = vmatpush.msra.mxu0 0.0
  %847 = vmatpush.msra.mxu0 0.0
  %848 = vmatpush.msra.mxu0 0.0
  %849 = vmatpush.msra.mxu0 0.0
  %850 = vmatpush.msra.mxu0 0.0
  %851 = vmatpush.msra.mxu0 0.0
  %852 = vmatpush.msra.mxu0 0.0
  %853 = vmatpush.msra.mxu0 0.0
  %854 = vmatpush.msra.mxu0 0.0
  %855 = vmatpush.msra.mxu0 0.0
  %856 = vmatpush.msra.mxu0 0.0
  %857 = vmatpush.msra.mxu0 0.0
  %858 = vmatpush.msra.mxu0 0.0
  %859 = vmatpush.msra.mxu0 0.0
  %v860 = vand.u32 %v839, 4294901760
  %861 = vmatpush.msra.mxu0 %v860
  %v862 = vand.u32 %v838, 4294901760
  %863 = vmatpush.msra.mxu0 %v862
  %v864 = vand.u32 %v841, 4294901760
  %v865 = vsub.f32 %v841, %v864
  %v866 = vand.u32 %v865, 4294901760
  %v867 = vsub.f32 %v865, %v866
  %v868 = vand.u32 %v867, 4294901760
  %869 = vmatmul.f32.gmra.mxu0 %v868
  %v870 = vpop.f32.mrf.mxu0
  %v871 = vadd.f32 0.0, %v870
  %v872 = vand.u32 %v844, 4294901760
  %v873 = vsub.f32 %v844, %v872
  %v874 = vand.u32 %v873, 4294901760
  %v875 = vsub.f32 %v873, %v874
  %v876 = vand.u32 %v875, 4294901760
  %877 = vmatmul.f32.gmra.mxu0 %v876
  %v878 = vpop.f32.mrf.mxu0
  %v879 = vadd.f32 0.0, %v878
  %880 = vdwg.mxu0
  %881 = vmatpush.msra.mxu0 0.0
  %882 = vmatpush.msra.mxu0 0.0
  %883 = vmatpush.msra.mxu0 0.0
  %884 = vmatpush.msra.mxu0 0.0
  %885 = vmatpush.msra.mxu0 0.0
  %886 = vmatpush.msra.mxu0 0.0
  %887 = vmatpush.msra.mxu0 0.0
  %888 = vmatpush.msra.mxu0 0.0
  %889 = vmatpush.msra.mxu0 0.0
  %890 = vmatpush.msra.mxu0 0.0
  %891 = vmatpush.msra.mxu0 0.0
  %892 = vmatpush.msra.mxu0 0.0
  %893 = vmatpush.msra.mxu0 0.0
  %894 = vmatpush.msra.mxu0 0.0
  %v895 = vand.u32 %v839, 4294901760
  %v896 = vsub.f32 %v839, %v895
  %v897 = vand.u32 %v896, 4294901760
  %v898 = vsub.f32 %v896, %v897
  %v899 = vand.u32 %v898, 4294901760
  %900 = vmatpush.msra.mxu0 %v899
  %v901 = vand.u32 %v838, 4294901760
  %v902 = vsub.f32 %v838, %v901
  %v903 = vand.u32 %v902, 4294901760
  %v904 = vsub.f32 %v902, %v903
  %v905 = vand.u32 %v904, 4294901760
  %906 = vmatpush.msra.mxu0 %v905
  %v907 = vand.u32 %v841, 4294901760
  %908 = vmatmul.f32.gmra.mxu0 %v907
  %v909 = vpop.f32.mrf.mxu0
  %v910 = vadd.f32 %v871, %v909
  %v911 = vand.u32 %v844, 4294901760
  %912 = vmatmul.f32.gmra.mxu0 %v911
  %v913 = vpop.f32.mrf.mxu0
  %v914 = vadd.f32 %v879, %v913
  %915 = vdwg.mxu0
  %916 = vmatpush.msra.mxu0 0.0
  %917 = vmatpush.msra.mxu0 0.0
  %918 = vmatpush.msra.mxu0 0.0
  %919 = vmatpush.msra.mxu0 0.0
  %920 = vmatpush.msra.mxu0 0.0
  %921 = vmatpush.msra.mxu0 0.0
  %922 = vmatpush.msra.mxu0 0.0
  %923 = vmatpush.msra.mxu0 0.0
  %924 = vmatpush.msra.mxu0 0.0
  %925 = vmatpush.msra.mxu0 0.0
  %926 = vmatpush.msra.mxu0 0.0
  %927 = vmatpush.msra.mxu0 0.0
  %928 = vmatpush.msra.mxu0 0.0
  %929 = vmatpush.msra.mxu0 0.0
  %v930 = vand.u32 %v839, 4294901760
  %v931 = vsub.f32 %v839, %v930
  %932 = vmatpush.msra.mxu0 %v931
  %v933 = vand.u32 %v838, 4294901760
  %v934 = vsub.f32 %v838, %v933
  %935 = vmatpush.msra.mxu0 %v934
  %v936 = vand.u32 %v841, 4294901760
  %v937 = vsub.f32 %v841, %v936
  %938 = vmatmul.f32.gmra.mxu0 %v937
  %v939 = vpop.f32.mrf.mxu0
  %v940 = vadd.f32 %v910, %v939
  %v941 = vand.u32 %v844, 4294901760
  %v942 = vsub.f32 %v844, %v941
  %943 = vmatmul.f32.gmra.mxu0 %v942
  %v944 = vpop.f32.mrf.mxu0
  %v945 = vadd.f32 %v914, %v944
  %946 = vdwg.mxu0
  %947 = vmatpush.msra.mxu0 0.0
  %948 = vmatpush.msra.mxu0 0.0
  %949 = vmatpush.msra.mxu0 0.0
  %950 = vmatpush.msra.mxu0 0.0
  %951 = vmatpush.msra.mxu0 0.0
  %952 = vmatpush.msra.mxu0 0.0
  %953 = vmatpush.msra.mxu0 0.0
  %954 = vmatpush.msra.mxu0 0.0
  %955 = vmatpush.msra.mxu0 0.0
  %956 = vmatpush.msra.mxu0 0.0
  %957 = vmatpush.msra.mxu0 0.0
  %958 = vmatpush.msra.mxu0 0.0
  %959 = vmatpush.msra.mxu0 0.0
  %960 = vmatpush.msra.mxu0 0.0
  %v961 = vand.u32 %v839, 4294901760
  %962 = vmatpush.msra.mxu0 %v961
  %v963 = vand.u32 %v838, 4294901760
  %964 = vmatpush.msra.mxu0 %v963
  %v965 = vand.u32 %v841, 4294901760
  %v966 = vsub.f32 %v841, %v965
  %v967 = vand.u32 %v966, 4294901760
  %968 = vmatmul.f32.gmra.mxu0 %v967
  %v969 = vpop.f32.mrf.mxu0
  %v970 = vadd.f32 %v940, %v969
  %v971 = vand.u32 %v844, 4294901760
  %v972 = vsub.f32 %v844, %v971
  %v973 = vand.u32 %v972, 4294901760
  %974 = vmatmul.f32.gmra.mxu0 %v973
  %v975 = vpop.f32.mrf.mxu0
  %v976 = vadd.f32 %v945, %v975
  %977 = vdwg.mxu0
  %978 = vmatpush.msra.mxu0 0.0
  %979 = vmatpush.msra.mxu0 0.0
  %980 = vmatpush.msra.mxu0 0.0
  %981 = vmatpush.msra.mxu0 0.0
  %982 = vmatpush.msra.mxu0 0.0
  %983 = vmatpush.msra.mxu0 0.0
  %984 = vmatpush.msra.mxu0 0.0
  %985 = vmatpush.msra.mxu0 0.0
  %986 = vmatpush.msra.mxu0 0.0
  %987 = vmatpush.msra.mxu0 0.0
  %988 = vmatpush.msra.mxu0 0.0
  %989 = vmatpush.msra.mxu0 0.0
  %990 = vmatpush.msra.mxu0 0.0
  %991 = vmatpush.msra.mxu0 0.0
  %v992 = vand.u32 %v839, 4294901760
  %v993 = vsub.f32 %v839, %v992
  %v994 = vand.u32 %v993, 4294901760
  %995 = vmatpush.msra.mxu0 %v994
  %v996 = vand.u32 %v838, 4294901760
  %v997 = vsub.f32 %v838, %v996
  %v998 = vand.u32 %v997, 4294901760
  %999 = vmatpush.msra.mxu0 %v998
  %v1000 = vand.u32 %v841, 4294901760
  %1001 = vmatmul.f32.gmra.mxu0 %v1000
  %v1002 = vpop.f32.mrf.mxu0
  %v1003 = vadd.f32 %v970, %v1002
  %v1004 = vand.u32 %v844, 4294901760
  %1005 = vmatmul.f32.gmra.mxu0 %v1004
  %v1006 = vpop.f32.mrf.mxu0
  %v1007 = vadd.f32 %v976, %v1006
  %1008 = vdwg.mxu0
  %1009 = vmatpush.msra.mxu0 0.0
  %1010 = vmatpush.msra.mxu0 0.0
  %1011 = vmatpush.msra.mxu0 0.0
  %1012 = vmatpush.msra.mxu0 0.0
  %1013 = vmatpush.msra.mxu0 0.0
  %1014 = vmatpush.msra.mxu0 0.0
  %1015 = vmatpush.msra.mxu0 0.0
  %1016 = vmatpush.msra.mxu0 0.0
  %1017 = vmatpush.msra.mxu0 0.0
  %1018 = vmatpush.msra.mxu0 0.0
  %1019 = vmatpush.msra.mxu0 0.0
  %1020 = vmatpush.msra.mxu0 0.0
  %1021 = vmatpush.msra.mxu0 0.0
  %1022 = vmatpush.msra.mxu0 0.0
  %v1023 = vand.u32 %v839, 4294901760
  %1024 = vmatpush.msra.mxu0 %v1023
  %v1025 = vand.u32 %v838, 4294901760
  %1026 = vmatpush.msra.mxu0 %v1025
  %v1027 = vand.u32 %v841, 4294901760
  %1028 = vmatmul.f32.gmra.mxu0 %v1027
  %v1029 = vpop.f32.mrf.mxu0
  %v1030 = vadd.f32 %v1003, %v1029
  %v1031 = vand.u32 %v844, 4294901760
  %1032 = vmatmul.f32.gmra.mxu0 %v1031
  %v1033 = vpop.f32.mrf.mxu0
  %v1034 = vadd.f32 %v1007, %v1033
  %1035 = vdwg.mxu0
  %v1036 = vadd.f32 %v635, %v1030
  %v1037 = vadd.f32 %v639, %v1034
  %v1038 = vperm.slane %v37, 0
  %v1039 = vadd.f32 %v1036, %v1038
  %v1040 = vadd.f32 %v1037, %v1038
  %v1041 = vadd.f32 %v1039, %v41
  %v1042 = vadd.f32 %v1040, %v42
  %v1043 = vperm.slane %v37, 1
  %v1044 = vmul.f32 %v1041, %v1043
  %v1045 = vmul.f32 %v1042, %v1043
  %v1046 = vperm.slane %v37, 2
  %v1047 = vadd.f32 %v1044, %v1046
  %v1048 = vadd.f32 %v1045, %v1046
  %s1049 = scalar_lea.vmem %s2, 48
  %v1050 = vld [vmem:[%s1049] sm:$0xff]
  %v1051 = vld [vmem:[%s1049 + $0x8] sm:$0xff]
  %v1052 = vperm.slane %v37, 3
  %1053 = vmatpush.msra.mxu0 0.0
  %1054 = vmatpush.msra.mxu0 0.0
  %1055 = vmatpush.msra.mxu0 0.0
  %1056 = vmatpush.msra.mxu0 0.0
  %1057 = vmatpush.msra.mxu0 0.0
  %1058 = vmatpush.msra.mxu0 0.0
  %1059 = vmatpush.msra.mxu0 0.0
  %1060 = vmatpush.msra.mxu0 0.0
  %1061 = vmatpush.msra.mxu0 0.0
  %1062 = vmatpush.msra.mxu0 0.0
  %1063 = vmatpush.msra.mxu0 0.0
  %1064 = vmatpush.msra.mxu0 0.0
  %1065 = vmatpush.msra.mxu0 0.0
  %1066 = vmatpush.msra.mxu0 0.0
  %v1067 = vand.u32 %v1051, 4294901760
  %1068 = vmatpush.msra.mxu0 %v1067
  %v1069 = vand.u32 %v1050, 4294901760
  %1070 = vmatpush.msra.mxu0 %v1069
  %v1071 = vand.u32 %v447, 4294901760
  %v1072 = vsub.f32 %v447, %v1071
  %v1073 = vand.u32 %v1072, 4294901760
  %v1074 = vsub.f32 %v1072, %v1073
  %v1075 = vand.u32 %v1074, 4294901760
  %1076 = vmatmul.f32.gmra.mxu0 %v1075
  %v1077 = vpop.f32.mrf.mxu0
  %v1078 = vadd.f32 %v1052, %v1077
  %v1079 = vand.u32 %v449, 4294901760
  %v1080 = vsub.f32 %v449, %v1079
  %v1081 = vand.u32 %v1080, 4294901760
  %v1082 = vsub.f32 %v1080, %v1081
  %v1083 = vand.u32 %v1082, 4294901760
  %1084 = vmatmul.f32.gmra.mxu0 %v1083
  %v1085 = vpop.f32.mrf.mxu0
  %v1086 = vadd.f32 %v1052, %v1085
  %1087 = vdwg.mxu0
  %1088 = vmatpush.msra.mxu0 0.0
  %1089 = vmatpush.msra.mxu0 0.0
  %1090 = vmatpush.msra.mxu0 0.0
  %1091 = vmatpush.msra.mxu0 0.0
  %1092 = vmatpush.msra.mxu0 0.0
  %1093 = vmatpush.msra.mxu0 0.0
  %1094 = vmatpush.msra.mxu0 0.0
  %1095 = vmatpush.msra.mxu0 0.0
  %1096 = vmatpush.msra.mxu0 0.0
  %1097 = vmatpush.msra.mxu0 0.0
  %1098 = vmatpush.msra.mxu0 0.0
  %1099 = vmatpush.msra.mxu0 0.0
  %1100 = vmatpush.msra.mxu0 0.0
  %1101 = vmatpush.msra.mxu0 0.0
  %v1102 = vand.u32 %v1051, 4294901760
  %v1103 = vsub.f32 %v1051, %v1102
  %v1104 = vand.u32 %v1103, 4294901760
  %v1105 = vsub.f32 %v1103, %v1104
  %v1106 = vand.u32 %v1105, 4294901760
  %1107 = vmatpush.msra.mxu0 %v1106
  %v1108 = vand.u32 %v1050, 4294901760
  %v1109 = vsub.f32 %v1050, %v1108
  %v1110 = vand.u32 %v1109, 4294901760
  %v1111 = vsub.f32 %v1109, %v1110
  %v1112 = vand.u32 %v1111, 4294901760
  %1113 = vmatpush.msra.mxu0 %v1112
  %v1114 = vand.u32 %v447, 4294901760
  %1115 = vmatmul.f32.gmra.mxu0 %v1114
  %v1116 = vpop.f32.mrf.mxu0
  %v1117 = vadd.f32 %v1078, %v1116
  %v1118 = vand.u32 %v449, 4294901760
  %1119 = vmatmul.f32.gmra.mxu0 %v1118
  %v1120 = vpop.f32.mrf.mxu0
  %v1121 = vadd.f32 %v1086, %v1120
  %1122 = vdwg.mxu0
  %1123 = vmatpush.msra.mxu0 0.0
  %1124 = vmatpush.msra.mxu0 0.0
  %1125 = vmatpush.msra.mxu0 0.0
  %1126 = vmatpush.msra.mxu0 0.0
  %1127 = vmatpush.msra.mxu0 0.0
  %1128 = vmatpush.msra.mxu0 0.0
  %1129 = vmatpush.msra.mxu0 0.0
  %1130 = vmatpush.msra.mxu0 0.0
  %1131 = vmatpush.msra.mxu0 0.0
  %1132 = vmatpush.msra.mxu0 0.0
  %1133 = vmatpush.msra.mxu0 0.0
  %1134 = vmatpush.msra.mxu0 0.0
  %1135 = vmatpush.msra.mxu0 0.0
  %1136 = vmatpush.msra.mxu0 0.0
  %v1137 = vand.u32 %v1051, 4294901760
  %v1138 = vsub.f32 %v1051, %v1137
  %1139 = vmatpush.msra.mxu0 %v1138
  %v1140 = vand.u32 %v1050, 4294901760
  %v1141 = vsub.f32 %v1050, %v1140
  %1142 = vmatpush.msra.mxu0 %v1141
  %v1143 = vand.u32 %v447, 4294901760
  %v1144 = vsub.f32 %v447, %v1143
  %1145 = vmatmul.f32.gmra.mxu0 %v1144
  %v1146 = vpop.f32.mrf.mxu0
  %v1147 = vadd.f32 %v1117, %v1146
  %v1148 = vand.u32 %v449, 4294901760
  %v1149 = vsub.f32 %v449, %v1148
  %1150 = vmatmul.f32.gmra.mxu0 %v1149
  %v1151 = vpop.f32.mrf.mxu0
  %v1152 = vadd.f32 %v1121, %v1151
  %1153 = vdwg.mxu0
  %1154 = vmatpush.msra.mxu0 0.0
  %1155 = vmatpush.msra.mxu0 0.0
  %1156 = vmatpush.msra.mxu0 0.0
  %1157 = vmatpush.msra.mxu0 0.0
  %1158 = vmatpush.msra.mxu0 0.0
  %1159 = vmatpush.msra.mxu0 0.0
  %1160 = vmatpush.msra.mxu0 0.0
  %1161 = vmatpush.msra.mxu0 0.0
  %1162 = vmatpush.msra.mxu0 0.0
  %1163 = vmatpush.msra.mxu0 0.0
  %1164 = vmatpush.msra.mxu0 0.0
  %1165 = vmatpush.msra.mxu0 0.0
  %1166 = vmatpush.msra.mxu0 0.0
  %1167 = vmatpush.msra.mxu0 0.0
  %v1168 = vand.u32 %v1051, 4294901760
  %1169 = vmatpush.msra.mxu0 %v1168
  %v1170 = vand.u32 %v1050, 4294901760
  %1171 = vmatpush.msra.mxu0 %v1170
  %v1172 = vand.u32 %v447, 4294901760
  %v1173 = vsub.f32 %v447, %v1172
  %v1174 = vand.u32 %v1173, 4294901760
  %1175 = vmatmul.f32.gmra.mxu0 %v1174
  %v1176 = vpop.f32.mrf.mxu0
  %v1177 = vadd.f32 %v1147, %v1176
  %v1178 = vand.u32 %v449, 4294901760
  %v1179 = vsub.f32 %v449, %v1178
  %v1180 = vand.u32 %v1179, 4294901760
  %1181 = vmatmul.f32.gmra.mxu0 %v1180
  %v1182 = vpop.f32.mrf.mxu0
  %v1183 = vadd.f32 %v1152, %v1182
  %1184 = vdwg.mxu0
  %1185 = vmatpush.msra.mxu0 0.0
  %1186 = vmatpush.msra.mxu0 0.0
  %1187 = vmatpush.msra.mxu0 0.0
  %1188 = vmatpush.msra.mxu0 0.0
  %1189 = vmatpush.msra.mxu0 0.0
  %1190 = vmatpush.msra.mxu0 0.0
  %1191 = vmatpush.msra.mxu0 0.0
  %1192 = vmatpush.msra.mxu0 0.0
  %1193 = vmatpush.msra.mxu0 0.0
  %1194 = vmatpush.msra.mxu0 0.0
  %1195 = vmatpush.msra.mxu0 0.0
  %1196 = vmatpush.msra.mxu0 0.0
  %1197 = vmatpush.msra.mxu0 0.0
  %1198 = vmatpush.msra.mxu0 0.0
  %v1199 = vand.u32 %v1051, 4294901760
  %v1200 = vsub.f32 %v1051, %v1199
  %v1201 = vand.u32 %v1200, 4294901760
  %1202 = vmatpush.msra.mxu0 %v1201
  %v1203 = vand.u32 %v1050, 4294901760
  %v1204 = vsub.f32 %v1050, %v1203
  %v1205 = vand.u32 %v1204, 4294901760
  %1206 = vmatpush.msra.mxu0 %v1205
  %v1207 = vand.u32 %v447, 4294901760
  %1208 = vmatmul.f32.gmra.mxu0 %v1207
  %v1209 = vpop.f32.mrf.mxu0
  %v1210 = vadd.f32 %v1177, %v1209
  %v1211 = vand.u32 %v449, 4294901760
  %1212 = vmatmul.f32.gmra.mxu0 %v1211
  %v1213 = vpop.f32.mrf.mxu0
  %v1214 = vadd.f32 %v1183, %v1213
  %1215 = vdwg.mxu0
  %1216 = vmatpush.msra.mxu0 0.0
  %1217 = vmatpush.msra.mxu0 0.0
  %1218 = vmatpush.msra.mxu0 0.0
  %1219 = vmatpush.msra.mxu0 0.0
  %1220 = vmatpush.msra.mxu0 0.0
  %1221 = vmatpush.msra.mxu0 0.0
  %1222 = vmatpush.msra.mxu0 0.0
  %1223 = vmatpush.msra.mxu0 0.0
  %1224 = vmatpush.msra.mxu0 0.0
  %1225 = vmatpush.msra.mxu0 0.0
  %1226 = vmatpush.msra.mxu0 0.0
  %1227 = vmatpush.msra.mxu0 0.0
  %1228 = vmatpush.msra.mxu0 0.0
  %1229 = vmatpush.msra.mxu0 0.0
  %v1230 = vand.u32 %v1051, 4294901760
  %1231 = vmatpush.msra.mxu0 %v1230
  %v1232 = vand.u32 %v1050, 4294901760
  %1233 = vmatpush.msra.mxu0 %v1232
  %v1234 = vand.u32 %v447, 4294901760
  %1235 = vmatmul.f32.gmra.mxu0 %v1234
  %v1236 = vpop.f32.mrf.mxu0
  %v1237 = vadd.f32 %v1210, %v1236
  %v1238 = vand.u32 %v449, 4294901760
  %1239 = vmatmul.f32.gmra.mxu0 %v1238
  %v1240 = vpop.f32.mrf.mxu0
  %v1241 = vadd.f32 %v1214, %v1240
  %1242 = vdwg.mxu0
  %s1243 = scalar_lea.vmem %s2, 64
  %v1244 = vld [vmem:[%s1243] sm:$0xff]
  %v1245 = vld [vmem:[%s1243 + $0x8] sm:$0xff]
  %v1246 = vperm.slane %v37, 4
  %1247 = vmatpush.msra.mxu0 0.0
  %1248 = vmatpush.msra.mxu0 0.0
  %1249 = vmatpush.msra.mxu0 0.0
  %1250 = vmatpush.msra.mxu0 0.0
  %1251 = vmatpush.msra.mxu0 0.0
  %1252 = vmatpush.msra.mxu0 0.0
  %1253 = vmatpush.msra.mxu0 0.0
  %1254 = vmatpush.msra.mxu0 0.0
  %1255 = vmatpush.msra.mxu0 0.0
  %1256 = vmatpush.msra.mxu0 0.0
  %1257 = vmatpush.msra.mxu0 0.0
  %1258 = vmatpush.msra.mxu0 0.0
  %1259 = vmatpush.msra.mxu0 0.0
  %1260 = vmatpush.msra.mxu0 0.0
  %v1261 = vand.u32 %v1245, 4294901760
  %1262 = vmatpush.msra.mxu0 %v1261
  %v1263 = vand.u32 %v1244, 4294901760
  %1264 = vmatpush.msra.mxu0 %v1263
  %v1265 = vand.u32 %v447, 4294901760
  %v1266 = vsub.f32 %v447, %v1265
  %v1267 = vand.u32 %v1266, 4294901760
  %v1268 = vsub.f32 %v1266, %v1267
  %v1269 = vand.u32 %v1268, 4294901760
  %1270 = vmatmul.f32.gmra.mxu0 %v1269
  %v1271 = vpop.f32.mrf.mxu0
  %v1272 = vadd.f32 %v1246, %v1271
  %v1273 = vand.u32 %v449, 4294901760
  %v1274 = vsub.f32 %v449, %v1273
  %v1275 = vand.u32 %v1274, 4294901760
  %v1276 = vsub.f32 %v1274, %v1275
  %v1277 = vand.u32 %v1276, 4294901760
  %1278 = vmatmul.f32.gmra.mxu0 %v1277
  %v1279 = vpop.f32.mrf.mxu0
  %v1280 = vadd.f32 %v1246, %v1279
  %1281 = vdwg.mxu0
  %1282 = vmatpush.msra.mxu0 0.0
  %1283 = vmatpush.msra.mxu0 0.0
  %1284 = vmatpush.msra.mxu0 0.0
  %1285 = vmatpush.msra.mxu0 0.0
  %1286 = vmatpush.msra.mxu0 0.0
  %1287 = vmatpush.msra.mxu0 0.0
  %1288 = vmatpush.msra.mxu0 0.0
  %1289 = vmatpush.msra.mxu0 0.0
  %1290 = vmatpush.msra.mxu0 0.0
  %1291 = vmatpush.msra.mxu0 0.0
  %1292 = vmatpush.msra.mxu0 0.0
  %1293 = vmatpush.msra.mxu0 0.0
  %1294 = vmatpush.msra.mxu0 0.0
  %1295 = vmatpush.msra.mxu0 0.0
  %v1296 = vand.u32 %v1245, 4294901760
  %v1297 = vsub.f32 %v1245, %v1296
  %v1298 = vand.u32 %v1297, 4294901760
  %v1299 = vsub.f32 %v1297, %v1298
  %v1300 = vand.u32 %v1299, 4294901760
  %1301 = vmatpush.msra.mxu0 %v1300
  %v1302 = vand.u32 %v1244, 4294901760
  %v1303 = vsub.f32 %v1244, %v1302
  %v1304 = vand.u32 %v1303, 4294901760
  %v1305 = vsub.f32 %v1303, %v1304
  %v1306 = vand.u32 %v1305, 4294901760
  %1307 = vmatpush.msra.mxu0 %v1306
  %v1308 = vand.u32 %v447, 4294901760
  %1309 = vmatmul.f32.gmra.mxu0 %v1308
  %v1310 = vpop.f32.mrf.mxu0
  %v1311 = vadd.f32 %v1272, %v1310
  %v1312 = vand.u32 %v449, 4294901760
  %1313 = vmatmul.f32.gmra.mxu0 %v1312
  %v1314 = vpop.f32.mrf.mxu0
  %v1315 = vadd.f32 %v1280, %v1314
  %1316 = vdwg.mxu0
  %1317 = vmatpush.msra.mxu0 0.0
  %1318 = vmatpush.msra.mxu0 0.0
  %1319 = vmatpush.msra.mxu0 0.0
  %1320 = vmatpush.msra.mxu0 0.0
  %1321 = vmatpush.msra.mxu0 0.0
  %1322 = vmatpush.msra.mxu0 0.0
  %1323 = vmatpush.msra.mxu0 0.0
  %1324 = vmatpush.msra.mxu0 0.0
  %1325 = vmatpush.msra.mxu0 0.0
  %1326 = vmatpush.msra.mxu0 0.0
  %1327 = vmatpush.msra.mxu0 0.0
  %1328 = vmatpush.msra.mxu0 0.0
  %1329 = vmatpush.msra.mxu0 0.0
  %1330 = vmatpush.msra.mxu0 0.0
  %v1331 = vand.u32 %v1245, 4294901760
  %v1332 = vsub.f32 %v1245, %v1331
  %1333 = vmatpush.msra.mxu0 %v1332
  %v1334 = vand.u32 %v1244, 4294901760
  %v1335 = vsub.f32 %v1244, %v1334
  %1336 = vmatpush.msra.mxu0 %v1335
  %v1337 = vand.u32 %v447, 4294901760
  %v1338 = vsub.f32 %v447, %v1337
  %1339 = vmatmul.f32.gmra.mxu0 %v1338
  %v1340 = vpop.f32.mrf.mxu0
  %v1341 = vadd.f32 %v1311, %v1340
  %v1342 = vand.u32 %v449, 4294901760
  %v1343 = vsub.f32 %v449, %v1342
  %1344 = vmatmul.f32.gmra.mxu0 %v1343
  %v1345 = vpop.f32.mrf.mxu0
  %v1346 = vadd.f32 %v1315, %v1345
  %1347 = vdwg.mxu0
  %1348 = vmatpush.msra.mxu0 0.0
  %1349 = vmatpush.msra.mxu0 0.0
  %1350 = vmatpush.msra.mxu0 0.0
  %1351 = vmatpush.msra.mxu0 0.0
  %1352 = vmatpush.msra.mxu0 0.0
  %1353 = vmatpush.msra.mxu0 0.0
  %1354 = vmatpush.msra.mxu0 0.0
  %1355 = vmatpush.msra.mxu0 0.0
  %1356 = vmatpush.msra.mxu0 0.0
  %1357 = vmatpush.msra.mxu0 0.0
  %1358 = vmatpush.msra.mxu0 0.0
  %1359 = vmatpush.msra.mxu0 0.0
  %1360 = vmatpush.msra.mxu0 0.0
  %1361 = vmatpush.msra.mxu0 0.0
  %v1362 = vand.u32 %v1245, 4294901760
  %1363 = vmatpush.msra.mxu0 %v1362
  %v1364 = vand.u32 %v1244, 4294901760
  %1365 = vmatpush.msra.mxu0 %v1364
  %v1366 = vand.u32 %v447, 4294901760
  %v1367 = vsub.f32 %v447, %v1366
  %v1368 = vand.u32 %v1367, 4294901760
  %1369 = vmatmul.f32.gmra.mxu0 %v1368
  %v1370 = vpop.f32.mrf.mxu0
  %v1371 = vadd.f32 %v1341, %v1370
  %v1372 = vand.u32 %v449, 4294901760
  %v1373 = vsub.f32 %v449, %v1372
  %v1374 = vand.u32 %v1373, 4294901760
  %1375 = vmatmul.f32.gmra.mxu0 %v1374
  %v1376 = vpop.f32.mrf.mxu0
  %v1377 = vadd.f32 %v1346, %v1376
  %1378 = vdwg.mxu0
  %1379 = vmatpush.msra.mxu0 0.0
  %1380 = vmatpush.msra.mxu0 0.0
  %1381 = vmatpush.msra.mxu0 0.0
  %1382 = vmatpush.msra.mxu0 0.0
  %1383 = vmatpush.msra.mxu0 0.0
  %1384 = vmatpush.msra.mxu0 0.0
  %1385 = vmatpush.msra.mxu0 0.0
  %1386 = vmatpush.msra.mxu0 0.0
  %1387 = vmatpush.msra.mxu0 0.0
  %1388 = vmatpush.msra.mxu0 0.0
  %1389 = vmatpush.msra.mxu0 0.0
  %1390 = vmatpush.msra.mxu0 0.0
  %1391 = vmatpush.msra.mxu0 0.0
  %1392 = vmatpush.msra.mxu0 0.0
  %v1393 = vand.u32 %v1245, 4294901760
  %v1394 = vsub.f32 %v1245, %v1393
  %v1395 = vand.u32 %v1394, 4294901760
  %1396 = vmatpush.msra.mxu0 %v1395
  %v1397 = vand.u32 %v1244, 4294901760
  %v1398 = vsub.f32 %v1244, %v1397
  %v1399 = vand.u32 %v1398, 4294901760
  %1400 = vmatpush.msra.mxu0 %v1399
  %v1401 = vand.u32 %v447, 4294901760
  %1402 = vmatmul.f32.gmra.mxu0 %v1401
  %v1403 = vpop.f32.mrf.mxu0
  %v1404 = vadd.f32 %v1371, %v1403
  %v1405 = vand.u32 %v449, 4294901760
  %1406 = vmatmul.f32.gmra.mxu0 %v1405
  %v1407 = vpop.f32.mrf.mxu0
  %v1408 = vadd.f32 %v1377, %v1407
  %1409 = vdwg.mxu0
  %1410 = vmatpush.msra.mxu0 0.0
  %1411 = vmatpush.msra.mxu0 0.0
  %1412 = vmatpush.msra.mxu0 0.0
  %1413 = vmatpush.msra.mxu0 0.0
  %1414 = vmatpush.msra.mxu0 0.0
  %1415 = vmatpush.msra.mxu0 0.0
  %1416 = vmatpush.msra.mxu0 0.0
  %1417 = vmatpush.msra.mxu0 0.0
  %1418 = vmatpush.msra.mxu0 0.0
  %1419 = vmatpush.msra.mxu0 0.0
  %1420 = vmatpush.msra.mxu0 0.0
  %1421 = vmatpush.msra.mxu0 0.0
  %1422 = vmatpush.msra.mxu0 0.0
  %1423 = vmatpush.msra.mxu0 0.0
  %v1424 = vand.u32 %v1245, 4294901760
  %1425 = vmatpush.msra.mxu0 %v1424
  %v1426 = vand.u32 %v1244, 4294901760
  %1427 = vmatpush.msra.mxu0 %v1426
  %v1428 = vand.u32 %v447, 4294901760
  %1429 = vmatmul.f32.gmra.mxu0 %v1428
  %v1430 = vpop.f32.mrf.mxu0
  %v1431 = vadd.f32 %v1404, %v1430
  %v1432 = vand.u32 %v449, 4294901760
  %1433 = vmatmul.f32.gmra.mxu0 %v1432
  %v1434 = vpop.f32.mrf.mxu0
  %v1435 = vadd.f32 %v1408, %v1434
  %1436 = vdwg.mxu0
  %s1437 = scalar_lea.vmem %s2, 80
  %v1438 = vld [vmem:[%s1437] sm:$0xff]
  %v1439 = vld [vmem:[%s1437 + $0x8] sm:$0xff]
  %v1440 = vperm.slane %v37, 5
  %1441 = vmatpush.msra.mxu0 0.0
  %1442 = vmatpush.msra.mxu0 0.0
  %1443 = vmatpush.msra.mxu0 0.0
  %1444 = vmatpush.msra.mxu0 0.0
  %1445 = vmatpush.msra.mxu0 0.0
  %1446 = vmatpush.msra.mxu0 0.0
  %1447 = vmatpush.msra.mxu0 0.0
  %1448 = vmatpush.msra.mxu0 0.0
  %1449 = vmatpush.msra.mxu0 0.0
  %1450 = vmatpush.msra.mxu0 0.0
  %1451 = vmatpush.msra.mxu0 0.0
  %1452 = vmatpush.msra.mxu0 0.0
  %1453 = vmatpush.msra.mxu0 0.0
  %1454 = vmatpush.msra.mxu0 0.0
  %v1455 = vand.u32 %v1439, 4294901760
  %1456 = vmatpush.msra.mxu0 %v1455
  %v1457 = vand.u32 %v1438, 4294901760
  %1458 = vmatpush.msra.mxu0 %v1457
  %v1459 = vand.u32 %v447, 4294901760
  %v1460 = vsub.f32 %v447, %v1459
  %v1461 = vand.u32 %v1460, 4294901760
  %v1462 = vsub.f32 %v1460, %v1461
  %v1463 = vand.u32 %v1462, 4294901760
  %1464 = vmatmul.f32.gmra.mxu0 %v1463
  %v1465 = vpop.f32.mrf.mxu0
  %v1466 = vadd.f32 %v1440, %v1465
  %v1467 = vand.u32 %v449, 4294901760
  %v1468 = vsub.f32 %v449, %v1467
  %v1469 = vand.u32 %v1468, 4294901760
  %v1470 = vsub.f32 %v1468, %v1469
  %v1471 = vand.u32 %v1470, 4294901760
  %1472 = vmatmul.f32.gmra.mxu0 %v1471
  %v1473 = vpop.f32.mrf.mxu0
  %v1474 = vadd.f32 %v1440, %v1473
  %1475 = vdwg.mxu0
  %1476 = vmatpush.msra.mxu0 0.0
  %1477 = vmatpush.msra.mxu0 0.0
  %1478 = vmatpush.msra.mxu0 0.0
  %1479 = vmatpush.msra.mxu0 0.0
  %1480 = vmatpush.msra.mxu0 0.0
  %1481 = vmatpush.msra.mxu0 0.0
  %1482 = vmatpush.msra.mxu0 0.0
  %1483 = vmatpush.msra.mxu0 0.0
  %1484 = vmatpush.msra.mxu0 0.0
  %1485 = vmatpush.msra.mxu0 0.0
  %1486 = vmatpush.msra.mxu0 0.0
  %1487 = vmatpush.msra.mxu0 0.0
  %1488 = vmatpush.msra.mxu0 0.0
  %1489 = vmatpush.msra.mxu0 0.0
  %v1490 = vand.u32 %v1439, 4294901760
  %v1491 = vsub.f32 %v1439, %v1490
  %v1492 = vand.u32 %v1491, 4294901760
  %v1493 = vsub.f32 %v1491, %v1492
  %v1494 = vand.u32 %v1493, 4294901760
  %1495 = vmatpush.msra.mxu0 %v1494
  %v1496 = vand.u32 %v1438, 4294901760
  %v1497 = vsub.f32 %v1438, %v1496
  %v1498 = vand.u32 %v1497, 4294901760
  %v1499 = vsub.f32 %v1497, %v1498
  %v1500 = vand.u32 %v1499, 4294901760
  %1501 = vmatpush.msra.mxu0 %v1500
  %v1502 = vand.u32 %v447, 4294901760
  %1503 = vmatmul.f32.gmra.mxu0 %v1502
  %v1504 = vpop.f32.mrf.mxu0
  %v1505 = vadd.f32 %v1466, %v1504
  %v1506 = vand.u32 %v449, 4294901760
  %1507 = vmatmul.f32.gmra.mxu0 %v1506
  %v1508 = vpop.f32.mrf.mxu0
  %v1509 = vadd.f32 %v1474, %v1508
  %1510 = vdwg.mxu0
  %1511 = vmatpush.msra.mxu0 0.0
  %1512 = vmatpush.msra.mxu0 0.0
  %1513 = vmatpush.msra.mxu0 0.0
  %1514 = vmatpush.msra.mxu0 0.0
  %1515 = vmatpush.msra.mxu0 0.0
  %1516 = vmatpush.msra.mxu0 0.0
  %1517 = vmatpush.msra.mxu0 0.0
  %1518 = vmatpush.msra.mxu0 0.0
  %1519 = vmatpush.msra.mxu0 0.0
  %1520 = vmatpush.msra.mxu0 0.0
  %1521 = vmatpush.msra.mxu0 0.0
  %1522 = vmatpush.msra.mxu0 0.0
  %1523 = vmatpush.msra.mxu0 0.0
  %1524 = vmatpush.msra.mxu0 0.0
  %v1525 = vand.u32 %v1439, 4294901760
  %v1526 = vsub.f32 %v1439, %v1525
  %1527 = vmatpush.msra.mxu0 %v1526
  %v1528 = vand.u32 %v1438, 4294901760
  %v1529 = vsub.f32 %v1438, %v1528
  %1530 = vmatpush.msra.mxu0 %v1529
  %v1531 = vand.u32 %v447, 4294901760
  %v1532 = vsub.f32 %v447, %v1531
  %1533 = vmatmul.f32.gmra.mxu0 %v1532
  %v1534 = vpop.f32.mrf.mxu0
  %v1535 = vadd.f32 %v1505, %v1534
  %v1536 = vand.u32 %v449, 4294901760
  %v1537 = vsub.f32 %v449, %v1536
  %1538 = vmatmul.f32.gmra.mxu0 %v1537
  %v1539 = vpop.f32.mrf.mxu0
  %v1540 = vadd.f32 %v1509, %v1539
  %1541 = vdwg.mxu0
  %1542 = vmatpush.msra.mxu0 0.0
  %1543 = vmatpush.msra.mxu0 0.0
  %1544 = vmatpush.msra.mxu0 0.0
  %1545 = vmatpush.msra.mxu0 0.0
  %1546 = vmatpush.msra.mxu0 0.0
  %1547 = vmatpush.msra.mxu0 0.0
  %1548 = vmatpush.msra.mxu0 0.0
  %1549 = vmatpush.msra.mxu0 0.0
  %1550 = vmatpush.msra.mxu0 0.0
  %1551 = vmatpush.msra.mxu0 0.0
  %1552 = vmatpush.msra.mxu0 0.0
  %1553 = vmatpush.msra.mxu0 0.0
  %1554 = vmatpush.msra.mxu0 0.0
  %1555 = vmatpush.msra.mxu0 0.0
  %v1556 = vand.u32 %v1439, 4294901760
  %1557 = vmatpush.msra.mxu0 %v1556
  %v1558 = vand.u32 %v1438, 4294901760
  %1559 = vmatpush.msra.mxu0 %v1558
  %v1560 = vand.u32 %v447, 4294901760
  %v1561 = vsub.f32 %v447, %v1560
  %v1562 = vand.u32 %v1561, 4294901760
  %1563 = vmatmul.f32.gmra.mxu0 %v1562
  %v1564 = vpop.f32.mrf.mxu0
  %v1565 = vadd.f32 %v1535, %v1564
  %v1566 = vand.u32 %v449, 4294901760
  %v1567 = vsub.f32 %v449, %v1566
  %v1568 = vand.u32 %v1567, 4294901760
  %1569 = vmatmul.f32.gmra.mxu0 %v1568
  %v1570 = vpop.f32.mrf.mxu0
  %v1571 = vadd.f32 %v1540, %v1570
  %1572 = vdwg.mxu0
  %1573 = vmatpush.msra.mxu0 0.0
  %1574 = vmatpush.msra.mxu0 0.0
  %1575 = vmatpush.msra.mxu0 0.0
  %1576 = vmatpush.msra.mxu0 0.0
  %1577 = vmatpush.msra.mxu0 0.0
  %1578 = vmatpush.msra.mxu0 0.0
  %1579 = vmatpush.msra.mxu0 0.0
  %1580 = vmatpush.msra.mxu0 0.0
  %1581 = vmatpush.msra.mxu0 0.0
  %1582 = vmatpush.msra.mxu0 0.0
  %1583 = vmatpush.msra.mxu0 0.0
  %1584 = vmatpush.msra.mxu0 0.0
  %1585 = vmatpush.msra.mxu0 0.0
  %1586 = vmatpush.msra.mxu0 0.0
  %v1587 = vand.u32 %v1439, 4294901760
  %v1588 = vsub.f32 %v1439, %v1587
  %v1589 = vand.u32 %v1588, 4294901760
  %1590 = vmatpush.msra.mxu0 %v1589
  %v1591 = vand.u32 %v1438, 4294901760
  %v1592 = vsub.f32 %v1438, %v1591
  %v1593 = vand.u32 %v1592, 4294901760
  %1594 = vmatpush.msra.mxu0 %v1593
  %v1595 = vand.u32 %v447, 4294901760
  %1596 = vmatmul.f32.gmra.mxu0 %v1595
  %v1597 = vpop.f32.mrf.mxu0
  %v1598 = vadd.f32 %v1565, %v1597
  %v1599 = vand.u32 %v449, 4294901760
  %1600 = vmatmul.f32.gmra.mxu0 %v1599
  %v1601 = vpop.f32.mrf.mxu0
  %v1602 = vadd.f32 %v1571, %v1601
  %1603 = vdwg.mxu0
  %1604 = vmatpush.msra.mxu0 0.0
  %1605 = vmatpush.msra.mxu0 0.0
  %1606 = vmatpush.msra.mxu0 0.0
  %1607 = vmatpush.msra.mxu0 0.0
  %1608 = vmatpush.msra.mxu0 0.0
  %1609 = vmatpush.msra.mxu0 0.0
  %1610 = vmatpush.msra.mxu0 0.0
  %1611 = vmatpush.msra.mxu0 0.0
  %1612 = vmatpush.msra.mxu0 0.0
  %1613 = vmatpush.msra.mxu0 0.0
  %1614 = vmatpush.msra.mxu0 0.0
  %1615 = vmatpush.msra.mxu0 0.0
  %1616 = vmatpush.msra.mxu0 0.0
  %1617 = vmatpush.msra.mxu0 0.0
  %v1618 = vand.u32 %v1439, 4294901760
  %1619 = vmatpush.msra.mxu0 %v1618
  %v1620 = vand.u32 %v1438, 4294901760
  %1621 = vmatpush.msra.mxu0 %v1620
  %v1622 = vand.u32 %v447, 4294901760
  %1623 = vmatmul.f32.gmra.mxu0 %v1622
  %v1624 = vpop.f32.mrf.mxu0
  %v1625 = vadd.f32 %v1598, %v1624
  %v1626 = vand.u32 %v449, 4294901760
  %1627 = vmatmul.f32.gmra.mxu0 %v1626
  %v1628 = vpop.f32.mrf.mxu0
  %v1629 = vadd.f32 %v1602, %v1628
  %1630 = vdwg.mxu0
  %v1631 = vlaneseq
  %v1632 = vand.u32 %v1631, 127
  %vm1633 = vcmp.ge.s32.totalorder %v1632, 0
  %vm1634 = vcmp.lt.s32.totalorder %v1632, 4
  %vm1635 = vmand %vm1633, %vm1634
  %v1636 = vsel %vm1635, 1, 0
  %v1637 = vcvt.s32.f32 %v1636
  %v1638 = vmul.f32 %v1237, %v1637
  %v1639 = vmul.f32 %v1241, %v1637
  %v1641 = vsel %vm249, %v1638, 0
  %v1644 = vsel %vm249, %v1639, 0
  %v1647 = vsel %vm249, %v1431, 0
  %v1650 = vsel %vm249, %v1435, 0
  %1652 = vmatpush.xpose.msra.mxu0 0.0
  %1653 = vmatpush.xpose.msra.mxu0 0.0
  %1654 = vmatpush.xpose.msra.mxu0 0.0
  %1655 = vmatpush.xpose.msra.mxu0 0.0
  %1656 = vmatpush.xpose.msra.mxu0 0.0
  %1657 = vmatpush.xpose.msra.mxu0 0.0
  %1658 = vmatpush.xpose.msra.mxu0 0.0
  %1659 = vmatpush.xpose.msra.mxu0 0.0
  %1660 = vmatpush.xpose.msra.mxu0 0.0
  %1661 = vmatpush.xpose.msra.mxu0 0.0
  %1662 = vmatpush.xpose.msra.mxu0 0.0
  %1663 = vmatpush.xpose.msra.mxu0 0.0
  %1664 = vmatpush.xpose.msra.mxu0 0.0
  %1665 = vmatpush.xpose.msra.mxu0 0.0
  %v1666 = vand.u32 %v1650, 4294901760
  %1667 = vmatpush.xpose.msra.mxu0 %v1666
  %v1668 = vand.u32 %v1647, 4294901760
  %1669 = vmatpush.xpose.msra.mxu0 %v1668
  %v1670 = vand.u32 %v1641, 4294901760
  %v1671 = vsub.f32 %v1641, %v1670
  %v1672 = vand.u32 %v1671, 4294901760
  %v1673 = vsub.f32 %v1671, %v1672
  %v1674 = vand.u32 %v1673, 4294901760
  %1675 = vmatmul.f32.gmra.mxu0 %v1674
  %v1676 = vpop.f32.mrf.mxu0
  %v1677 = vadd.f32 0.0, %v1676
  %v1678 = vand.u32 %v1644, 4294901760
  %v1679 = vsub.f32 %v1644, %v1678
  %v1680 = vand.u32 %v1679, 4294901760
  %v1681 = vsub.f32 %v1679, %v1680
  %v1682 = vand.u32 %v1681, 4294901760
  %1683 = vmatmul.f32.gmra.mxu0 %v1682
  %v1684 = vpop.f32.mrf.mxu0
  %v1685 = vadd.f32 0.0, %v1684
  %1686 = vdwg.mxu0
  %1687 = vmatpush.xpose.msra.mxu0 0.0
  %1688 = vmatpush.xpose.msra.mxu0 0.0
  %1689 = vmatpush.xpose.msra.mxu0 0.0
  %1690 = vmatpush.xpose.msra.mxu0 0.0
  %1691 = vmatpush.xpose.msra.mxu0 0.0
  %1692 = vmatpush.xpose.msra.mxu0 0.0
  %1693 = vmatpush.xpose.msra.mxu0 0.0
  %1694 = vmatpush.xpose.msra.mxu0 0.0
  %1695 = vmatpush.xpose.msra.mxu0 0.0
  %1696 = vmatpush.xpose.msra.mxu0 0.0
  %1697 = vmatpush.xpose.msra.mxu0 0.0
  %1698 = vmatpush.xpose.msra.mxu0 0.0
  %1699 = vmatpush.xpose.msra.mxu0 0.0
  %1700 = vmatpush.xpose.msra.mxu0 0.0
  %v1701 = vand.u32 %v1650, 4294901760
  %v1702 = vsub.f32 %v1650, %v1701
  %v1703 = vand.u32 %v1702, 4294901760
  %v1704 = vsub.f32 %v1702, %v1703
  %v1705 = vand.u32 %v1704, 4294901760
  %1706 = vmatpush.xpose.msra.mxu0 %v1705
  %v1707 = vand.u32 %v1647, 4294901760
  %v1708 = vsub.f32 %v1647, %v1707
  %v1709 = vand.u32 %v1708, 4294901760
  %v1710 = vsub.f32 %v1708, %v1709
  %v1711 = vand.u32 %v1710, 4294901760
  %1712 = vmatpush.xpose.msra.mxu0 %v1711
  %v1713 = vand.u32 %v1641, 4294901760
  %1714 = vmatmul.f32.gmra.mxu0 %v1713
  %v1715 = vpop.f32.mrf.mxu0
  %v1716 = vadd.f32 %v1677, %v1715
  %v1717 = vand.u32 %v1644, 4294901760
  %1718 = vmatmul.f32.gmra.mxu0 %v1717
  %v1719 = vpop.f32.mrf.mxu0
  %v1720 = vadd.f32 %v1685, %v1719
  %1721 = vdwg.mxu0
  %1722 = vmatpush.xpose.msra.mxu0 0.0
  %1723 = vmatpush.xpose.msra.mxu0 0.0
  %1724 = vmatpush.xpose.msra.mxu0 0.0
  %1725 = vmatpush.xpose.msra.mxu0 0.0
  %1726 = vmatpush.xpose.msra.mxu0 0.0
  %1727 = vmatpush.xpose.msra.mxu0 0.0
  %1728 = vmatpush.xpose.msra.mxu0 0.0
  %1729 = vmatpush.xpose.msra.mxu0 0.0
  %1730 = vmatpush.xpose.msra.mxu0 0.0
  %1731 = vmatpush.xpose.msra.mxu0 0.0
  %1732 = vmatpush.xpose.msra.mxu0 0.0
  %1733 = vmatpush.xpose.msra.mxu0 0.0
  %1734 = vmatpush.xpose.msra.mxu0 0.0
  %1735 = vmatpush.xpose.msra.mxu0 0.0
  %v1736 = vand.u32 %v1650, 4294901760
  %v1737 = vsub.f32 %v1650, %v1736
  %1738 = vmatpush.xpose.msra.mxu0 %v1737
  %v1739 = vand.u32 %v1647, 4294901760
  %v1740 = vsub.f32 %v1647, %v1739
  %1741 = vmatpush.xpose.msra.mxu0 %v1740
  %v1742 = vand.u32 %v1641, 4294901760
  %v1743 = vsub.f32 %v1641, %v1742
  %1744 = vmatmul.f32.gmra.mxu0 %v1743
  %v1745 = vpop.f32.mrf.mxu0
  %v1746 = vadd.f32 %v1716, %v1745
  %v1747 = vand.u32 %v1644, 4294901760
  %v1748 = vsub.f32 %v1644, %v1747
  %1749 = vmatmul.f32.gmra.mxu0 %v1748
  %v1750 = vpop.f32.mrf.mxu0
  %v1751 = vadd.f32 %v1720, %v1750
  %1752 = vdwg.mxu0
  %1753 = vmatpush.xpose.msra.mxu0 0.0
  %1754 = vmatpush.xpose.msra.mxu0 0.0
  %1755 = vmatpush.xpose.msra.mxu0 0.0
  %1756 = vmatpush.xpose.msra.mxu0 0.0
  %1757 = vmatpush.xpose.msra.mxu0 0.0
  %1758 = vmatpush.xpose.msra.mxu0 0.0
  %1759 = vmatpush.xpose.msra.mxu0 0.0
  %1760 = vmatpush.xpose.msra.mxu0 0.0
  %1761 = vmatpush.xpose.msra.mxu0 0.0
  %1762 = vmatpush.xpose.msra.mxu0 0.0
  %1763 = vmatpush.xpose.msra.mxu0 0.0
  %1764 = vmatpush.xpose.msra.mxu0 0.0
  %1765 = vmatpush.xpose.msra.mxu0 0.0
  %1766 = vmatpush.xpose.msra.mxu0 0.0
  %v1767 = vand.u32 %v1650, 4294901760
  %1768 = vmatpush.xpose.msra.mxu0 %v1767
  %v1769 = vand.u32 %v1647, 4294901760
  %1770 = vmatpush.xpose.msra.mxu0 %v1769
  %v1771 = vand.u32 %v1641, 4294901760
  %v1772 = vsub.f32 %v1641, %v1771
  %v1773 = vand.u32 %v1772, 4294901760
  %1774 = vmatmul.f32.gmra.mxu0 %v1773
  %v1775 = vpop.f32.mrf.mxu0
  %v1776 = vadd.f32 %v1746, %v1775
  %v1777 = vand.u32 %v1644, 4294901760
  %v1778 = vsub.f32 %v1644, %v1777
  %v1779 = vand.u32 %v1778, 4294901760
  %1780 = vmatmul.f32.gmra.mxu0 %v1779
  %v1781 = vpop.f32.mrf.mxu0
  %v1782 = vadd.f32 %v1751, %v1781
  %1783 = vdwg.mxu0
  %1784 = vmatpush.xpose.msra.mxu0 0.0
  %1785 = vmatpush.xpose.msra.mxu0 0.0
  %1786 = vmatpush.xpose.msra.mxu0 0.0
  %1787 = vmatpush.xpose.msra.mxu0 0.0
  %1788 = vmatpush.xpose.msra.mxu0 0.0
  %1789 = vmatpush.xpose.msra.mxu0 0.0
  %1790 = vmatpush.xpose.msra.mxu0 0.0
  %1791 = vmatpush.xpose.msra.mxu0 0.0
  %1792 = vmatpush.xpose.msra.mxu0 0.0
  %1793 = vmatpush.xpose.msra.mxu0 0.0
  %1794 = vmatpush.xpose.msra.mxu0 0.0
  %1795 = vmatpush.xpose.msra.mxu0 0.0
  %1796 = vmatpush.xpose.msra.mxu0 0.0
  %1797 = vmatpush.xpose.msra.mxu0 0.0
  %v1798 = vand.u32 %v1650, 4294901760
  %v1799 = vsub.f32 %v1650, %v1798
  %v1800 = vand.u32 %v1799, 4294901760
  %1801 = vmatpush.xpose.msra.mxu0 %v1800
  %v1802 = vand.u32 %v1647, 4294901760
  %v1803 = vsub.f32 %v1647, %v1802
  %v1804 = vand.u32 %v1803, 4294901760
  %1805 = vmatpush.xpose.msra.mxu0 %v1804
  %v1806 = vand.u32 %v1641, 4294901760
  %1807 = vmatmul.f32.gmra.mxu0 %v1806
  %v1808 = vpop.f32.mrf.mxu0
  %v1809 = vadd.f32 %v1776, %v1808
  %v1810 = vand.u32 %v1644, 4294901760
  %1811 = vmatmul.f32.gmra.mxu0 %v1810
  %v1812 = vpop.f32.mrf.mxu0
  %v1813 = vadd.f32 %v1782, %v1812
  %1814 = vdwg.mxu0
  %1815 = vmatpush.xpose.msra.mxu0 0.0
  %1816 = vmatpush.xpose.msra.mxu0 0.0
  %1817 = vmatpush.xpose.msra.mxu0 0.0
  %1818 = vmatpush.xpose.msra.mxu0 0.0
  %1819 = vmatpush.xpose.msra.mxu0 0.0
  %1820 = vmatpush.xpose.msra.mxu0 0.0
  %1821 = vmatpush.xpose.msra.mxu0 0.0
  %1822 = vmatpush.xpose.msra.mxu0 0.0
  %1823 = vmatpush.xpose.msra.mxu0 0.0
  %1824 = vmatpush.xpose.msra.mxu0 0.0
  %1825 = vmatpush.xpose.msra.mxu0 0.0
  %1826 = vmatpush.xpose.msra.mxu0 0.0
  %1827 = vmatpush.xpose.msra.mxu0 0.0
  %1828 = vmatpush.xpose.msra.mxu0 0.0
  %v1829 = vand.u32 %v1650, 4294901760
  %1830 = vmatpush.xpose.msra.mxu0 %v1829
  %v1831 = vand.u32 %v1647, 4294901760
  %1832 = vmatpush.xpose.msra.mxu0 %v1831
  %v1833 = vand.u32 %v1641, 4294901760
  %1834 = vmatmul.f32.gmra.mxu0 %v1833
  %v1835 = vpop.f32.mrf.mxu0
  %v1836 = vadd.f32 %v1809, %v1835
  %v1837 = vand.u32 %v1644, 4294901760
  %1838 = vmatmul.f32.gmra.mxu0 %v1837
  %v1839 = vpop.f32.mrf.mxu0
  %v1840 = vadd.f32 %v1813, %v1839
  %1841 = vdwg.mxu0
  %v1842 = vmul.f32 %v1836, 0.5
  %v1843 = vmul.f32 %v1840, 0.5
  %v1844 = vsel %vm45, %v1842, -inf
  %1845 = vmax.xlane.f32.xlu0 %v1844
  %v1846 = vpop.xlane.xlu0 %1845
  %vm1847 = vcmask 93184
  %v1848 = vsel %vm1847, %v1843, -inf
  %1849 = vmax.xlane.f32.xlu0 %v1848
  %v1850 = vpop.xlane.xlu0 %1849
  %v1851 = vsub.f32 %v1842, %v1846
  %v1852 = vsub.f32 %v1843, %v1850
  %v1853 = vmul.f32 %v1851, 1.442695
  %v1854 = vpow.pop %v1853
  %v1855 = vmul.f32 %v1852, 1.442695
  %v1856 = vpow.pop %v1855
  %v1857 = vsel %vm45, %v1854, 0.0
  %1858 = vadd.xlane.f32.xlu0 %v1857
  %v1859 = vpop.xlane.xlu0 %1858
  %v1860 = vsel %vm1847, %v1856, 0.0
  %1861 = vadd.xlane.f32.xlu0 %v1860
  %v1862 = vpop.xlane.xlu0 %1861
  %v1863 = vrcp.pop %v1859
  %v1864 = vmul.f32 %v1859, %v1863
  %v1865 = vsub.f32 1.0, %v1864
  %v1866 = vmul.f32 %v1863, %v1865
  %v1867 = vadd.f32 %v1863, %v1866
  %vm1868 = vweird.f32 %v1859
  %vm1869 = vweird.f32 %v1863
  %vm1870 = vmor %vm1868, %vm1869
  %v1871 = vsel %vm1870, %v1863, %v1867
  %v1872 = vand.u32 2147483647, %v1859
  %vm1873 = vcmp.eq.f32.partialorder %v1872, 8.507059e+37
  %v1874 = vand.u32 %v1859, 2147483648
  %v1875 = vor.u32 1.1754944e-38, %v1874
  %v1876 = vsel %vm1873, %v1875, %v1871
  %v1877 = vmul.f32 %v1854, %v1876
  %v1878 = vrcp.pop %v1862
  %v1879 = vmul.f32 %v1862, %v1878
  %v1880 = vsub.f32 1.0, %v1879
  %v1881 = vmul.f32 %v1878, %v1880
  %v1882 = vadd.f32 %v1878, %v1881
  %vm1883 = vweird.f32 %v1862
  %vm1884 = vweird.f32 %v1878
  %vm1885 = vmor %vm1883, %vm1884
  %v1886 = vsel %vm1885, %v1878, %v1882
  %v1887 = vand.u32 2147483647, %v1862
  %vm1888 = vcmp.eq.f32.partialorder %v1887, 8.507059e+37
  %v1889 = vand.u32 %v1862, 2147483648
  %v1890 = vor.u32 1.1754944e-38, %v1889
  %v1891 = vsel %vm1888, %v1890, %v1886
  %v1892 = vmul.f32 %v1856, %v1891
  %v1893 = vmul.f32 %v1625, %v1637
  %v1894 = vmul.f32 %v1629, %v1637
  %vm1895 = vcmp.ge.s32.totalorder %v1632, 4
  %vm1896 = vcmp.lt.s32.totalorder %v1632, 8
  %vm1897 = vmand %vm1895, %vm1896
  %v1898 = vsel %vm1897, 1, 0
  %v1899 = vcvt.s32.f32 %v1898
  %v1900 = vmul.f32 %v1237, %v1899
  %v1901 = vmul.f32 %v1241, %v1899
  %v1903 = vsel %vm249, %v1900, 0
  %v1906 = vsel %vm249, %v1901, 0
  %1908 = vmatpush.xpose.msra.mxu0 0.0
  %1909 = vmatpush.xpose.msra.mxu0 0.0
  %1910 = vmatpush.xpose.msra.mxu0 0.0
  %1911 = vmatpush.xpose.msra.mxu0 0.0
  %1912 = vmatpush.xpose.msra.mxu0 0.0
  %1913 = vmatpush.xpose.msra.mxu0 0.0
  %1914 = vmatpush.xpose.msra.mxu0 0.0
  %1915 = vmatpush.xpose.msra.mxu0 0.0
  %1916 = vmatpush.xpose.msra.mxu0 0.0
  %1917 = vmatpush.xpose.msra.mxu0 0.0
  %1918 = vmatpush.xpose.msra.mxu0 0.0
  %1919 = vmatpush.xpose.msra.mxu0 0.0
  %1920 = vmatpush.xpose.msra.mxu0 0.0
  %1921 = vmatpush.xpose.msra.mxu0 0.0
  %v1922 = vand.u32 %v1650, 4294901760
  %1923 = vmatpush.xpose.msra.mxu0 %v1922
  %v1924 = vand.u32 %v1647, 4294901760
  %1925 = vmatpush.xpose.msra.mxu0 %v1924
  %v1926 = vand.u32 %v1903, 4294901760
  %v1927 = vsub.f32 %v1903, %v1926
  %v1928 = vand.u32 %v1927, 4294901760
  %v1929 = vsub.f32 %v1927, %v1928
  %v1930 = vand.u32 %v1929, 4294901760
  %1931 = vmatmul.f32.gmra.mxu0 %v1930
  %v1932 = vpop.f32.mrf.mxu0
  %v1933 = vadd.f32 0.0, %v1932
  %v1934 = vand.u32 %v1906, 4294901760
  %v1935 = vsub.f32 %v1906, %v1934
  %v1936 = vand.u32 %v1935, 4294901760
  %v1937 = vsub.f32 %v1935, %v1936
  %v1938 = vand.u32 %v1937, 4294901760
  %1939 = vmatmul.f32.gmra.mxu0 %v1938
  %v1940 = vpop.f32.mrf.mxu0
  %v1941 = vadd.f32 0.0, %v1940
  %1942 = vdwg.mxu0
  %1943 = vmatpush.xpose.msra.mxu0 0.0
  %1944 = vmatpush.xpose.msra.mxu0 0.0
  %1945 = vmatpush.xpose.msra.mxu0 0.0
  %1946 = vmatpush.xpose.msra.mxu0 0.0
  %1947 = vmatpush.xpose.msra.mxu0 0.0
  %1948 = vmatpush.xpose.msra.mxu0 0.0
  %1949 = vmatpush.xpose.msra.mxu0 0.0
  %1950 = vmatpush.xpose.msra.mxu0 0.0
  %1951 = vmatpush.xpose.msra.mxu0 0.0
  %1952 = vmatpush.xpose.msra.mxu0 0.0
  %1953 = vmatpush.xpose.msra.mxu0 0.0
  %1954 = vmatpush.xpose.msra.mxu0 0.0
  %1955 = vmatpush.xpose.msra.mxu0 0.0
  %1956 = vmatpush.xpose.msra.mxu0 0.0
  %v1957 = vand.u32 %v1650, 4294901760
  %v1958 = vsub.f32 %v1650, %v1957
  %v1959 = vand.u32 %v1958, 4294901760
  %v1960 = vsub.f32 %v1958, %v1959
  %v1961 = vand.u32 %v1960, 4294901760
  %1962 = vmatpush.xpose.msra.mxu0 %v1961
  %v1963 = vand.u32 %v1647, 4294901760
  %v1964 = vsub.f32 %v1647, %v1963
  %v1965 = vand.u32 %v1964, 4294901760
  %v1966 = vsub.f32 %v1964, %v1965
  %v1967 = vand.u32 %v1966, 4294901760
  %1968 = vmatpush.xpose.msra.mxu0 %v1967
  %v1969 = vand.u32 %v1903, 4294901760
  %1970 = vmatmul.f32.gmra.mxu0 %v1969
  %v1971 = vpop.f32.mrf.mxu0
  %v1972 = vadd.f32 %v1933, %v1971
  %v1973 = vand.u32 %v1906, 4294901760
  %1974 = vmatmul.f32.gmra.mxu0 %v1973
  %v1975 = vpop.f32.mrf.mxu0
  %v1976 = vadd.f32 %v1941, %v1975
  %1977 = vdwg.mxu0
  %1978 = vmatpush.xpose.msra.mxu0 0.0
  %1979 = vmatpush.xpose.msra.mxu0 0.0
  %1980 = vmatpush.xpose.msra.mxu0 0.0
  %1981 = vmatpush.xpose.msra.mxu0 0.0
  %1982 = vmatpush.xpose.msra.mxu0 0.0
  %1983 = vmatpush.xpose.msra.mxu0 0.0
  %1984 = vmatpush.xpose.msra.mxu0 0.0
  %1985 = vmatpush.xpose.msra.mxu0 0.0
  %1986 = vmatpush.xpose.msra.mxu0 0.0
  %1987 = vmatpush.xpose.msra.mxu0 0.0
  %1988 = vmatpush.xpose.msra.mxu0 0.0
  %1989 = vmatpush.xpose.msra.mxu0 0.0
  %1990 = vmatpush.xpose.msra.mxu0 0.0
  %1991 = vmatpush.xpose.msra.mxu0 0.0
  %v1992 = vand.u32 %v1650, 4294901760
  %v1993 = vsub.f32 %v1650, %v1992
  %1994 = vmatpush.xpose.msra.mxu0 %v1993
  %v1995 = vand.u32 %v1647, 4294901760
  %v1996 = vsub.f32 %v1647, %v1995
  %1997 = vmatpush.xpose.msra.mxu0 %v1996
  %v1998 = vand.u32 %v1903, 4294901760
  %v1999 = vsub.f32 %v1903, %v1998
  %2000 = vmatmul.f32.gmra.mxu0 %v1999
  %v2001 = vpop.f32.mrf.mxu0
  %v2002 = vadd.f32 %v1972, %v2001
  %v2003 = vand.u32 %v1906, 4294901760
  %v2004 = vsub.f32 %v1906, %v2003
  %2005 = vmatmul.f32.gmra.mxu0 %v2004
  %v2006 = vpop.f32.mrf.mxu0
  %v2007 = vadd.f32 %v1976, %v2006
  %2008 = vdwg.mxu0
  %2009 = vmatpush.xpose.msra.mxu0 0.0
  %2010 = vmatpush.xpose.msra.mxu0 0.0
  %2011 = vmatpush.xpose.msra.mxu0 0.0
  %2012 = vmatpush.xpose.msra.mxu0 0.0
  %2013 = vmatpush.xpose.msra.mxu0 0.0
  %2014 = vmatpush.xpose.msra.mxu0 0.0
  %2015 = vmatpush.xpose.msra.mxu0 0.0
  %2016 = vmatpush.xpose.msra.mxu0 0.0
  %2017 = vmatpush.xpose.msra.mxu0 0.0
  %2018 = vmatpush.xpose.msra.mxu0 0.0
  %2019 = vmatpush.xpose.msra.mxu0 0.0
  %2020 = vmatpush.xpose.msra.mxu0 0.0
  %2021 = vmatpush.xpose.msra.mxu0 0.0
  %2022 = vmatpush.xpose.msra.mxu0 0.0
  %v2023 = vand.u32 %v1650, 4294901760
  %2024 = vmatpush.xpose.msra.mxu0 %v2023
  %v2025 = vand.u32 %v1647, 4294901760
  %2026 = vmatpush.xpose.msra.mxu0 %v2025
  %v2027 = vand.u32 %v1903, 4294901760
  %v2028 = vsub.f32 %v1903, %v2027
  %v2029 = vand.u32 %v2028, 4294901760
  %2030 = vmatmul.f32.gmra.mxu0 %v2029
  %v2031 = vpop.f32.mrf.mxu0
  %v2032 = vadd.f32 %v2002, %v2031
  %v2033 = vand.u32 %v1906, 4294901760
  %v2034 = vsub.f32 %v1906, %v2033
  %v2035 = vand.u32 %v2034, 4294901760
  %2036 = vmatmul.f32.gmra.mxu0 %v2035
  %v2037 = vpop.f32.mrf.mxu0
  %v2038 = vadd.f32 %v2007, %v2037
  %2039 = vdwg.mxu0
  %2040 = vmatpush.xpose.msra.mxu0 0.0
  %2041 = vmatpush.xpose.msra.mxu0 0.0
  %2042 = vmatpush.xpose.msra.mxu0 0.0
  %2043 = vmatpush.xpose.msra.mxu0 0.0
  %2044 = vmatpush.xpose.msra.mxu0 0.0
  %2045 = vmatpush.xpose.msra.mxu0 0.0
  %2046 = vmatpush.xpose.msra.mxu0 0.0
  %2047 = vmatpush.xpose.msra.mxu0 0.0
  %2048 = vmatpush.xpose.msra.mxu0 0.0
  %2049 = vmatpush.xpose.msra.mxu0 0.0
  %2050 = vmatpush.xpose.msra.mxu0 0.0
  %2051 = vmatpush.xpose.msra.mxu0 0.0
  %2052 = vmatpush.xpose.msra.mxu0 0.0
  %2053 = vmatpush.xpose.msra.mxu0 0.0
  %v2054 = vand.u32 %v1650, 4294901760
  %v2055 = vsub.f32 %v1650, %v2054
  %v2056 = vand.u32 %v2055, 4294901760
  %2057 = vmatpush.xpose.msra.mxu0 %v2056
  %v2058 = vand.u32 %v1647, 4294901760
  %v2059 = vsub.f32 %v1647, %v2058
  %v2060 = vand.u32 %v2059, 4294901760
  %2061 = vmatpush.xpose.msra.mxu0 %v2060
  %v2062 = vand.u32 %v1903, 4294901760
  %2063 = vmatmul.f32.gmra.mxu0 %v2062
  %v2064 = vpop.f32.mrf.mxu0
  %v2065 = vadd.f32 %v2032, %v2064
  %v2066 = vand.u32 %v1906, 4294901760
  %2067 = vmatmul.f32.gmra.mxu0 %v2066
  %v2068 = vpop.f32.mrf.mxu0
  %v2069 = vadd.f32 %v2038, %v2068
  %2070 = vdwg.mxu0
  %2071 = vmatpush.xpose.msra.mxu0 0.0
  %2072 = vmatpush.xpose.msra.mxu0 0.0
  %2073 = vmatpush.xpose.msra.mxu0 0.0
  %2074 = vmatpush.xpose.msra.mxu0 0.0
  %2075 = vmatpush.xpose.msra.mxu0 0.0
  %2076 = vmatpush.xpose.msra.mxu0 0.0
  %2077 = vmatpush.xpose.msra.mxu0 0.0
  %2078 = vmatpush.xpose.msra.mxu0 0.0
  %2079 = vmatpush.xpose.msra.mxu0 0.0
  %2080 = vmatpush.xpose.msra.mxu0 0.0
  %2081 = vmatpush.xpose.msra.mxu0 0.0
  %2082 = vmatpush.xpose.msra.mxu0 0.0
  %2083 = vmatpush.xpose.msra.mxu0 0.0
  %2084 = vmatpush.xpose.msra.mxu0 0.0
  %v2085 = vand.u32 %v1650, 4294901760
  %2086 = vmatpush.xpose.msra.mxu0 %v2085
  %v2087 = vand.u32 %v1647, 4294901760
  %2088 = vmatpush.xpose.msra.mxu0 %v2087
  %v2089 = vand.u32 %v1903, 4294901760
  %2090 = vmatmul.f32.gmra.mxu0 %v2089
  %v2091 = vpop.f32.mrf.mxu0
  %v2092 = vadd.f32 %v2065, %v2091
  %v2093 = vand.u32 %v1906, 4294901760
  %2094 = vmatmul.f32.gmra.mxu0 %v2093
  %v2095 = vpop.f32.mrf.mxu0
  %v2096 = vadd.f32 %v2069, %v2095
  %2097 = vdwg.mxu0
  %v2098 = vmul.f32 %v2092, 0.5
  %v2099 = vmul.f32 %v2096, 0.5
  %v2100 = vsel %vm45, %v2098, -inf
  %2101 = vmax.xlane.f32.xlu0 %v2100
  %v2102 = vpop.xlane.xlu0 %2101
  %v2103 = vsel %vm1847, %v2099, -inf
  %2104 = vmax.xlane.f32.xlu0 %v2103
  %v2105 = vpop.xlane.xlu0 %2104
  %v2106 = vsub.f32 %v2098, %v2102
  %v2107 = vsub.f32 %v2099, %v2105
  %v2108 = vmul.f32 %v2106, 1.442695
  %v2109 = vpow.pop %v2108
  %v2110 = vmul.f32 %v2107, 1.442695
  %v2111 = vpow.pop %v2110
  %v2112 = vsel %vm45, %v2109, 0.0
  %2113 = vadd.xlane.f32.xlu0 %v2112
  %v2114 = vpop.xlane.xlu0 %2113
  %v2115 = vsel %vm1847, %v2111, 0.0
  %2116 = vadd.xlane.f32.xlu0 %v2115
  %v2117 = vpop.xlane.xlu0 %2116
  %v2118 = vrcp.pop %v2114
  %v2119 = vmul.f32 %v2114, %v2118
  %v2120 = vsub.f32 1.0, %v2119
  %v2121 = vmul.f32 %v2118, %v2120
  %v2122 = vadd.f32 %v2118, %v2121
  %vm2123 = vweird.f32 %v2114
  %vm2124 = vweird.f32 %v2118
  %vm2125 = vmor %vm2123, %vm2124
  %v2126 = vsel %vm2125, %v2118, %v2122
  %v2127 = vand.u32 2147483647, %v2114
  %vm2128 = vcmp.eq.f32.partialorder %v2127, 8.507059e+37
  %v2129 = vand.u32 %v2114, 2147483648
  %v2130 = vor.u32 1.1754944e-38, %v2129
  %v2131 = vsel %vm2128, %v2130, %v2126
  %v2132 = vmul.f32 %v2109, %v2131
  %v2133 = vrcp.pop %v2117
  %v2134 = vmul.f32 %v2117, %v2133
  %v2135 = vsub.f32 1.0, %v2134
  %v2136 = vmul.f32 %v2133, %v2135
  %v2137 = vadd.f32 %v2133, %v2136
  %vm2138 = vweird.f32 %v2117
  %vm2139 = vweird.f32 %v2133
  %vm2140 = vmor %vm2138, %vm2139
  %v2141 = vsel %vm2140, %v2133, %v2137
  %v2142 = vand.u32 2147483647, %v2117
  %vm2143 = vcmp.eq.f32.partialorder %v2142, 8.507059e+37
  %v2144 = vand.u32 %v2117, 2147483648
  %v2145 = vor.u32 1.1754944e-38, %v2144
  %v2146 = vsel %vm2143, %v2145, %v2141
  %v2147 = vmul.f32 %v2111, %v2146
  %v2148 = vmul.f32 %v1625, %v1899
  %v2149 = vmul.f32 %v1629, %v1899
  %v2151 = vsel %vm45, %v2132, 0
  %v2154 = vsel %vm45, %v2147, 0
  %v2157 = vsel %vm52, %v2149, 0
  %2159 = vmatpush.msra.mxu0 0.0
  %2160 = vmatpush.msra.mxu0 0.0
  %2161 = vmatpush.msra.mxu0 0.0
  %2162 = vmatpush.msra.mxu0 0.0
  %2163 = vmatpush.msra.mxu0 0.0
  %2164 = vmatpush.msra.mxu0 0.0
  %2165 = vmatpush.msra.mxu0 0.0
  %2166 = vmatpush.msra.mxu0 0.0
  %2167 = vmatpush.msra.mxu0 0.0
  %2168 = vmatpush.msra.mxu0 0.0
  %2169 = vmatpush.msra.mxu0 0.0
  %2170 = vmatpush.msra.mxu0 0.0
  %2171 = vmatpush.msra.mxu0 0.0
  %2172 = vmatpush.msra.mxu0 0.0
  %v2173 = vand.u32 %v2157, 4294901760
  %2174 = vmatpush.msra.mxu0 %v2173
  %v2175 = vand.u32 %v2148, 4294901760
  %2176 = vmatpush.msra.mxu0 %v2175
  %v2177 = vand.u32 %v2151, 4294901760
  %v2178 = vsub.f32 %v2151, %v2177
  %v2179 = vand.u32 %v2178, 4294901760
  %v2180 = vsub.f32 %v2178, %v2179
  %v2181 = vand.u32 %v2180, 4294901760
  %2182 = vmatmul.f32.gmra.mxu0 %v2181
  %v2183 = vpop.f32.mrf.mxu0
  %v2184 = vadd.f32 0.0, %v2183
  %v2185 = vand.u32 %v2154, 4294901760
  %v2186 = vsub.f32 %v2154, %v2185
  %v2187 = vand.u32 %v2186, 4294901760
  %v2188 = vsub.f32 %v2186, %v2187
  %v2189 = vand.u32 %v2188, 4294901760
  %2190 = vmatmul.f32.gmra.mxu0 %v2189
  %v2191 = vpop.f32.mrf.mxu0
  %v2192 = vadd.f32 0.0, %v2191
  %2193 = vdwg.mxu0
  %2194 = vmatpush.msra.mxu0 0.0
  %2195 = vmatpush.msra.mxu0 0.0
  %2196 = vmatpush.msra.mxu0 0.0
  %2197 = vmatpush.msra.mxu0 0.0
  %2198 = vmatpush.msra.mxu0 0.0
  %2199 = vmatpush.msra.mxu0 0.0
  %2200 = vmatpush.msra.mxu0 0.0
  %2201 = vmatpush.msra.mxu0 0.0
  %2202 = vmatpush.msra.mxu0 0.0
  %2203 = vmatpush.msra.mxu0 0.0
  %2204 = vmatpush.msra.mxu0 0.0
  %2205 = vmatpush.msra.mxu0 0.0
  %2206 = vmatpush.msra.mxu0 0.0
  %2207 = vmatpush.msra.mxu0 0.0
  %v2208 = vand.u32 %v2157, 4294901760
  %v2209 = vsub.f32 %v2157, %v2208
  %v2210 = vand.u32 %v2209, 4294901760
  %v2211 = vsub.f32 %v2209, %v2210
  %v2212 = vand.u32 %v2211, 4294901760
  %2213 = vmatpush.msra.mxu0 %v2212
  %v2214 = vand.u32 %v2148, 4294901760
  %v2215 = vsub.f32 %v2148, %v2214
  %v2216 = vand.u32 %v2215, 4294901760
  %v2217 = vsub.f32 %v2215, %v2216
  %v2218 = vand.u32 %v2217, 4294901760
  %2219 = vmatpush.msra.mxu0 %v2218
  %v2220 = vand.u32 %v2151, 4294901760
  %2221 = vmatmul.f32.gmra.mxu0 %v2220
  %v2222 = vpop.f32.mrf.mxu0
  %v2223 = vadd.f32 %v2184, %v2222
  %v2224 = vand.u32 %v2154, 4294901760
  %2225 = vmatmul.f32.gmra.mxu0 %v2224
  %v2226 = vpop.f32.mrf.mxu0
  %v2227 = vadd.f32 %v2192, %v2226
  %2228 = vdwg.mxu0
  %2229 = vmatpush.msra.mxu0 0.0
  %2230 = vmatpush.msra.mxu0 0.0
  %2231 = vmatpush.msra.mxu0 0.0
  %2232 = vmatpush.msra.mxu0 0.0
  %2233 = vmatpush.msra.mxu0 0.0
  %2234 = vmatpush.msra.mxu0 0.0
  %2235 = vmatpush.msra.mxu0 0.0
  %2236 = vmatpush.msra.mxu0 0.0
  %2237 = vmatpush.msra.mxu0 0.0
  %2238 = vmatpush.msra.mxu0 0.0
  %2239 = vmatpush.msra.mxu0 0.0
  %2240 = vmatpush.msra.mxu0 0.0
  %2241 = vmatpush.msra.mxu0 0.0
  %2242 = vmatpush.msra.mxu0 0.0
  %v2243 = vand.u32 %v2157, 4294901760
  %v2244 = vsub.f32 %v2157, %v2243
  %2245 = vmatpush.msra.mxu0 %v2244
  %v2246 = vand.u32 %v2148, 4294901760
  %v2247 = vsub.f32 %v2148, %v2246
  %2248 = vmatpush.msra.mxu0 %v2247
  %v2249 = vand.u32 %v2151, 4294901760
  %v2250 = vsub.f32 %v2151, %v2249
  %2251 = vmatmul.f32.gmra.mxu0 %v2250
  %v2252 = vpop.f32.mrf.mxu0
  %v2253 = vadd.f32 %v2223, %v2252
  %v2254 = vand.u32 %v2154, 4294901760
  %v2255 = vsub.f32 %v2154, %v2254
  %2256 = vmatmul.f32.gmra.mxu0 %v2255
  %v2257 = vpop.f32.mrf.mxu0
  %v2258 = vadd.f32 %v2227, %v2257
  %2259 = vdwg.mxu0
  %2260 = vmatpush.msra.mxu0 0.0
  %2261 = vmatpush.msra.mxu0 0.0
  %2262 = vmatpush.msra.mxu0 0.0
  %2263 = vmatpush.msra.mxu0 0.0
  %2264 = vmatpush.msra.mxu0 0.0
  %2265 = vmatpush.msra.mxu0 0.0
  %2266 = vmatpush.msra.mxu0 0.0
  %2267 = vmatpush.msra.mxu0 0.0
  %2268 = vmatpush.msra.mxu0 0.0
  %2269 = vmatpush.msra.mxu0 0.0
  %2270 = vmatpush.msra.mxu0 0.0
  %2271 = vmatpush.msra.mxu0 0.0
  %2272 = vmatpush.msra.mxu0 0.0
  %2273 = vmatpush.msra.mxu0 0.0
  %v2274 = vand.u32 %v2157, 4294901760
  %2275 = vmatpush.msra.mxu0 %v2274
  %v2276 = vand.u32 %v2148, 4294901760
  %2277 = vmatpush.msra.mxu0 %v2276
  %v2278 = vand.u32 %v2151, 4294901760
  %v2279 = vsub.f32 %v2151, %v2278
  %v2280 = vand.u32 %v2279, 4294901760
  %2281 = vmatmul.f32.gmra.mxu0 %v2280
  %v2282 = vpop.f32.mrf.mxu0
  %v2283 = vadd.f32 %v2253, %v2282
  %v2284 = vand.u32 %v2154, 4294901760
  %v2285 = vsub.f32 %v2154, %v2284
  %v2286 = vand.u32 %v2285, 4294901760
  %2287 = vmatmul.f32.gmra.mxu0 %v2286
  %v2288 = vpop.f32.mrf.mxu0
  %v2289 = vadd.f32 %v2258, %v2288
  %2290 = vdwg.mxu0
  %2291 = vmatpush.msra.mxu0 0.0
  %2292 = vmatpush.msra.mxu0 0.0
  %2293 = vmatpush.msra.mxu0 0.0
  %2294 = vmatpush.msra.mxu0 0.0
  %2295 = vmatpush.msra.mxu0 0.0
  %2296 = vmatpush.msra.mxu0 0.0
  %2297 = vmatpush.msra.mxu0 0.0
  %2298 = vmatpush.msra.mxu0 0.0
  %2299 = vmatpush.msra.mxu0 0.0
  %2300 = vmatpush.msra.mxu0 0.0
  %2301 = vmatpush.msra.mxu0 0.0
  %2302 = vmatpush.msra.mxu0 0.0
  %2303 = vmatpush.msra.mxu0 0.0
  %2304 = vmatpush.msra.mxu0 0.0
  %v2305 = vand.u32 %v2157, 4294901760
  %v2306 = vsub.f32 %v2157, %v2305
  %v2307 = vand.u32 %v2306, 4294901760
  %2308 = vmatpush.msra.mxu0 %v2307
  %v2309 = vand.u32 %v2148, 4294901760
  %v2310 = vsub.f32 %v2148, %v2309
  %v2311 = vand.u32 %v2310, 4294901760
  %2312 = vmatpush.msra.mxu0 %v2311
  %v2313 = vand.u32 %v2151, 4294901760
  %2314 = vmatmul.f32.gmra.mxu0 %v2313
  %v2315 = vpop.f32.mrf.mxu0
  %v2316 = vadd.f32 %v2283, %v2315
  %v2317 = vand.u32 %v2154, 4294901760
  %2318 = vmatmul.f32.gmra.mxu0 %v2317
  %v2319 = vpop.f32.mrf.mxu0
  %v2320 = vadd.f32 %v2289, %v2319
  %2321 = vdwg.mxu0
  %2322 = vmatpush.msra.mxu0 0.0
  %2323 = vmatpush.msra.mxu0 0.0
  %2324 = vmatpush.msra.mxu0 0.0
  %2325 = vmatpush.msra.mxu0 0.0
  %2326 = vmatpush.msra.mxu0 0.0
  %2327 = vmatpush.msra.mxu0 0.0
  %2328 = vmatpush.msra.mxu0 0.0
  %2329 = vmatpush.msra.mxu0 0.0
  %2330 = vmatpush.msra.mxu0 0.0
  %2331 = vmatpush.msra.mxu0 0.0
  %2332 = vmatpush.msra.mxu0 0.0
  %2333 = vmatpush.msra.mxu0 0.0
  %2334 = vmatpush.msra.mxu0 0.0
  %2335 = vmatpush.msra.mxu0 0.0
  %v2336 = vand.u32 %v2157, 4294901760
  %2337 = vmatpush.msra.mxu0 %v2336
  %v2338 = vand.u32 %v2148, 4294901760
  %2339 = vmatpush.msra.mxu0 %v2338
  %v2340 = vand.u32 %v2151, 4294901760
  %2341 = vmatmul.f32.gmra.mxu0 %v2340
  %v2342 = vpop.f32.mrf.mxu0
  %v2343 = vadd.f32 %v2316, %v2342
  %v2344 = vand.u32 %v2154, 4294901760
  %2345 = vmatmul.f32.gmra.mxu0 %v2344
  %v2346 = vpop.f32.mrf.mxu0
  %v2347 = vadd.f32 %v2320, %v2346
  %2348 = vdwg.mxu0
  %v2350 = vsel %vm45, %v1877, 0
  %v2353 = vsel %vm45, %v1892, 0
  %v2356 = vsel %vm52, %v1894, 0
  %2358 = vmatpush.msra.mxu0 0.0
  %2359 = vmatpush.msra.mxu0 0.0
  %2360 = vmatpush.msra.mxu0 0.0
  %2361 = vmatpush.msra.mxu0 0.0
  %2362 = vmatpush.msra.mxu0 0.0
  %2363 = vmatpush.msra.mxu0 0.0
  %2364 = vmatpush.msra.mxu0 0.0
  %2365 = vmatpush.msra.mxu0 0.0
  %2366 = vmatpush.msra.mxu0 0.0
  %2367 = vmatpush.msra.mxu0 0.0
  %2368 = vmatpush.msra.mxu0 0.0
  %2369 = vmatpush.msra.mxu0 0.0
  %2370 = vmatpush.msra.mxu0 0.0
  %2371 = vmatpush.msra.mxu0 0.0
  %v2372 = vand.u32 %v2356, 4294901760
  %2373 = vmatpush.msra.mxu0 %v2372
  %v2374 = vand.u32 %v1893, 4294901760
  %2375 = vmatpush.msra.mxu0 %v2374
  %v2376 = vand.u32 %v2350, 4294901760
  %v2377 = vsub.f32 %v2350, %v2376
  %v2378 = vand.u32 %v2377, 4294901760
  %v2379 = vsub.f32 %v2377, %v2378
  %v2380 = vand.u32 %v2379, 4294901760
  %2381 = vmatmul.f32.gmra.mxu0 %v2380
  %v2382 = vpop.f32.mrf.mxu0
  %v2383 = vadd.f32 %v2343, %v2382
  %v2384 = vand.u32 %v2353, 4294901760
  %v2385 = vsub.f32 %v2353, %v2384
  %v2386 = vand.u32 %v2385, 4294901760
  %v2387 = vsub.f32 %v2385, %v2386
  %v2388 = vand.u32 %v2387, 4294901760
  %2389 = vmatmul.f32.gmra.mxu0 %v2388
  %v2390 = vpop.f32.mrf.mxu0
  %v2391 = vadd.f32 %v2347, %v2390
  %2392 = vdwg.mxu0
  %2393 = vmatpush.msra.mxu0 0.0
  %2394 = vmatpush.msra.mxu0 0.0
  %2395 = vmatpush.msra.mxu0 0.0
  %2396 = vmatpush.msra.mxu0 0.0
  %2397 = vmatpush.msra.mxu0 0.0
  %2398 = vmatpush.msra.mxu0 0.0
  %2399 = vmatpush.msra.mxu0 0.0
  %2400 = vmatpush.msra.mxu0 0.0
  %2401 = vmatpush.msra.mxu0 0.0
  %2402 = vmatpush.msra.mxu0 0.0
  %2403 = vmatpush.msra.mxu0 0.0
  %2404 = vmatpush.msra.mxu0 0.0
  %2405 = vmatpush.msra.mxu0 0.0
  %2406 = vmatpush.msra.mxu0 0.0
  %v2407 = vand.u32 %v2356, 4294901760
  %v2408 = vsub.f32 %v2356, %v2407
  %v2409 = vand.u32 %v2408, 4294901760
  %v2410 = vsub.f32 %v2408, %v2409
  %v2411 = vand.u32 %v2410, 4294901760
  %2412 = vmatpush.msra.mxu0 %v2411
  %v2413 = vand.u32 %v1893, 4294901760
  %v2414 = vsub.f32 %v1893, %v2413
  %v2415 = vand.u32 %v2414, 4294901760
  %v2416 = vsub.f32 %v2414, %v2415
  %v2417 = vand.u32 %v2416, 4294901760
  %2418 = vmatpush.msra.mxu0 %v2417
  %v2419 = vand.u32 %v2350, 4294901760
  %2420 = vmatmul.f32.gmra.mxu0 %v2419
  %v2421 = vpop.f32.mrf.mxu0
  %v2422 = vadd.f32 %v2383, %v2421
  %v2423 = vand.u32 %v2353, 4294901760
  %2424 = vmatmul.f32.gmra.mxu0 %v2423
  %v2425 = vpop.f32.mrf.mxu0
  %v2426 = vadd.f32 %v2391, %v2425
  %2427 = vdwg.mxu0
  %2428 = vmatpush.msra.mxu0 0.0
  %2429 = vmatpush.msra.mxu0 0.0
  %2430 = vmatpush.msra.mxu0 0.0
  %2431 = vmatpush.msra.mxu0 0.0
  %2432 = vmatpush.msra.mxu0 0.0
  %2433 = vmatpush.msra.mxu0 0.0
  %2434 = vmatpush.msra.mxu0 0.0
  %2435 = vmatpush.msra.mxu0 0.0
  %2436 = vmatpush.msra.mxu0 0.0
  %2437 = vmatpush.msra.mxu0 0.0
  %2438 = vmatpush.msra.mxu0 0.0
  %2439 = vmatpush.msra.mxu0 0.0
  %2440 = vmatpush.msra.mxu0 0.0
  %2441 = vmatpush.msra.mxu0 0.0
  %v2442 = vand.u32 %v2356, 4294901760
  %v2443 = vsub.f32 %v2356, %v2442
  %2444 = vmatpush.msra.mxu0 %v2443
  %v2445 = vand.u32 %v1893, 4294901760
  %v2446 = vsub.f32 %v1893, %v2445
  %2447 = vmatpush.msra.mxu0 %v2446
  %v2448 = vand.u32 %v2350, 4294901760
  %v2449 = vsub.f32 %v2350, %v2448
  %2450 = vmatmul.f32.gmra.mxu0 %v2449
  %v2451 = vpop.f32.mrf.mxu0
  %v2452 = vadd.f32 %v2422, %v2451
  %v2453 = vand.u32 %v2353, 4294901760
  %v2454 = vsub.f32 %v2353, %v2453
  %2455 = vmatmul.f32.gmra.mxu0 %v2454
  %v2456 = vpop.f32.mrf.mxu0
  %v2457 = vadd.f32 %v2426, %v2456
  %2458 = vdwg.mxu0
  %2459 = vmatpush.msra.mxu0 0.0
  %2460 = vmatpush.msra.mxu0 0.0
  %2461 = vmatpush.msra.mxu0 0.0
  %2462 = vmatpush.msra.mxu0 0.0
  %2463 = vmatpush.msra.mxu0 0.0
  %2464 = vmatpush.msra.mxu0 0.0
  %2465 = vmatpush.msra.mxu0 0.0
  %2466 = vmatpush.msra.mxu0 0.0
  %2467 = vmatpush.msra.mxu0 0.0
  %2468 = vmatpush.msra.mxu0 0.0
  %2469 = vmatpush.msra.mxu0 0.0
  %2470 = vmatpush.msra.mxu0 0.0
  %2471 = vmatpush.msra.mxu0 0.0
  %2472 = vmatpush.msra.mxu0 0.0
  %v2473 = vand.u32 %v2356, 4294901760
  %2474 = vmatpush.msra.mxu0 %v2473
  %v2475 = vand.u32 %v1893, 4294901760
  %2476 = vmatpush.msra.mxu0 %v2475
  %v2477 = vand.u32 %v2350, 4294901760
  %v2478 = vsub.f32 %v2350, %v2477
  %v2479 = vand.u32 %v2478, 4294901760
  %2480 = vmatmul.f32.gmra.mxu0 %v2479
  %v2481 = vpop.f32.mrf.mxu0
  %v2482 = vadd.f32 %v2452, %v2481
  %v2483 = vand.u32 %v2353, 4294901760
  %v2484 = vsub.f32 %v2353, %v2483
  %v2485 = vand.u32 %v2484, 4294901760
  %2486 = vmatmul.f32.gmra.mxu0 %v2485
  %v2487 = vpop.f32.mrf.mxu0
  %v2488 = vadd.f32 %v2457, %v2487
  %2489 = vdwg.mxu0
  %2490 = vmatpush.msra.mxu0 0.0
  %2491 = vmatpush.msra.mxu0 0.0
  %2492 = vmatpush.msra.mxu0 0.0
  %2493 = vmatpush.msra.mxu0 0.0
  %2494 = vmatpush.msra.mxu0 0.0
  %2495 = vmatpush.msra.mxu0 0.0
  %2496 = vmatpush.msra.mxu0 0.0
  %2497 = vmatpush.msra.mxu0 0.0
  %2498 = vmatpush.msra.mxu0 0.0
  %2499 = vmatpush.msra.mxu0 0.0
  %2500 = vmatpush.msra.mxu0 0.0
  %2501 = vmatpush.msra.mxu0 0.0
  %2502 = vmatpush.msra.mxu0 0.0
  %2503 = vmatpush.msra.mxu0 0.0
  %v2504 = vand.u32 %v2356, 4294901760
  %v2505 = vsub.f32 %v2356, %v2504
  %v2506 = vand.u32 %v2505, 4294901760
  %2507 = vmatpush.msra.mxu0 %v2506
  %v2508 = vand.u32 %v1893, 4294901760
  %v2509 = vsub.f32 %v1893, %v2508
  %v2510 = vand.u32 %v2509, 4294901760
  %2511 = vmatpush.msra.mxu0 %v2510
  %v2512 = vand.u32 %v2350, 4294901760
  %2513 = vmatmul.f32.gmra.mxu0 %v2512
  %v2514 = vpop.f32.mrf.mxu0
  %v2515 = vadd.f32 %v2482, %v2514
  %v2516 = vand.u32 %v2353, 4294901760
  %2517 = vmatmul.f32.gmra.mxu0 %v2516
  %v2518 = vpop.f32.mrf.mxu0
  %v2519 = vadd.f32 %v2488, %v2518
  %2520 = vdwg.mxu0
  %2521 = vmatpush.msra.mxu0 0.0
  %2522 = vmatpush.msra.mxu0 0.0
  %2523 = vmatpush.msra.mxu0 0.0
  %2524 = vmatpush.msra.mxu0 0.0
  %2525 = vmatpush.msra.mxu0 0.0
  %2526 = vmatpush.msra.mxu0 0.0
  %2527 = vmatpush.msra.mxu0 0.0
  %2528 = vmatpush.msra.mxu0 0.0
  %2529 = vmatpush.msra.mxu0 0.0
  %2530 = vmatpush.msra.mxu0 0.0
  %2531 = vmatpush.msra.mxu0 0.0
  %2532 = vmatpush.msra.mxu0 0.0
  %2533 = vmatpush.msra.mxu0 0.0
  %2534 = vmatpush.msra.mxu0 0.0
  %v2535 = vand.u32 %v2356, 4294901760
  %2536 = vmatpush.msra.mxu0 %v2535
  %v2537 = vand.u32 %v1893, 4294901760
  %2538 = vmatpush.msra.mxu0 %v2537
  %v2539 = vand.u32 %v2350, 4294901760
  %2540 = vmatmul.f32.gmra.mxu0 %v2539
  %v2541 = vpop.f32.mrf.mxu0
  %v2542 = vadd.f32 %v2515, %v2541
  %v2543 = vand.u32 %v2353, 4294901760
  %2544 = vmatmul.f32.gmra.mxu0 %v2543
  %v2545 = vpop.f32.mrf.mxu0
  %v2546 = vadd.f32 %v2519, %v2545
  %2547 = vdwg.mxu0
  %vm2548 = vcmp.ge.s32.totalorder %v1632, 8
  %vm2549 = vcmp.lt.s32.totalorder %v1632, 12
  %vm2550 = vmand %vm2548, %vm2549
  %v2551 = vsel %vm2550, 1, 0
  %v2552 = vcvt.s32.f32 %v2551
  %v2553 = vmul.f32 %v1237, %v2552
  %v2554 = vmul.f32 %v1241, %v2552
  %v2556 = vsel %vm249, %v2553, 0
  %v2559 = vsel %vm249, %v2554, 0
  %2561 = vmatpush.xpose.msra.mxu0 0.0
  %2562 = vmatpush.xpose.msra.mxu0 0.0
  %2563 = vmatpush.xpose.msra.mxu0 0.0
  %2564 = vmatpush.xpose.msra.mxu0 0.0
  %2565 = vmatpush.xpose.msra.mxu0 0.0
  %2566 = vmatpush.xpose.msra.mxu0 0.0
  %2567 = vmatpush.xpose.msra.mxu0 0.0
  %2568 = vmatpush.xpose.msra.mxu0 0.0
  %2569 = vmatpush.xpose.msra.mxu0 0.0
  %2570 = vmatpush.xpose.msra.mxu0 0.0
  %2571 = vmatpush.xpose.msra.mxu0 0.0
  %2572 = vmatpush.xpose.msra.mxu0 0.0
  %2573 = vmatpush.xpose.msra.mxu0 0.0
  %2574 = vmatpush.xpose.msra.mxu0 0.0
  %v2575 = vand.u32 %v1650, 4294901760
  %2576 = vmatpush.xpose.msra.mxu0 %v2575
  %v2577 = vand.u32 %v1647, 4294901760
  %2578 = vmatpush.xpose.msra.mxu0 %v2577
  %v2579 = vand.u32 %v2556, 4294901760
  %v2580 = vsub.f32 %v2556, %v2579
  %v2581 = vand.u32 %v2580, 4294901760
  %v2582 = vsub.f32 %v2580, %v2581
  %v2583 = vand.u32 %v2582, 4294901760
  %2584 = vmatmul.f32.gmra.mxu0 %v2583
  %v2585 = vpop.f32.mrf.mxu0
  %v2586 = vadd.f32 0.0, %v2585
  %v2587 = vand.u32 %v2559, 4294901760
  %v2588 = vsub.f32 %v2559, %v2587
  %v2589 = vand.u32 %v2588, 4294901760
  %v2590 = vsub.f32 %v2588, %v2589
  %v2591 = vand.u32 %v2590, 4294901760
  %2592 = vmatmul.f32.gmra.mxu0 %v2591
  %v2593 = vpop.f32.mrf.mxu0
  %v2594 = vadd.f32 0.0, %v2593
  %2595 = vdwg.mxu0
  %2596 = vmatpush.xpose.msra.mxu0 0.0
  %2597 = vmatpush.xpose.msra.mxu0 0.0
  %2598 = vmatpush.xpose.msra.mxu0 0.0
  %2599 = vmatpush.xpose.msra.mxu0 0.0
  %2600 = vmatpush.xpose.msra.mxu0 0.0
  %2601 = vmatpush.xpose.msra.mxu0 0.0
  %2602 = vmatpush.xpose.msra.mxu0 0.0
  %2603 = vmatpush.xpose.msra.mxu0 0.0
  %2604 = vmatpush.xpose.msra.mxu0 0.0
  %2605 = vmatpush.xpose.msra.mxu0 0.0
  %2606 = vmatpush.xpose.msra.mxu0 0.0
  %2607 = vmatpush.xpose.msra.mxu0 0.0
  %2608 = vmatpush.xpose.msra.mxu0 0.0
  %2609 = vmatpush.xpose.msra.mxu0 0.0
  %v2610 = vand.u32 %v1650, 4294901760
  %v2611 = vsub.f32 %v1650, %v2610
  %v2612 = vand.u32 %v2611, 4294901760
  %v2613 = vsub.f32 %v2611, %v2612
  %v2614 = vand.u32 %v2613, 4294901760
  %2615 = vmatpush.xpose.msra.mxu0 %v2614
  %v2616 = vand.u32 %v1647, 4294901760
  %v2617 = vsub.f32 %v1647, %v2616
  %v2618 = vand.u32 %v2617, 4294901760
  %v2619 = vsub.f32 %v2617, %v2618
  %v2620 = vand.u32 %v2619, 4294901760
  %2621 = vmatpush.xpose.msra.mxu0 %v2620
  %v2622 = vand.u32 %v2556, 4294901760
  %2623 = vmatmul.f32.gmra.mxu0 %v2622
  %v2624 = vpop.f32.mrf.mxu0
  %v2625 = vadd.f32 %v2586, %v2624
  %v2626 = vand.u32 %v2559, 4294901760
  %2627 = vmatmul.f32.gmra.mxu0 %v2626
  %v2628 = vpop.f32.mrf.mxu0
  %v2629 = vadd.f32 %v2594, %v2628
  %2630 = vdwg.mxu0
  %2631 = vmatpush.xpose.msra.mxu0 0.0
  %2632 = vmatpush.xpose.msra.mxu0 0.0
  %2633 = vmatpush.xpose.msra.mxu0 0.0
  %2634 = vmatpush.xpose.msra.mxu0 0.0
  %2635 = vmatpush.xpose.msra.mxu0 0.0
  %2636 = vmatpush.xpose.msra.mxu0 0.0
  %2637 = vmatpush.xpose.msra.mxu0 0.0
  %2638 = vmatpush.xpose.msra.mxu0 0.0
  %2639 = vmatpush.xpose.msra.mxu0 0.0
  %2640 = vmatpush.xpose.msra.mxu0 0.0
  %2641 = vmatpush.xpose.msra.mxu0 0.0
  %2642 = vmatpush.xpose.msra.mxu0 0.0
  %2643 = vmatpush.xpose.msra.mxu0 0.0
  %2644 = vmatpush.xpose.msra.mxu0 0.0
  %v2645 = vand.u32 %v1650, 4294901760
  %v2646 = vsub.f32 %v1650, %v2645
  %2647 = vmatpush.xpose.msra.mxu0 %v2646
  %v2648 = vand.u32 %v1647, 4294901760
  %v2649 = vsub.f32 %v1647, %v2648
  %2650 = vmatpush.xpose.msra.mxu0 %v2649
  %v2651 = vand.u32 %v2556, 4294901760
  %v2652 = vsub.f32 %v2556, %v2651
  %2653 = vmatmul.f32.gmra.mxu0 %v2652
  %v2654 = vpop.f32.mrf.mxu0
  %v2655 = vadd.f32 %v2625, %v2654
  %v2656 = vand.u32 %v2559, 4294901760
  %v2657 = vsub.f32 %v2559, %v2656
  %2658 = vmatmul.f32.gmra.mxu0 %v2657
  %v2659 = vpop.f32.mrf.mxu0
  %v2660 = vadd.f32 %v2629, %v2659
  %2661 = vdwg.mxu0
  %2662 = vmatpush.xpose.msra.mxu0 0.0
  %2663 = vmatpush.xpose.msra.mxu0 0.0
  %2664 = vmatpush.xpose.msra.mxu0 0.0
  %2665 = vmatpush.xpose.msra.mxu0 0.0
  %2666 = vmatpush.xpose.msra.mxu0 0.0
  %2667 = vmatpush.xpose.msra.mxu0 0.0
  %2668 = vmatpush.xpose.msra.mxu0 0.0
  %2669 = vmatpush.xpose.msra.mxu0 0.0
  %2670 = vmatpush.xpose.msra.mxu0 0.0
  %2671 = vmatpush.xpose.msra.mxu0 0.0
  %2672 = vmatpush.xpose.msra.mxu0 0.0
  %2673 = vmatpush.xpose.msra.mxu0 0.0
  %2674 = vmatpush.xpose.msra.mxu0 0.0
  %2675 = vmatpush.xpose.msra.mxu0 0.0
  %v2676 = vand.u32 %v1650, 4294901760
  %2677 = vmatpush.xpose.msra.mxu0 %v2676
  %v2678 = vand.u32 %v1647, 4294901760
  %2679 = vmatpush.xpose.msra.mxu0 %v2678
  %v2680 = vand.u32 %v2556, 4294901760
  %v2681 = vsub.f32 %v2556, %v2680
  %v2682 = vand.u32 %v2681, 4294901760
  %2683 = vmatmul.f32.gmra.mxu0 %v2682
  %v2684 = vpop.f32.mrf.mxu0
  %v2685 = vadd.f32 %v2655, %v2684
  %v2686 = vand.u32 %v2559, 4294901760
  %v2687 = vsub.f32 %v2559, %v2686
  %v2688 = vand.u32 %v2687, 4294901760
  %2689 = vmatmul.f32.gmra.mxu0 %v2688
  %v2690 = vpop.f32.mrf.mxu0
  %v2691 = vadd.f32 %v2660, %v2690
  %2692 = vdwg.mxu0
  %2693 = vmatpush.xpose.msra.mxu0 0.0
  %2694 = vmatpush.xpose.msra.mxu0 0.0
  %2695 = vmatpush.xpose.msra.mxu0 0.0
  %2696 = vmatpush.xpose.msra.mxu0 0.0
  %2697 = vmatpush.xpose.msra.mxu0 0.0
  %2698 = vmatpush.xpose.msra.mxu0 0.0
  %2699 = vmatpush.xpose.msra.mxu0 0.0
  %2700 = vmatpush.xpose.msra.mxu0 0.0
  %2701 = vmatpush.xpose.msra.mxu0 0.0
  %2702 = vmatpush.xpose.msra.mxu0 0.0
  %2703 = vmatpush.xpose.msra.mxu0 0.0
  %2704 = vmatpush.xpose.msra.mxu0 0.0
  %2705 = vmatpush.xpose.msra.mxu0 0.0
  %2706 = vmatpush.xpose.msra.mxu0 0.0
  %v2707 = vand.u32 %v1650, 4294901760
  %v2708 = vsub.f32 %v1650, %v2707
  %v2709 = vand.u32 %v2708, 4294901760
  %2710 = vmatpush.xpose.msra.mxu0 %v2709
  %v2711 = vand.u32 %v1647, 4294901760
  %v2712 = vsub.f32 %v1647, %v2711
  %v2713 = vand.u32 %v2712, 4294901760
  %2714 = vmatpush.xpose.msra.mxu0 %v2713
  %v2715 = vand.u32 %v2556, 4294901760
  %2716 = vmatmul.f32.gmra.mxu0 %v2715
  %v2717 = vpop.f32.mrf.mxu0
  %v2718 = vadd.f32 %v2685, %v2717
  %v2719 = vand.u32 %v2559, 4294901760
  %2720 = vmatmul.f32.gmra.mxu0 %v2719
  %v2721 = vpop.f32.mrf.mxu0
  %v2722 = vadd.f32 %v2691, %v2721
  %2723 = vdwg.mxu0
  %2724 = vmatpush.xpose.msra.mxu0 0.0
  %2725 = vmatpush.xpose.msra.mxu0 0.0
  %2726 = vmatpush.xpose.msra.mxu0 0.0
  %2727 = vmatpush.xpose.msra.mxu0 0.0
  %2728 = vmatpush.xpose.msra.mxu0 0.0
  %2729 = vmatpush.xpose.msra.mxu0 0.0
  %2730 = vmatpush.xpose.msra.mxu0 0.0
  %2731 = vmatpush.xpose.msra.mxu0 0.0
  %2732 = vmatpush.xpose.msra.mxu0 0.0
  %2733 = vmatpush.xpose.msra.mxu0 0.0
  %2734 = vmatpush.xpose.msra.mxu0 0.0
  %2735 = vmatpush.xpose.msra.mxu0 0.0
  %2736 = vmatpush.xpose.msra.mxu0 0.0
  %2737 = vmatpush.xpose.msra.mxu0 0.0
  %v2738 = vand.u32 %v1650, 4294901760
  %2739 = vmatpush.xpose.msra.mxu0 %v2738
  %v2740 = vand.u32 %v1647, 4294901760
  %2741 = vmatpush.xpose.msra.mxu0 %v2740
  %v2742 = vand.u32 %v2556, 4294901760
  %2743 = vmatmul.f32.gmra.mxu0 %v2742
  %v2744 = vpop.f32.mrf.mxu0
  %v2745 = vadd.f32 %v2718, %v2744
  %v2746 = vand.u32 %v2559, 4294901760
  %2747 = vmatmul.f32.gmra.mxu0 %v2746
  %v2748 = vpop.f32.mrf.mxu0
  %v2749 = vadd.f32 %v2722, %v2748
  %2750 = vdwg.mxu0
  %v2751 = vmul.f32 %v2745, 0.5
  %v2752 = vmul.f32 %v2749, 0.5
  %v2753 = vsel %vm45, %v2751, -inf
  %2754 = vmax.xlane.f32.xlu0 %v2753
  %v2755 = vpop.xlane.xlu0 %2754
  %v2756 = vsel %vm1847, %v2752, -inf
  %2757 = vmax.xlane.f32.xlu0 %v2756
  %v2758 = vpop.xlane.xlu0 %2757
  %v2759 = vsub.f32 %v2751, %v2755
  %v2760 = vsub.f32 %v2752, %v2758
  %v2761 = vmul.f32 %v2759, 1.442695
  %v2762 = vpow.pop %v2761
  %v2763 = vmul.f32 %v2760, 1.442695
  %v2764 = vpow.pop %v2763
  %v2765 = vsel %vm45, %v2762, 0.0
  %2766 = vadd.xlane.f32.xlu0 %v2765
  %v2767 = vpop.xlane.xlu0 %2766
  %v2768 = vsel %vm1847, %v2764, 0.0
  %2769 = vadd.xlane.f32.xlu0 %v2768
  %v2770 = vpop.xlane.xlu0 %2769
  %v2771 = vrcp.pop %v2767
  %v2772 = vmul.f32 %v2767, %v2771
  %v2773 = vsub.f32 1.0, %v2772
  %v2774 = vmul.f32 %v2771, %v2773
  %v2775 = vadd.f32 %v2771, %v2774
  %vm2776 = vweird.f32 %v2767
  %vm2777 = vweird.f32 %v2771
  %vm2778 = vmor %vm2776, %vm2777
  %v2779 = vsel %vm2778, %v2771, %v2775
  %v2780 = vand.u32 2147483647, %v2767
  %vm2781 = vcmp.eq.f32.partialorder %v2780, 8.507059e+37
  %v2782 = vand.u32 %v2767, 2147483648
  %v2783 = vor.u32 1.1754944e-38, %v2782
  %v2784 = vsel %vm2781, %v2783, %v2779
  %v2785 = vmul.f32 %v2762, %v2784
  %v2786 = vrcp.pop %v2770
  %v2787 = vmul.f32 %v2770, %v2786
  %v2788 = vsub.f32 1.0, %v2787
  %v2789 = vmul.f32 %v2786, %v2788
  %v2790 = vadd.f32 %v2786, %v2789
  %vm2791 = vweird.f32 %v2770
  %vm2792 = vweird.f32 %v2786
  %vm2793 = vmor %vm2791, %vm2792
  %v2794 = vsel %vm2793, %v2786, %v2790
  %v2795 = vand.u32 2147483647, %v2770
  %vm2796 = vcmp.eq.f32.partialorder %v2795, 8.507059e+37
  %v2797 = vand.u32 %v2770, 2147483648
  %v2798 = vor.u32 1.1754944e-38, %v2797
  %v2799 = vsel %vm2796, %v2798, %v2794
  %v2800 = vmul.f32 %v2764, %v2799
  %v2801 = vmul.f32 %v1625, %v2552
  %v2802 = vmul.f32 %v1629, %v2552
  %v2804 = vsel %vm45, %v2785, 0
  %v2807 = vsel %vm45, %v2800, 0
  %v2810 = vsel %vm52, %v2802, 0
  %2812 = vmatpush.msra.mxu0 0.0
  %2813 = vmatpush.msra.mxu0 0.0
  %2814 = vmatpush.msra.mxu0 0.0
  %2815 = vmatpush.msra.mxu0 0.0
  %2816 = vmatpush.msra.mxu0 0.0
  %2817 = vmatpush.msra.mxu0 0.0
  %2818 = vmatpush.msra.mxu0 0.0
  %2819 = vmatpush.msra.mxu0 0.0
  %2820 = vmatpush.msra.mxu0 0.0
  %2821 = vmatpush.msra.mxu0 0.0
  %2822 = vmatpush.msra.mxu0 0.0
  %2823 = vmatpush.msra.mxu0 0.0
  %2824 = vmatpush.msra.mxu0 0.0
  %2825 = vmatpush.msra.mxu0 0.0
  %v2826 = vand.u32 %v2810, 4294901760
  %2827 = vmatpush.msra.mxu0 %v2826
  %v2828 = vand.u32 %v2801, 4294901760
  %2829 = vmatpush.msra.mxu0 %v2828
  %v2830 = vand.u32 %v2804, 4294901760
  %v2831 = vsub.f32 %v2804, %v2830
  %v2832 = vand.u32 %v2831, 4294901760
  %v2833 = vsub.f32 %v2831, %v2832
  %v2834 = vand.u32 %v2833, 4294901760
  %2835 = vmatmul.f32.gmra.mxu0 %v2834
  %v2836 = vpop.f32.mrf.mxu0
  %v2837 = vadd.f32 0.0, %v2836
  %v2838 = vand.u32 %v2807, 4294901760
  %v2839 = vsub.f32 %v2807, %v2838
  %v2840 = vand.u32 %v2839, 4294901760
  %v2841 = vsub.f32 %v2839, %v2840
  %v2842 = vand.u32 %v2841, 4294901760
  %2843 = vmatmul.f32.gmra.mxu0 %v2842
  %v2844 = vpop.f32.mrf.mxu0
  %v2845 = vadd.f32 0.0, %v2844
  %2846 = vdwg.mxu0
  %2847 = vmatpush.msra.mxu0 0.0
  %2848 = vmatpush.msra.mxu0 0.0
  %2849 = vmatpush.msra.mxu0 0.0
  %2850 = vmatpush.msra.mxu0 0.0
  %2851 = vmatpush.msra.mxu0 0.0
  %2852 = vmatpush.msra.mxu0 0.0
  %2853 = vmatpush.msra.mxu0 0.0
  %2854 = vmatpush.msra.mxu0 0.0
  %2855 = vmatpush.msra.mxu0 0.0
  %2856 = vmatpush.msra.mxu0 0.0
  %2857 = vmatpush.msra.mxu0 0.0
  %2858 = vmatpush.msra.mxu0 0.0
  %2859 = vmatpush.msra.mxu0 0.0
  %2860 = vmatpush.msra.mxu0 0.0
  %v2861 = vand.u32 %v2810, 4294901760
  %v2862 = vsub.f32 %v2810, %v2861
  %v2863 = vand.u32 %v2862, 4294901760
  %v2864 = vsub.f32 %v2862, %v2863
  %v2865 = vand.u32 %v2864, 4294901760
  %2866 = vmatpush.msra.mxu0 %v2865
  %v2867 = vand.u32 %v2801, 4294901760
  %v2868 = vsub.f32 %v2801, %v2867
  %v2869 = vand.u32 %v2868, 4294901760
  %v2870 = vsub.f32 %v2868, %v2869
  %v2871 = vand.u32 %v2870, 4294901760
  %2872 = vmatpush.msra.mxu0 %v2871
  %v2873 = vand.u32 %v2804, 4294901760
  %2874 = vmatmul.f32.gmra.mxu0 %v2873
  %v2875 = vpop.f32.mrf.mxu0
  %v2876 = vadd.f32 %v2837, %v2875
  %v2877 = vand.u32 %v2807, 4294901760
  %2878 = vmatmul.f32.gmra.mxu0 %v2877
  %v2879 = vpop.f32.mrf.mxu0
  %v2880 = vadd.f32 %v2845, %v2879
  %2881 = vdwg.mxu0
  %2882 = vmatpush.msra.mxu0 0.0
  %2883 = vmatpush.msra.mxu0 0.0
  %2884 = vmatpush.msra.mxu0 0.0
  %2885 = vmatpush.msra.mxu0 0.0
  %2886 = vmatpush.msra.mxu0 0.0
  %2887 = vmatpush.msra.mxu0 0.0
  %2888 = vmatpush.msra.mxu0 0.0
  %2889 = vmatpush.msra.mxu0 0.0
  %2890 = vmatpush.msra.mxu0 0.0
  %2891 = vmatpush.msra.mxu0 0.0
  %2892 = vmatpush.msra.mxu0 0.0
  %2893 = vmatpush.msra.mxu0 0.0
  %2894 = vmatpush.msra.mxu0 0.0
  %2895 = vmatpush.msra.mxu0 0.0
  %v2896 = vand.u32 %v2810, 4294901760
  %v2897 = vsub.f32 %v2810, %v2896
  %2898 = vmatpush.msra.mxu0 %v2897
  %v2899 = vand.u32 %v2801, 4294901760
  %v2900 = vsub.f32 %v2801, %v2899
  %2901 = vmatpush.msra.mxu0 %v2900
  %v2902 = vand.u32 %v2804, 4294901760
  %v2903 = vsub.f32 %v2804, %v2902
  %2904 = vmatmul.f32.gmra.mxu0 %v2903
  %v2905 = vpop.f32.mrf.mxu0
  %v2906 = vadd.f32 %v2876, %v2905
  %v2907 = vand.u32 %v2807, 4294901760
  %v2908 = vsub.f32 %v2807, %v2907
  %2909 = vmatmul.f32.gmra.mxu0 %v2908
  %v2910 = vpop.f32.mrf.mxu0
  %v2911 = vadd.f32 %v2880, %v2910
  %2912 = vdwg.mxu0
  %2913 = vmatpush.msra.mxu0 0.0
  %2914 = vmatpush.msra.mxu0 0.0
  %2915 = vmatpush.msra.mxu0 0.0
  %2916 = vmatpush.msra.mxu0 0.0
  %2917 = vmatpush.msra.mxu0 0.0
  %2918 = vmatpush.msra.mxu0 0.0
  %2919 = vmatpush.msra.mxu0 0.0
  %2920 = vmatpush.msra.mxu0 0.0
  %2921 = vmatpush.msra.mxu0 0.0
  %2922 = vmatpush.msra.mxu0 0.0
  %2923 = vmatpush.msra.mxu0 0.0
  %2924 = vmatpush.msra.mxu0 0.0
  %2925 = vmatpush.msra.mxu0 0.0
  %2926 = vmatpush.msra.mxu0 0.0
  %v2927 = vand.u32 %v2810, 4294901760
  %2928 = vmatpush.msra.mxu0 %v2927
  %v2929 = vand.u32 %v2801, 4294901760
  %2930 = vmatpush.msra.mxu0 %v2929
  %v2931 = vand.u32 %v2804, 4294901760
  %v2932 = vsub.f32 %v2804, %v2931
  %v2933 = vand.u32 %v2932, 4294901760
  %2934 = vmatmul.f32.gmra.mxu0 %v2933
  %v2935 = vpop.f32.mrf.mxu0
  %v2936 = vadd.f32 %v2906, %v2935
  %v2937 = vand.u32 %v2807, 4294901760
  %v2938 = vsub.f32 %v2807, %v2937
  %v2939 = vand.u32 %v2938, 4294901760
  %2940 = vmatmul.f32.gmra.mxu0 %v2939
  %v2941 = vpop.f32.mrf.mxu0
  %v2942 = vadd.f32 %v2911, %v2941
  %2943 = vdwg.mxu0
  %2944 = vmatpush.msra.mxu0 0.0
  %2945 = vmatpush.msra.mxu0 0.0
  %2946 = vmatpush.msra.mxu0 0.0
  %2947 = vmatpush.msra.mxu0 0.0
  %2948 = vmatpush.msra.mxu0 0.0
  %2949 = vmatpush.msra.mxu0 0.0
  %2950 = vmatpush.msra.mxu0 0.0
  %2951 = vmatpush.msra.mxu0 0.0
  %2952 = vmatpush.msra.mxu0 0.0
  %2953 = vmatpush.msra.mxu0 0.0
  %2954 = vmatpush.msra.mxu0 0.0
  %2955 = vmatpush.msra.mxu0 0.0
  %2956 = vmatpush.msra.mxu0 0.0
  %2957 = vmatpush.msra.mxu0 0.0
  %v2958 = vand.u32 %v2810, 4294901760
  %v2959 = vsub.f32 %v2810, %v2958
  %v2960 = vand.u32 %v2959, 4294901760
  %2961 = vmatpush.msra.mxu0 %v2960
  %v2962 = vand.u32 %v2801, 4294901760
  %v2963 = vsub.f32 %v2801, %v2962
  %v2964 = vand.u32 %v2963, 4294901760
  %2965 = vmatpush.msra.mxu0 %v2964
  %v2966 = vand.u32 %v2804, 4294901760
  %2967 = vmatmul.f32.gmra.mxu0 %v2966
  %v2968 = vpop.f32.mrf.mxu0
  %v2969 = vadd.f32 %v2936, %v2968
  %v2970 = vand.u32 %v2807, 4294901760
  %2971 = vmatmul.f32.gmra.mxu0 %v2970
  %v2972 = vpop.f32.mrf.mxu0
  %v2973 = vadd.f32 %v2942, %v2972
  %2974 = vdwg.mxu0
  %2975 = vmatpush.msra.mxu0 0.0
  %2976 = vmatpush.msra.mxu0 0.0
  %2977 = vmatpush.msra.mxu0 0.0
  %2978 = vmatpush.msra.mxu0 0.0
  %2979 = vmatpush.msra.mxu0 0.0
  %2980 = vmatpush.msra.mxu0 0.0
  %2981 = vmatpush.msra.mxu0 0.0
  %2982 = vmatpush.msra.mxu0 0.0
  %2983 = vmatpush.msra.mxu0 0.0
  %2984 = vmatpush.msra.mxu0 0.0
  %2985 = vmatpush.msra.mxu0 0.0
  %2986 = vmatpush.msra.mxu0 0.0
  %2987 = vmatpush.msra.mxu0 0.0
  %2988 = vmatpush.msra.mxu0 0.0
  %v2989 = vand.u32 %v2810, 4294901760
  %2990 = vmatpush.msra.mxu0 %v2989
  %v2991 = vand.u32 %v2801, 4294901760
  %2992 = vmatpush.msra.mxu0 %v2991
  %v2993 = vand.u32 %v2804, 4294901760
  %2994 = vmatmul.f32.gmra.mxu0 %v2993
  %v2995 = vpop.f32.mrf.mxu0
  %v2996 = vadd.f32 %v2969, %v2995
  %v2997 = vand.u32 %v2807, 4294901760
  %2998 = vmatmul.f32.gmra.mxu0 %v2997
  %v2999 = vpop.f32.mrf.mxu0
  %v3000 = vadd.f32 %v2973, %v2999
  %3001 = vdwg.mxu0
  %v3002 = vadd.f32 %v2542, %v2996
  %v3003 = vadd.f32 %v2546, %v3000
  %vm3004 = vcmp.ge.s32.totalorder %v1632, 12
  %vm3005 = vcmp.lt.s32.totalorder %v1632, 16
  %vm3006 = vmand %vm3004, %vm3005
  %v3007 = vsel %vm3006, 1, 0
  %v3008 = vcvt.s32.f32 %v3007
  %v3009 = vmul.f32 %v1237, %v3008
  %v3010 = vmul.f32 %v1241, %v3008
  %v3012 = vsel %vm249, %v3009, 0
  %v3015 = vsel %vm249, %v3010, 0
  %3017 = vmatpush.xpose.msra.mxu0 0.0
  %3018 = vmatpush.xpose.msra.mxu0 0.0
  %3019 = vmatpush.xpose.msra.mxu0 0.0
  %3020 = vmatpush.xpose.msra.mxu0 0.0
  %3021 = vmatpush.xpose.msra.mxu0 0.0
  %3022 = vmatpush.xpose.msra.mxu0 0.0
  %3023 = vmatpush.xpose.msra.mxu0 0.0
  %3024 = vmatpush.xpose.msra.mxu0 0.0
  %3025 = vmatpush.xpose.msra.mxu0 0.0
  %3026 = vmatpush.xpose.msra.mxu0 0.0
  %3027 = vmatpush.xpose.msra.mxu0 0.0
  %3028 = vmatpush.xpose.msra.mxu0 0.0
  %3029 = vmatpush.xpose.msra.mxu0 0.0
  %3030 = vmatpush.xpose.msra.mxu0 0.0
  %v3031 = vand.u32 %v1650, 4294901760
  %3032 = vmatpush.xpose.msra.mxu0 %v3031
  %v3033 = vand.u32 %v1647, 4294901760
  %3034 = vmatpush.xpose.msra.mxu0 %v3033
  %v3035 = vand.u32 %v3012, 4294901760
  %v3036 = vsub.f32 %v3012, %v3035
  %v3037 = vand.u32 %v3036, 4294901760
  %v3038 = vsub.f32 %v3036, %v3037
  %v3039 = vand.u32 %v3038, 4294901760
  %3040 = vmatmul.f32.gmra.mxu0 %v3039
  %v3041 = vpop.f32.mrf.mxu0
  %v3042 = vadd.f32 0.0, %v3041
  %v3043 = vand.u32 %v3015, 4294901760
  %v3044 = vsub.f32 %v3015, %v3043
  %v3045 = vand.u32 %v3044, 4294901760
  %v3046 = vsub.f32 %v3044, %v3045
  %v3047 = vand.u32 %v3046, 4294901760
  %3048 = vmatmul.f32.gmra.mxu0 %v3047
  %v3049 = vpop.f32.mrf.mxu0
  %v3050 = vadd.f32 0.0, %v3049
  %3051 = vdwg.mxu0
  %3052 = vmatpush.xpose.msra.mxu0 0.0
  %3053 = vmatpush.xpose.msra.mxu0 0.0
  %3054 = vmatpush.xpose.msra.mxu0 0.0
  %3055 = vmatpush.xpose.msra.mxu0 0.0
  %3056 = vmatpush.xpose.msra.mxu0 0.0
  %3057 = vmatpush.xpose.msra.mxu0 0.0
  %3058 = vmatpush.xpose.msra.mxu0 0.0
  %3059 = vmatpush.xpose.msra.mxu0 0.0
  %3060 = vmatpush.xpose.msra.mxu0 0.0
  %3061 = vmatpush.xpose.msra.mxu0 0.0
  %3062 = vmatpush.xpose.msra.mxu0 0.0
  %3063 = vmatpush.xpose.msra.mxu0 0.0
  %3064 = vmatpush.xpose.msra.mxu0 0.0
  %3065 = vmatpush.xpose.msra.mxu0 0.0
  %v3066 = vand.u32 %v1650, 4294901760
  %v3067 = vsub.f32 %v1650, %v3066
  %v3068 = vand.u32 %v3067, 4294901760
  %v3069 = vsub.f32 %v3067, %v3068
  %v3070 = vand.u32 %v3069, 4294901760
  %3071 = vmatpush.xpose.msra.mxu0 %v3070
  %v3072 = vand.u32 %v1647, 4294901760
  %v3073 = vsub.f32 %v1647, %v3072
  %v3074 = vand.u32 %v3073, 4294901760
  %v3075 = vsub.f32 %v3073, %v3074
  %v3076 = vand.u32 %v3075, 4294901760
  %3077 = vmatpush.xpose.msra.mxu0 %v3076
  %v3078 = vand.u32 %v3012, 4294901760
  %3079 = vmatmul.f32.gmra.mxu0 %v3078
  %v3080 = vpop.f32.mrf.mxu0
  %v3081 = vadd.f32 %v3042, %v3080
  %v3082 = vand.u32 %v3015, 4294901760
  %3083 = vmatmul.f32.gmra.mxu0 %v3082
  %v3084 = vpop.f32.mrf.mxu0
  %v3085 = vadd.f32 %v3050, %v3084
  %3086 = vdwg.mxu0
  %3087 = vmatpush.xpose.msra.mxu0 0.0
  %3088 = vmatpush.xpose.msra.mxu0 0.0
  %3089 = vmatpush.xpose.msra.mxu0 0.0
  %3090 = vmatpush.xpose.msra.mxu0 0.0
  %3091 = vmatpush.xpose.msra.mxu0 0.0
  %3092 = vmatpush.xpose.msra.mxu0 0.0
  %3093 = vmatpush.xpose.msra.mxu0 0.0
  %3094 = vmatpush.xpose.msra.mxu0 0.0
  %3095 = vmatpush.xpose.msra.mxu0 0.0
  %3096 = vmatpush.xpose.msra.mxu0 0.0
  %3097 = vmatpush.xpose.msra.mxu0 0.0
  %3098 = vmatpush.xpose.msra.mxu0 0.0
  %3099 = vmatpush.xpose.msra.mxu0 0.0
  %3100 = vmatpush.xpose.msra.mxu0 0.0
  %v3101 = vand.u32 %v1650, 4294901760
  %v3102 = vsub.f32 %v1650, %v3101
  %3103 = vmatpush.xpose.msra.mxu0 %v3102
  %v3104 = vand.u32 %v1647, 4294901760
  %v3105 = vsub.f32 %v1647, %v3104
  %3106 = vmatpush.xpose.msra.mxu0 %v3105
  %v3107 = vand.u32 %v3012, 4294901760
  %v3108 = vsub.f32 %v3012, %v3107
  %3109 = vmatmul.f32.gmra.mxu0 %v3108
  %v3110 = vpop.f32.mrf.mxu0
  %v3111 = vadd.f32 %v3081, %v3110
  %v3112 = vand.u32 %v3015, 4294901760
  %v3113 = vsub.f32 %v3015, %v3112
  %3114 = vmatmul.f32.gmra.mxu0 %v3113
  %v3115 = vpop.f32.mrf.mxu0
  %v3116 = vadd.f32 %v3085, %v3115
  %3117 = vdwg.mxu0
  %3118 = vmatpush.xpose.msra.mxu0 0.0
  %3119 = vmatpush.xpose.msra.mxu0 0.0
  %3120 = vmatpush.xpose.msra.mxu0 0.0
  %3121 = vmatpush.xpose.msra.mxu0 0.0
  %3122 = vmatpush.xpose.msra.mxu0 0.0
  %3123 = vmatpush.xpose.msra.mxu0 0.0
  %3124 = vmatpush.xpose.msra.mxu0 0.0
  %3125 = vmatpush.xpose.msra.mxu0 0.0
  %3126 = vmatpush.xpose.msra.mxu0 0.0
  %3127 = vmatpush.xpose.msra.mxu0 0.0
  %3128 = vmatpush.xpose.msra.mxu0 0.0
  %3129 = vmatpush.xpose.msra.mxu0 0.0
  %3130 = vmatpush.xpose.msra.mxu0 0.0
  %3131 = vmatpush.xpose.msra.mxu0 0.0
  %v3132 = vand.u32 %v1650, 4294901760
  %3133 = vmatpush.xpose.msra.mxu0 %v3132
  %v3134 = vand.u32 %v1647, 4294901760
  %3135 = vmatpush.xpose.msra.mxu0 %v3134
  %v3136 = vand.u32 %v3012, 4294901760
  %v3137 = vsub.f32 %v3012, %v3136
  %v3138 = vand.u32 %v3137, 4294901760
  %3139 = vmatmul.f32.gmra.mxu0 %v3138
  %v3140 = vpop.f32.mrf.mxu0
  %v3141 = vadd.f32 %v3111, %v3140
  %v3142 = vand.u32 %v3015, 4294901760
  %v3143 = vsub.f32 %v3015, %v3142
  %v3144 = vand.u32 %v3143, 4294901760
  %3145 = vmatmul.f32.gmra.mxu0 %v3144
  %v3146 = vpop.f32.mrf.mxu0
  %v3147 = vadd.f32 %v3116, %v3146
  %3148 = vdwg.mxu0
  %3149 = vmatpush.xpose.msra.mxu0 0.0
  %3150 = vmatpush.xpose.msra.mxu0 0.0
  %3151 = vmatpush.xpose.msra.mxu0 0.0
  %3152 = vmatpush.xpose.msra.mxu0 0.0
  %3153 = vmatpush.xpose.msra.mxu0 0.0
  %3154 = vmatpush.xpose.msra.mxu0 0.0
  %3155 = vmatpush.xpose.msra.mxu0 0.0
  %3156 = vmatpush.xpose.msra.mxu0 0.0
  %3157 = vmatpush.xpose.msra.mxu0 0.0
  %3158 = vmatpush.xpose.msra.mxu0 0.0
  %3159 = vmatpush.xpose.msra.mxu0 0.0
  %3160 = vmatpush.xpose.msra.mxu0 0.0
  %3161 = vmatpush.xpose.msra.mxu0 0.0
  %3162 = vmatpush.xpose.msra.mxu0 0.0
  %v3163 = vand.u32 %v1650, 4294901760
  %v3164 = vsub.f32 %v1650, %v3163
  %v3165 = vand.u32 %v3164, 4294901760
  %3166 = vmatpush.xpose.msra.mxu0 %v3165
  %v3167 = vand.u32 %v1647, 4294901760
  %v3168 = vsub.f32 %v1647, %v3167
  %v3169 = vand.u32 %v3168, 4294901760
  %3170 = vmatpush.xpose.msra.mxu0 %v3169
  %v3171 = vand.u32 %v3012, 4294901760
  %3172 = vmatmul.f32.gmra.mxu0 %v3171
  %v3173 = vpop.f32.mrf.mxu0
  %v3174 = vadd.f32 %v3141, %v3173
  %v3175 = vand.u32 %v3015, 4294901760
  %3176 = vmatmul.f32.gmra.mxu0 %v3175
  %v3177 = vpop.f32.mrf.mxu0
  %v3178 = vadd.f32 %v3147, %v3177
  %3179 = vdwg.mxu0
  %3180 = vmatpush.xpose.msra.mxu0 0.0
  %3181 = vmatpush.xpose.msra.mxu0 0.0
  %3182 = vmatpush.xpose.msra.mxu0 0.0
  %3183 = vmatpush.xpose.msra.mxu0 0.0
  %3184 = vmatpush.xpose.msra.mxu0 0.0
  %3185 = vmatpush.xpose.msra.mxu0 0.0
  %3186 = vmatpush.xpose.msra.mxu0 0.0
  %3187 = vmatpush.xpose.msra.mxu0 0.0
  %3188 = vmatpush.xpose.msra.mxu0 0.0
  %3189 = vmatpush.xpose.msra.mxu0 0.0
  %3190 = vmatpush.xpose.msra.mxu0 0.0
  %3191 = vmatpush.xpose.msra.mxu0 0.0
  %3192 = vmatpush.xpose.msra.mxu0 0.0
  %3193 = vmatpush.xpose.msra.mxu0 0.0
  %v3194 = vand.u32 %v1650, 4294901760
  %3195 = vmatpush.xpose.msra.mxu0 %v3194
  %v3196 = vand.u32 %v1647, 4294901760
  %3197 = vmatpush.xpose.msra.mxu0 %v3196
  %v3198 = vand.u32 %v3012, 4294901760
  %3199 = vmatmul.f32.gmra.mxu0 %v3198
  %v3200 = vpop.f32.mrf.mxu0
  %v3201 = vadd.f32 %v3174, %v3200
  %v3202 = vand.u32 %v3015, 4294901760
  %3203 = vmatmul.f32.gmra.mxu0 %v3202
  %v3204 = vpop.f32.mrf.mxu0
  %v3205 = vadd.f32 %v3178, %v3204
  %3206 = vdwg.mxu0
  %v3207 = vmul.f32 %v3201, 0.5
  %v3208 = vmul.f32 %v3205, 0.5
  %v3209 = vsel %vm45, %v3207, -inf
  %3210 = vmax.xlane.f32.xlu0 %v3209
  %v3211 = vpop.xlane.xlu0 %3210
  %v3212 = vsel %vm1847, %v3208, -inf
  %3213 = vmax.xlane.f32.xlu0 %v3212
  %v3214 = vpop.xlane.xlu0 %3213
  %v3215 = vsub.f32 %v3207, %v3211
  %v3216 = vsub.f32 %v3208, %v3214
  %v3217 = vmul.f32 %v3215, 1.442695
  %v3218 = vpow.pop %v3217
  %v3219 = vmul.f32 %v3216, 1.442695
  %v3220 = vpow.pop %v3219
  %v3221 = vsel %vm45, %v3218, 0.0
  %3222 = vadd.xlane.f32.xlu0 %v3221
  %v3223 = vpop.xlane.xlu0 %3222
  %v3224 = vsel %vm1847, %v3220, 0.0
  %3225 = vadd.xlane.f32.xlu0 %v3224
  %v3226 = vpop.xlane.xlu0 %3225
  %v3227 = vrcp.pop %v3223
  %v3228 = vmul.f32 %v3223, %v3227
  %v3229 = vsub.f32 1.0, %v3228
  %v3230 = vmul.f32 %v3227, %v3229
  %v3231 = vadd.f32 %v3227, %v3230
  %vm3232 = vweird.f32 %v3223
  %vm3233 = vweird.f32 %v3227
  %vm3234 = vmor %vm3232, %vm3233
  %v3235 = vsel %vm3234, %v3227, %v3231
  %v3236 = vand.u32 2147483647, %v3223
  %vm3237 = vcmp.eq.f32.partialorder %v3236, 8.507059e+37
  %v3238 = vand.u32 %v3223, 2147483648
  %v3239 = vor.u32 1.1754944e-38, %v3238
  %v3240 = vsel %vm3237, %v3239, %v3235
  %v3241 = vmul.f32 %v3218, %v3240
  %v3242 = vrcp.pop %v3226
  %v3243 = vmul.f32 %v3226, %v3242
  %v3244 = vsub.f32 1.0, %v3243
  %v3245 = vmul.f32 %v3242, %v3244
  %v3246 = vadd.f32 %v3242, %v3245
  %vm3247 = vweird.f32 %v3226
  %vm3248 = vweird.f32 %v3242
  %vm3249 = vmor %vm3247, %vm3248
  %v3250 = vsel %vm3249, %v3242, %v3246
  %v3251 = vand.u32 2147483647, %v3226
  %vm3252 = vcmp.eq.f32.partialorder %v3251, 8.507059e+37
  %v3253 = vand.u32 %v3226, 2147483648
  %v3254 = vor.u32 1.1754944e-38, %v3253
  %v3255 = vsel %vm3252, %v3254, %v3250
  %v3256 = vmul.f32 %v3220, %v3255
  %v3257 = vmul.f32 %v1625, %v3008
  %v3258 = vmul.f32 %v1629, %v3008
  %v3260 = vsel %vm45, %v3241, 0
  %v3263 = vsel %vm45, %v3256, 0
  %v3266 = vsel %vm52, %v3258, 0
  %3268 = vmatpush.msra.mxu0 0.0
  %3269 = vmatpush.msra.mxu0 0.0
  %3270 = vmatpush.msra.mxu0 0.0
  %3271 = vmatpush.msra.mxu0 0.0
  %3272 = vmatpush.msra.mxu0 0.0
  %3273 = vmatpush.msra.mxu0 0.0
  %3274 = vmatpush.msra.mxu0 0.0
  %3275 = vmatpush.msra.mxu0 0.0
  %3276 = vmatpush.msra.mxu0 0.0
  %3277 = vmatpush.msra.mxu0 0.0
  %3278 = vmatpush.msra.mxu0 0.0
  %3279 = vmatpush.msra.mxu0 0.0
  %3280 = vmatpush.msra.mxu0 0.0
  %3281 = vmatpush.msra.mxu0 0.0
  %v3282 = vand.u32 %v3266, 4294901760
  %3283 = vmatpush.msra.mxu0 %v3282
  %v3284 = vand.u32 %v3257, 4294901760
  %3285 = vmatpush.msra.mxu0 %v3284
  %v3286 = vand.u32 %v3260, 4294901760
  %v3287 = vsub.f32 %v3260, %v3286
  %v3288 = vand.u32 %v3287, 4294901760
  %v3289 = vsub.f32 %v3287, %v3288
  %v3290 = vand.u32 %v3289, 4294901760
  %3291 = vmatmul.f32.gmra.mxu0 %v3290
  %v3292 = vpop.f32.mrf.mxu0
  %v3293 = vadd.f32 0.0, %v3292
  %v3294 = vand.u32 %v3263, 4294901760
  %v3295 = vsub.f32 %v3263, %v3294
  %v3296 = vand.u32 %v3295, 4294901760
  %v3297 = vsub.f32 %v3295, %v3296
  %v3298 = vand.u32 %v3297, 4294901760
  %3299 = vmatmul.f32.gmra.mxu0 %v3298
  %v3300 = vpop.f32.mrf.mxu0
  %v3301 = vadd.f32 0.0, %v3300
  %3302 = vdwg.mxu0
  %3303 = vmatpush.msra.mxu0 0.0
  %3304 = vmatpush.msra.mxu0 0.0
  %3305 = vmatpush.msra.mxu0 0.0
  %3306 = vmatpush.msra.mxu0 0.0
  %3307 = vmatpush.msra.mxu0 0.0
  %3308 = vmatpush.msra.mxu0 0.0
  %3309 = vmatpush.msra.mxu0 0.0
  %3310 = vmatpush.msra.mxu0 0.0
  %3311 = vmatpush.msra.mxu0 0.0
  %3312 = vmatpush.msra.mxu0 0.0
  %3313 = vmatpush.msra.mxu0 0.0
  %3314 = vmatpush.msra.mxu0 0.0
  %3315 = vmatpush.msra.mxu0 0.0
  %3316 = vmatpush.msra.mxu0 0.0
  %v3317 = vand.u32 %v3266, 4294901760
  %v3318 = vsub.f32 %v3266, %v3317
  %v3319 = vand.u32 %v3318, 4294901760
  %v3320 = vsub.f32 %v3318, %v3319
  %v3321 = vand.u32 %v3320, 4294901760
  %3322 = vmatpush.msra.mxu0 %v3321
  %v3323 = vand.u32 %v3257, 4294901760
  %v3324 = vsub.f32 %v3257, %v3323
  %v3325 = vand.u32 %v3324, 4294901760
  %v3326 = vsub.f32 %v3324, %v3325
  %v3327 = vand.u32 %v3326, 4294901760
  %3328 = vmatpush.msra.mxu0 %v3327
  %v3329 = vand.u32 %v3260, 4294901760
  %3330 = vmatmul.f32.gmra.mxu0 %v3329
  %v3331 = vpop.f32.mrf.mxu0
  %v3332 = vadd.f32 %v3293, %v3331
  %v3333 = vand.u32 %v3263, 4294901760
  %3334 = vmatmul.f32.gmra.mxu0 %v3333
  %v3335 = vpop.f32.mrf.mxu0
  %v3336 = vadd.f32 %v3301, %v3335
  %3337 = vdwg.mxu0
  %3338 = vmatpush.msra.mxu0 0.0
  %3339 = vmatpush.msra.mxu0 0.0
  %3340 = vmatpush.msra.mxu0 0.0
  %3341 = vmatpush.msra.mxu0 0.0
  %3342 = vmatpush.msra.mxu0 0.0
  %3343 = vmatpush.msra.mxu0 0.0
  %3344 = vmatpush.msra.mxu0 0.0
  %3345 = vmatpush.msra.mxu0 0.0
  %3346 = vmatpush.msra.mxu0 0.0
  %3347 = vmatpush.msra.mxu0 0.0
  %3348 = vmatpush.msra.mxu0 0.0
  %3349 = vmatpush.msra.mxu0 0.0
  %3350 = vmatpush.msra.mxu0 0.0
  %3351 = vmatpush.msra.mxu0 0.0
  %v3352 = vand.u32 %v3266, 4294901760
  %v3353 = vsub.f32 %v3266, %v3352
  %3354 = vmatpush.msra.mxu0 %v3353
  %v3355 = vand.u32 %v3257, 4294901760
  %v3356 = vsub.f32 %v3257, %v3355
  %3357 = vmatpush.msra.mxu0 %v3356
  %v3358 = vand.u32 %v3260, 4294901760
  %v3359 = vsub.f32 %v3260, %v3358
  %3360 = vmatmul.f32.gmra.mxu0 %v3359
  %v3361 = vpop.f32.mrf.mxu0
  %v3362 = vadd.f32 %v3332, %v3361
  %v3363 = vand.u32 %v3263, 4294901760
  %v3364 = vsub.f32 %v3263, %v3363
  %3365 = vmatmul.f32.gmra.mxu0 %v3364
  %v3366 = vpop.f32.mrf.mxu0
  %v3367 = vadd.f32 %v3336, %v3366
  %3368 = vdwg.mxu0
  %3369 = vmatpush.msra.mxu0 0.0
  %3370 = vmatpush.msra.mxu0 0.0
  %3371 = vmatpush.msra.mxu0 0.0
  %3372 = vmatpush.msra.mxu0 0.0
  %3373 = vmatpush.msra.mxu0 0.0
  %3374 = vmatpush.msra.mxu0 0.0
  %3375 = vmatpush.msra.mxu0 0.0
  %3376 = vmatpush.msra.mxu0 0.0
  %3377 = vmatpush.msra.mxu0 0.0
  %3378 = vmatpush.msra.mxu0 0.0
  %3379 = vmatpush.msra.mxu0 0.0
  %3380 = vmatpush.msra.mxu0 0.0
  %3381 = vmatpush.msra.mxu0 0.0
  %3382 = vmatpush.msra.mxu0 0.0
  %v3383 = vand.u32 %v3266, 4294901760
  %3384 = vmatpush.msra.mxu0 %v3383
  %v3385 = vand.u32 %v3257, 4294901760
  %3386 = vmatpush.msra.mxu0 %v3385
  %v3387 = vand.u32 %v3260, 4294901760
  %v3388 = vsub.f32 %v3260, %v3387
  %v3389 = vand.u32 %v3388, 4294901760
  %3390 = vmatmul.f32.gmra.mxu0 %v3389
  %v3391 = vpop.f32.mrf.mxu0
  %v3392 = vadd.f32 %v3362, %v3391
  %v3393 = vand.u32 %v3263, 4294901760
  %v3394 = vsub.f32 %v3263, %v3393
  %v3395 = vand.u32 %v3394, 4294901760
  %3396 = vmatmul.f32.gmra.mxu0 %v3395
  %v3397 = vpop.f32.mrf.mxu0
  %v3398 = vadd.f32 %v3367, %v3397
  %3399 = vdwg.mxu0
  %3400 = vmatpush.msra.mxu0 0.0
  %3401 = vmatpush.msra.mxu0 0.0
  %3402 = vmatpush.msra.mxu0 0.0
  %3403 = vmatpush.msra.mxu0 0.0
  %3404 = vmatpush.msra.mxu0 0.0
  %3405 = vmatpush.msra.mxu0 0.0
  %3406 = vmatpush.msra.mxu0 0.0
  %3407 = vmatpush.msra.mxu0 0.0
  %3408 = vmatpush.msra.mxu0 0.0
  %3409 = vmatpush.msra.mxu0 0.0
  %3410 = vmatpush.msra.mxu0 0.0
  %3411 = vmatpush.msra.mxu0 0.0
  %3412 = vmatpush.msra.mxu0 0.0
  %3413 = vmatpush.msra.mxu0 0.0
  %v3414 = vand.u32 %v3266, 4294901760
  %v3415 = vsub.f32 %v3266, %v3414
  %v3416 = vand.u32 %v3415, 4294901760
  %3417 = vmatpush.msra.mxu0 %v3416
  %v3418 = vand.u32 %v3257, 4294901760
  %v3419 = vsub.f32 %v3257, %v3418
  %v3420 = vand.u32 %v3419, 4294901760
  %3421 = vmatpush.msra.mxu0 %v3420
  %v3422 = vand.u32 %v3260, 4294901760
  %3423 = vmatmul.f32.gmra.mxu0 %v3422
  %v3424 = vpop.f32.mrf.mxu0
  %v3425 = vadd.f32 %v3392, %v3424
  %v3426 = vand.u32 %v3263, 4294901760
  %3427 = vmatmul.f32.gmra.mxu0 %v3426
  %v3428 = vpop.f32.mrf.mxu0
  %v3429 = vadd.f32 %v3398, %v3428
  %3430 = vdwg.mxu0
  %3431 = vmatpush.msra.mxu0 0.0
  %3432 = vmatpush.msra.mxu0 0.0
  %3433 = vmatpush.msra.mxu0 0.0
  %3434 = vmatpush.msra.mxu0 0.0
  %3435 = vmatpush.msra.mxu0 0.0
  %3436 = vmatpush.msra.mxu0 0.0
  %3437 = vmatpush.msra.mxu0 0.0
  %3438 = vmatpush.msra.mxu0 0.0
  %3439 = vmatpush.msra.mxu0 0.0
  %3440 = vmatpush.msra.mxu0 0.0
  %3441 = vmatpush.msra.mxu0 0.0
  %3442 = vmatpush.msra.mxu0 0.0
  %3443 = vmatpush.msra.mxu0 0.0
  %3444 = vmatpush.msra.mxu0 0.0
  %v3445 = vand.u32 %v3266, 4294901760
  %3446 = vmatpush.msra.mxu0 %v3445
  %v3447 = vand.u32 %v3257, 4294901760
  %3448 = vmatpush.msra.mxu0 %v3447
  %v3449 = vand.u32 %v3260, 4294901760
  %3450 = vmatmul.f32.gmra.mxu0 %v3449
  %v3451 = vpop.f32.mrf.mxu0
  %v3452 = vadd.f32 %v3425, %v3451
  %v3453 = vand.u32 %v3263, 4294901760
  %3454 = vmatmul.f32.gmra.mxu0 %v3453
  %v3455 = vpop.f32.mrf.mxu0
  %v3456 = vadd.f32 %v3429, %v3455
  %3457 = vdwg.mxu0
  %v3458 = vadd.f32 %v3002, %v3452
  %v3459 = vadd.f32 %v3003, %v3456
  %s3460 = scalar_lea.vmem %s2, 96
  %v3461 = vld [vmem:[%s3460] sm:$0xff]
  %v3462 = vld [vmem:[%s3460 + $0x8] sm:$0xff]
  %v3463 = vperm.slane %v37, 6
  %v3465 = vsel %vm249, %v3458, 0
  %v3468 = vsel %vm249, %v3459, 0
  %3470 = vmatpush.msra.mxu0 0.0
  %3471 = vmatpush.msra.mxu0 0.0
  %3472 = vmatpush.msra.mxu0 0.0
  %3473 = vmatpush.msra.mxu0 0.0
  %3474 = vmatpush.msra.mxu0 0.0
  %3475 = vmatpush.msra.mxu0 0.0
  %3476 = vmatpush.msra.mxu0 0.0
  %3477 = vmatpush.msra.mxu0 0.0
  %3478 = vmatpush.msra.mxu0 0.0
  %3479 = vmatpush.msra.mxu0 0.0
  %3480 = vmatpush.msra.mxu0 0.0
  %3481 = vmatpush.msra.mxu0 0.0
  %3482 = vmatpush.msra.mxu0 0.0
  %3483 = vmatpush.msra.mxu0 0.0
  %v3484 = vand.u32 %v3462, 4294901760
  %3485 = vmatpush.msra.mxu0 %v3484
  %v3486 = vand.u32 %v3461, 4294901760
  %3487 = vmatpush.msra.mxu0 %v3486
  %v3488 = vand.u32 %v3465, 4294901760
  %v3489 = vsub.f32 %v3465, %v3488
  %v3490 = vand.u32 %v3489, 4294901760
  %v3491 = vsub.f32 %v3489, %v3490
  %v3492 = vand.u32 %v3491, 4294901760
  %3493 = vmatmul.f32.gmra.mxu0 %v3492
  %v3494 = vpop.f32.mrf.mxu0
  %v3495 = vadd.f32 %v3463, %v3494
  %v3496 = vand.u32 %v3468, 4294901760
  %v3497 = vsub.f32 %v3468, %v3496
  %v3498 = vand.u32 %v3497, 4294901760
  %v3499 = vsub.f32 %v3497, %v3498
  %v3500 = vand.u32 %v3499, 4294901760
  %3501 = vmatmul.f32.gmra.mxu0 %v3500
  %v3502 = vpop.f32.mrf.mxu0
  %v3503 = vadd.f32 %v3463, %v3502
  %3504 = vdwg.mxu0
  %3505 = vmatpush.msra.mxu0 0.0
  %3506 = vmatpush.msra.mxu0 0.0
  %3507 = vmatpush.msra.mxu0 0.0
  %3508 = vmatpush.msra.mxu0 0.0
  %3509 = vmatpush.msra.mxu0 0.0
  %3510 = vmatpush.msra.mxu0 0.0
  %3511 = vmatpush.msra.mxu0 0.0
  %3512 = vmatpush.msra.mxu0 0.0
  %3513 = vmatpush.msra.mxu0 0.0
  %3514 = vmatpush.msra.mxu0 0.0
  %3515 = vmatpush.msra.mxu0 0.0
  %3516 = vmatpush.msra.mxu0 0.0
  %3517 = vmatpush.msra.mxu0 0.0
  %3518 = vmatpush.msra.mxu0 0.0
  %v3519 = vand.u32 %v3462, 4294901760
  %v3520 = vsub.f32 %v3462, %v3519
  %v3521 = vand.u32 %v3520, 4294901760
  %v3522 = vsub.f32 %v3520, %v3521
  %v3523 = vand.u32 %v3522, 4294901760
  %3524 = vmatpush.msra.mxu0 %v3523
  %v3525 = vand.u32 %v3461, 4294901760
  %v3526 = vsub.f32 %v3461, %v3525
  %v3527 = vand.u32 %v3526, 4294901760
  %v3528 = vsub.f32 %v3526, %v3527
  %v3529 = vand.u32 %v3528, 4294901760
  %3530 = vmatpush.msra.mxu0 %v3529
  %v3531 = vand.u32 %v3465, 4294901760
  %3532 = vmatmul.f32.gmra.mxu0 %v3531
  %v3533 = vpop.f32.mrf.mxu0
  %v3534 = vadd.f32 %v3495, %v3533
  %v3535 = vand.u32 %v3468, 4294901760
  %3536 = vmatmul.f32.gmra.mxu0 %v3535
  %v3537 = vpop.f32.mrf.mxu0
  %v3538 = vadd.f32 %v3503, %v3537
  %3539 = vdwg.mxu0
  %3540 = vmatpush.msra.mxu0 0.0
  %3541 = vmatpush.msra.mxu0 0.0
  %3542 = vmatpush.msra.mxu0 0.0
  %3543 = vmatpush.msra.mxu0 0.0
  %3544 = vmatpush.msra.mxu0 0.0
  %3545 = vmatpush.msra.mxu0 0.0
  %3546 = vmatpush.msra.mxu0 0.0
  %3547 = vmatpush.msra.mxu0 0.0
  %3548 = vmatpush.msra.mxu0 0.0
  %3549 = vmatpush.msra.mxu0 0.0
  %3550 = vmatpush.msra.mxu0 0.0
  %3551 = vmatpush.msra.mxu0 0.0
  %3552 = vmatpush.msra.mxu0 0.0
  %3553 = vmatpush.msra.mxu0 0.0
  %v3554 = vand.u32 %v3462, 4294901760
  %v3555 = vsub.f32 %v3462, %v3554
  %3556 = vmatpush.msra.mxu0 %v3555
  %v3557 = vand.u32 %v3461, 4294901760
  %v3558 = vsub.f32 %v3461, %v3557
  %3559 = vmatpush.msra.mxu0 %v3558
  %v3560 = vand.u32 %v3465, 4294901760
  %v3561 = vsub.f32 %v3465, %v3560
  %3562 = vmatmul.f32.gmra.mxu0 %v3561
  %v3563 = vpop.f32.mrf.mxu0
  %v3564 = vadd.f32 %v3534, %v3563
  %v3565 = vand.u32 %v3468, 4294901760
  %v3566 = vsub.f32 %v3468, %v3565
  %3567 = vmatmul.f32.gmra.mxu0 %v3566
  %v3568 = vpop.f32.mrf.mxu0
  %v3569 = vadd.f32 %v3538, %v3568
  %3570 = vdwg.mxu0
  %3571 = vmatpush.msra.mxu0 0.0
  %3572 = vmatpush.msra.mxu0 0.0
  %3573 = vmatpush.msra.mxu0 0.0
  %3574 = vmatpush.msra.mxu0 0.0
  %3575 = vmatpush.msra.mxu0 0.0
  %3576 = vmatpush.msra.mxu0 0.0
  %3577 = vmatpush.msra.mxu0 0.0
  %3578 = vmatpush.msra.mxu0 0.0
  %3579 = vmatpush.msra.mxu0 0.0
  %3580 = vmatpush.msra.mxu0 0.0
  %3581 = vmatpush.msra.mxu0 0.0
  %3582 = vmatpush.msra.mxu0 0.0
  %3583 = vmatpush.msra.mxu0 0.0
  %3584 = vmatpush.msra.mxu0 0.0
  %v3585 = vand.u32 %v3462, 4294901760
  %3586 = vmatpush.msra.mxu0 %v3585
  %v3587 = vand.u32 %v3461, 4294901760
  %3588 = vmatpush.msra.mxu0 %v3587
  %v3589 = vand.u32 %v3465, 4294901760
  %v3590 = vsub.f32 %v3465, %v3589
  %v3591 = vand.u32 %v3590, 4294901760
  %3592 = vmatmul.f32.gmra.mxu0 %v3591
  %v3593 = vpop.f32.mrf.mxu0
  %v3594 = vadd.f32 %v3564, %v3593
  %v3595 = vand.u32 %v3468, 4294901760
  %v3596 = vsub.f32 %v3468, %v3595
  %v3597 = vand.u32 %v3596, 4294901760
  %3598 = vmatmul.f32.gmra.mxu0 %v3597
  %v3599 = vpop.f32.mrf.mxu0
  %v3600 = vadd.f32 %v3569, %v3599
  %3601 = vdwg.mxu0
  %3602 = vmatpush.msra.mxu0 0.0
  %3603 = vmatpush.msra.mxu0 0.0
  %3604 = vmatpush.msra.mxu0 0.0
  %3605 = vmatpush.msra.mxu0 0.0
  %3606 = vmatpush.msra.mxu0 0.0
  %3607 = vmatpush.msra.mxu0 0.0
  %3608 = vmatpush.msra.mxu0 0.0
  %3609 = vmatpush.msra.mxu0 0.0
  %3610 = vmatpush.msra.mxu0 0.0
  %3611 = vmatpush.msra.mxu0 0.0
  %3612 = vmatpush.msra.mxu0 0.0
  %3613 = vmatpush.msra.mxu0 0.0
  %3614 = vmatpush.msra.mxu0 0.0
  %3615 = vmatpush.msra.mxu0 0.0
  %v3616 = vand.u32 %v3462, 4294901760
  %v3617 = vsub.f32 %v3462, %v3616
  %v3618 = vand.u32 %v3617, 4294901760
  %3619 = vmatpush.msra.mxu0 %v3618
  %v3620 = vand.u32 %v3461, 4294901760
  %v3621 = vsub.f32 %v3461, %v3620
  %v3622 = vand.u32 %v3621, 4294901760
  %3623 = vmatpush.msra.mxu0 %v3622
  %v3624 = vand.u32 %v3465, 4294901760
  %3625 = vmatmul.f32.gmra.mxu0 %v3624
  %v3626 = vpop.f32.mrf.mxu0
  %v3627 = vadd.f32 %v3594, %v3626
  %v3628 = vand.u32 %v3468, 4294901760
  %3629 = vmatmul.f32.gmra.mxu0 %v3628
  %v3630 = vpop.f32.mrf.mxu0
  %v3631 = vadd.f32 %v3600, %v3630
  %3632 = vdwg.mxu0
  %3633 = vmatpush.msra.mxu0 0.0
  %3634 = vmatpush.msra.mxu0 0.0
  %3635 = vmatpush.msra.mxu0 0.0
  %3636 = vmatpush.msra.mxu0 0.0
  %3637 = vmatpush.msra.mxu0 0.0
  %3638 = vmatpush.msra.mxu0 0.0
  %3639 = vmatpush.msra.mxu0 0.0
  %3640 = vmatpush.msra.mxu0 0.0
  %3641 = vmatpush.msra.mxu0 0.0
  %3642 = vmatpush.msra.mxu0 0.0
  %3643 = vmatpush.msra.mxu0 0.0
  %3644 = vmatpush.msra.mxu0 0.0
  %3645 = vmatpush.msra.mxu0 0.0
  %3646 = vmatpush.msra.mxu0 0.0
  %v3647 = vand.u32 %v3462, 4294901760
  %3648 = vmatpush.msra.mxu0 %v3647
  %v3649 = vand.u32 %v3461, 4294901760
  %3650 = vmatpush.msra.mxu0 %v3649
  %v3651 = vand.u32 %v3465, 4294901760
  %3652 = vmatmul.f32.gmra.mxu0 %v3651
  %v3653 = vpop.f32.mrf.mxu0
  %v3654 = vadd.f32 %v3627, %v3653
  %v3655 = vand.u32 %v3468, 4294901760
  %3656 = vmatmul.f32.gmra.mxu0 %v3655
  %v3657 = vpop.f32.mrf.mxu0
  %v3658 = vadd.f32 %v3631, %v3657
  %3659 = vdwg.mxu0
  %v3660 = vadd.f32 %v3654, %v41
  %v3661 = vadd.f32 %v3658, %v42
  %v3662 = vperm.slane %v37, 7
  %v3663 = vmul.f32 %v3660, %v3662
  %v3664 = vmul.f32 %v3661, %v3662
  %v3665 = vperm.slane %v38, 0
  %v3666 = vadd.f32 %v3663, %v3665
  %v3667 = vadd.f32 %v3664, %v3665
  %v3668 = vadd.f32 %v1047, %v3666
  %v3669 = vadd.f32 %v1048, %v3667
  %v3670 = vld [vmem:[%s3] sm:$0xff]
  %v3671 = vld [vmem:[%s3 + $0x8] sm:$0xff]
  %v3672 = vperm.slane %v38, 1
  %v3674 = vsel %vm249, %v3668, 0
  %v3677 = vsel %vm249, %v3669, 0
  %3679 = vmatpush.msra.mxu0 0.0
  %3680 = vmatpush.msra.mxu0 0.0
  %3681 = vmatpush.msra.mxu0 0.0
  %3682 = vmatpush.msra.mxu0 0.0
  %3683 = vmatpush.msra.mxu0 0.0
  %3684 = vmatpush.msra.mxu0 0.0
  %3685 = vmatpush.msra.mxu0 0.0
  %3686 = vmatpush.msra.mxu0 0.0
  %3687 = vmatpush.msra.mxu0 0.0
  %3688 = vmatpush.msra.mxu0 0.0
  %3689 = vmatpush.msra.mxu0 0.0
  %3690 = vmatpush.msra.mxu0 0.0
  %3691 = vmatpush.msra.mxu0 0.0
  %3692 = vmatpush.msra.mxu0 0.0
  %v3693 = vand.u32 %v3671, 4294901760
  %3694 = vmatpush.msra.mxu0 %v3693
  %v3695 = vand.u32 %v3670, 4294901760
  %3696 = vmatpush.msra.mxu0 %v3695
  %v3697 = vand.u32 %v3674, 4294901760
  %v3698 = vsub.f32 %v3674, %v3697
  %v3699 = vand.u32 %v3698, 4294901760
  %v3700 = vsub.f32 %v3698, %v3699
  %v3701 = vand.u32 %v3700, 4294901760
  %3702 = vmatmul.f32.gmra.mxu0 %v3701
  %v3703 = vpop.f32.mrf.mxu0
  %v3704 = vadd.f32 %v3672, %v3703
  %v3705 = vand.u32 %v3677, 4294901760
  %v3706 = vsub.f32 %v3677, %v3705
  %v3707 = vand.u32 %v3706, 4294901760
  %v3708 = vsub.f32 %v3706, %v3707
  %v3709 = vand.u32 %v3708, 4294901760
  %3710 = vmatmul.f32.gmra.mxu0 %v3709
  %v3711 = vpop.f32.mrf.mxu0
  %v3712 = vadd.f32 %v3672, %v3711
  %3713 = vdwg.mxu0
  %3714 = vmatpush.msra.mxu0 0.0
  %3715 = vmatpush.msra.mxu0 0.0
  %3716 = vmatpush.msra.mxu0 0.0
  %3717 = vmatpush.msra.mxu0 0.0
  %3718 = vmatpush.msra.mxu0 0.0
  %3719 = vmatpush.msra.mxu0 0.0
  %3720 = vmatpush.msra.mxu0 0.0
  %3721 = vmatpush.msra.mxu0 0.0
  %3722 = vmatpush.msra.mxu0 0.0
  %3723 = vmatpush.msra.mxu0 0.0
  %3724 = vmatpush.msra.mxu0 0.0
  %3725 = vmatpush.msra.mxu0 0.0
  %3726 = vmatpush.msra.mxu0 0.0
  %3727 = vmatpush.msra.mxu0 0.0
  %v3728 = vand.u32 %v3671, 4294901760
  %v3729 = vsub.f32 %v3671, %v3728
  %v3730 = vand.u32 %v3729, 4294901760
  %v3731 = vsub.f32 %v3729, %v3730
  %v3732 = vand.u32 %v3731, 4294901760
  %3733 = vmatpush.msra.mxu0 %v3732
  %v3734 = vand.u32 %v3670, 4294901760
  %v3735 = vsub.f32 %v3670, %v3734
  %v3736 = vand.u32 %v3735, 4294901760
  %v3737 = vsub.f32 %v3735, %v3736
  %v3738 = vand.u32 %v3737, 4294901760
  %3739 = vmatpush.msra.mxu0 %v3738
  %v3740 = vand.u32 %v3674, 4294901760
  %3741 = vmatmul.f32.gmra.mxu0 %v3740
  %v3742 = vpop.f32.mrf.mxu0
  %v3743 = vadd.f32 %v3704, %v3742
  %v3744 = vand.u32 %v3677, 4294901760
  %3745 = vmatmul.f32.gmra.mxu0 %v3744
  %v3746 = vpop.f32.mrf.mxu0
  %v3747 = vadd.f32 %v3712, %v3746
  %3748 = vdwg.mxu0
  %3749 = vmatpush.msra.mxu0 0.0
  %3750 = vmatpush.msra.mxu0 0.0
  %3751 = vmatpush.msra.mxu0 0.0
  %3752 = vmatpush.msra.mxu0 0.0
  %3753 = vmatpush.msra.mxu0 0.0
  %3754 = vmatpush.msra.mxu0 0.0
  %3755 = vmatpush.msra.mxu0 0.0
  %3756 = vmatpush.msra.mxu0 0.0
  %3757 = vmatpush.msra.mxu0 0.0
  %3758 = vmatpush.msra.mxu0 0.0
  %3759 = vmatpush.msra.mxu0 0.0
  %3760 = vmatpush.msra.mxu0 0.0
  %3761 = vmatpush.msra.mxu0 0.0
  %3762 = vmatpush.msra.mxu0 0.0
  %v3763 = vand.u32 %v3671, 4294901760
  %v3764 = vsub.f32 %v3671, %v3763
  %3765 = vmatpush.msra.mxu0 %v3764
  %v3766 = vand.u32 %v3670, 4294901760
  %v3767 = vsub.f32 %v3670, %v3766
  %3768 = vmatpush.msra.mxu0 %v3767
  %v3769 = vand.u32 %v3674, 4294901760
  %v3770 = vsub.f32 %v3674, %v3769
  %3771 = vmatmul.f32.gmra.mxu0 %v3770
  %v3772 = vpop.f32.mrf.mxu0
  %v3773 = vadd.f32 %v3743, %v3772
  %v3774 = vand.u32 %v3677, 4294901760
  %v3775 = vsub.f32 %v3677, %v3774
  %3776 = vmatmul.f32.gmra.mxu0 %v3775
  %v3777 = vpop.f32.mrf.mxu0
  %v3778 = vadd.f32 %v3747, %v3777
  %3779 = vdwg.mxu0
  %3780 = vmatpush.msra.mxu0 0.0
  %3781 = vmatpush.msra.mxu0 0.0
  %3782 = vmatpush.msra.mxu0 0.0
  %3783 = vmatpush.msra.mxu0 0.0
  %3784 = vmatpush.msra.mxu0 0.0
  %3785 = vmatpush.msra.mxu0 0.0
  %3786 = vmatpush.msra.mxu0 0.0
  %3787 = vmatpush.msra.mxu0 0.0
  %3788 = vmatpush.msra.mxu0 0.0
  %3789 = vmatpush.msra.mxu0 0.0
  %3790 = vmatpush.msra.mxu0 0.0
  %3791 = vmatpush.msra.mxu0 0.0
  %3792 = vmatpush.msra.mxu0 0.0
  %3793 = vmatpush.msra.mxu0 0.0
  %v3794 = vand.u32 %v3671, 4294901760
  %3795 = vmatpush.msra.mxu0 %v3794
  %v3796 = vand.u32 %v3670, 4294901760
  %3797 = vmatpush.msra.mxu0 %v3796
  %v3798 = vand.u32 %v3674, 4294901760
  %v3799 = vsub.f32 %v3674, %v3798
  %v3800 = vand.u32 %v3799, 4294901760
  %3801 = vmatmul.f32.gmra.mxu0 %v3800
  %v3802 = vpop.f32.mrf.mxu0
  %v3803 = vadd.f32 %v3773, %v3802
  %v3804 = vand.u32 %v3677, 4294901760
  %v3805 = vsub.f32 %v3677, %v3804
  %v3806 = vand.u32 %v3805, 4294901760
  %3807 = vmatmul.f32.gmra.mxu0 %v3806
  %v3808 = vpop.f32.mrf.mxu0
  %v3809 = vadd.f32 %v3778, %v3808
  %3810 = vdwg.mxu0
  %3811 = vmatpush.msra.mxu0 0.0
  %3812 = vmatpush.msra.mxu0 0.0
  %3813 = vmatpush.msra.mxu0 0.0
  %3814 = vmatpush.msra.mxu0 0.0
  %3815 = vmatpush.msra.mxu0 0.0
  %3816 = vmatpush.msra.mxu0 0.0
  %3817 = vmatpush.msra.mxu0 0.0
  %3818 = vmatpush.msra.mxu0 0.0
  %3819 = vmatpush.msra.mxu0 0.0
  %3820 = vmatpush.msra.mxu0 0.0
  %3821 = vmatpush.msra.mxu0 0.0
  %3822 = vmatpush.msra.mxu0 0.0
  %3823 = vmatpush.msra.mxu0 0.0
  %3824 = vmatpush.msra.mxu0 0.0
  %v3825 = vand.u32 %v3671, 4294901760
  %v3826 = vsub.f32 %v3671, %v3825
  %v3827 = vand.u32 %v3826, 4294901760
  %3828 = vmatpush.msra.mxu0 %v3827
  %v3829 = vand.u32 %v3670, 4294901760
  %v3830 = vsub.f32 %v3670, %v3829
  %v3831 = vand.u32 %v3830, 4294901760
  %3832 = vmatpush.msra.mxu0 %v3831
  %v3833 = vand.u32 %v3674, 4294901760
  %3834 = vmatmul.f32.gmra.mxu0 %v3833
  %v3835 = vpop.f32.mrf.mxu0
  %v3836 = vadd.f32 %v3803, %v3835
  %v3837 = vand.u32 %v3677, 4294901760
  %3838 = vmatmul.f32.gmra.mxu0 %v3837
  %v3839 = vpop.f32.mrf.mxu0
  %v3840 = vadd.f32 %v3809, %v3839
  %3841 = vdwg.mxu0
  %3842 = vmatpush.msra.mxu0 0.0
  %3843 = vmatpush.msra.mxu0 0.0
  %3844 = vmatpush.msra.mxu0 0.0
  %3845 = vmatpush.msra.mxu0 0.0
  %3846 = vmatpush.msra.mxu0 0.0
  %3847 = vmatpush.msra.mxu0 0.0
  %3848 = vmatpush.msra.mxu0 0.0
  %3849 = vmatpush.msra.mxu0 0.0
  %3850 = vmatpush.msra.mxu0 0.0
  %3851 = vmatpush.msra.mxu0 0.0
  %3852 = vmatpush.msra.mxu0 0.0
  %3853 = vmatpush.msra.mxu0 0.0
  %3854 = vmatpush.msra.mxu0 0.0
  %3855 = vmatpush.msra.mxu0 0.0
  %v3856 = vand.u32 %v3671, 4294901760
  %3857 = vmatpush.msra.mxu0 %v3856
  %v3858 = vand.u32 %v3670, 4294901760
  %3859 = vmatpush.msra.mxu0 %v3858
  %v3860 = vand.u32 %v3674, 4294901760
  %3861 = vmatmul.f32.gmra.mxu0 %v3860
  %v3862 = vpop.f32.mrf.mxu0
  %v3863 = vadd.f32 %v3836, %v3862
  %v3864 = vand.u32 %v3677, 4294901760
  %3865 = vmatmul.f32.gmra.mxu0 %v3864
  %v3866 = vpop.f32.mrf.mxu0
  %v3867 = vadd.f32 %v3840, %v3866
  %3868 = vdwg.mxu0
  %v3869 = vmax.f32 %v3863, 0.0
  %v3870 = vmax.f32 %v3867, 0.0
  %v3871 = vld [vmem:[%s4] sm:$0xff]
  %v3872 = vld [vmem:[%s4 + $0x8] sm:$0xff]
  %v3873 = vld [vmem:[%s4 + $0x10] sm:$0xff]
  %v3874 = vld [vmem:[%s4 + $0x18] sm:$0xff]
  %v3875 = vperm.slane %v38, 2
  %vm3876 = vcmask 261120
  %v3878 = vsel %vm3876, %v3869, 0
  %v3881 = vsel %vm3876, %v3870, 0
  %3883 = vmatpush.msra.mxu0 0.0
  %3884 = vmatpush.msra.mxu0 0.0
  %3885 = vmatpush.msra.mxu0 0.0
  %3886 = vmatpush.msra.mxu0 0.0
  %3887 = vmatpush.msra.mxu0 0.0
  %3888 = vmatpush.msra.mxu0 0.0
  %3889 = vmatpush.msra.mxu0 0.0
  %3890 = vmatpush.msra.mxu0 0.0
  %3891 = vmatpush.msra.mxu0 0.0
  %3892 = vmatpush.msra.mxu0 0.0
  %3893 = vmatpush.msra.mxu0 0.0
  %3894 = vmatpush.msra.mxu0 0.0
  %v3895 = vand.u32 %v3874, 4294901760
  %3896 = vmatpush.msra.mxu0 %v3895
  %v3897 = vand.u32 %v3873, 4294901760
  %3898 = vmatpush.msra.mxu0 %v3897
  %v3899 = vand.u32 %v3872, 4294901760
  %3900 = vmatpush.msra.mxu0 %v3899
  %v3901 = vand.u32 %v3871, 4294901760
  %3902 = vmatpush.msra.mxu0 %v3901
  %v3903 = vand.u32 %v3878, 4294901760
  %v3904 = vsub.f32 %v3878, %v3903
  %v3905 = vand.u32 %v3904, 4294901760
  %v3906 = vsub.f32 %v3904, %v3905
  %v3907 = vand.u32 %v3906, 4294901760
  %3908 = vmatmul.f32.gmra.mxu0 %v3907
  %v3909 = vpop.f32.mrf.mxu0
  %v3910 = vadd.f32 %v3875, %v3909
  %v3911 = vand.u32 %v3881, 4294901760
  %v3912 = vsub.f32 %v3881, %v3911
  %v3913 = vand.u32 %v3912, 4294901760
  %v3914 = vsub.f32 %v3912, %v3913
  %v3915 = vand.u32 %v3914, 4294901760
  %3916 = vmatmul.f32.gmra.mxu0 %v3915
  %v3917 = vpop.f32.mrf.mxu0
  %v3918 = vadd.f32 %v3875, %v3917
  %3919 = vdwg.mxu0
  %3920 = vmatpush.msra.mxu0 0.0
  %3921 = vmatpush.msra.mxu0 0.0
  %3922 = vmatpush.msra.mxu0 0.0
  %3923 = vmatpush.msra.mxu0 0.0
  %3924 = vmatpush.msra.mxu0 0.0
  %3925 = vmatpush.msra.mxu0 0.0
  %3926 = vmatpush.msra.mxu0 0.0
  %3927 = vmatpush.msra.mxu0 0.0
  %3928 = vmatpush.msra.mxu0 0.0
  %3929 = vmatpush.msra.mxu0 0.0
  %3930 = vmatpush.msra.mxu0 0.0
  %3931 = vmatpush.msra.mxu0 0.0
  %v3932 = vand.u32 %v3874, 4294901760
  %v3933 = vsub.f32 %v3874, %v3932
  %v3934 = vand.u32 %v3933, 4294901760
  %v3935 = vsub.f32 %v3933, %v3934
  %v3936 = vand.u32 %v3935, 4294901760
  %3937 = vmatpush.msra.mxu0 %v3936
  %v3938 = vand.u32 %v3873, 4294901760
  %v3939 = vsub.f32 %v3873, %v3938
  %v3940 = vand.u32 %v3939, 4294901760
  %v3941 = vsub.f32 %v3939, %v3940
  %v3942 = vand.u32 %v3941, 4294901760
  %3943 = vmatpush.msra.mxu0 %v3942
  %v3944 = vand.u32 %v3872, 4294901760
  %v3945 = vsub.f32 %v3872, %v3944
  %v3946 = vand.u32 %v3945, 4294901760
  %v3947 = vsub.f32 %v3945, %v3946
  %v3948 = vand.u32 %v3947, 4294901760
  %3949 = vmatpush.msra.mxu0 %v3948
  %v3950 = vand.u32 %v3871, 4294901760
  %v3951 = vsub.f32 %v3871, %v3950
  %v3952 = vand.u32 %v3951, 4294901760
  %v3953 = vsub.f32 %v3951, %v3952
  %v3954 = vand.u32 %v3953, 4294901760
  %3955 = vmatpush.msra.mxu0 %v3954
  %v3956 = vand.u32 %v3878, 4294901760
  %3957 = vmatmul.f32.gmra.mxu0 %v3956
  %v3958 = vpop.f32.mrf.mxu0
  %v3959 = vadd.f32 %v3910, %v3958
  %v3960 = vand.u32 %v3881, 4294901760
  %3961 = vmatmul.f32.gmra.mxu0 %v3960
  %v3962 = vpop.f32.mrf.mxu0
  %v3963 = vadd.f32 %v3918, %v3962
  %3964 = vdwg.mxu0
  %3965 = vmatpush.msra.mxu0 0.0
  %3966 = vmatpush.msra.mxu0 0.0
  %3967 = vmatpush.msra.mxu0 0.0
  %3968 = vmatpush.msra.mxu0 0.0
  %3969 = vmatpush.msra.mxu0 0.0
  %3970 = vmatpush.msra.mxu0 0.0
  %3971 = vmatpush.msra.mxu0 0.0
  %3972 = vmatpush.msra.mxu0 0.0
  %3973 = vmatpush.msra.mxu0 0.0
  %3974 = vmatpush.msra.mxu0 0.0
  %3975 = vmatpush.msra.mxu0 0.0
  %3976 = vmatpush.msra.mxu0 0.0
  %v3977 = vand.u32 %v3874, 4294901760
  %v3978 = vsub.f32 %v3874, %v3977
  %3979 = vmatpush.msra.mxu0 %v3978
  %v3980 = vand.u32 %v3873, 4294901760
  %v3981 = vsub.f32 %v3873, %v3980
  %3982 = vmatpush.msra.mxu0 %v3981
  %v3983 = vand.u32 %v3872, 4294901760
  %v3984 = vsub.f32 %v3872, %v3983
  %3985 = vmatpush.msra.mxu0 %v3984
  %v3986 = vand.u32 %v3871, 4294901760
  %v3987 = vsub.f32 %v3871, %v3986
  %3988 = vmatpush.msra.mxu0 %v3987
  %v3989 = vand.u32 %v3878, 4294901760
  %v3990 = vsub.f32 %v3878, %v3989
  %3991 = vmatmul.f32.gmra.mxu0 %v3990
  %v3992 = vpop.f32.mrf.mxu0
  %v3993 = vadd.f32 %v3959, %v3992
  %v3994 = vand.u32 %v3881, 4294901760
  %v3995 = vsub.f32 %v3881, %v3994
  %3996 = vmatmul.f32.gmra.mxu0 %v3995
  %v3997 = vpop.f32.mrf.mxu0
  %v3998 = vadd.f32 %v3963, %v3997
  %3999 = vdwg.mxu0
  %4000 = vmatpush.msra.mxu0 0.0
  %4001 = vmatpush.msra.mxu0 0.0
  %4002 = vmatpush.msra.mxu0 0.0
  %4003 = vmatpush.msra.mxu0 0.0
  %4004 = vmatpush.msra.mxu0 0.0
  %4005 = vmatpush.msra.mxu0 0.0
  %4006 = vmatpush.msra.mxu0 0.0
  %4007 = vmatpush.msra.mxu0 0.0
  %4008 = vmatpush.msra.mxu0 0.0
  %4009 = vmatpush.msra.mxu0 0.0
  %4010 = vmatpush.msra.mxu0 0.0
  %4011 = vmatpush.msra.mxu0 0.0
  %v4012 = vand.u32 %v3874, 4294901760
  %4013 = vmatpush.msra.mxu0 %v4012
  %v4014 = vand.u32 %v3873, 4294901760
  %4015 = vmatpush.msra.mxu0 %v4014
  %v4016 = vand.u32 %v3872, 4294901760
  %4017 = vmatpush.msra.mxu0 %v4016
  %v4018 = vand.u32 %v3871, 4294901760
  %4019 = vmatpush.msra.mxu0 %v4018
  %v4020 = vand.u32 %v3878, 4294901760
  %v4021 = vsub.f32 %v3878, %v4020
  %v4022 = vand.u32 %v4021, 4294901760
  %4023 = vmatmul.f32.gmra.mxu0 %v4022
  %v4024 = vpop.f32.mrf.mxu0
  %v4025 = vadd.f32 %v3993, %v4024
  %v4026 = vand.u32 %v3881, 4294901760
  %v4027 = vsub.f32 %v3881, %v4026
  %v4028 = vand.u32 %v4027, 4294901760
  %4029 = vmatmul.f32.gmra.mxu0 %v4028
  %v4030 = vpop.f32.mrf.mxu0
  %v4031 = vadd.f32 %v3998, %v4030
  %4032 = vdwg.mxu0
  %4033 = vmatpush.msra.mxu0 0.0
  %4034 = vmatpush.msra.mxu0 0.0
  %4035 = vmatpush.msra.mxu0 0.0
  %4036 = vmatpush.msra.mxu0 0.0
  %4037 = vmatpush.msra.mxu0 0.0
  %4038 = vmatpush.msra.mxu0 0.0
  %4039 = vmatpush.msra.mxu0 0.0
  %4040 = vmatpush.msra.mxu0 0.0
  %4041 = vmatpush.msra.mxu0 0.0
  %4042 = vmatpush.msra.mxu0 0.0
  %4043 = vmatpush.msra.mxu0 0.0
  %4044 = vmatpush.msra.mxu0 0.0
  %v4045 = vand.u32 %v3874, 4294901760
  %v4046 = vsub.f32 %v3874, %v4045
  %v4047 = vand.u32 %v4046, 4294901760
  %4048 = vmatpush.msra.mxu0 %v4047
  %v4049 = vand.u32 %v3873, 4294901760
  %v4050 = vsub.f32 %v3873, %v4049
  %v4051 = vand.u32 %v4050, 4294901760
  %4052 = vmatpush.msra.mxu0 %v4051
  %v4053 = vand.u32 %v3872, 4294901760
  %v4054 = vsub.f32 %v3872, %v4053
  %v4055 = vand.u32 %v4054, 4294901760
  %4056 = vmatpush.msra.mxu0 %v4055
  %v4057 = vand.u32 %v3871, 4294901760
  %v4058 = vsub.f32 %v3871, %v4057
  %v4059 = vand.u32 %v4058, 4294901760
  %4060 = vmatpush.msra.mxu0 %v4059
  %v4061 = vand.u32 %v3878, 4294901760
  %4062 = vmatmul.f32.gmra.mxu0 %v4061
  %v4063 = vpop.f32.mrf.mxu0
  %v4064 = vadd.f32 %v4025, %v4063
  %v4065 = vand.u32 %v3881, 4294901760
  %4066 = vmatmul.f32.gmra.mxu0 %v4065
  %v4067 = vpop.f32.mrf.mxu0
  %v4068 = vadd.f32 %v4031, %v4067
  %4069 = vdwg.mxu0
  %4070 = vmatpush.msra.mxu0 0.0
  %4071 = vmatpush.msra.mxu0 0.0
  %4072 = vmatpush.msra.mxu0 0.0
  %4073 = vmatpush.msra.mxu0 0.0
  %4074 = vmatpush.msra.mxu0 0.0
  %4075 = vmatpush.msra.mxu0 0.0
  %4076 = vmatpush.msra.mxu0 0.0
  %4077 = vmatpush.msra.mxu0 0.0
  %4078 = vmatpush.msra.mxu0 0.0
  %4079 = vmatpush.msra.mxu0 0.0
  %4080 = vmatpush.msra.mxu0 0.0
  %4081 = vmatpush.msra.mxu0 0.0
  %v4082 = vand.u32 %v3874, 4294901760
  %4083 = vmatpush.msra.mxu0 %v4082
  %v4084 = vand.u32 %v3873, 4294901760
  %4085 = vmatpush.msra.mxu0 %v4084
  %v4086 = vand.u32 %v3872, 4294901760
  %4087 = vmatpush.msra.mxu0 %v4086
  %v4088 = vand.u32 %v3871, 4294901760
  %4089 = vmatpush.msra.mxu0 %v4088
  %v4090 = vand.u32 %v3878, 4294901760
  %4091 = vmatmul.f32.gmra.mxu0 %v4090
  %v4092 = vpop.f32.mrf.mxu0
  %v4093 = vadd.f32 %v4064, %v4092
  %v4094 = vand.u32 %v3881, 4294901760
  %4095 = vmatmul.f32.gmra.mxu0 %v4094
  %v4096 = vpop.f32.mrf.mxu0
  %v4097 = vadd.f32 %v4068, %v4096
  %4098 = vdwg.mxu0
  %v4099 = vadd.f32 %v3668, %v4093
  %v4100 = vadd.f32 %v3669, %v4097
  %v4101 = vperm.slane %v38, 3
  %v4102 = vmul.f32 %v4099, %v4101
  %v4103 = vmul.f32 %v4100, %v4101
  %v4104 = vperm.slane %v38, 4
  %v4105 = vadd.f32 %v4102, %v4104
  %v4106 = vadd.f32 %v4103, %v4104
  %v4107 = vperm.slane %v40, 2
  %v4108 = vmul.f32 %v4105, %v4107
  %v4109 = vmul.f32 %v4106, %v4107
  %v4110 = vperm.slane %v40, 3
  %v4111 = vadd.f32 %v4108, %v4110
  %v4112 = vadd.f32 %v4109, %v4110
  %v4113 = vmax.f32 %v4111, 0.0
  %v4114 = vmax.f32 %v4112, 0.0
  %v4115 = vld [vmem:[%s5] sm:$0xff]
  %v4116 = vld [vmem:[%s5 + $0x8] sm:$0xff]
  %v4118 = vsel %vm52, %v4114, 0
  %4120 = vmatpush.msra.mxu0 0.0
  %4121 = vmatpush.msra.mxu0 0.0
  %4122 = vmatpush.msra.mxu0 0.0
  %4123 = vmatpush.msra.mxu0 0.0
  %4124 = vmatpush.msra.mxu0 0.0
  %4125 = vmatpush.msra.mxu0 0.0
  %4126 = vmatpush.msra.mxu0 0.0
  %4127 = vmatpush.msra.mxu0 0.0
  %4128 = vmatpush.msra.mxu0 0.0
  %4129 = vmatpush.msra.mxu0 0.0
  %4130 = vmatpush.msra.mxu0 0.0
  %4131 = vmatpush.msra.mxu0 0.0
  %4132 = vmatpush.msra.mxu0 0.0
  %4133 = vmatpush.msra.mxu0 0.0
  %v4134 = vand.u32 %v4118, 4294901760
  %4135 = vmatpush.msra.mxu0 %v4134
  %v4136 = vand.u32 %v4113, 4294901760
  %4137 = vmatpush.msra.mxu0 %v4136
  %v4138 = vand.u32 %v47, 4294901760
  %v4139 = vsub.f32 %v47, %v4138
  %v4140 = vand.u32 %v4139, 4294901760
  %v4141 = vsub.f32 %v4139, %v4140
  %v4142 = vand.u32 %v4141, 4294901760
  %4143 = vmatmul.f32.gmra.mxu0 %v4142
  %v4144 = vpop.f32.mrf.mxu0
  %v4145 = vadd.f32 0.0, %v4144
  %v4146 = vand.u32 %v50, 4294901760
  %v4147 = vsub.f32 %v50, %v4146
  %v4148 = vand.u32 %v4147, 4294901760
  %v4149 = vsub.f32 %v4147, %v4148
  %v4150 = vand.u32 %v4149, 4294901760
  %4151 = vmatmul.f32.gmra.mxu0 %v4150
  %v4152 = vpop.f32.mrf.mxu0
  %v4153 = vadd.f32 0.0, %v4152
  %4154 = vdwg.mxu0
  %4155 = vmatpush.msra.mxu0 0.0
  %4156 = vmatpush.msra.mxu0 0.0
  %4157 = vmatpush.msra.mxu0 0.0
  %4158 = vmatpush.msra.mxu0 0.0
  %4159 = vmatpush.msra.mxu0 0.0
  %4160 = vmatpush.msra.mxu0 0.0
  %4161 = vmatpush.msra.mxu0 0.0
  %4162 = vmatpush.msra.mxu0 0.0
  %4163 = vmatpush.msra.mxu0 0.0
  %4164 = vmatpush.msra.mxu0 0.0
  %4165 = vmatpush.msra.mxu0 0.0
  %4166 = vmatpush.msra.mxu0 0.0
  %4167 = vmatpush.msra.mxu0 0.0
  %4168 = vmatpush.msra.mxu0 0.0
  %v4169 = vand.u32 %v4118, 4294901760
  %v4170 = vsub.f32 %v4118, %v4169
  %v4171 = vand.u32 %v4170, 4294901760
  %v4172 = vsub.f32 %v4170, %v4171
  %v4173 = vand.u32 %v4172, 4294901760
  %4174 = vmatpush.msra.mxu0 %v4173
  %v4175 = vand.u32 %v4113, 4294901760
  %v4176 = vsub.f32 %v4113, %v4175
  %v4177 = vand.u32 %v4176, 4294901760
  %v4178 = vsub.f32 %v4176, %v4177
  %v4179 = vand.u32 %v4178, 4294901760
  %4180 = vmatpush.msra.mxu0 %v4179
  %v4181 = vand.u32 %v47, 4294901760
  %4182 = vmatmul.f32.gmra.mxu0 %v4181
  %v4183 = vpop.f32.mrf.mxu0
  %v4184 = vadd.f32 %v4145, %v4183
  %v4185 = vand.u32 %v50, 4294901760
  %4186 = vmatmul.f32.gmra.mxu0 %v4185
  %v4187 = vpop.f32.mrf.mxu0
  %v4188 = vadd.f32 %v4153, %v4187
  %4189 = vdwg.mxu0
  %4190 = vmatpush.msra.mxu0 0.0
  %4191 = vmatpush.msra.mxu0 0.0
  %4192 = vmatpush.msra.mxu0 0.0
  %4193 = vmatpush.msra.mxu0 0.0
  %4194 = vmatpush.msra.mxu0 0.0
  %4195 = vmatpush.msra.mxu0 0.0
  %4196 = vmatpush.msra.mxu0 0.0
  %4197 = vmatpush.msra.mxu0 0.0
  %4198 = vmatpush.msra.mxu0 0.0
  %4199 = vmatpush.msra.mxu0 0.0
  %4200 = vmatpush.msra.mxu0 0.0
  %4201 = vmatpush.msra.mxu0 0.0
  %4202 = vmatpush.msra.mxu0 0.0
  %4203 = vmatpush.msra.mxu0 0.0
  %v4204 = vand.u32 %v4118, 4294901760
  %v4205 = vsub.f32 %v4118, %v4204
  %4206 = vmatpush.msra.mxu0 %v4205
  %v4207 = vand.u32 %v4113, 4294901760
  %v4208 = vsub.f32 %v4113, %v4207
  %4209 = vmatpush.msra.mxu0 %v4208
  %v4210 = vand.u32 %v47, 4294901760
  %v4211 = vsub.f32 %v47, %v4210
  %4212 = vmatmul.f32.gmra.mxu0 %v4211
  %v4213 = vpop.f32.mrf.mxu0
  %v4214 = vadd.f32 %v4184, %v4213
  %v4215 = vand.u32 %v50, 4294901760
  %v4216 = vsub.f32 %v50, %v4215
  %4217 = vmatmul.f32.gmra.mxu0 %v4216
  %v4218 = vpop.f32.mrf.mxu0
  %v4219 = vadd.f32 %v4188, %v4218
  %4220 = vdwg.mxu0
  %4221 = vmatpush.msra.mxu0 0.0
  %4222 = vmatpush.msra.mxu0 0.0
  %4223 = vmatpush.msra.mxu0 0.0
  %4224 = vmatpush.msra.mxu0 0.0
  %4225 = vmatpush.msra.mxu0 0.0
  %4226 = vmatpush.msra.mxu0 0.0
  %4227 = vmatpush.msra.mxu0 0.0
  %4228 = vmatpush.msra.mxu0 0.0
  %4229 = vmatpush.msra.mxu0 0.0
  %4230 = vmatpush.msra.mxu0 0.0
  %4231 = vmatpush.msra.mxu0 0.0
  %4232 = vmatpush.msra.mxu0 0.0
  %4233 = vmatpush.msra.mxu0 0.0
  %4234 = vmatpush.msra.mxu0 0.0
  %v4235 = vand.u32 %v4118, 4294901760
  %4236 = vmatpush.msra.mxu0 %v4235
  %v4237 = vand.u32 %v4113, 4294901760
  %4238 = vmatpush.msra.mxu0 %v4237
  %v4239 = vand.u32 %v47, 4294901760
  %v4240 = vsub.f32 %v47, %v4239
  %v4241 = vand.u32 %v4240, 4294901760
  %4242 = vmatmul.f32.gmra.mxu0 %v4241
  %v4243 = vpop.f32.mrf.mxu0
  %v4244 = vadd.f32 %v4214, %v4243
  %v4245 = vand.u32 %v50, 4294901760
  %v4246 = vsub.f32 %v50, %v4245
  %v4247 = vand.u32 %v4246, 4294901760
  %4248 = vmatmul.f32.gmra.mxu0 %v4247
  %v4249 = vpop.f32.mrf.mxu0
  %v4250 = vadd.f32 %v4219, %v4249
  %4251 = vdwg.mxu0
  %4252 = vmatpush.msra.mxu0 0.0
  %4253 = vmatpush.msra.mxu0 0.0
  %4254 = vmatpush.msra.mxu0 0.0
  %4255 = vmatpush.msra.mxu0 0.0
  %4256 = vmatpush.msra.mxu0 0.0
  %4257 = vmatpush.msra.mxu0 0.0
  %4258 = vmatpush.msra.mxu0 0.0
  %4259 = vmatpush.msra.mxu0 0.0
  %4260 = vmatpush.msra.mxu0 0.0
  %4261 = vmatpush.msra.mxu0 0.0
  %4262 = vmatpush.msra.mxu0 0.0
  %4263 = vmatpush.msra.mxu0 0.0
  %4264 = vmatpush.msra.mxu0 0.0
  %4265 = vmatpush.msra.mxu0 0.0
  %v4266 = vand.u32 %v4118, 4294901760
  %v4267 = vsub.f32 %v4118, %v4266
  %v4268 = vand.u32 %v4267, 4294901760
  %4269 = vmatpush.msra.mxu0 %v4268
  %v4270 = vand.u32 %v4113, 4294901760
  %v4271 = vsub.f32 %v4113, %v4270
  %v4272 = vand.u32 %v4271, 4294901760
  %4273 = vmatpush.msra.mxu0 %v4272
  %v4274 = vand.u32 %v47, 4294901760
  %4275 = vmatmul.f32.gmra.mxu0 %v4274
  %v4276 = vpop.f32.mrf.mxu0
  %v4277 = vadd.f32 %v4244, %v4276
  %v4278 = vand.u32 %v50, 4294901760
  %4279 = vmatmul.f32.gmra.mxu0 %v4278
  %v4280 = vpop.f32.mrf.mxu0
  %v4281 = vadd.f32 %v4250, %v4280
  %4282 = vdwg.mxu0
  %4283 = vmatpush.msra.mxu0 0.0
  %4284 = vmatpush.msra.mxu0 0.0
  %4285 = vmatpush.msra.mxu0 0.0
  %4286 = vmatpush.msra.mxu0 0.0
  %4287 = vmatpush.msra.mxu0 0.0
  %4288 = vmatpush.msra.mxu0 0.0
  %4289 = vmatpush.msra.mxu0 0.0
  %4290 = vmatpush.msra.mxu0 0.0
  %4291 = vmatpush.msra.mxu0 0.0
  %4292 = vmatpush.msra.mxu0 0.0
  %4293 = vmatpush.msra.mxu0 0.0
  %4294 = vmatpush.msra.mxu0 0.0
  %4295 = vmatpush.msra.mxu0 0.0
  %4296 = vmatpush.msra.mxu0 0.0
  %v4297 = vand.u32 %v4118, 4294901760
  %4298 = vmatpush.msra.mxu0 %v4297
  %v4299 = vand.u32 %v4113, 4294901760
  %4300 = vmatpush.msra.mxu0 %v4299
  %v4301 = vand.u32 %v47, 4294901760
  %4302 = vmatmul.f32.gmra.mxu0 %v4301
  %v4303 = vpop.f32.mrf.mxu0
  %v4304 = vadd.f32 %v4277, %v4303
  %v4305 = vand.u32 %v50, 4294901760
  %4306 = vmatmul.f32.gmra.mxu0 %v4305
  %v4307 = vpop.f32.mrf.mxu0
  %v4308 = vadd.f32 %v4281, %v4307
  %4309 = vdwg.mxu0
  %s4310 = scalar_lea.vmem %s5, 16
  %v4311 = vld [vmem:[%s4310] sm:$0xff]
  %v4312 = vld [vmem:[%s4310 + $0x8] sm:$0xff]
  %v4314 = vsel %vm249, %v4304, 0
  %v4317 = vsel %vm249, %v4308, 0
  %4319 = vmatpush.msra.mxu0 0.0
  %4320 = vmatpush.msra.mxu0 0.0
  %4321 = vmatpush.msra.mxu0 0.0
  %4322 = vmatpush.msra.mxu0 0.0
  %4323 = vmatpush.msra.mxu0 0.0
  %4324 = vmatpush.msra.mxu0 0.0
  %4325 = vmatpush.msra.mxu0 0.0
  %4326 = vmatpush.msra.mxu0 0.0
  %4327 = vmatpush.msra.mxu0 0.0
  %4328 = vmatpush.msra.mxu0 0.0
  %4329 = vmatpush.msra.mxu0 0.0
  %4330 = vmatpush.msra.mxu0 0.0
  %4331 = vmatpush.msra.mxu0 0.0
  %4332 = vmatpush.msra.mxu0 0.0
  %v4333 = vand.u32 %v4312, 4294901760
  %4334 = vmatpush.msra.mxu0 %v4333
  %v4335 = vand.u32 %v4311, 4294901760
  %4336 = vmatpush.msra.mxu0 %v4335
  %v4337 = vand.u32 %v4314, 4294901760
  %v4338 = vsub.f32 %v4314, %v4337
  %v4339 = vand.u32 %v4338, 4294901760
  %v4340 = vsub.f32 %v4338, %v4339
  %v4341 = vand.u32 %v4340, 4294901760
  %4342 = vmatmul.f32.gmra.mxu0 %v4341
  %v4343 = vpop.f32.mrf.mxu0
  %v4344 = vadd.f32 0.0, %v4343
  %v4345 = vand.u32 %v4317, 4294901760
  %v4346 = vsub.f32 %v4317, %v4345
  %v4347 = vand.u32 %v4346, 4294901760
  %v4348 = vsub.f32 %v4346, %v4347
  %v4349 = vand.u32 %v4348, 4294901760
  %4350 = vmatmul.f32.gmra.mxu0 %v4349
  %v4351 = vpop.f32.mrf.mxu0
  %v4352 = vadd.f32 0.0, %v4351
  %4353 = vdwg.mxu0
  %4354 = vmatpush.msra.mxu0 0.0
  %4355 = vmatpush.msra.mxu0 0.0
  %4356 = vmatpush.msra.mxu0 0.0
  %4357 = vmatpush.msra.mxu0 0.0
  %4358 = vmatpush.msra.mxu0 0.0
  %4359 = vmatpush.msra.mxu0 0.0
  %4360 = vmatpush.msra.mxu0 0.0
  %4361 = vmatpush.msra.mxu0 0.0
  %4362 = vmatpush.msra.mxu0 0.0
  %4363 = vmatpush.msra.mxu0 0.0
  %4364 = vmatpush.msra.mxu0 0.0
  %4365 = vmatpush.msra.mxu0 0.0
  %4366 = vmatpush.msra.mxu0 0.0
  %4367 = vmatpush.msra.mxu0 0.0
  %v4368 = vand.u32 %v4312, 4294901760
  %v4369 = vsub.f32 %v4312, %v4368
  %v4370 = vand.u32 %v4369, 4294901760
  %v4371 = vsub.f32 %v4369, %v4370
  %v4372 = vand.u32 %v4371, 4294901760
  %4373 = vmatpush.msra.mxu0 %v4372
  %v4374 = vand.u32 %v4311, 4294901760
  %v4375 = vsub.f32 %v4311, %v4374
  %v4376 = vand.u32 %v4375, 4294901760
  %v4377 = vsub.f32 %v4375, %v4376
  %v4378 = vand.u32 %v4377, 4294901760
  %4379 = vmatpush.msra.mxu0 %v4378
  %v4380 = vand.u32 %v4314, 4294901760
  %4381 = vmatmul.f32.gmra.mxu0 %v4380
  %v4382 = vpop.f32.mrf.mxu0
  %v4383 = vadd.f32 %v4344, %v4382
  %v4384 = vand.u32 %v4317, 4294901760
  %4385 = vmatmul.f32.gmra.mxu0 %v4384
  %v4386 = vpop.f32.mrf.mxu0
  %v4387 = vadd.f32 %v4352, %v4386
  %4388 = vdwg.mxu0
  %4389 = vmatpush.msra.mxu0 0.0
  %4390 = vmatpush.msra.mxu0 0.0
  %4391 = vmatpush.msra.mxu0 0.0
  %4392 = vmatpush.msra.mxu0 0.0
  %4393 = vmatpush.msra.mxu0 0.0
  %4394 = vmatpush.msra.mxu0 0.0
  %4395 = vmatpush.msra.mxu0 0.0
  %4396 = vmatpush.msra.mxu0 0.0
  %4397 = vmatpush.msra.mxu0 0.0
  %4398 = vmatpush.msra.mxu0 0.0
  %4399 = vmatpush.msra.mxu0 0.0
  %4400 = vmatpush.msra.mxu0 0.0
  %4401 = vmatpush.msra.mxu0 0.0
  %4402 = vmatpush.msra.mxu0 0.0
  %v4403 = vand.u32 %v4312, 4294901760
  %v4404 = vsub.f32 %v4312, %v4403
  %4405 = vmatpush.msra.mxu0 %v4404
  %v4406 = vand.u32 %v4311, 4294901760
  %v4407 = vsub.f32 %v4311, %v4406
  %4408 = vmatpush.msra.mxu0 %v4407
  %v4409 = vand.u32 %v4314, 4294901760
  %v4410 = vsub.f32 %v4314, %v4409
  %4411 = vmatmul.f32.gmra.mxu0 %v4410
  %v4412 = vpop.f32.mrf.mxu0
  %v4413 = vadd.f32 %v4383, %v4412
  %v4414 = vand.u32 %v4317, 4294901760
  %v4415 = vsub.f32 %v4317, %v4414
  %4416 = vmatmul.f32.gmra.mxu0 %v4415
  %v4417 = vpop.f32.mrf.mxu0
  %v4418 = vadd.f32 %v4387, %v4417
  %4419 = vdwg.mxu0
  %4420 = vmatpush.msra.mxu0 0.0
  %4421 = vmatpush.msra.mxu0 0.0
  %4422 = vmatpush.msra.mxu0 0.0
  %4423 = vmatpush.msra.mxu0 0.0
  %4424 = vmatpush.msra.mxu0 0.0
  %4425 = vmatpush.msra.mxu0 0.0
  %4426 = vmatpush.msra.mxu0 0.0
  %4427 = vmatpush.msra.mxu0 0.0
  %4428 = vmatpush.msra.mxu0 0.0
  %4429 = vmatpush.msra.mxu0 0.0
  %4430 = vmatpush.msra.mxu0 0.0
  %4431 = vmatpush.msra.mxu0 0.0
  %4432 = vmatpush.msra.mxu0 0.0
  %4433 = vmatpush.msra.mxu0 0.0
  %v4434 = vand.u32 %v4312, 4294901760
  %4435 = vmatpush.msra.mxu0 %v4434
  %v4436 = vand.u32 %v4311, 4294901760
  %4437 = vmatpush.msra.mxu0 %v4436
  %v4438 = vand.u32 %v4314, 4294901760
  %v4439 = vsub.f32 %v4314, %v4438
  %v4440 = vand.u32 %v4439, 4294901760
  %4441 = vmatmul.f32.gmra.mxu0 %v4440
  %v4442 = vpop.f32.mrf.mxu0
  %v4443 = vadd.f32 %v4413, %v4442
  %v4444 = vand.u32 %v4317, 4294901760
  %v4445 = vsub.f32 %v4317, %v4444
  %v4446 = vand.u32 %v4445, 4294901760
  %4447 = vmatmul.f32.gmra.mxu0 %v4446
  %v4448 = vpop.f32.mrf.mxu0
  %v4449 = vadd.f32 %v4418, %v4448
  %4450 = vdwg.mxu0
  %4451 = vmatpush.msra.mxu0 0.0
  %4452 = vmatpush.msra.mxu0 0.0
  %4453 = vmatpush.msra.mxu0 0.0
  %4454 = vmatpush.msra.mxu0 0.0
  %4455 = vmatpush.msra.mxu0 0.0
  %4456 = vmatpush.msra.mxu0 0.0
  %4457 = vmatpush.msra.mxu0 0.0
  %4458 = vmatpush.msra.mxu0 0.0
  %4459 = vmatpush.msra.mxu0 0.0
  %4460 = vmatpush.msra.mxu0 0.0
  %4461 = vmatpush.msra.mxu0 0.0
  %4462 = vmatpush.msra.mxu0 0.0
  %4463 = vmatpush.msra.mxu0 0.0
  %4464 = vmatpush.msra.mxu0 0.0
  %v4465 = vand.u32 %v4312, 4294901760
  %v4466 = vsub.f32 %v4312, %v4465
  %v4467 = vand.u32 %v4466, 4294901760
  %4468 = vmatpush.msra.mxu0 %v4467
  %v4469 = vand.u32 %v4311, 4294901760
  %v4470 = vsub.f32 %v4311, %v4469
  %v4471 = vand.u32 %v4470, 4294901760
  %4472 = vmatpush.msra.mxu0 %v4471
  %v4473 = vand.u32 %v4314, 4294901760
  %4474 = vmatmul.f32.gmra.mxu0 %v4473
  %v4475 = vpop.f32.mrf.mxu0
  %v4476 = vadd.f32 %v4443, %v4475
  %v4477 = vand.u32 %v4317, 4294901760
  %4478 = vmatmul.f32.gmra.mxu0 %v4477
  %v4479 = vpop.f32.mrf.mxu0
  %v4480 = vadd.f32 %v4449, %v4479
  %4481 = vdwg.mxu0
  %4482 = vmatpush.msra.mxu0 0.0
  %4483 = vmatpush.msra.mxu0 0.0
  %4484 = vmatpush.msra.mxu0 0.0
  %4485 = vmatpush.msra.mxu0 0.0
  %4486 = vmatpush.msra.mxu0 0.0
  %4487 = vmatpush.msra.mxu0 0.0
  %4488 = vmatpush.msra.mxu0 0.0
  %4489 = vmatpush.msra.mxu0 0.0
  %4490 = vmatpush.msra.mxu0 0.0
  %4491 = vmatpush.msra.mxu0 0.0
  %4492 = vmatpush.msra.mxu0 0.0
  %4493 = vmatpush.msra.mxu0 0.0
  %4494 = vmatpush.msra.mxu0 0.0
  %4495 = vmatpush.msra.mxu0 0.0
  %v4496 = vand.u32 %v4312, 4294901760
  %4497 = vmatpush.msra.mxu0 %v4496
  %v4498 = vand.u32 %v4311, 4294901760
  %4499 = vmatpush.msra.mxu0 %v4498
  %v4500 = vand.u32 %v4314, 4294901760
  %4501 = vmatmul.f32.gmra.mxu0 %v4500
  %v4502 = vpop.f32.mrf.mxu0
  %v4503 = vadd.f32 %v4476, %v4502
  %v4504 = vand.u32 %v4317, 4294901760
  %4505 = vmatmul.f32.gmra.mxu0 %v4504
  %v4506 = vpop.f32.mrf.mxu0
  %v4507 = vadd.f32 %v4480, %v4506
  %4508 = vdwg.mxu0
  %v4510 = vsel %vm249, %v4113, 0
  %v4512 = vsel %vm249, %v4114, 0
  %4514 = vmatpush.msra.mxu0 0.0
  %4515 = vmatpush.msra.mxu0 0.0
  %4516 = vmatpush.msra.mxu0 0.0
  %4517 = vmatpush.msra.mxu0 0.0
  %4518 = vmatpush.msra.mxu0 0.0
  %4519 = vmatpush.msra.mxu0 0.0
  %4520 = vmatpush.msra.mxu0 0.0
  %4521 = vmatpush.msra.mxu0 0.0
  %4522 = vmatpush.msra.mxu0 0.0
  %4523 = vmatpush.msra.mxu0 0.0
  %4524 = vmatpush.msra.mxu0 0.0
  %4525 = vmatpush.msra.mxu0 0.0
  %4526 = vmatpush.msra.mxu0 0.0
  %4527 = vmatpush.msra.mxu0 0.0
  %v4528 = vand.u32 %v4116, 4294901760
  %4529 = vmatpush.msra.mxu0 %v4528
  %v4530 = vand.u32 %v4115, 4294901760
  %4531 = vmatpush.msra.mxu0 %v4530
  %v4532 = vand.u32 %v4510, 4294901760
  %v4533 = vsub.f32 %v4510, %v4532
  %v4534 = vand.u32 %v4533, 4294901760
  %v4535 = vsub.f32 %v4533, %v4534
  %v4536 = vand.u32 %v4535, 4294901760
  %4537 = vmatmul.f32.gmra.mxu0 %v4536
  %v4538 = vpop.f32.mrf.mxu0
  %v4539 = vadd.f32 %v4503, %v4538
  %v4540 = vand.u32 %v4512, 4294901760
  %v4541 = vsub.f32 %v4512, %v4540
  %v4542 = vand.u32 %v4541, 4294901760
  %v4543 = vsub.f32 %v4541, %v4542
  %v4544 = vand.u32 %v4543, 4294901760
  %4545 = vmatmul.f32.gmra.mxu0 %v4544
  %v4546 = vpop.f32.mrf.mxu0
  %v4547 = vadd.f32 %v4507, %v4546
  %4548 = vdwg.mxu0
  %4549 = vmatpush.msra.mxu0 0.0
  %4550 = vmatpush.msra.mxu0 0.0
  %4551 = vmatpush.msra.mxu0 0.0
  %4552 = vmatpush.msra.mxu0 0.0
  %4553 = vmatpush.msra.mxu0 0.0
  %4554 = vmatpush.msra.mxu0 0.0
  %4555 = vmatpush.msra.mxu0 0.0
  %4556 = vmatpush.msra.mxu0 0.0
  %4557 = vmatpush.msra.mxu0 0.0
  %4558 = vmatpush.msra.mxu0 0.0
  %4559 = vmatpush.msra.mxu0 0.0
  %4560 = vmatpush.msra.mxu0 0.0
  %4561 = vmatpush.msra.mxu0 0.0
  %4562 = vmatpush.msra.mxu0 0.0
  %v4563 = vand.u32 %v4116, 4294901760
  %v4564 = vsub.f32 %v4116, %v4563
  %v4565 = vand.u32 %v4564, 4294901760
  %v4566 = vsub.f32 %v4564, %v4565
  %v4567 = vand.u32 %v4566, 4294901760
  %4568 = vmatpush.msra.mxu0 %v4567
  %v4569 = vand.u32 %v4115, 4294901760
  %v4570 = vsub.f32 %v4115, %v4569
  %v4571 = vand.u32 %v4570, 4294901760
  %v4572 = vsub.f32 %v4570, %v4571
  %v4573 = vand.u32 %v4572, 4294901760
  %4574 = vmatpush.msra.mxu0 %v4573
  %v4575 = vand.u32 %v4510, 4294901760
  %4576 = vmatmul.f32.gmra.mxu0 %v4575
  %v4577 = vpop.f32.mrf.mxu0
  %v4578 = vadd.f32 %v4539, %v4577
  %v4579 = vand.u32 %v4512, 4294901760
  %4580 = vmatmul.f32.gmra.mxu0 %v4579
  %v4581 = vpop.f32.mrf.mxu0
  %v4582 = vadd.f32 %v4547, %v4581
  %4583 = vdwg.mxu0
  %4584 = vmatpush.msra.mxu0 0.0
  %4585 = vmatpush.msra.mxu0 0.0
  %4586 = vmatpush.msra.mxu0 0.0
  %4587 = vmatpush.msra.mxu0 0.0
  %4588 = vmatpush.msra.mxu0 0.0
  %4589 = vmatpush.msra.mxu0 0.0
  %4590 = vmatpush.msra.mxu0 0.0
  %4591 = vmatpush.msra.mxu0 0.0
  %4592 = vmatpush.msra.mxu0 0.0
  %4593 = vmatpush.msra.mxu0 0.0
  %4594 = vmatpush.msra.mxu0 0.0
  %4595 = vmatpush.msra.mxu0 0.0
  %4596 = vmatpush.msra.mxu0 0.0
  %4597 = vmatpush.msra.mxu0 0.0
  %v4598 = vand.u32 %v4116, 4294901760
  %v4599 = vsub.f32 %v4116, %v4598
  %4600 = vmatpush.msra.mxu0 %v4599
  %v4601 = vand.u32 %v4115, 4294901760
  %v4602 = vsub.f32 %v4115, %v4601
  %4603 = vmatpush.msra.mxu0 %v4602
  %v4604 = vand.u32 %v4510, 4294901760
  %v4605 = vsub.f32 %v4510, %v4604
  %4606 = vmatmul.f32.gmra.mxu0 %v4605
  %v4607 = vpop.f32.mrf.mxu0
  %v4608 = vadd.f32 %v4578, %v4607
  %v4609 = vand.u32 %v4512, 4294901760
  %v4610 = vsub.f32 %v4512, %v4609
  %4611 = vmatmul.f32.gmra.mxu0 %v4610
  %v4612 = vpop.f32.mrf.mxu0
  %v4613 = vadd.f32 %v4582, %v4612
  %4614 = vdwg.mxu0
  %4615 = vmatpush.msra.mxu0 0.0
  %4616 = vmatpush.msra.mxu0 0.0
  %4617 = vmatpush.msra.mxu0 0.0
  %4618 = vmatpush.msra.mxu0 0.0
  %4619 = vmatpush.msra.mxu0 0.0
  %4620 = vmatpush.msra.mxu0 0.0
  %4621 = vmatpush.msra.mxu0 0.0
  %4622 = vmatpush.msra.mxu0 0.0
  %4623 = vmatpush.msra.mxu0 0.0
  %4624 = vmatpush.msra.mxu0 0.0
  %4625 = vmatpush.msra.mxu0 0.0
  %4626 = vmatpush.msra.mxu0 0.0
  %4627 = vmatpush.msra.mxu0 0.0
  %4628 = vmatpush.msra.mxu0 0.0
  %v4629 = vand.u32 %v4116, 4294901760
  %4630 = vmatpush.msra.mxu0 %v4629
  %v4631 = vand.u32 %v4115, 4294901760
  %4632 = vmatpush.msra.mxu0 %v4631
  %v4633 = vand.u32 %v4510, 4294901760
  %v4634 = vsub.f32 %v4510, %v4633
  %v4635 = vand.u32 %v4634, 4294901760
  %4636 = vmatmul.f32.gmra.mxu0 %v4635
  %v4637 = vpop.f32.mrf.mxu0
  %v4638 = vadd.f32 %v4608, %v4637
  %v4639 = vand.u32 %v4512, 4294901760
  %v4640 = vsub.f32 %v4512, %v4639
  %v4641 = vand.u32 %v4640, 4294901760
  %4642 = vmatmul.f32.gmra.mxu0 %v4641
  %v4643 = vpop.f32.mrf.mxu0
  %v4644 = vadd.f32 %v4613, %v4643
  %4645 = vdwg.mxu0
  %4646 = vmatpush.msra.mxu0 0.0
  %4647 = vmatpush.msra.mxu0 0.0
  %4648 = vmatpush.msra.mxu0 0.0
  %4649 = vmatpush.msra.mxu0 0.0
  %4650 = vmatpush.msra.mxu0 0.0
  %4651 = vmatpush.msra.mxu0 0.0
  %4652 = vmatpush.msra.mxu0 0.0
  %4653 = vmatpush.msra.mxu0 0.0
  %4654 = vmatpush.msra.mxu0 0.0
  %4655 = vmatpush.msra.mxu0 0.0
  %4656 = vmatpush.msra.mxu0 0.0
  %4657 = vmatpush.msra.mxu0 0.0
  %4658 = vmatpush.msra.mxu0 0.0
  %4659 = vmatpush.msra.mxu0 0.0
  %v4660 = vand.u32 %v4116, 4294901760
  %v4661 = vsub.f32 %v4116, %v4660
  %v4662 = vand.u32 %v4661, 4294901760
  %4663 = vmatpush.msra.mxu0 %v4662
  %v4664 = vand.u32 %v4115, 4294901760
  %v4665 = vsub.f32 %v4115, %v4664
  %v4666 = vand.u32 %v4665, 4294901760
  %4667 = vmatpush.msra.mxu0 %v4666
  %v4668 = vand.u32 %v4510, 4294901760
  %4669 = vmatmul.f32.gmra.mxu0 %v4668
  %v4670 = vpop.f32.mrf.mxu0
  %v4671 = vadd.f32 %v4638, %v4670
  %v4672 = vand.u32 %v4512, 4294901760
  %4673 = vmatmul.f32.gmra.mxu0 %v4672
  %v4674 = vpop.f32.mrf.mxu0
  %v4675 = vadd.f32 %v4644, %v4674
  %4676 = vdwg.mxu0
  %4677 = vmatpush.msra.mxu0 0.0
  %4678 = vmatpush.msra.mxu0 0.0
  %4679 = vmatpush.msra.mxu0 0.0
  %4680 = vmatpush.msra.mxu0 0.0
  %4681 = vmatpush.msra.mxu0 0.0
  %4682 = vmatpush.msra.mxu0 0.0
  %4683 = vmatpush.msra.mxu0 0.0
  %4684 = vmatpush.msra.mxu0 0.0
  %4685 = vmatpush.msra.mxu0 0.0
  %4686 = vmatpush.msra.mxu0 0.0
  %4687 = vmatpush.msra.mxu0 0.0
  %4688 = vmatpush.msra.mxu0 0.0
  %4689 = vmatpush.msra.mxu0 0.0
  %4690 = vmatpush.msra.mxu0 0.0
  %v4691 = vand.u32 %v4116, 4294901760
  %4692 = vmatpush.msra.mxu0 %v4691
  %v4693 = vand.u32 %v4115, 4294901760
  %4694 = vmatpush.msra.mxu0 %v4693
  %v4695 = vand.u32 %v4510, 4294901760
  %4696 = vmatmul.f32.gmra.mxu0 %v4695
  %v4697 = vpop.f32.mrf.mxu0
  %v4698 = vadd.f32 %v4671, %v4697
  %v4699 = vand.u32 %v4512, 4294901760
  %4700 = vmatmul.f32.gmra.mxu0 %v4699
  %v4701 = vpop.f32.mrf.mxu0
  %v4702 = vadd.f32 %v4675, %v4701
  %4703 = vdwg.mxu0
  %v4704 = vsel %vm52, %v4308, 0
  %4706 = vmatpush.msra.mxu0 0.0
  %4707 = vmatpush.msra.mxu0 0.0
  %4708 = vmatpush.msra.mxu0 0.0
  %4709 = vmatpush.msra.mxu0 0.0
  %4710 = vmatpush.msra.mxu0 0.0
  %4711 = vmatpush.msra.mxu0 0.0
  %4712 = vmatpush.msra.mxu0 0.0
  %4713 = vmatpush.msra.mxu0 0.0
  %4714 = vmatpush.msra.mxu0 0.0
  %4715 = vmatpush.msra.mxu0 0.0
  %4716 = vmatpush.msra.mxu0 0.0
  %4717 = vmatpush.msra.mxu0 0.0
  %4718 = vmatpush.msra.mxu0 0.0
  %4719 = vmatpush.msra.mxu0 0.0
  %v4720 = vand.u32 %v4704, 4294901760
  %4721 = vmatpush.msra.mxu0 %v4720
  %v4722 = vand.u32 %v4304, 4294901760
  %4723 = vmatpush.msra.mxu0 %v4722
  %v4724 = vand.u32 %v47, 4294901760
  %v4725 = vsub.f32 %v47, %v4724
  %v4726 = vand.u32 %v4725, 4294901760
  %v4727 = vsub.f32 %v4725, %v4726
  %v4728 = vand.u32 %v4727, 4294901760
  %4729 = vmatmul.f32.gmra.mxu0 %v4728
  %v4730 = vpop.f32.mrf.mxu0
  %v4731 = vadd.f32 0.0, %v4730
  %v4732 = vand.u32 %v50, 4294901760
  %v4733 = vsub.f32 %v50, %v4732
  %v4734 = vand.u32 %v4733, 4294901760
  %v4735 = vsub.f32 %v4733, %v4734
  %v4736 = vand.u32 %v4735, 4294901760
  %4737 = vmatmul.f32.gmra.mxu0 %v4736
  %v4738 = vpop.f32.mrf.mxu0
  %v4739 = vadd.f32 0.0, %v4738
  %4740 = vdwg.mxu0
  %4741 = vmatpush.msra.mxu0 0.0
  %4742 = vmatpush.msra.mxu0 0.0
  %4743 = vmatpush.msra.mxu0 0.0
  %4744 = vmatpush.msra.mxu0 0.0
  %4745 = vmatpush.msra.mxu0 0.0
  %4746 = vmatpush.msra.mxu0 0.0
  %4747 = vmatpush.msra.mxu0 0.0
  %4748 = vmatpush.msra.mxu0 0.0
  %4749 = vmatpush.msra.mxu0 0.0
  %4750 = vmatpush.msra.mxu0 0.0
  %4751 = vmatpush.msra.mxu0 0.0
  %4752 = vmatpush.msra.mxu0 0.0
  %4753 = vmatpush.msra.mxu0 0.0
  %4754 = vmatpush.msra.mxu0 0.0
  %v4755 = vand.u32 %v4704, 4294901760
  %v4756 = vsub.f32 %v4704, %v4755
  %v4757 = vand.u32 %v4756, 4294901760
  %v4758 = vsub.f32 %v4756, %v4757
  %v4759 = vand.u32 %v4758, 4294901760
  %4760 = vmatpush.msra.mxu0 %v4759
  %v4761 = vand.u32 %v4304, 4294901760
  %v4762 = vsub.f32 %v4304, %v4761
  %v4763 = vand.u32 %v4762, 4294901760
  %v4764 = vsub.f32 %v4762, %v4763
  %v4765 = vand.u32 %v4764, 4294901760
  %4766 = vmatpush.msra.mxu0 %v4765
  %v4767 = vand.u32 %v47, 4294901760
  %4768 = vmatmul.f32.gmra.mxu0 %v4767
  %v4769 = vpop.f32.mrf.mxu0
  %v4770 = vadd.f32 %v4731, %v4769
  %v4771 = vand.u32 %v50, 4294901760
  %4772 = vmatmul.f32.gmra.mxu0 %v4771
  %v4773 = vpop.f32.mrf.mxu0
  %v4774 = vadd.f32 %v4739, %v4773
  %4775 = vdwg.mxu0
  %4776 = vmatpush.msra.mxu0 0.0
  %4777 = vmatpush.msra.mxu0 0.0
  %4778 = vmatpush.msra.mxu0 0.0
  %4779 = vmatpush.msra.mxu0 0.0
  %4780 = vmatpush.msra.mxu0 0.0
  %4781 = vmatpush.msra.mxu0 0.0
  %4782 = vmatpush.msra.mxu0 0.0
  %4783 = vmatpush.msra.mxu0 0.0
  %4784 = vmatpush.msra.mxu0 0.0
  %4785 = vmatpush.msra.mxu0 0.0
  %4786 = vmatpush.msra.mxu0 0.0
  %4787 = vmatpush.msra.mxu0 0.0
  %4788 = vmatpush.msra.mxu0 0.0
  %4789 = vmatpush.msra.mxu0 0.0
  %v4790 = vand.u32 %v4704, 4294901760
  %v4791 = vsub.f32 %v4704, %v4790
  %4792 = vmatpush.msra.mxu0 %v4791
  %v4793 = vand.u32 %v4304, 4294901760
  %v4794 = vsub.f32 %v4304, %v4793
  %4795 = vmatpush.msra.mxu0 %v4794
  %v4796 = vand.u32 %v47, 4294901760
  %v4797 = vsub.f32 %v47, %v4796
  %4798 = vmatmul.f32.gmra.mxu0 %v4797
  %v4799 = vpop.f32.mrf.mxu0
  %v4800 = vadd.f32 %v4770, %v4799
  %v4801 = vand.u32 %v50, 4294901760
  %v4802 = vsub.f32 %v50, %v4801
  %4803 = vmatmul.f32.gmra.mxu0 %v4802
  %v4804 = vpop.f32.mrf.mxu0
  %v4805 = vadd.f32 %v4774, %v4804
  %4806 = vdwg.mxu0
  %4807 = vmatpush.msra.mxu0 0.0
  %4808 = vmatpush.msra.mxu0 0.0
  %4809 = vmatpush.msra.mxu0 0.0
  %4810 = vmatpush.msra.mxu0 0.0
  %4811 = vmatpush.msra.mxu0 0.0
  %4812 = vmatpush.msra.mxu0 0.0
  %4813 = vmatpush.msra.mxu0 0.0
  %4814 = vmatpush.msra.mxu0 0.0
  %4815 = vmatpush.msra.mxu0 0.0
  %4816 = vmatpush.msra.mxu0 0.0
  %4817 = vmatpush.msra.mxu0 0.0
  %4818 = vmatpush.msra.mxu0 0.0
  %4819 = vmatpush.msra.mxu0 0.0
  %4820 = vmatpush.msra.mxu0 0.0
  %v4821 = vand.u32 %v4704, 4294901760
  %4822 = vmatpush.msra.mxu0 %v4821
  %v4823 = vand.u32 %v4304, 4294901760
  %4824 = vmatpush.msra.mxu0 %v4823
  %v4825 = vand.u32 %v47, 4294901760
  %v4826 = vsub.f32 %v47, %v4825
  %v4827 = vand.u32 %v4826, 4294901760
  %4828 = vmatmul.f32.gmra.mxu0 %v4827
  %v4829 = vpop.f32.mrf.mxu0
  %v4830 = vadd.f32 %v4800, %v4829
  %v4831 = vand.u32 %v50, 4294901760
  %v4832 = vsub.f32 %v50, %v4831
  %v4833 = vand.u32 %v4832, 4294901760
  %4834 = vmatmul.f32.gmra.mxu0 %v4833
  %v4835 = vpop.f32.mrf.mxu0
  %v4836 = vadd.f32 %v4805, %v4835
  %4837 = vdwg.mxu0
  %4838 = vmatpush.msra.mxu0 0.0
  %4839 = vmatpush.msra.mxu0 0.0
  %4840 = vmatpush.msra.mxu0 0.0
  %4841 = vmatpush.msra.mxu0 0.0
  %4842 = vmatpush.msra.mxu0 0.0
  %4843 = vmatpush.msra.mxu0 0.0
  %4844 = vmatpush.msra.mxu0 0.0
  %4845 = vmatpush.msra.mxu0 0.0
  %4846 = vmatpush.msra.mxu0 0.0
  %4847 = vmatpush.msra.mxu0 0.0
  %4848 = vmatpush.msra.mxu0 0.0
  %4849 = vmatpush.msra.mxu0 0.0
  %4850 = vmatpush.msra.mxu0 0.0
  %4851 = vmatpush.msra.mxu0 0.0
  %v4852 = vand.u32 %v4704, 4294901760
  %v4853 = vsub.f32 %v4704, %v4852
  %v4854 = vand.u32 %v4853, 4294901760
  %4855 = vmatpush.msra.mxu0 %v4854
  %v4856 = vand.u32 %v4304, 4294901760
  %v4857 = vsub.f32 %v4304, %v4856
  %v4858 = vand.u32 %v4857, 4294901760
  %4859 = vmatpush.msra.mxu0 %v4858
  %v4860 = vand.u32 %v47, 4294901760
  %4861 = vmatmul.f32.gmra.mxu0 %v4860
  %v4862 = vpop.f32.mrf.mxu0
  %v4863 = vadd.f32 %v4830, %v4862
  %v4864 = vand.u32 %v50, 4294901760
  %4865 = vmatmul.f32.gmra.mxu0 %v4864
  %v4866 = vpop.f32.mrf.mxu0
  %v4867 = vadd.f32 %v4836, %v4866
  %4868 = vdwg.mxu0
  %4869 = vmatpush.msra.mxu0 0.0
  %4870 = vmatpush.msra.mxu0 0.0
  %4871 = vmatpush.msra.mxu0 0.0
  %4872 = vmatpush.msra.mxu0 0.0
  %4873 = vmatpush.msra.mxu0 0.0
  %4874 = vmatpush.msra.mxu0 0.0
  %4875 = vmatpush.msra.mxu0 0.0
  %4876 = vmatpush.msra.mxu0 0.0
  %4877 = vmatpush.msra.mxu0 0.0
  %4878 = vmatpush.msra.mxu0 0.0
  %4879 = vmatpush.msra.mxu0 0.0
  %4880 = vmatpush.msra.mxu0 0.0
  %4881 = vmatpush.msra.mxu0 0.0
  %4882 = vmatpush.msra.mxu0 0.0
  %v4883 = vand.u32 %v4704, 4294901760
  %4884 = vmatpush.msra.mxu0 %v4883
  %v4885 = vand.u32 %v4304, 4294901760
  %4886 = vmatpush.msra.mxu0 %v4885
  %v4887 = vand.u32 %v47, 4294901760
  %4888 = vmatmul.f32.gmra.mxu0 %v4887
  %v4889 = vpop.f32.mrf.mxu0
  %v4890 = vadd.f32 %v4863, %v4889
  %v4891 = vand.u32 %v50, 4294901760
  %4892 = vmatmul.f32.gmra.mxu0 %v4891
  %v4893 = vpop.f32.mrf.mxu0
  %v4894 = vadd.f32 %v4867, %v4893
  %4895 = vdwg.mxu0
  %v4896 = vmul.f32 %v4890, 2.0
  %v4897 = vmul.f32 %v4894, 2.0
  %v4898 = vsub.f32 %v4896, %v4113
  %v4899 = vsub.f32 %v4897, %v4114
  %s4900 = scalar_lea.vmem %s5, 32
  %v4901 = vld [vmem:[%s4900] sm:$0xff]
  %v4902 = vld [vmem:[%s4900 + $0x8] sm:$0xff]
  %v4904 = vsel %vm249, %v4898, 0
  %v4907 = vsel %vm249, %v4899, 0
  %4909 = vmatpush.msra.mxu0 0.0
  %4910 = vmatpush.msra.mxu0 0.0
  %4911 = vmatpush.msra.mxu0 0.0
  %4912 = vmatpush.msra.mxu0 0.0
  %4913 = vmatpush.msra.mxu0 0.0
  %4914 = vmatpush.msra.mxu0 0.0
  %4915 = vmatpush.msra.mxu0 0.0
  %4916 = vmatpush.msra.mxu0 0.0
  %4917 = vmatpush.msra.mxu0 0.0
  %4918 = vmatpush.msra.mxu0 0.0
  %4919 = vmatpush.msra.mxu0 0.0
  %4920 = vmatpush.msra.mxu0 0.0
  %4921 = vmatpush.msra.mxu0 0.0
  %4922 = vmatpush.msra.mxu0 0.0
  %v4923 = vand.u32 %v4902, 4294901760
  %4924 = vmatpush.msra.mxu0 %v4923
  %v4925 = vand.u32 %v4901, 4294901760
  %4926 = vmatpush.msra.mxu0 %v4925
  %v4927 = vand.u32 %v4904, 4294901760
  %v4928 = vsub.f32 %v4904, %v4927
  %v4929 = vand.u32 %v4928, 4294901760
  %v4930 = vsub.f32 %v4928, %v4929
  %v4931 = vand.u32 %v4930, 4294901760
  %4932 = vmatmul.f32.gmra.mxu0 %v4931
  %v4933 = vpop.f32.mrf.mxu0
  %v4934 = vadd.f32 0.0, %v4933
  %v4935 = vand.u32 %v4907, 4294901760
  %v4936 = vsub.f32 %v4907, %v4935
  %v4937 = vand.u32 %v4936, 4294901760
  %v4938 = vsub.f32 %v4936, %v4937
  %v4939 = vand.u32 %v4938, 4294901760
  %4940 = vmatmul.f32.gmra.mxu0 %v4939
  %v4941 = vpop.f32.mrf.mxu0
  %v4942 = vadd.f32 0.0, %v4941
  %4943 = vdwg.mxu0
  %4944 = vmatpush.msra.mxu0 0.0
  %4945 = vmatpush.msra.mxu0 0.0
  %4946 = vmatpush.msra.mxu0 0.0
  %4947 = vmatpush.msra.mxu0 0.0
  %4948 = vmatpush.msra.mxu0 0.0
  %4949 = vmatpush.msra.mxu0 0.0
  %4950 = vmatpush.msra.mxu0 0.0
  %4951 = vmatpush.msra.mxu0 0.0
  %4952 = vmatpush.msra.mxu0 0.0
  %4953 = vmatpush.msra.mxu0 0.0
  %4954 = vmatpush.msra.mxu0 0.0
  %4955 = vmatpush.msra.mxu0 0.0
  %4956 = vmatpush.msra.mxu0 0.0
  %4957 = vmatpush.msra.mxu0 0.0
  %v4958 = vand.u32 %v4902, 4294901760
  %v4959 = vsub.f32 %v4902, %v4958
  %v4960 = vand.u32 %v4959, 4294901760
  %v4961 = vsub.f32 %v4959, %v4960
  %v4962 = vand.u32 %v4961, 4294901760
  %4963 = vmatpush.msra.mxu0 %v4962
  %v4964 = vand.u32 %v4901, 4294901760
  %v4965 = vsub.f32 %v4901, %v4964
  %v4966 = vand.u32 %v4965, 4294901760
  %v4967 = vsub.f32 %v4965, %v4966
  %v4968 = vand.u32 %v4967, 4294901760
  %4969 = vmatpush.msra.mxu0 %v4968
  %v4970 = vand.u32 %v4904, 4294901760
  %4971 = vmatmul.f32.gmra.mxu0 %v4970
  %v4972 = vpop.f32.mrf.mxu0
  %v4973 = vadd.f32 %v4934, %v4972
  %v4974 = vand.u32 %v4907, 4294901760
  %4975 = vmatmul.f32.gmra.mxu0 %v4974
  %v4976 = vpop.f32.mrf.mxu0
  %v4977 = vadd.f32 %v4942, %v4976
  %4978 = vdwg.mxu0
  %4979 = vmatpush.msra.mxu0 0.0
  %4980 = vmatpush.msra.mxu0 0.0
  %4981 = vmatpush.msra.mxu0 0.0
  %4982 = vmatpush.msra.mxu0 0.0
  %4983 = vmatpush.msra.mxu0 0.0
  %4984 = vmatpush.msra.mxu0 0.0
  %4985 = vmatpush.msra.mxu0 0.0
  %4986 = vmatpush.msra.mxu0 0.0
  %4987 = vmatpush.msra.mxu0 0.0
  %4988 = vmatpush.msra.mxu0 0.0
  %4989 = vmatpush.msra.mxu0 0.0
  %4990 = vmatpush.msra.mxu0 0.0
  %4991 = vmatpush.msra.mxu0 0.0
  %4992 = vmatpush.msra.mxu0 0.0
  %v4993 = vand.u32 %v4902, 4294901760
  %v4994 = vsub.f32 %v4902, %v4993
  %4995 = vmatpush.msra.mxu0 %v4994
  %v4996 = vand.u32 %v4901, 4294901760
  %v4997 = vsub.f32 %v4901, %v4996
  %4998 = vmatpush.msra.mxu0 %v4997
  %v4999 = vand.u32 %v4904, 4294901760
  %v5000 = vsub.f32 %v4904, %v4999
  %5001 = vmatmul.f32.gmra.mxu0 %v5000
  %v5002 = vpop.f32.mrf.mxu0
  %v5003 = vadd.f32 %v4973, %v5002
  %v5004 = vand.u32 %v4907, 4294901760
  %v5005 = vsub.f32 %v4907, %v5004
  %5006 = vmatmul.f32.gmra.mxu0 %v5005
  %v5007 = vpop.f32.mrf.mxu0
  %v5008 = vadd.f32 %v4977, %v5007
  %5009 = vdwg.mxu0
  %5010 = vmatpush.msra.mxu0 0.0
  %5011 = vmatpush.msra.mxu0 0.0
  %5012 = vmatpush.msra.mxu0 0.0
  %5013 = vmatpush.msra.mxu0 0.0
  %5014 = vmatpush.msra.mxu0 0.0
  %5015 = vmatpush.msra.mxu0 0.0
  %5016 = vmatpush.msra.mxu0 0.0
  %5017 = vmatpush.msra.mxu0 0.0
  %5018 = vmatpush.msra.mxu0 0.0
  %5019 = vmatpush.msra.mxu0 0.0
  %5020 = vmatpush.msra.mxu0 0.0
  %5021 = vmatpush.msra.mxu0 0.0
  %5022 = vmatpush.msra.mxu0 0.0
  %5023 = vmatpush.msra.mxu0 0.0
  %v5024 = vand.u32 %v4902, 4294901760
  %5025 = vmatpush.msra.mxu0 %v5024
  %v5026 = vand.u32 %v4901, 4294901760
  %5027 = vmatpush.msra.mxu0 %v5026
  %v5028 = vand.u32 %v4904, 4294901760
  %v5029 = vsub.f32 %v4904, %v5028
  %v5030 = vand.u32 %v5029, 4294901760
  %5031 = vmatmul.f32.gmra.mxu0 %v5030
  %v5032 = vpop.f32.mrf.mxu0
  %v5033 = vadd.f32 %v5003, %v5032
  %v5034 = vand.u32 %v4907, 4294901760
  %v5035 = vsub.f32 %v4907, %v5034
  %v5036 = vand.u32 %v5035, 4294901760
  %5037 = vmatmul.f32.gmra.mxu0 %v5036
  %v5038 = vpop.f32.mrf.mxu0
  %v5039 = vadd.f32 %v5008, %v5038
  %5040 = vdwg.mxu0
  %5041 = vmatpush.msra.mxu0 0.0
  %5042 = vmatpush.msra.mxu0 0.0
  %5043 = vmatpush.msra.mxu0 0.0
  %5044 = vmatpush.msra.mxu0 0.0
  %5045 = vmatpush.msra.mxu0 0.0
  %5046 = vmatpush.msra.mxu0 0.0
  %5047 = vmatpush.msra.mxu0 0.0
  %5048 = vmatpush.msra.mxu0 0.0
  %5049 = vmatpush.msra.mxu0 0.0
  %5050 = vmatpush.msra.mxu0 0.0
  %5051 = vmatpush.msra.mxu0 0.0
  %5052 = vmatpush.msra.mxu0 0.0
  %5053 = vmatpush.msra.mxu0 0.0
  %5054 = vmatpush.msra.mxu0 0.0
  %v5055 = vand.u32 %v4902, 4294901760
  %v5056 = vsub.f32 %v4902, %v5055
  %v5057 = vand.u32 %v5056, 4294901760
  %5058 = vmatpush.msra.mxu0 %v5057
  %v5059 = vand.u32 %v4901, 4294901760
  %v5060 = vsub.f32 %v4901, %v5059
  %v5061 = vand.u32 %v5060, 4294901760
  %5062 = vmatpush.msra.mxu0 %v5061
  %v5063 = vand.u32 %v4904, 4294901760
  %5064 = vmatmul.f32.gmra.mxu0 %v5063
  %v5065 = vpop.f32.mrf.mxu0
  %v5066 = vadd.f32 %v5033, %v5065
  %v5067 = vand.u32 %v4907, 4294901760
  %5068 = vmatmul.f32.gmra.mxu0 %v5067
  %v5069 = vpop.f32.mrf.mxu0
  %v5070 = vadd.f32 %v5039, %v5069
  %5071 = vdwg.mxu0
  %5072 = vmatpush.msra.mxu0 0.0
  %5073 = vmatpush.msra.mxu0 0.0
  %5074 = vmatpush.msra.mxu0 0.0
  %5075 = vmatpush.msra.mxu0 0.0
  %5076 = vmatpush.msra.mxu0 0.0
  %5077 = vmatpush.msra.mxu0 0.0
  %5078 = vmatpush.msra.mxu0 0.0
  %5079 = vmatpush.msra.mxu0 0.0
  %5080 = vmatpush.msra.mxu0 0.0
  %5081 = vmatpush.msra.mxu0 0.0
  %5082 = vmatpush.msra.mxu0 0.0
  %5083 = vmatpush.msra.mxu0 0.0
  %5084 = vmatpush.msra.mxu0 0.0
  %5085 = vmatpush.msra.mxu0 0.0
  %v5086 = vand.u32 %v4902, 4294901760
  %5087 = vmatpush.msra.mxu0 %v5086
  %v5088 = vand.u32 %v4901, 4294901760
  %5089 = vmatpush.msra.mxu0 %v5088
  %v5090 = vand.u32 %v4904, 4294901760
  %5091 = vmatmul.f32.gmra.mxu0 %v5090
  %v5092 = vpop.f32.mrf.mxu0
  %v5093 = vadd.f32 %v5066, %v5092
  %v5094 = vand.u32 %v4907, 4294901760
  %5095 = vmatmul.f32.gmra.mxu0 %v5094
  %v5096 = vpop.f32.mrf.mxu0
  %v5097 = vadd.f32 %v5070, %v5096
  %5098 = vdwg.mxu0
  %v5099 = vadd.f32 %v4698, %v5093
  %v5100 = vadd.f32 %v4702, %v5097
  %v5101 = vperm.slane %v38, 5
  %v5102 = vadd.f32 %v5099, %v5101
  %v5103 = vadd.f32 %v5100, %v5101
  %v5104 = vadd.f32 %v5102, %v4113
  %v5105 = vadd.f32 %v5103, %v4114
  %v5106 = vperm.slane %v38, 6
  %v5107 = vmul.f32 %v5104, %v5106
  %v5108 = vmul.f32 %v5105, %v5106
  %v5109 = vperm.slane %v38, 7
  %v5110 = vadd.f32 %v5107, %v5109
  %v5111 = vadd.f32 %v5108, %v5109
  %s5112 = scalar_lea.vmem %s5, 48
  %v5113 = vld [vmem:[%s5112] sm:$0xff]
  %v5114 = vld [vmem:[%s5112 + $0x8] sm:$0xff]
  %v5115 = vperm.slane %v39, 0
  %5116 = vmatpush.msra.mxu0 0.0
  %5117 = vmatpush.msra.mxu0 0.0
  %5118 = vmatpush.msra.mxu0 0.0
  %5119 = vmatpush.msra.mxu0 0.0
  %5120 = vmatpush.msra.mxu0 0.0
  %5121 = vmatpush.msra.mxu0 0.0
  %5122 = vmatpush.msra.mxu0 0.0
  %5123 = vmatpush.msra.mxu0 0.0
  %5124 = vmatpush.msra.mxu0 0.0
  %5125 = vmatpush.msra.mxu0 0.0
  %5126 = vmatpush.msra.mxu0 0.0
  %5127 = vmatpush.msra.mxu0 0.0
  %5128 = vmatpush.msra.mxu0 0.0
  %5129 = vmatpush.msra.mxu0 0.0
  %v5130 = vand.u32 %v5114, 4294901760
  %5131 = vmatpush.msra.mxu0 %v5130
  %v5132 = vand.u32 %v5113, 4294901760
  %5133 = vmatpush.msra.mxu0 %v5132
  %v5134 = vand.u32 %v4510, 4294901760
  %v5135 = vsub.f32 %v4510, %v5134
  %v5136 = vand.u32 %v5135, 4294901760
  %v5137 = vsub.f32 %v5135, %v5136
  %v5138 = vand.u32 %v5137, 4294901760
  %5139 = vmatmul.f32.gmra.mxu0 %v5138
  %v5140 = vpop.f32.mrf.mxu0
  %v5141 = vadd.f32 %v5115, %v5140
  %v5142 = vand.u32 %v4512, 4294901760
  %v5143 = vsub.f32 %v4512, %v5142
  %v5144 = vand.u32 %v5143, 4294901760
  %v5145 = vsub.f32 %v5143, %v5144
  %v5146 = vand.u32 %v5145, 4294901760
  %5147 = vmatmul.f32.gmra.mxu0 %v5146
  %v5148 = vpop.f32.mrf.mxu0
  %v5149 = vadd.f32 %v5115, %v5148
  %5150 = vdwg.mxu0
  %5151 = vmatpush.msra.mxu0 0.0
  %5152 = vmatpush.msra.mxu0 0.0
  %5153 = vmatpush.msra.mxu0 0.0
  %5154 = vmatpush.msra.mxu0 0.0
  %5155 = vmatpush.msra.mxu0 0.0
  %5156 = vmatpush.msra.mxu0 0.0
  %5157 = vmatpush.msra.mxu0 0.0
  %5158 = vmatpush.msra.mxu0 0.0
  %5159 = vmatpush.msra.mxu0 0.0
  %5160 = vmatpush.msra.mxu0 0.0
  %5161 = vmatpush.msra.mxu0 0.0
  %5162 = vmatpush.msra.mxu0 0.0
  %5163 = vmatpush.msra.mxu0 0.0
  %5164 = vmatpush.msra.mxu0 0.0
  %v5165 = vand.u32 %v5114, 4294901760
  %v5166 = vsub.f32 %v5114, %v5165
  %v5167 = vand.u32 %v5166, 4294901760
  %v5168 = vsub.f32 %v5166, %v5167
  %v5169 = vand.u32 %v5168, 4294901760
  %5170 = vmatpush.msra.mxu0 %v5169
  %v5171 = vand.u32 %v5113, 4294901760
  %v5172 = vsub.f32 %v5113, %v5171
  %v5173 = vand.u32 %v5172, 4294901760
  %v5174 = vsub.f32 %v5172, %v5173
  %v5175 = vand.u32 %v5174, 4294901760
  %5176 = vmatpush.msra.mxu0 %v5175
  %v5177 = vand.u32 %v4510, 4294901760
  %5178 = vmatmul.f32.gmra.mxu0 %v5177
  %v5179 = vpop.f32.mrf.mxu0
  %v5180 = vadd.f32 %v5141, %v5179
  %v5181 = vand.u32 %v4512, 4294901760
  %5182 = vmatmul.f32.gmra.mxu0 %v5181
  %v5183 = vpop.f32.mrf.mxu0
  %v5184 = vadd.f32 %v5149, %v5183
  %5185 = vdwg.mxu0
  %5186 = vmatpush.msra.mxu0 0.0
  %5187 = vmatpush.msra.mxu0 0.0
  %5188 = vmatpush.msra.mxu0 0.0
  %5189 = vmatpush.msra.mxu0 0.0
  %5190 = vmatpush.msra.mxu0 0.0
  %5191 = vmatpush.msra.mxu0 0.0
  %5192 = vmatpush.msra.mxu0 0.0
  %5193 = vmatpush.msra.mxu0 0.0
  %5194 = vmatpush.msra.mxu0 0.0
  %5195 = vmatpush.msra.mxu0 0.0
  %5196 = vmatpush.msra.mxu0 0.0
  %5197 = vmatpush.msra.mxu0 0.0
  %5198 = vmatpush.msra.mxu0 0.0
  %5199 = vmatpush.msra.mxu0 0.0
  %v5200 = vand.u32 %v5114, 4294901760
  %v5201 = vsub.f32 %v5114, %v5200
  %5202 = vmatpush.msra.mxu0 %v5201
  %v5203 = vand.u32 %v5113, 4294901760
  %v5204 = vsub.f32 %v5113, %v5203
  %5205 = vmatpush.msra.mxu0 %v5204
  %v5206 = vand.u32 %v4510, 4294901760
  %v5207 = vsub.f32 %v4510, %v5206
  %5208 = vmatmul.f32.gmra.mxu0 %v5207
  %v5209 = vpop.f32.mrf.mxu0
  %v5210 = vadd.f32 %v5180, %v5209
  %v5211 = vand.u32 %v4512, 4294901760
  %v5212 = vsub.f32 %v4512, %v5211
  %5213 = vmatmul.f32.gmra.mxu0 %v5212
  %v5214 = vpop.f32.mrf.mxu0
  %v5215 = vadd.f32 %v5184, %v5214
  %5216 = vdwg.mxu0
  %5217 = vmatpush.msra.mxu0 0.0
  %5218 = vmatpush.msra.mxu0 0.0
  %5219 = vmatpush.msra.mxu0 0.0
  %5220 = vmatpush.msra.mxu0 0.0
  %5221 = vmatpush.msra.mxu0 0.0
  %5222 = vmatpush.msra.mxu0 0.0
  %5223 = vmatpush.msra.mxu0 0.0
  %5224 = vmatpush.msra.mxu0 0.0
  %5225 = vmatpush.msra.mxu0 0.0
  %5226 = vmatpush.msra.mxu0 0.0
  %5227 = vmatpush.msra.mxu0 0.0
  %5228 = vmatpush.msra.mxu0 0.0
  %5229 = vmatpush.msra.mxu0 0.0
  %5230 = vmatpush.msra.mxu0 0.0
  %v5231 = vand.u32 %v5114, 4294901760
  %5232 = vmatpush.msra.mxu0 %v5231
  %v5233 = vand.u32 %v5113, 4294901760
  %5234 = vmatpush.msra.mxu0 %v5233
  %v5235 = vand.u32 %v4510, 4294901760
  %v5236 = vsub.f32 %v4510, %v5235
  %v5237 = vand.u32 %v5236, 4294901760
  %5238 = vmatmul.f32.gmra.mxu0 %v5237
  %v5239 = vpop.f32.mrf.mxu0
  %v5240 = vadd.f32 %v5210, %v5239
  %v5241 = vand.u32 %v4512, 4294901760
  %v5242 = vsub.f32 %v4512, %v5241
  %v5243 = vand.u32 %v5242, 4294901760
  %5244 = vmatmul.f32.gmra.mxu0 %v5243
  %v5245 = vpop.f32.mrf.mxu0
  %v5246 = vadd.f32 %v5215, %v5245
  %5247 = vdwg.mxu0
  %5248 = vmatpush.msra.mxu0 0.0
  %5249 = vmatpush.msra.mxu0 0.0
  %5250 = vmatpush.msra.mxu0 0.0
  %5251 = vmatpush.msra.mxu0 0.0
  %5252 = vmatpush.msra.mxu0 0.0
  %5253 = vmatpush.msra.mxu0 0.0
  %5254 = vmatpush.msra.mxu0 0.0
  %5255 = vmatpush.msra.mxu0 0.0
  %5256 = vmatpush.msra.mxu0 0.0
  %5257 = vmatpush.msra.mxu0 0.0
  %5258 = vmatpush.msra.mxu0 0.0
  %5259 = vmatpush.msra.mxu0 0.0
  %5260 = vmatpush.msra.mxu0 0.0
  %5261 = vmatpush.msra.mxu0 0.0
  %v5262 = vand.u32 %v5114, 4294901760
  %v5263 = vsub.f32 %v5114, %v5262
  %v5264 = vand.u32 %v5263, 4294901760
  %5265 = vmatpush.msra.mxu0 %v5264
  %v5266 = vand.u32 %v5113, 4294901760
  %v5267 = vsub.f32 %v5113, %v5266
  %v5268 = vand.u32 %v5267, 4294901760
  %5269 = vmatpush.msra.mxu0 %v5268
  %v5270 = vand.u32 %v4510, 4294901760
  %5271 = vmatmul.f32.gmra.mxu0 %v5270
  %v5272 = vpop.f32.mrf.mxu0
  %v5273 = vadd.f32 %v5240, %v5272
  %v5274 = vand.u32 %v4512, 4294901760
  %5275 = vmatmul.f32.gmra.mxu0 %v5274
  %v5276 = vpop.f32.mrf.mxu0
  %v5277 = vadd.f32 %v5246, %v5276
  %5278 = vdwg.mxu0
  %5279 = vmatpush.msra.mxu0 0.0
  %5280 = vmatpush.msra.mxu0 0.0
  %5281 = vmatpush.msra.mxu0 0.0
  %5282 = vmatpush.msra.mxu0 0.0
  %5283 = vmatpush.msra.mxu0 0.0
  %5284 = vmatpush.msra.mxu0 0.0
  %5285 = vmatpush.msra.mxu0 0.0
  %5286 = vmatpush.msra.mxu0 0.0
  %5287 = vmatpush.msra.mxu0 0.0
  %5288 = vmatpush.msra.mxu0 0.0
  %5289 = vmatpush.msra.mxu0 0.0
  %5290 = vmatpush.msra.mxu0 0.0
  %5291 = vmatpush.msra.mxu0 0.0
  %5292 = vmatpush.msra.mxu0 0.0
  %v5293 = vand.u32 %v5114, 4294901760
  %5294 = vmatpush.msra.mxu0 %v5293
  %v5295 = vand.u32 %v5113, 4294901760
  %5296 = vmatpush.msra.mxu0 %v5295
  %v5297 = vand.u32 %v4510, 4294901760
  %5298 = vmatmul.f32.gmra.mxu0 %v5297
  %v5299 = vpop.f32.mrf.mxu0
  %v5300 = vadd.f32 %v5273, %v5299
  %v5301 = vand.u32 %v4512, 4294901760
  %5302 = vmatmul.f32.gmra.mxu0 %v5301
  %v5303 = vpop.f32.mrf.mxu0
  %v5304 = vadd.f32 %v5277, %v5303
  %5305 = vdwg.mxu0
  %s5306 = scalar_lea.vmem %s5, 64
  %v5307 = vld [vmem:[%s5306] sm:$0xff]
  %v5308 = vld [vmem:[%s5306 + $0x8] sm:$0xff]
  %v5309 = vperm.slane %v39, 1
  %5310 = vmatpush.msra.mxu0 0.0
  %5311 = vmatpush.msra.mxu0 0.0
  %5312 = vmatpush.msra.mxu0 0.0
  %5313 = vmatpush.msra.mxu0 0.0
  %5314 = vmatpush.msra.mxu0 0.0
  %5315 = vmatpush.msra.mxu0 0.0
  %5316 = vmatpush.msra.mxu0 0.0
  %5317 = vmatpush.msra.mxu0 0.0
  %5318 = vmatpush.msra.mxu0 0.0
  %5319 = vmatpush.msra.mxu0 0.0
  %5320 = vmatpush.msra.mxu0 0.0
  %5321 = vmatpush.msra.mxu0 0.0
  %5322 = vmatpush.msra.mxu0 0.0
  %5323 = vmatpush.msra.mxu0 0.0
  %v5324 = vand.u32 %v5308, 4294901760
  %5325 = vmatpush.msra.mxu0 %v5324
  %v5326 = vand.u32 %v5307, 4294901760
  %5327 = vmatpush.msra.mxu0 %v5326
  %v5328 = vand.u32 %v4510, 4294901760
  %v5329 = vsub.f32 %v4510, %v5328
  %v5330 = vand.u32 %v5329, 4294901760
  %v5331 = vsub.f32 %v5329, %v5330
  %v5332 = vand.u32 %v5331, 4294901760
  %5333 = vmatmul.f32.gmra.mxu0 %v5332
  %v5334 = vpop.f32.mrf.mxu0
  %v5335 = vadd.f32 %v5309, %v5334
  %v5336 = vand.u32 %v4512, 4294901760
  %v5337 = vsub.f32 %v4512, %v5336
  %v5338 = vand.u32 %v5337, 4294901760
  %v5339 = vsub.f32 %v5337, %v5338
  %v5340 = vand.u32 %v5339, 4294901760
  %5341 = vmatmul.f32.gmra.mxu0 %v5340
  %v5342 = vpop.f32.mrf.mxu0
  %v5343 = vadd.f32 %v5309, %v5342
  %5344 = vdwg.mxu0
  %5345 = vmatpush.msra.mxu0 0.0
  %5346 = vmatpush.msra.mxu0 0.0
  %5347 = vmatpush.msra.mxu0 0.0
  %5348 = vmatpush.msra.mxu0 0.0
  %5349 = vmatpush.msra.mxu0 0.0
  %5350 = vmatpush.msra.mxu0 0.0
  %5351 = vmatpush.msra.mxu0 0.0
  %5352 = vmatpush.msra.mxu0 0.0
  %5353 = vmatpush.msra.mxu0 0.0
  %5354 = vmatpush.msra.mxu0 0.0
  %5355 = vmatpush.msra.mxu0 0.0
  %5356 = vmatpush.msra.mxu0 0.0
  %5357 = vmatpush.msra.mxu0 0.0
  %5358 = vmatpush.msra.mxu0 0.0
  %v5359 = vand.u32 %v5308, 4294901760
  %v5360 = vsub.f32 %v5308, %v5359
  %v5361 = vand.u32 %v5360, 4294901760
  %v5362 = vsub.f32 %v5360, %v5361
  %v5363 = vand.u32 %v5362, 4294901760
  %5364 = vmatpush.msra.mxu0 %v5363
  %v5365 = vand.u32 %v5307, 4294901760
  %v5366 = vsub.f32 %v5307, %v5365
  %v5367 = vand.u32 %v5366, 4294901760
  %v5368 = vsub.f32 %v5366, %v5367
  %v5369 = vand.u32 %v5368, 4294901760
  %5370 = vmatpush.msra.mxu0 %v5369
  %v5371 = vand.u32 %v4510, 4294901760
  %5372 = vmatmul.f32.gmra.mxu0 %v5371
  %v5373 = vpop.f32.mrf.mxu0
  %v5374 = vadd.f32 %v5335, %v5373
  %v5375 = vand.u32 %v4512, 4294901760
  %5376 = vmatmul.f32.gmra.mxu0 %v5375
  %v5377 = vpop.f32.mrf.mxu0
  %v5378 = vadd.f32 %v5343, %v5377
  %5379 = vdwg.mxu0
  %5380 = vmatpush.msra.mxu0 0.0
  %5381 = vmatpush.msra.mxu0 0.0
  %5382 = vmatpush.msra.mxu0 0.0
  %5383 = vmatpush.msra.mxu0 0.0
  %5384 = vmatpush.msra.mxu0 0.0
  %5385 = vmatpush.msra.mxu0 0.0
  %5386 = vmatpush.msra.mxu0 0.0
  %5387 = vmatpush.msra.mxu0 0.0
  %5388 = vmatpush.msra.mxu0 0.0
  %5389 = vmatpush.msra.mxu0 0.0
  %5390 = vmatpush.msra.mxu0 0.0
  %5391 = vmatpush.msra.mxu0 0.0
  %5392 = vmatpush.msra.mxu0 0.0
  %5393 = vmatpush.msra.mxu0 0.0
  %v5394 = vand.u32 %v5308, 4294901760
  %v5395 = vsub.f32 %v5308, %v5394
  %5396 = vmatpush.msra.mxu0 %v5395
  %v5397 = vand.u32 %v5307, 4294901760
  %v5398 = vsub.f32 %v5307, %v5397
  %5399 = vmatpush.msra.mxu0 %v5398
  %v5400 = vand.u32 %v4510, 4294901760
  %v5401 = vsub.f32 %v4510, %v5400
  %5402 = vmatmul.f32.gmra.mxu0 %v5401
  %v5403 = vpop.f32.mrf.mxu0
  %v5404 = vadd.f32 %v5374, %v5403
  %v5405 = vand.u32 %v4512, 4294901760
  %v5406 = vsub.f32 %v4512, %v5405
  %5407 = vmatmul.f32.gmra.mxu0 %v5406
  %v5408 = vpop.f32.mrf.mxu0
  %v5409 = vadd.f32 %v5378, %v5408
  %5410 = vdwg.mxu0
  %5411 = vmatpush.msra.mxu0 0.0
  %5412 = vmatpush.msra.mxu0 0.0
  %5413 = vmatpush.msra.mxu0 0.0
  %5414 = vmatpush.msra.mxu0 0.0
  %5415 = vmatpush.msra.mxu0 0.0
  %5416 = vmatpush.msra.mxu0 0.0
  %5417 = vmatpush.msra.mxu0 0.0
  %5418 = vmatpush.msra.mxu0 0.0
  %5419 = vmatpush.msra.mxu0 0.0
  %5420 = vmatpush.msra.mxu0 0.0
  %5421 = vmatpush.msra.mxu0 0.0
  %5422 = vmatpush.msra.mxu0 0.0
  %5423 = vmatpush.msra.mxu0 0.0
  %5424 = vmatpush.msra.mxu0 0.0
  %v5425 = vand.u32 %v5308, 4294901760
  %5426 = vmatpush.msra.mxu0 %v5425
  %v5427 = vand.u32 %v5307, 4294901760
  %5428 = vmatpush.msra.mxu0 %v5427
  %v5429 = vand.u32 %v4510, 4294901760
  %v5430 = vsub.f32 %v4510, %v5429
  %v5431 = vand.u32 %v5430, 4294901760
  %5432 = vmatmul.f32.gmra.mxu0 %v5431
  %v5433 = vpop.f32.mrf.mxu0
  %v5434 = vadd.f32 %v5404, %v5433
  %v5435 = vand.u32 %v4512, 4294901760
  %v5436 = vsub.f32 %v4512, %v5435
  %v5437 = vand.u32 %v5436, 4294901760
  %5438 = vmatmul.f32.gmra.mxu0 %v5437
  %v5439 = vpop.f32.mrf.mxu0
  %v5440 = vadd.f32 %v5409, %v5439
  %5441 = vdwg.mxu0
  %5442 = vmatpush.msra.mxu0 0.0
  %5443 = vmatpush.msra.mxu0 0.0
  %5444 = vmatpush.msra.mxu0 0.0
  %5445 = vmatpush.msra.mxu0 0.0
  %5446 = vmatpush.msra.mxu0 0.0
  %5447 = vmatpush.msra.mxu0 0.0
  %5448 = vmatpush.msra.mxu0 0.0
  %5449 = vmatpush.msra.mxu0 0.0
  %5450 = vmatpush.msra.mxu0 0.0
  %5451 = vmatpush.msra.mxu0 0.0
  %5452 = vmatpush.msra.mxu0 0.0
  %5453 = vmatpush.msra.mxu0 0.0
  %5454 = vmatpush.msra.mxu0 0.0
  %5455 = vmatpush.msra.mxu0 0.0
  %v5456 = vand.u32 %v5308, 4294901760
  %v5457 = vsub.f32 %v5308, %v5456
  %v5458 = vand.u32 %v5457, 4294901760
  %5459 = vmatpush.msra.mxu0 %v5458
  %v5460 = vand.u32 %v5307, 4294901760
  %v5461 = vsub.f32 %v5307, %v5460
  %v5462 = vand.u32 %v5461, 4294901760
  %5463 = vmatpush.msra.mxu0 %v5462
  %v5464 = vand.u32 %v4510, 4294901760
  %5465 = vmatmul.f32.gmra.mxu0 %v5464
  %v5466 = vpop.f32.mrf.mxu0
  %v5467 = vadd.f32 %v5434, %v5466
  %v5468 = vand.u32 %v4512, 4294901760
  %5469 = vmatmul.f32.gmra.mxu0 %v5468
  %v5470 = vpop.f32.mrf.mxu0
  %v5471 = vadd.f32 %v5440, %v5470
  %5472 = vdwg.mxu0
  %5473 = vmatpush.msra.mxu0 0.0
  %5474 = vmatpush.msra.mxu0 0.0
  %5475 = vmatpush.msra.mxu0 0.0
  %5476 = vmatpush.msra.mxu0 0.0
  %5477 = vmatpush.msra.mxu0 0.0
  %5478 = vmatpush.msra.mxu0 0.0
  %5479 = vmatpush.msra.mxu0 0.0
  %5480 = vmatpush.msra.mxu0 0.0
  %5481 = vmatpush.msra.mxu0 0.0
  %5482 = vmatpush.msra.mxu0 0.0
  %5483 = vmatpush.msra.mxu0 0.0
  %5484 = vmatpush.msra.mxu0 0.0
  %5485 = vmatpush.msra.mxu0 0.0
  %5486 = vmatpush.msra.mxu0 0.0
  %v5487 = vand.u32 %v5308, 4294901760
  %5488 = vmatpush.msra.mxu0 %v5487
  %v5489 = vand.u32 %v5307, 4294901760
  %5490 = vmatpush.msra.mxu0 %v5489
  %v5491 = vand.u32 %v4510, 4294901760
  %5492 = vmatmul.f32.gmra.mxu0 %v5491
  %v5493 = vpop.f32.mrf.mxu0
  %v5494 = vadd.f32 %v5467, %v5493
  %v5495 = vand.u32 %v4512, 4294901760
  %5496 = vmatmul.f32.gmra.mxu0 %v5495
  %v5497 = vpop.f32.mrf.mxu0
  %v5498 = vadd.f32 %v5471, %v5497
  %5499 = vdwg.mxu0
  %s5500 = scalar_lea.vmem %s5, 80
  %v5501 = vld [vmem:[%s5500] sm:$0xff]
  %v5502 = vld [vmem:[%s5500 + $0x8] sm:$0xff]
  %v5503 = vperm.slane %v39, 2
  %5504 = vmatpush.msra.mxu0 0.0
  %5505 = vmatpush.msra.mxu0 0.0
  %5506 = vmatpush.msra.mxu0 0.0
  %5507 = vmatpush.msra.mxu0 0.0
  %5508 = vmatpush.msra.mxu0 0.0
  %5509 = vmatpush.msra.mxu0 0.0
  %5510 = vmatpush.msra.mxu0 0.0
  %5511 = vmatpush.msra.mxu0 0.0
  %5512 = vmatpush.msra.mxu0 0.0
  %5513 = vmatpush.msra.mxu0 0.0
  %5514 = vmatpush.msra.mxu0 0.0
  %5515 = vmatpush.msra.mxu0 0.0
  %5516 = vmatpush.msra.mxu0 0.0
  %5517 = vmatpush.msra.mxu0 0.0
  %v5518 = vand.u32 %v5502, 4294901760
  %5519 = vmatpush.msra.mxu0 %v5518
  %v5520 = vand.u32 %v5501, 4294901760
  %5521 = vmatpush.msra.mxu0 %v5520
  %v5522 = vand.u32 %v4510, 4294901760
  %v5523 = vsub.f32 %v4510, %v5522
  %v5524 = vand.u32 %v5523, 4294901760
  %v5525 = vsub.f32 %v5523, %v5524
  %v5526 = vand.u32 %v5525, 4294901760
  %5527 = vmatmul.f32.gmra.mxu0 %v5526
  %v5528 = vpop.f32.mrf.mxu0
  %v5529 = vadd.f32 %v5503, %v5528
  %v5530 = vand.u32 %v4512, 4294901760
  %v5531 = vsub.f32 %v4512, %v5530
  %v5532 = vand.u32 %v5531, 4294901760
  %v5533 = vsub.f32 %v5531, %v5532
  %v5534 = vand.u32 %v5533, 4294901760
  %5535 = vmatmul.f32.gmra.mxu0 %v5534
  %v5536 = vpop.f32.mrf.mxu0
  %v5537 = vadd.f32 %v5503, %v5536
  %5538 = vdwg.mxu0
  %5539 = vmatpush.msra.mxu0 0.0
  %5540 = vmatpush.msra.mxu0 0.0
  %5541 = vmatpush.msra.mxu0 0.0
  %5542 = vmatpush.msra.mxu0 0.0
  %5543 = vmatpush.msra.mxu0 0.0
  %5544 = vmatpush.msra.mxu0 0.0
  %5545 = vmatpush.msra.mxu0 0.0
  %5546 = vmatpush.msra.mxu0 0.0
  %5547 = vmatpush.msra.mxu0 0.0
  %5548 = vmatpush.msra.mxu0 0.0
  %5549 = vmatpush.msra.mxu0 0.0
  %5550 = vmatpush.msra.mxu0 0.0
  %5551 = vmatpush.msra.mxu0 0.0
  %5552 = vmatpush.msra.mxu0 0.0
  %v5553 = vand.u32 %v5502, 4294901760
  %v5554 = vsub.f32 %v5502, %v5553
  %v5555 = vand.u32 %v5554, 4294901760
  %v5556 = vsub.f32 %v5554, %v5555
  %v5557 = vand.u32 %v5556, 4294901760
  %5558 = vmatpush.msra.mxu0 %v5557
  %v5559 = vand.u32 %v5501, 4294901760
  %v5560 = vsub.f32 %v5501, %v5559
  %v5561 = vand.u32 %v5560, 4294901760
  %v5562 = vsub.f32 %v5560, %v5561
  %v5563 = vand.u32 %v5562, 4294901760
  %5564 = vmatpush.msra.mxu0 %v5563
  %v5565 = vand.u32 %v4510, 4294901760
  %5566 = vmatmul.f32.gmra.mxu0 %v5565
  %v5567 = vpop.f32.mrf.mxu0
  %v5568 = vadd.f32 %v5529, %v5567
  %v5569 = vand.u32 %v4512, 4294901760
  %5570 = vmatmul.f32.gmra.mxu0 %v5569
  %v5571 = vpop.f32.mrf.mxu0
  %v5572 = vadd.f32 %v5537, %v5571
  %5573 = vdwg.mxu0
  %5574 = vmatpush.msra.mxu0 0.0
  %5575 = vmatpush.msra.mxu0 0.0
  %5576 = vmatpush.msra.mxu0 0.0
  %5577 = vmatpush.msra.mxu0 0.0
  %5578 = vmatpush.msra.mxu0 0.0
  %5579 = vmatpush.msra.mxu0 0.0
  %5580 = vmatpush.msra.mxu0 0.0
  %5581 = vmatpush.msra.mxu0 0.0
  %5582 = vmatpush.msra.mxu0 0.0
  %5583 = vmatpush.msra.mxu0 0.0
  %5584 = vmatpush.msra.mxu0 0.0
  %5585 = vmatpush.msra.mxu0 0.0
  %5586 = vmatpush.msra.mxu0 0.0
  %5587 = vmatpush.msra.mxu0 0.0
  %v5588 = vand.u32 %v5502, 4294901760
  %v5589 = vsub.f32 %v5502, %v5588
  %5590 = vmatpush.msra.mxu0 %v5589
  %v5591 = vand.u32 %v5501, 4294901760
  %v5592 = vsub.f32 %v5501, %v5591
  %5593 = vmatpush.msra.mxu0 %v5592
  %v5594 = vand.u32 %v4510, 4294901760
  %v5595 = vsub.f32 %v4510, %v5594
  %5596 = vmatmul.f32.gmra.mxu0 %v5595
  %v5597 = vpop.f32.mrf.mxu0
  %v5598 = vadd.f32 %v5568, %v5597
  %v5599 = vand.u32 %v4512, 4294901760
  %v5600 = vsub.f32 %v4512, %v5599
  %5601 = vmatmul.f32.gmra.mxu0 %v5600
  %v5602 = vpop.f32.mrf.mxu0
  %v5603 = vadd.f32 %v5572, %v5602
  %5604 = vdwg.mxu0
  %5605 = vmatpush.msra.mxu0 0.0
  %5606 = vmatpush.msra.mxu0 0.0
  %5607 = vmatpush.msra.mxu0 0.0
  %5608 = vmatpush.msra.mxu0 0.0
  %5609 = vmatpush.msra.mxu0 0.0
  %5610 = vmatpush.msra.mxu0 0.0
  %5611 = vmatpush.msra.mxu0 0.0
  %5612 = vmatpush.msra.mxu0 0.0
  %5613 = vmatpush.msra.mxu0 0.0
  %5614 = vmatpush.msra.mxu0 0.0
  %5615 = vmatpush.msra.mxu0 0.0
  %5616 = vmatpush.msra.mxu0 0.0
  %5617 = vmatpush.msra.mxu0 0.0
  %5618 = vmatpush.msra.mxu0 0.0
  %v5619 = vand.u32 %v5502, 4294901760
  %5620 = vmatpush.msra.mxu0 %v5619
  %v5621 = vand.u32 %v5501, 4294901760
  %5622 = vmatpush.msra.mxu0 %v5621
  %v5623 = vand.u32 %v4510, 4294901760
  %v5624 = vsub.f32 %v4510, %v5623
  %v5625 = vand.u32 %v5624, 4294901760
  %5626 = vmatmul.f32.gmra.mxu0 %v5625
  %v5627 = vpop.f32.mrf.mxu0
  %v5628 = vadd.f32 %v5598, %v5627
  %v5629 = vand.u32 %v4512, 4294901760
  %v5630 = vsub.f32 %v4512, %v5629
  %v5631 = vand.u32 %v5630, 4294901760
  %5632 = vmatmul.f32.gmra.mxu0 %v5631
  %v5633 = vpop.f32.mrf.mxu0
  %v5634 = vadd.f32 %v5603, %v5633
  %5635 = vdwg.mxu0
  %5636 = vmatpush.msra.mxu0 0.0
  %5637 = vmatpush.msra.mxu0 0.0
  %5638 = vmatpush.msra.mxu0 0.0
  %5639 = vmatpush.msra.mxu0 0.0
  %5640 = vmatpush.msra.mxu0 0.0
  %5641 = vmatpush.msra.mxu0 0.0
  %5642 = vmatpush.msra.mxu0 0.0
  %5643 = vmatpush.msra.mxu0 0.0
  %5644 = vmatpush.msra.mxu0 0.0
  %5645 = vmatpush.msra.mxu0 0.0
  %5646 = vmatpush.msra.mxu0 0.0
  %5647 = vmatpush.msra.mxu0 0.0
  %5648 = vmatpush.msra.mxu0 0.0
  %5649 = vmatpush.msra.mxu0 0.0
  %v5650 = vand.u32 %v5502, 4294901760
  %v5651 = vsub.f32 %v5502, %v5650
  %v5652 = vand.u32 %v5651, 4294901760
  %5653 = vmatpush.msra.mxu0 %v5652
  %v5654 = vand.u32 %v5501, 4294901760
  %v5655 = vsub.f32 %v5501, %v5654
  %v5656 = vand.u32 %v5655, 4294901760
  %5657 = vmatpush.msra.mxu0 %v5656
  %v5658 = vand.u32 %v4510, 4294901760
  %5659 = vmatmul.f32.gmra.mxu0 %v5658
  %v5660 = vpop.f32.mrf.mxu0
  %v5661 = vadd.f32 %v5628, %v5660
  %v5662 = vand.u32 %v4512, 4294901760
  %5663 = vmatmul.f32.gmra.mxu0 %v5662
  %v5664 = vpop.f32.mrf.mxu0
  %v5665 = vadd.f32 %v5634, %v5664
  %5666 = vdwg.mxu0
  %5667 = vmatpush.msra.mxu0 0.0
  %5668 = vmatpush.msra.mxu0 0.0
  %5669 = vmatpush.msra.mxu0 0.0
  %5670 = vmatpush.msra.mxu0 0.0
  %5671 = vmatpush.msra.mxu0 0.0
  %5672 = vmatpush.msra.mxu0 0.0
  %5673 = vmatpush.msra.mxu0 0.0
  %5674 = vmatpush.msra.mxu0 0.0
  %5675 = vmatpush.msra.mxu0 0.0
  %5676 = vmatpush.msra.mxu0 0.0
  %5677 = vmatpush.msra.mxu0 0.0
  %5678 = vmatpush.msra.mxu0 0.0
  %5679 = vmatpush.msra.mxu0 0.0
  %5680 = vmatpush.msra.mxu0 0.0
  %v5681 = vand.u32 %v5502, 4294901760
  %5682 = vmatpush.msra.mxu0 %v5681
  %v5683 = vand.u32 %v5501, 4294901760
  %5684 = vmatpush.msra.mxu0 %v5683
  %v5685 = vand.u32 %v4510, 4294901760
  %5686 = vmatmul.f32.gmra.mxu0 %v5685
  %v5687 = vpop.f32.mrf.mxu0
  %v5688 = vadd.f32 %v5661, %v5687
  %v5689 = vand.u32 %v4512, 4294901760
  %5690 = vmatmul.f32.gmra.mxu0 %v5689
  %v5691 = vpop.f32.mrf.mxu0
  %v5692 = vadd.f32 %v5665, %v5691
  %5693 = vdwg.mxu0
  %vm5694 = vmand %vm1633, %vm3005
  %v5695 = vsel %vm5694, 1, 0
  %v5696 = vcvt.s32.f32 %v5695
  %v5697 = vmul.f32 %v5300, %v5696
  %v5698 = vmul.f32 %v5304, %v5696
  %v5700 = vsel %vm249, %v5697, 0
  %v5703 = vsel %vm249, %v5698, 0
  %v5706 = vsel %vm249, %v5494, 0
  %v5709 = vsel %vm249, %v5498, 0
  %5711 = vmatpush.xpose.msra.mxu0 0.0
  %5712 = vmatpush.xpose.msra.mxu0 0.0
  %5713 = vmatpush.xpose.msra.mxu0 0.0
  %5714 = vmatpush.xpose.msra.mxu0 0.0
  %5715 = vmatpush.xpose.msra.mxu0 0.0
  %5716 = vmatpush.xpose.msra.mxu0 0.0
  %5717 = vmatpush.xpose.msra.mxu0 0.0
  %5718 = vmatpush.xpose.msra.mxu0 0.0
  %5719 = vmatpush.xpose.msra.mxu0 0.0
  %5720 = vmatpush.xpose.msra.mxu0 0.0
  %5721 = vmatpush.xpose.msra.mxu0 0.0
  %5722 = vmatpush.xpose.msra.mxu0 0.0
  %5723 = vmatpush.xpose.msra.mxu0 0.0
  %5724 = vmatpush.xpose.msra.mxu0 0.0
  %v5725 = vand.u32 %v5709, 4294901760
  %5726 = vmatpush.xpose.msra.mxu0 %v5725
  %v5727 = vand.u32 %v5706, 4294901760
  %5728 = vmatpush.xpose.msra.mxu0 %v5727
  %v5729 = vand.u32 %v5700, 4294901760
  %v5730 = vsub.f32 %v5700, %v5729
  %v5731 = vand.u32 %v5730, 4294901760
  %v5732 = vsub.f32 %v5730, %v5731
  %v5733 = vand.u32 %v5732, 4294901760
  %5734 = vmatmul.f32.gmra.mxu0 %v5733
  %v5735 = vpop.f32.mrf.mxu0
  %v5736 = vadd.f32 0.0, %v5735
  %v5737 = vand.u32 %v5703, 4294901760
  %v5738 = vsub.f32 %v5703, %v5737
  %v5739 = vand.u32 %v5738, 4294901760
  %v5740 = vsub.f32 %v5738, %v5739
  %v5741 = vand.u32 %v5740, 4294901760
  %5742 = vmatmul.f32.gmra.mxu0 %v5741
  %v5743 = vpop.f32.mrf.mxu0
  %v5744 = vadd.f32 0.0, %v5743
  %5745 = vdwg.mxu0
  %5746 = vmatpush.xpose.msra.mxu0 0.0
  %5747 = vmatpush.xpose.msra.mxu0 0.0
  %5748 = vmatpush.xpose.msra.mxu0 0.0
  %5749 = vmatpush.xpose.msra.mxu0 0.0
  %5750 = vmatpush.xpose.msra.mxu0 0.0
  %5751 = vmatpush.xpose.msra.mxu0 0.0
  %5752 = vmatpush.xpose.msra.mxu0 0.0
  %5753 = vmatpush.xpose.msra.mxu0 0.0
  %5754 = vmatpush.xpose.msra.mxu0 0.0
  %5755 = vmatpush.xpose.msra.mxu0 0.0
  %5756 = vmatpush.xpose.msra.mxu0 0.0
  %5757 = vmatpush.xpose.msra.mxu0 0.0
  %5758 = vmatpush.xpose.msra.mxu0 0.0
  %5759 = vmatpush.xpose.msra.mxu0 0.0
  %v5760 = vand.u32 %v5709, 4294901760
  %v5761 = vsub.f32 %v5709, %v5760
  %v5762 = vand.u32 %v5761, 4294901760
  %v5763 = vsub.f32 %v5761, %v5762
  %v5764 = vand.u32 %v5763, 4294901760
  %5765 = vmatpush.xpose.msra.mxu0 %v5764
  %v5766 = vand.u32 %v5706, 4294901760
  %v5767 = vsub.f32 %v5706, %v5766
  %v5768 = vand.u32 %v5767, 4294901760
  %v5769 = vsub.f32 %v5767, %v5768
  %v5770 = vand.u32 %v5769, 4294901760
  %5771 = vmatpush.xpose.msra.mxu0 %v5770
  %v5772 = vand.u32 %v5700, 4294901760
  %5773 = vmatmul.f32.gmra.mxu0 %v5772
  %v5774 = vpop.f32.mrf.mxu0
  %v5775 = vadd.f32 %v5736, %v5774
  %v5776 = vand.u32 %v5703, 4294901760
  %5777 = vmatmul.f32.gmra.mxu0 %v5776
  %v5778 = vpop.f32.mrf.mxu0
  %v5779 = vadd.f32 %v5744, %v5778
  %5780 = vdwg.mxu0
  %5781 = vmatpush.xpose.msra.mxu0 0.0
  %5782 = vmatpush.xpose.msra.mxu0 0.0
  %5783 = vmatpush.xpose.msra.mxu0 0.0
  %5784 = vmatpush.xpose.msra.mxu0 0.0
  %5785 = vmatpush.xpose.msra.mxu0 0.0
  %5786 = vmatpush.xpose.msra.mxu0 0.0
  %5787 = vmatpush.xpose.msra.mxu0 0.0
  %5788 = vmatpush.xpose.msra.mxu0 0.0
  %5789 = vmatpush.xpose.msra.mxu0 0.0
  %5790 = vmatpush.xpose.msra.mxu0 0.0
  %5791 = vmatpush.xpose.msra.mxu0 0.0
  %5792 = vmatpush.xpose.msra.mxu0 0.0
  %5793 = vmatpush.xpose.msra.mxu0 0.0
  %5794 = vmatpush.xpose.msra.mxu0 0.0
  %v5795 = vand.u32 %v5709, 4294901760
  %v5796 = vsub.f32 %v5709, %v5795
  %5797 = vmatpush.xpose.msra.mxu0 %v5796
  %v5798 = vand.u32 %v5706, 4294901760
  %v5799 = vsub.f32 %v5706, %v5798
  %5800 = vmatpush.xpose.msra.mxu0 %v5799
  %v5801 = vand.u32 %v5700, 4294901760
  %v5802 = vsub.f32 %v5700, %v5801
  %5803 = vmatmul.f32.gmra.mxu0 %v5802
  %v5804 = vpop.f32.mrf.mxu0
  %v5805 = vadd.f32 %v5775, %v5804
  %v5806 = vand.u32 %v5703, 4294901760
  %v5807 = vsub.f32 %v5703, %v5806
  %5808 = vmatmul.f32.gmra.mxu0 %v5807
  %v5809 = vpop.f32.mrf.mxu0
  %v5810 = vadd.f32 %v5779, %v5809
  %5811 = vdwg.mxu0
  %5812 = vmatpush.xpose.msra.mxu0 0.0
  %5813 = vmatpush.xpose.msra.mxu0 0.0
  %5814 = vmatpush.xpose.msra.mxu0 0.0
  %5815 = vmatpush.xpose.msra.mxu0 0.0
  %5816 = vmatpush.xpose.msra.mxu0 0.0
  %5817 = vmatpush.xpose.msra.mxu0 0.0
  %5818 = vmatpush.xpose.msra.mxu0 0.0
  %5819 = vmatpush.xpose.msra.mxu0 0.0
  %5820 = vmatpush.xpose.msra.mxu0 0.0
  %5821 = vmatpush.xpose.msra.mxu0 0.0
  %5822 = vmatpush.xpose.msra.mxu0 0.0
  %5823 = vmatpush.xpose.msra.mxu0 0.0
  %5824 = vmatpush.xpose.msra.mxu0 0.0
  %5825 = vmatpush.xpose.msra.mxu0 0.0
  %v5826 = vand.u32 %v5709, 4294901760
  %5827 = vmatpush.xpose.msra.mxu0 %v5826
  %v5828 = vand.u32 %v5706, 4294901760
  %5829 = vmatpush.xpose.msra.mxu0 %v5828
  %v5830 = vand.u32 %v5700, 4294901760
  %v5831 = vsub.f32 %v5700, %v5830
  %v5832 = vand.u32 %v5831, 4294901760
  %5833 = vmatmul.f32.gmra.mxu0 %v5832
  %v5834 = vpop.f32.mrf.mxu0
  %v5835 = vadd.f32 %v5805, %v5834
  %v5836 = vand.u32 %v5703, 4294901760
  %v5837 = vsub.f32 %v5703, %v5836
  %v5838 = vand.u32 %v5837, 4294901760
  %5839 = vmatmul.f32.gmra.mxu0 %v5838
  %v5840 = vpop.f32.mrf.mxu0
  %v5841 = vadd.f32 %v5810, %v5840
  %5842 = vdwg.mxu0
  %5843 = vmatpush.xpose.msra.mxu0 0.0
  %5844 = vmatpush.xpose.msra.mxu0 0.0
  %5845 = vmatpush.xpose.msra.mxu0 0.0
  %5846 = vmatpush.xpose.msra.mxu0 0.0
  %5847 = vmatpush.xpose.msra.mxu0 0.0
  %5848 = vmatpush.xpose.msra.mxu0 0.0
  %5849 = vmatpush.xpose.msra.mxu0 0.0
  %5850 = vmatpush.xpose.msra.mxu0 0.0
  %5851 = vmatpush.xpose.msra.mxu0 0.0
  %5852 = vmatpush.xpose.msra.mxu0 0.0
  %5853 = vmatpush.xpose.msra.mxu0 0.0
  %5854 = vmatpush.xpose.msra.mxu0 0.0
  %5855 = vmatpush.xpose.msra.mxu0 0.0
  %5856 = vmatpush.xpose.msra.mxu0 0.0
  %v5857 = vand.u32 %v5709, 4294901760
  %v5858 = vsub.f32 %v5709, %v5857
  %v5859 = vand.u32 %v5858, 4294901760
  %5860 = vmatpush.xpose.msra.mxu0 %v5859
  %v5861 = vand.u32 %v5706, 4294901760
  %v5862 = vsub.f32 %v5706, %v5861
  %v5863 = vand.u32 %v5862, 4294901760
  %5864 = vmatpush.xpose.msra.mxu0 %v5863
  %v5865 = vand.u32 %v5700, 4294901760
  %5866 = vmatmul.f32.gmra.mxu0 %v5865
  %v5867 = vpop.f32.mrf.mxu0
  %v5868 = vadd.f32 %v5835, %v5867
  %v5869 = vand.u32 %v5703, 4294901760
  %5870 = vmatmul.f32.gmra.mxu0 %v5869
  %v5871 = vpop.f32.mrf.mxu0
  %v5872 = vadd.f32 %v5841, %v5871
  %5873 = vdwg.mxu0
  %5874 = vmatpush.xpose.msra.mxu0 0.0
  %5875 = vmatpush.xpose.msra.mxu0 0.0
  %5876 = vmatpush.xpose.msra.mxu0 0.0
  %5877 = vmatpush.xpose.msra.mxu0 0.0
  %5878 = vmatpush.xpose.msra.mxu0 0.0
  %5879 = vmatpush.xpose.msra.mxu0 0.0
  %5880 = vmatpush.xpose.msra.mxu0 0.0
  %5881 = vmatpush.xpose.msra.mxu0 0.0
  %5882 = vmatpush.xpose.msra.mxu0 0.0
  %5883 = vmatpush.xpose.msra.mxu0 0.0
  %5884 = vmatpush.xpose.msra.mxu0 0.0
  %5885 = vmatpush.xpose.msra.mxu0 0.0
  %5886 = vmatpush.xpose.msra.mxu0 0.0
  %5887 = vmatpush.xpose.msra.mxu0 0.0
  %v5888 = vand.u32 %v5709, 4294901760
  %5889 = vmatpush.xpose.msra.mxu0 %v5888
  %v5890 = vand.u32 %v5706, 4294901760
  %5891 = vmatpush.xpose.msra.mxu0 %v5890
  %v5892 = vand.u32 %v5700, 4294901760
  %5893 = vmatmul.f32.gmra.mxu0 %v5892
  %v5894 = vpop.f32.mrf.mxu0
  %v5895 = vadd.f32 %v5868, %v5894
  %v5896 = vand.u32 %v5703, 4294901760
  %5897 = vmatmul.f32.gmra.mxu0 %v5896
  %v5898 = vpop.f32.mrf.mxu0
  %v5899 = vadd.f32 %v5872, %v5898
  %5900 = vdwg.mxu0
  %v5901 = vmul.f32 %v5895, 0.25
  %v5902 = vmul.f32 %v5899, 0.25
  %v5903 = vsel %vm45, %v5901, -inf
  %5904 = vmax.xlane.f32.xlu0 %v5903
  %v5905 = vpop.xlane.xlu0 %5904
  %v5906 = vsel %vm1847, %v5902, -inf
  %5907 = vmax.xlane.f32.xlu0 %v5906
  %v5908 = vpop.xlane.xlu0 %5907
  %v5909 = vsub.f32 %v5901, %v5905
  %v5910 = vsub.f32 %v5902, %v5908
  %v5911 = vmul.f32 %v5909, 1.442695
  %v5912 = vpow.pop %v5911
  %v5913 = vmul.f32 %v5910, 1.442695
  %v5914 = vpow.pop %v5913
  %v5915 = vsel %vm45, %v5912, 0.0
  %5916 = vadd.xlane.f32.xlu0 %v5915
  %v5917 = vpop.xlane.xlu0 %5916
  %v5918 = vsel %vm1847, %v5914, 0.0
  %5919 = vadd.xlane.f32.xlu0 %v5918
  %v5920 = vpop.xlane.xlu0 %5919
  %v5921 = vrcp.pop %v5917
  %v5922 = vmul.f32 %v5917, %v5921
  %v5923 = vsub.f32 1.0, %v5922
  %v5924 = vmul.f32 %v5921, %v5923
  %v5925 = vadd.f32 %v5921, %v5924
  %vm5926 = vweird.f32 %v5917
  %vm5927 = vweird.f32 %v5921
  %vm5928 = vmor %vm5926, %vm5927
  %v5929 = vsel %vm5928, %v5921, %v5925
  %v5930 = vand.u32 2147483647, %v5917
  %vm5931 = vcmp.eq.f32.partialorder %v5930, 8.507059e+37
  %v5932 = vand.u32 %v5917, 2147483648
  %v5933 = vor.u32 1.1754944e-38, %v5932
  %v5934 = vsel %vm5931, %v5933, %v5929
  %v5935 = vmul.f32 %v5912, %v5934
  %v5936 = vrcp.pop %v5920
  %v5937 = vmul.f32 %v5920, %v5936
  %v5938 = vsub.f32 1.0, %v5937
  %v5939 = vmul.f32 %v5936, %v5938
  %v5940 = vadd.f32 %v5936, %v5939
  %vm5941 = vweird.f32 %v5920
  %vm5942 = vweird.f32 %v5936
  %vm5943 = vmor %vm5941, %vm5942
  %v5944 = vsel %vm5943, %v5936, %v5940
  %v5945 = vand.u32 2147483647, %v5920
  %vm5946 = vcmp.eq.f32.partialorder %v5945, 8.507059e+37
  %v5947 = vand.u32 %v5920, 2147483648
  %v5948 = vor.u32 1.1754944e-38, %v5947
  %v5949 = vsel %vm5946, %v5948, %v5944
  %v5950 = vmul.f32 %v5914, %v5949
  %v5951 = vmul.f32 %v5688, %v5696
  %v5952 = vmul.f32 %v5692, %v5696
  %v5954 = vsel %vm45, %v5935, 0
  %v5957 = vsel %vm45, %v5950, 0
  %v5960 = vsel %vm52, %v5952, 0
  %5962 = vmatpush.msra.mxu0 0.0
  %5963 = vmatpush.msra.mxu0 0.0
  %5964 = vmatpush.msra.mxu0 0.0
  %5965 = vmatpush.msra.mxu0 0.0
  %5966 = vmatpush.msra.mxu0 0.0
  %5967 = vmatpush.msra.mxu0 0.0
  %5968 = vmatpush.msra.mxu0 0.0
  %5969 = vmatpush.msra.mxu0 0.0
  %5970 = vmatpush.msra.mxu0 0.0
  %5971 = vmatpush.msra.mxu0 0.0
  %5972 = vmatpush.msra.mxu0 0.0
  %5973 = vmatpush.msra.mxu0 0.0
  %5974 = vmatpush.msra.mxu0 0.0
  %5975 = vmatpush.msra.mxu0 0.0
  %v5976 = vand.u32 %v5960, 4294901760
  %5977 = vmatpush.msra.mxu0 %v5976
  %v5978 = vand.u32 %v5951, 4294901760
  %5979 = vmatpush.msra.mxu0 %v5978
  %v5980 = vand.u32 %v5954, 4294901760
  %v5981 = vsub.f32 %v5954, %v5980
  %v5982 = vand.u32 %v5981, 4294901760
  %v5983 = vsub.f32 %v5981, %v5982
  %v5984 = vand.u32 %v5983, 4294901760
  %5985 = vmatmul.f32.gmra.mxu0 %v5984
  %v5986 = vpop.f32.mrf.mxu0
  %v5987 = vadd.f32 0.0, %v5986
  %v5988 = vand.u32 %v5957, 4294901760
  %v5989 = vsub.f32 %v5957, %v5988
  %v5990 = vand.u32 %v5989, 4294901760
  %v5991 = vsub.f32 %v5989, %v5990
  %v5992 = vand.u32 %v5991, 4294901760
  %5993 = vmatmul.f32.gmra.mxu0 %v5992
  %v5994 = vpop.f32.mrf.mxu0
  %v5995 = vadd.f32 0.0, %v5994
  %5996 = vdwg.mxu0
  %5997 = vmatpush.msra.mxu0 0.0
  %5998 = vmatpush.msra.mxu0 0.0
  %5999 = vmatpush.msra.mxu0 0.0
  %6000 = vmatpush.msra.mxu0 0.0
  %6001 = vmatpush.msra.mxu0 0.0
  %6002 = vmatpush.msra.mxu0 0.0
  %6003 = vmatpush.msra.mxu0 0.0
  %6004 = vmatpush.msra.mxu0 0.0
  %6005 = vmatpush.msra.mxu0 0.0
  %6006 = vmatpush.msra.mxu0 0.0
  %6007 = vmatpush.msra.mxu0 0.0
  %6008 = vmatpush.msra.mxu0 0.0
  %6009 = vmatpush.msra.mxu0 0.0
  %6010 = vmatpush.msra.mxu0 0.0
  %v6011 = vand.u32 %v5960, 4294901760
  %v6012 = vsub.f32 %v5960, %v6011
  %v6013 = vand.u32 %v6012, 4294901760
  %v6014 = vsub.f32 %v6012, %v6013
  %v6015 = vand.u32 %v6014, 4294901760
  %6016 = vmatpush.msra.mxu0 %v6015
  %v6017 = vand.u32 %v5951, 4294901760
  %v6018 = vsub.f32 %v5951, %v6017
  %v6019 = vand.u32 %v6018, 4294901760
  %v6020 = vsub.f32 %v6018, %v6019
  %v6021 = vand.u32 %v6020, 4294901760
  %6022 = vmatpush.msra.mxu0 %v6021
  %v6023 = vand.u32 %v5954, 4294901760
  %6024 = vmatmul.f32.gmra.mxu0 %v6023
  %v6025 = vpop.f32.mrf.mxu0
  %v6026 = vadd.f32 %v5987, %v6025
  %v6027 = vand.u32 %v5957, 4294901760
  %6028 = vmatmul.f32.gmra.mxu0 %v6027
  %v6029 = vpop.f32.mrf.mxu0
  %v6030 = vadd.f32 %v5995, %v6029
  %6031 = vdwg.mxu0
  %6032 = vmatpush.msra.mxu0 0.0
  %6033 = vmatpush.msra.mxu0 0.0
  %6034 = vmatpush.msra.mxu0 0.0
  %6035 = vmatpush.msra.mxu0 0.0
  %6036 = vmatpush.msra.mxu0 0.0
  %6037 = vmatpush.msra.mxu0 0.0
  %6038 = vmatpush.msra.mxu0 0.0
  %6039 = vmatpush.msra.mxu0 0.0
  %6040 = vmatpush.msra.mxu0 0.0
  %6041 = vmatpush.msra.mxu0 0.0
  %6042 = vmatpush.msra.mxu0 0.0
  %6043 = vmatpush.msra.mxu0 0.0
  %6044 = vmatpush.msra.mxu0 0.0
  %6045 = vmatpush.msra.mxu0 0.0
  %v6046 = vand.u32 %v5960, 4294901760
  %v6047 = vsub.f32 %v5960, %v6046
  %6048 = vmatpush.msra.mxu0 %v6047
  %v6049 = vand.u32 %v5951, 4294901760
  %v6050 = vsub.f32 %v5951, %v6049
  %6051 = vmatpush.msra.mxu0 %v6050
  %v6052 = vand.u32 %v5954, 4294901760
  %v6053 = vsub.f32 %v5954, %v6052
  %6054 = vmatmul.f32.gmra.mxu0 %v6053
  %v6055 = vpop.f32.mrf.mxu0
  %v6056 = vadd.f32 %v6026, %v6055
  %v6057 = vand.u32 %v5957, 4294901760
  %v6058 = vsub.f32 %v5957, %v6057
  %6059 = vmatmul.f32.gmra.mxu0 %v6058
  %v6060 = vpop.f32.mrf.mxu0
  %v6061 = vadd.f32 %v6030, %v6060
  %6062 = vdwg.mxu0
  %6063 = vmatpush.msra.mxu0 0.0
  %6064 = vmatpush.msra.mxu0 0.0
  %6065 = vmatpush.msra.mxu0 0.0
  %6066 = vmatpush.msra.mxu0 0.0
  %6067 = vmatpush.msra.mxu0 0.0
  %6068 = vmatpush.msra.mxu0 0.0
  %6069 = vmatpush.msra.mxu0 0.0
  %6070 = vmatpush.msra.mxu0 0.0
  %6071 = vmatpush.msra.mxu0 0.0
  %6072 = vmatpush.msra.mxu0 0.0
  %6073 = vmatpush.msra.mxu0 0.0
  %6074 = vmatpush.msra.mxu0 0.0
  %6075 = vmatpush.msra.mxu0 0.0
  %6076 = vmatpush.msra.mxu0 0.0
  %v6077 = vand.u32 %v5960, 4294901760
  %6078 = vmatpush.msra.mxu0 %v6077
  %v6079 = vand.u32 %v5951, 4294901760
  %6080 = vmatpush.msra.mxu0 %v6079
  %v6081 = vand.u32 %v5954, 4294901760
  %v6082 = vsub.f32 %v5954, %v6081
  %v6083 = vand.u32 %v6082, 4294901760
  %6084 = vmatmul.f32.gmra.mxu0 %v6083
  %v6085 = vpop.f32.mrf.mxu0
  %v6086 = vadd.f32 %v6056, %v6085
  %v6087 = vand.u32 %v5957, 4294901760
  %v6088 = vsub.f32 %v5957, %v6087
  %v6089 = vand.u32 %v6088, 4294901760
  %6090 = vmatmul.f32.gmra.mxu0 %v6089
  %v6091 = vpop.f32.mrf.mxu0
  %v6092 = vadd.f32 %v6061, %v6091
  %6093 = vdwg.mxu0
  %6094 = vmatpush.msra.mxu0 0.0
  %6095 = vmatpush.msra.mxu0 0.0
  %6096 = vmatpush.msra.mxu0 0.0
  %6097 = vmatpush.msra.mxu0 0.0
  %6098 = vmatpush.msra.mxu0 0.0
  %6099 = vmatpush.msra.mxu0 0.0
  %6100 = vmatpush.msra.mxu0 0.0
  %6101 = vmatpush.msra.mxu0 0.0
  %6102 = vmatpush.msra.mxu0 0.0
  %6103 = vmatpush.msra.mxu0 0.0
  %6104 = vmatpush.msra.mxu0 0.0
  %6105 = vmatpush.msra.mxu0 0.0
  %6106 = vmatpush.msra.mxu0 0.0
  %6107 = vmatpush.msra.mxu0 0.0
  %v6108 = vand.u32 %v5960, 4294901760
  %v6109 = vsub.f32 %v5960, %v6108
  %v6110 = vand.u32 %v6109, 4294901760
  %6111 = vmatpush.msra.mxu0 %v6110
  %v6112 = vand.u32 %v5951, 4294901760
  %v6113 = vsub.f32 %v5951, %v6112
  %v6114 = vand.u32 %v6113, 4294901760
  %6115 = vmatpush.msra.mxu0 %v6114
  %v6116 = vand.u32 %v5954, 4294901760
  %6117 = vmatmul.f32.gmra.mxu0 %v6116
  %v6118 = vpop.f32.mrf.mxu0
  %v6119 = vadd.f32 %v6086, %v6118
  %v6120 = vand.u32 %v5957, 4294901760
  %6121 = vmatmul.f32.gmra.mxu0 %v6120
  %v6122 = vpop.f32.mrf.mxu0
  %v6123 = vadd.f32 %v6092, %v6122
  %6124 = vdwg.mxu0
  %6125 = vmatpush.msra.mxu0 0.0
  %6126 = vmatpush.msra.mxu0 0.0
  %6127 = vmatpush.msra.mxu0 0.0
  %6128 = vmatpush.msra.mxu0 0.0
  %6129 = vmatpush.msra.mxu0 0.0
  %6130 = vmatpush.msra.mxu0 0.0
  %6131 = vmatpush.msra.mxu0 0.0
  %6132 = vmatpush.msra.mxu0 0.0
  %6133 = vmatpush.msra.mxu0 0.0
  %6134 = vmatpush.msra.mxu0 0.0
  %6135 = vmatpush.msra.mxu0 0.0
  %6136 = vmatpush.msra.mxu0 0.0
  %6137 = vmatpush.msra.mxu0 0.0
  %6138 = vmatpush.msra.mxu0 0.0
  %v6139 = vand.u32 %v5960, 4294901760
  %6140 = vmatpush.msra.mxu0 %v6139
  %v6141 = vand.u32 %v5951, 4294901760
  %6142 = vmatpush.msra.mxu0 %v6141
  %v6143 = vand.u32 %v5954, 4294901760
  %6144 = vmatmul.f32.gmra.mxu0 %v6143
  %v6145 = vpop.f32.mrf.mxu0
  %v6146 = vadd.f32 %v6119, %v6145
  %v6147 = vand.u32 %v5957, 4294901760
  %6148 = vmatmul.f32.gmra.mxu0 %v6147
  %v6149 = vpop.f32.mrf.mxu0
  %v6150 = vadd.f32 %v6123, %v6149
  %6151 = vdwg.mxu0
  %s6152 = scalar_lea.vmem %s5, 96
  %v6153 = vld [vmem:[%s6152] sm:$0xff]
  %v6154 = vld [vmem:[%s6152 + $0x8] sm:$0xff]
  %v6155 = vperm.slane %v39, 3
  %v6157 = vsel %vm249, %v6146, 0
  %v6160 = vsel %vm249, %v6150, 0
  %6162 = vmatpush.msra.mxu0 0.0
  %6163 = vmatpush.msra.mxu0 0.0
  %6164 = vmatpush.msra.mxu0 0.0
  %6165 = vmatpush.msra.mxu0 0.0
  %6166 = vmatpush.msra.mxu0 0.0
  %6167 = vmatpush.msra.mxu0 0.0
  %6168 = vmatpush.msra.mxu0 0.0
  %6169 = vmatpush.msra.mxu0 0.0
  %6170 = vmatpush.msra.mxu0 0.0
  %6171 = vmatpush.msra.mxu0 0.0
  %6172 = vmatpush.msra.mxu0 0.0
  %6173 = vmatpush.msra.mxu0 0.0
  %6174 = vmatpush.msra.mxu0 0.0
  %6175 = vmatpush.msra.mxu0 0.0
  %v6176 = vand.u32 %v6154, 4294901760
  %6177 = vmatpush.msra.mxu0 %v6176
  %v6178 = vand.u32 %v6153, 4294901760
  %6179 = vmatpush.msra.mxu0 %v6178
  %v6180 = vand.u32 %v6157, 4294901760
  %v6181 = vsub.f32 %v6157, %v6180
  %v6182 = vand.u32 %v6181, 4294901760
  %v6183 = vsub.f32 %v6181, %v6182
  %v6184 = vand.u32 %v6183, 4294901760
  %6185 = vmatmul.f32.gmra.mxu0 %v6184
  %v6186 = vpop.f32.mrf.mxu0
  %v6187 = vadd.f32 %v6155, %v6186
  %v6188 = vand.u32 %v6160, 4294901760
  %v6189 = vsub.f32 %v6160, %v6188
  %v6190 = vand.u32 %v6189, 4294901760
  %v6191 = vsub.f32 %v6189, %v6190
  %v6192 = vand.u32 %v6191, 4294901760
  %6193 = vmatmul.f32.gmra.mxu0 %v6192
  %v6194 = vpop.f32.mrf.mxu0
  %v6195 = vadd.f32 %v6155, %v6194
  %6196 = vdwg.mxu0
  %6197 = vmatpush.msra.mxu0 0.0
  %6198 = vmatpush.msra.mxu0 0.0
  %6199 = vmatpush.msra.mxu0 0.0
  %6200 = vmatpush.msra.mxu0 0.0
  %6201 = vmatpush.msra.mxu0 0.0
  %6202 = vmatpush.msra.mxu0 0.0
  %6203 = vmatpush.msra.mxu0 0.0
  %6204 = vmatpush.msra.mxu0 0.0
  %6205 = vmatpush.msra.mxu0 0.0
  %6206 = vmatpush.msra.mxu0 0.0
  %6207 = vmatpush.msra.mxu0 0.0
  %6208 = vmatpush.msra.mxu0 0.0
  %6209 = vmatpush.msra.mxu0 0.0
  %6210 = vmatpush.msra.mxu0 0.0
  %v6211 = vand.u32 %v6154, 4294901760
  %v6212 = vsub.f32 %v6154, %v6211
  %v6213 = vand.u32 %v6212, 4294901760
  %v6214 = vsub.f32 %v6212, %v6213
  %v6215 = vand.u32 %v6214, 4294901760
  %6216 = vmatpush.msra.mxu0 %v6215
  %v6217 = vand.u32 %v6153, 4294901760
  %v6218 = vsub.f32 %v6153, %v6217
  %v6219 = vand.u32 %v6218, 4294901760
  %v6220 = vsub.f32 %v6218, %v6219
  %v6221 = vand.u32 %v6220, 4294901760
  %6222 = vmatpush.msra.mxu0 %v6221
  %v6223 = vand.u32 %v6157, 4294901760
  %6224 = vmatmul.f32.gmra.mxu0 %v6223
  %v6225 = vpop.f32.mrf.mxu0
  %v6226 = vadd.f32 %v6187, %v6225
  %v6227 = vand.u32 %v6160, 4294901760
  %6228 = vmatmul.f32.gmra.mxu0 %v6227
  %v6229 = vpop.f32.mrf.mxu0
  %v6230 = vadd.f32 %v6195, %v6229
  %6231 = vdwg.mxu0
  %6232 = vmatpush.msra.mxu0 0.0
  %6233 = vmatpush.msra.mxu0 0.0
  %6234 = vmatpush.msra.mxu0 0.0
  %6235 = vmatpush.msra.mxu0 0.0
  %6236 = vmatpush.msra.mxu0 0.0
  %6237 = vmatpush.msra.mxu0 0.0
  %6238 = vmatpush.msra.mxu0 0.0
  %6239 = vmatpush.msra.mxu0 0.0
  %6240 = vmatpush.msra.mxu0 0.0
  %6241 = vmatpush.msra.mxu0 0.0
  %6242 = vmatpush.msra.mxu0 0.0
  %6243 = vmatpush.msra.mxu0 0.0
  %6244 = vmatpush.msra.mxu0 0.0
  %6245 = vmatpush.msra.mxu0 0.0
  %v6246 = vand.u32 %v6154, 4294901760
  %v6247 = vsub.f32 %v6154, %v6246
  %6248 = vmatpush.msra.mxu0 %v6247
  %v6249 = vand.u32 %v6153, 4294901760
  %v6250 = vsub.f32 %v6153, %v6249
  %6251 = vmatpush.msra.mxu0 %v6250
  %v6252 = vand.u32 %v6157, 4294901760
  %v6253 = vsub.f32 %v6157, %v6252
  %6254 = vmatmul.f32.gmra.mxu0 %v6253
  %v6255 = vpop.f32.mrf.mxu0
  %v6256 = vadd.f32 %v6226, %v6255
  %v6257 = vand.u32 %v6160, 4294901760
  %v6258 = vsub.f32 %v6160, %v6257
  %6259 = vmatmul.f32.gmra.mxu0 %v6258
  %v6260 = vpop.f32.mrf.mxu0
  %v6261 = vadd.f32 %v6230, %v6260
  %6262 = vdwg.mxu0
  %6263 = vmatpush.msra.mxu0 0.0
  %6264 = vmatpush.msra.mxu0 0.0
  %6265 = vmatpush.msra.mxu0 0.0
  %6266 = vmatpush.msra.mxu0 0.0
  %6267 = vmatpush.msra.mxu0 0.0
  %6268 = vmatpush.msra.mxu0 0.0
  %6269 = vmatpush.msra.mxu0 0.0
  %6270 = vmatpush.msra.mxu0 0.0
  %6271 = vmatpush.msra.mxu0 0.0
  %6272 = vmatpush.msra.mxu0 0.0
  %6273 = vmatpush.msra.mxu0 0.0
  %6274 = vmatpush.msra.mxu0 0.0
  %6275 = vmatpush.msra.mxu0 0.0
  %6276 = vmatpush.msra.mxu0 0.0
  %v6277 = vand.u32 %v6154, 4294901760
  %6278 = vmatpush.msra.mxu0 %v6277
  %v6279 = vand.u32 %v6153, 4294901760
  %6280 = vmatpush.msra.mxu0 %v6279
  %v6281 = vand.u32 %v6157, 4294901760
  %v6282 = vsub.f32 %v6157, %v6281
  %v6283 = vand.u32 %v6282, 4294901760
  %6284 = vmatmul.f32.gmra.mxu0 %v6283
  %v6285 = vpop.f32.mrf.mxu0
  %v6286 = vadd.f32 %v6256, %v6285
  %v6287 = vand.u32 %v6160, 4294901760
  %v6288 = vsub.f32 %v6160, %v6287
  %v6289 = vand.u32 %v6288, 4294901760
  %6290 = vmatmul.f32.gmra.mxu0 %v6289
  %v6291 = vpop.f32.mrf.mxu0
  %v6292 = vadd.f32 %v6261, %v6291
  %6293 = vdwg.mxu0
  %6294 = vmatpush.msra.mxu0 0.0
  %6295 = vmatpush.msra.mxu0 0.0
  %6296 = vmatpush.msra.mxu0 0.0
  %6297 = vmatpush.msra.mxu0 0.0
  %6298 = vmatpush.msra.mxu0 0.0
  %6299 = vmatpush.msra.mxu0 0.0
  %6300 = vmatpush.msra.mxu0 0.0
  %6301 = vmatpush.msra.mxu0 0.0
  %6302 = vmatpush.msra.mxu0 0.0
  %6303 = vmatpush.msra.mxu0 0.0
  %6304 = vmatpush.msra.mxu0 0.0
  %6305 = vmatpush.msra.mxu0 0.0
  %6306 = vmatpush.msra.mxu0 0.0
  %6307 = vmatpush.msra.mxu0 0.0
  %v6308 = vand.u32 %v6154, 4294901760
  %v6309 = vsub.f32 %v6154, %v6308
  %v6310 = vand.u32 %v6309, 4294901760
  %6311 = vmatpush.msra.mxu0 %v6310
  %v6312 = vand.u32 %v6153, 4294901760
  %v6313 = vsub.f32 %v6153, %v6312
  %v6314 = vand.u32 %v6313, 4294901760
  %6315 = vmatpush.msra.mxu0 %v6314
  %v6316 = vand.u32 %v6157, 4294901760
  %6317 = vmatmul.f32.gmra.mxu0 %v6316
  %v6318 = vpop.f32.mrf.mxu0
  %v6319 = vadd.f32 %v6286, %v6318
  %v6320 = vand.u32 %v6160, 4294901760
  %6321 = vmatmul.f32.gmra.mxu0 %v6320
  %v6322 = vpop.f32.mrf.mxu0
  %v6323 = vadd.f32 %v6292, %v6322
  %6324 = vdwg.mxu0
  %6325 = vmatpush.msra.mxu0 0.0
  %6326 = vmatpush.msra.mxu0 0.0
  %6327 = vmatpush.msra.mxu0 0.0
  %6328 = vmatpush.msra.mxu0 0.0
  %6329 = vmatpush.msra.mxu0 0.0
  %6330 = vmatpush.msra.mxu0 0.0
  %6331 = vmatpush.msra.mxu0 0.0
  %6332 = vmatpush.msra.mxu0 0.0
  %6333 = vmatpush.msra.mxu0 0.0
  %6334 = vmatpush.msra.mxu0 0.0
  %6335 = vmatpush.msra.mxu0 0.0
  %6336 = vmatpush.msra.mxu0 0.0
  %6337 = vmatpush.msra.mxu0 0.0
  %6338 = vmatpush.msra.mxu0 0.0
  %v6339 = vand.u32 %v6154, 4294901760
  %6340 = vmatpush.msra.mxu0 %v6339
  %v6341 = vand.u32 %v6153, 4294901760
  %6342 = vmatpush.msra.mxu0 %v6341
  %v6343 = vand.u32 %v6157, 4294901760
  %6344 = vmatmul.f32.gmra.mxu0 %v6343
  %v6345 = vpop.f32.mrf.mxu0
  %v6346 = vadd.f32 %v6319, %v6345
  %v6347 = vand.u32 %v6160, 4294901760
  %6348 = vmatmul.f32.gmra.mxu0 %v6347
  %v6349 = vpop.f32.mrf.mxu0
  %v6350 = vadd.f32 %v6323, %v6349
  %6351 = vdwg.mxu0
  %v6352 = vadd.f32 %v6346, %v4113
  %v6353 = vadd.f32 %v6350, %v4114
  %v6354 = vperm.slane %v39, 4
  %v6355 = vmul.f32 %v6352, %v6354
  %v6356 = vmul.f32 %v6353, %v6354
  %v6357 = vperm.slane %v39, 5
  %v6358 = vadd.f32 %v6355, %v6357
  %v6359 = vadd.f32 %v6356, %v6357
  %v6360 = vadd.f32 %v5110, %v6358
  %v6361 = vadd.f32 %v5111, %v6359
  %v6362 = vld [vmem:[%s6] sm:$0xff]
  %v6363 = vld [vmem:[%s6 + $0x8] sm:$0xff]
  %v6364 = vperm.slane %v39, 6
  %v6366 = vsel %vm249, %v6360, 0
  %v6369 = vsel %vm249, %v6361, 0
  %6371 = vmatpush.msra.mxu0 0.0
  %6372 = vmatpush.msra.mxu0 0.0
  %6373 = vmatpush.msra.mxu0 0.0
  %6374 = vmatpush.msra.mxu0 0.0
  %6375 = vmatpush.msra.mxu0 0.0
  %6376 = vmatpush.msra.mxu0 0.0
  %6377 = vmatpush.msra.mxu0 0.0
  %6378 = vmatpush.msra.mxu0 0.0
  %6379 = vmatpush.msra.mxu0 0.0
  %6380 = vmatpush.msra.mxu0 0.0
  %6381 = vmatpush.msra.mxu0 0.0
  %6382 = vmatpush.msra.mxu0 0.0
  %6383 = vmatpush.msra.mxu0 0.0
  %6384 = vmatpush.msra.mxu0 0.0
  %v6385 = vand.u32 %v6363, 4294901760
  %6386 = vmatpush.msra.mxu0 %v6385
  %v6387 = vand.u32 %v6362, 4294901760
  %6388 = vmatpush.msra.mxu0 %v6387
  %v6389 = vand.u32 %v6366, 4294901760
  %v6390 = vsub.f32 %v6366, %v6389
  %v6391 = vand.u32 %v6390, 4294901760
  %v6392 = vsub.f32 %v6390, %v6391
  %v6393 = vand.u32 %v6392, 4294901760
  %6394 = vmatmul.f32.gmra.mxu0 %v6393
  %v6395 = vpop.f32.mrf.mxu0
  %v6396 = vadd.f32 %v6364, %v6395
  %v6397 = vand.u32 %v6369, 4294901760
  %v6398 = vsub.f32 %v6369, %v6397
  %v6399 = vand.u32 %v6398, 4294901760
  %v6400 = vsub.f32 %v6398, %v6399
  %v6401 = vand.u32 %v6400, 4294901760
  %6402 = vmatmul.f32.gmra.mxu0 %v6401
  %v6403 = vpop.f32.mrf.mxu0
  %v6404 = vadd.f32 %v6364, %v6403
  %6405 = vdwg.mxu0
  %6406 = vmatpush.msra.mxu0 0.0
  %6407 = vmatpush.msra.mxu0 0.0
  %6408 = vmatpush.msra.mxu0 0.0
  %6409 = vmatpush.msra.mxu0 0.0
  %6410 = vmatpush.msra.mxu0 0.0
  %6411 = vmatpush.msra.mxu0 0.0
  %6412 = vmatpush.msra.mxu0 0.0
  %6413 = vmatpush.msra.mxu0 0.0
  %6414 = vmatpush.msra.mxu0 0.0
  %6415 = vmatpush.msra.mxu0 0.0
  %6416 = vmatpush.msra.mxu0 0.0
  %6417 = vmatpush.msra.mxu0 0.0
  %6418 = vmatpush.msra.mxu0 0.0
  %6419 = vmatpush.msra.mxu0 0.0
  %v6420 = vand.u32 %v6363, 4294901760
  %v6421 = vsub.f32 %v6363, %v6420
  %v6422 = vand.u32 %v6421, 4294901760
  %v6423 = vsub.f32 %v6421, %v6422
  %v6424 = vand.u32 %v6423, 4294901760
  %6425 = vmatpush.msra.mxu0 %v6424
  %v6426 = vand.u32 %v6362, 4294901760
  %v6427 = vsub.f32 %v6362, %v6426
  %v6428 = vand.u32 %v6427, 4294901760
  %v6429 = vsub.f32 %v6427, %v6428
  %v6430 = vand.u32 %v6429, 4294901760
  %6431 = vmatpush.msra.mxu0 %v6430
  %v6432 = vand.u32 %v6366, 4294901760
  %6433 = vmatmul.f32.gmra.mxu0 %v6432
  %v6434 = vpop.f32.mrf.mxu0
  %v6435 = vadd.f32 %v6396, %v6434
  %v6436 = vand.u32 %v6369, 4294901760
  %6437 = vmatmul.f32.gmra.mxu0 %v6436
  %v6438 = vpop.f32.mrf.mxu0
  %v6439 = vadd.f32 %v6404, %v6438
  %6440 = vdwg.mxu0
  %6441 = vmatpush.msra.mxu0 0.0
  %6442 = vmatpush.msra.mxu0 0.0
  %6443 = vmatpush.msra.mxu0 0.0
  %6444 = vmatpush.msra.mxu0 0.0
  %6445 = vmatpush.msra.mxu0 0.0
  %6446 = vmatpush.msra.mxu0 0.0
  %6447 = vmatpush.msra.mxu0 0.0
  %6448 = vmatpush.msra.mxu0 0.0
  %6449 = vmatpush.msra.mxu0 0.0
  %6450 = vmatpush.msra.mxu0 0.0
  %6451 = vmatpush.msra.mxu0 0.0
  %6452 = vmatpush.msra.mxu0 0.0
  %6453 = vmatpush.msra.mxu0 0.0
  %6454 = vmatpush.msra.mxu0 0.0
  %v6455 = vand.u32 %v6363, 4294901760
  %v6456 = vsub.f32 %v6363, %v6455
  %6457 = vmatpush.msra.mxu0 %v6456
  %v6458 = vand.u32 %v6362, 4294901760
  %v6459 = vsub.f32 %v6362, %v6458
  %6460 = vmatpush.msra.mxu0 %v6459
  %v6461 = vand.u32 %v6366, 4294901760
  %v6462 = vsub.f32 %v6366, %v6461
  %6463 = vmatmul.f32.gmra.mxu0 %v6462
  %v6464 = vpop.f32.mrf.mxu0
  %v6465 = vadd.f32 %v6435, %v6464
  %v6466 = vand.u32 %v6369, 4294901760
  %v6467 = vsub.f32 %v6369, %v6466
  %6468 = vmatmul.f32.gmra.mxu0 %v6467
  %v6469 = vpop.f32.mrf.mxu0
  %v6470 = vadd.f32 %v6439, %v6469
  %6471 = vdwg.mxu0
  %6472 = vmatpush.msra.mxu0 0.0
  %6473 = vmatpush.msra.mxu0 0.0
  %6474 = vmatpush.msra.mxu0 0.0
  %6475 = vmatpush.msra.mxu0 0.0
  %6476 = vmatpush.msra.mxu0 0.0
  %6477 = vmatpush.msra.mxu0 0.0
  %6478 = vmatpush.msra.mxu0 0.0
  %6479 = vmatpush.msra.mxu0 0.0
  %6480 = vmatpush.msra.mxu0 0.0
  %6481 = vmatpush.msra.mxu0 0.0
  %6482 = vmatpush.msra.mxu0 0.0
  %6483 = vmatpush.msra.mxu0 0.0
  %6484 = vmatpush.msra.mxu0 0.0
  %6485 = vmatpush.msra.mxu0 0.0
  %v6486 = vand.u32 %v6363, 4294901760
  %6487 = vmatpush.msra.mxu0 %v6486
  %v6488 = vand.u32 %v6362, 4294901760
  %6489 = vmatpush.msra.mxu0 %v6488
  %v6490 = vand.u32 %v6366, 4294901760
  %v6491 = vsub.f32 %v6366, %v6490
  %v6492 = vand.u32 %v6491, 4294901760
  %6493 = vmatmul.f32.gmra.mxu0 %v6492
  %v6494 = vpop.f32.mrf.mxu0
  %v6495 = vadd.f32 %v6465, %v6494
  %v6496 = vand.u32 %v6369, 4294901760
  %v6497 = vsub.f32 %v6369, %v6496
  %v6498 = vand.u32 %v6497, 4294901760
  %6499 = vmatmul.f32.gmra.mxu0 %v6498
  %v6500 = vpop.f32.mrf.mxu0
  %v6501 = vadd.f32 %v6470, %v6500
  %6502 = vdwg.mxu0
  %6503 = vmatpush.msra.mxu0 0.0
  %6504 = vmatpush.msra.mxu0 0.0
  %6505 = vmatpush.msra.mxu0 0.0
  %6506 = vmatpush.msra.mxu0 0.0
  %6507 = vmatpush.msra.mxu0 0.0
  %6508 = vmatpush.msra.mxu0 0.0
  %6509 = vmatpush.msra.mxu0 0.0
  %6510 = vmatpush.msra.mxu0 0.0
  %6511 = vmatpush.msra.mxu0 0.0
  %6512 = vmatpush.msra.mxu0 0.0
  %6513 = vmatpush.msra.mxu0 0.0
  %6514 = vmatpush.msra.mxu0 0.0
  %6515 = vmatpush.msra.mxu0 0.0
  %6516 = vmatpush.msra.mxu0 0.0
  %v6517 = vand.u32 %v6363, 4294901760
  %v6518 = vsub.f32 %v6363, %v6517
  %v6519 = vand.u32 %v6518, 4294901760
  %6520 = vmatpush.msra.mxu0 %v6519
  %v6521 = vand.u32 %v6362, 4294901760
  %v6522 = vsub.f32 %v6362, %v6521
  %v6523 = vand.u32 %v6522, 4294901760
  %6524 = vmatpush.msra.mxu0 %v6523
  %v6525 = vand.u32 %v6366, 4294901760
  %6526 = vmatmul.f32.gmra.mxu0 %v6525
  %v6527 = vpop.f32.mrf.mxu0
  %v6528 = vadd.f32 %v6495, %v6527
  %v6529 = vand.u32 %v6369, 4294901760
  %6530 = vmatmul.f32.gmra.mxu0 %v6529
  %v6531 = vpop.f32.mrf.mxu0
  %v6532 = vadd.f32 %v6501, %v6531
  %6533 = vdwg.mxu0
  %6534 = vmatpush.msra.mxu0 0.0
  %6535 = vmatpush.msra.mxu0 0.0
  %6536 = vmatpush.msra.mxu0 0.0
  %6537 = vmatpush.msra.mxu0 0.0
  %6538 = vmatpush.msra.mxu0 0.0
  %6539 = vmatpush.msra.mxu0 0.0
  %6540 = vmatpush.msra.mxu0 0.0
  %6541 = vmatpush.msra.mxu0 0.0
  %6542 = vmatpush.msra.mxu0 0.0
  %6543 = vmatpush.msra.mxu0 0.0
  %6544 = vmatpush.msra.mxu0 0.0
  %6545 = vmatpush.msra.mxu0 0.0
  %6546 = vmatpush.msra.mxu0 0.0
  %6547 = vmatpush.msra.mxu0 0.0
  %v6548 = vand.u32 %v6363, 4294901760
  %6549 = vmatpush.msra.mxu0 %v6548
  %v6550 = vand.u32 %v6362, 4294901760
  %6551 = vmatpush.msra.mxu0 %v6550
  %v6552 = vand.u32 %v6366, 4294901760
  %6553 = vmatmul.f32.gmra.mxu0 %v6552
  %v6554 = vpop.f32.mrf.mxu0
  %v6555 = vadd.f32 %v6528, %v6554
  %v6556 = vand.u32 %v6369, 4294901760
  %6557 = vmatmul.f32.gmra.mxu0 %v6556
  %v6558 = vpop.f32.mrf.mxu0
  %v6559 = vadd.f32 %v6532, %v6558
  %6560 = vdwg.mxu0
  %v6561 = vmax.f32 %v6555, 0.0
  %v6562 = vmax.f32 %v6559, 0.0
  %v6563 = vld [vmem:[%s7] sm:$0xff]
  %v6564 = vld [vmem:[%s7 + $0x8] sm:$0xff]
  %v6565 = vld [vmem:[%s7 + $0x10] sm:$0xff]
  %v6566 = vld [vmem:[%s7 + $0x18] sm:$0xff]
  %v6567 = vperm.slane %v39, 7
  %v6569 = vsel %vm3876, %v6561, 0
  %v6572 = vsel %vm3876, %v6562, 0
  %6574 = vmatpush.msra.mxu0 0.0
  %6575 = vmatpush.msra.mxu0 0.0
  %6576 = vmatpush.msra.mxu0 0.0
  %6577 = vmatpush.msra.mxu0 0.0
  %6578 = vmatpush.msra.mxu0 0.0
  %6579 = vmatpush.msra.mxu0 0.0
  %6580 = vmatpush.msra.mxu0 0.0
  %6581 = vmatpush.msra.mxu0 0.0
  %6582 = vmatpush.msra.mxu0 0.0
  %6583 = vmatpush.msra.mxu0 0.0
  %6584 = vmatpush.msra.mxu0 0.0
  %6585 = vmatpush.msra.mxu0 0.0
  %v6586 = vand.u32 %v6566, 4294901760
  %6587 = vmatpush.msra.mxu0 %v6586
  %v6588 = vand.u32 %v6565, 4294901760
  %6589 = vmatpush.msra.mxu0 %v6588
  %v6590 = vand.u32 %v6564, 4294901760
  %6591 = vmatpush.msra.mxu0 %v6590
  %v6592 = vand.u32 %v6563, 4294901760
  %6593 = vmatpush.msra.mxu0 %v6592
  %v6594 = vand.u32 %v6569, 4294901760
  %v6595 = vsub.f32 %v6569, %v6594
  %v6596 = vand.u32 %v6595, 4294901760
  %v6597 = vsub.f32 %v6595, %v6596
  %v6598 = vand.u32 %v6597, 4294901760
  %6599 = vmatmul.f32.gmra.mxu0 %v6598
  %v6600 = vpop.f32.mrf.mxu0
  %v6601 = vadd.f32 %v6567, %v6600
  %v6602 = vand.u32 %v6572, 4294901760
  %v6603 = vsub.f32 %v6572, %v6602
  %v6604 = vand.u32 %v6603, 4294901760
  %v6605 = vsub.f32 %v6603, %v6604
  %v6606 = vand.u32 %v6605, 4294901760
  %6607 = vmatmul.f32.gmra.mxu0 %v6606
  %v6608 = vpop.f32.mrf.mxu0
  %v6609 = vadd.f32 %v6567, %v6608
  %6610 = vdwg.mxu0
  %6611 = vmatpush.msra.mxu0 0.0
  %6612 = vmatpush.msra.mxu0 0.0
  %6613 = vmatpush.msra.mxu0 0.0
  %6614 = vmatpush.msra.mxu0 0.0
  %6615 = vmatpush.msra.mxu0 0.0
  %6616 = vmatpush.msra.mxu0 0.0
  %6617 = vmatpush.msra.mxu0 0.0
  %6618 = vmatpush.msra.mxu0 0.0
  %6619 = vmatpush.msra.mxu0 0.0
  %6620 = vmatpush.msra.mxu0 0.0
  %6621 = vmatpush.msra.mxu0 0.0
  %6622 = vmatpush.msra.mxu0 0.0
  %v6623 = vand.u32 %v6566, 4294901760
  %v6624 = vsub.f32 %v6566, %v6623
  %v6625 = vand.u32 %v6624, 4294901760
  %v6626 = vsub.f32 %v6624, %v6625
  %v6627 = vand.u32 %v6626, 4294901760
  %6628 = vmatpush.msra.mxu0 %v6627
  %v6629 = vand.u32 %v6565, 4294901760
  %v6630 = vsub.f32 %v6565, %v6629
  %v6631 = vand.u32 %v6630, 4294901760
  %v6632 = vsub.f32 %v6630, %v6631
  %v6633 = vand.u32 %v6632, 4294901760
  %6634 = vmatpush.msra.mxu0 %v6633
  %v6635 = vand.u32 %v6564, 4294901760
  %v6636 = vsub.f32 %v6564, %v6635
  %v6637 = vand.u32 %v6636, 4294901760
  %v6638 = vsub.f32 %v6636, %v6637
  %v6639 = vand.u32 %v6638, 4294901760
  %6640 = vmatpush.msra.mxu0 %v6639
  %v6641 = vand.u32 %v6563, 4294901760
  %v6642 = vsub.f32 %v6563, %v6641
  %v6643 = vand.u32 %v6642, 4294901760
  %v6644 = vsub.f32 %v6642, %v6643
  %v6645 = vand.u32 %v6644, 4294901760
  %6646 = vmatpush.msra.mxu0 %v6645
  %v6647 = vand.u32 %v6569, 4294901760
  %6648 = vmatmul.f32.gmra.mxu0 %v6647
  %v6649 = vpop.f32.mrf.mxu0
  %v6650 = vadd.f32 %v6601, %v6649
  %v6651 = vand.u32 %v6572, 4294901760
  %6652 = vmatmul.f32.gmra.mxu0 %v6651
  %v6653 = vpop.f32.mrf.mxu0
  %v6654 = vadd.f32 %v6609, %v6653
  %6655 = vdwg.mxu0
  %6656 = vmatpush.msra.mxu0 0.0
  %6657 = vmatpush.msra.mxu0 0.0
  %6658 = vmatpush.msra.mxu0 0.0
  %6659 = vmatpush.msra.mxu0 0.0
  %6660 = vmatpush.msra.mxu0 0.0
  %6661 = vmatpush.msra.mxu0 0.0
  %6662 = vmatpush.msra.mxu0 0.0
  %6663 = vmatpush.msra.mxu0 0.0
  %6664 = vmatpush.msra.mxu0 0.0
  %6665 = vmatpush.msra.mxu0 0.0
  %6666 = vmatpush.msra.mxu0 0.0
  %6667 = vmatpush.msra.mxu0 0.0
  %v6668 = vand.u32 %v6566, 4294901760
  %v6669 = vsub.f32 %v6566, %v6668
  %6670 = vmatpush.msra.mxu0 %v6669
  %v6671 = vand.u32 %v6565, 4294901760
  %v6672 = vsub.f32 %v6565, %v6671
  %6673 = vmatpush.msra.mxu0 %v6672
  %v6674 = vand.u32 %v6564, 4294901760
  %v6675 = vsub.f32 %v6564, %v6674
  %6676 = vmatpush.msra.mxu0 %v6675
  %v6677 = vand.u32 %v6563, 4294901760
  %v6678 = vsub.f32 %v6563, %v6677
  %6679 = vmatpush.msra.mxu0 %v6678
  %v6680 = vand.u32 %v6569, 4294901760
  %v6681 = vsub.f32 %v6569, %v6680
  %6682 = vmatmul.f32.gmra.mxu0 %v6681
  %v6683 = vpop.f32.mrf.mxu0
  %v6684 = vadd.f32 %v6650, %v6683
  %v6685 = vand.u32 %v6572, 4294901760
  %v6686 = vsub.f32 %v6572, %v6685
  %6687 = vmatmul.f32.gmra.mxu0 %v6686
  %v6688 = vpop.f32.mrf.mxu0
  %v6689 = vadd.f32 %v6654, %v6688
  %6690 = vdwg.mxu0
  %6691 = vmatpush.msra.mxu0 0.0
  %6692 = vmatpush.msra.mxu0 0.0
  %6693 = vmatpush.msra.mxu0 0.0
  %6694 = vmatpush.msra.mxu0 0.0
  %6695 = vmatpush.msra.mxu0 0.0
  %6696 = vmatpush.msra.mxu0 0.0
  %6697 = vmatpush.msra.mxu0 0.0
  %6698 = vmatpush.msra.mxu0 0.0
  %6699 = vmatpush.msra.mxu0 0.0
  %6700 = vmatpush.msra.mxu0 0.0
  %6701 = vmatpush.msra.mxu0 0.0
  %6702 = vmatpush.msra.mxu0 0.0
  %v6703 = vand.u32 %v6566, 4294901760
  %6704 = vmatpush.msra.mxu0 %v6703
  %v6705 = vand.u32 %v6565, 4294901760
  %6706 = vmatpush.msra.mxu0 %v6705
  %v6707 = vand.u32 %v6564, 4294901760
  %6708 = vmatpush.msra.mxu0 %v6707
  %v6709 = vand.u32 %v6563, 4294901760
  %6710 = vmatpush.msra.mxu0 %v6709
  %v6711 = vand.u32 %v6569, 4294901760
  %v6712 = vsub.f32 %v6569, %v6711
  %v6713 = vand.u32 %v6712, 4294901760
  %6714 = vmatmul.f32.gmra.mxu0 %v6713
  %v6715 = vpop.f32.mrf.mxu0
  %v6716 = vadd.f32 %v6684, %v6715
  %v6717 = vand.u32 %v6572, 4294901760
  %v6718 = vsub.f32 %v6572, %v6717
  %v6719 = vand.u32 %v6718, 4294901760
  %6720 = vmatmul.f32.gmra.mxu0 %v6719
  %v6721 = vpop.f32.mrf.mxu0
  %v6722 = vadd.f32 %v6689, %v6721
  %6723 = vdwg.mxu0
  %6724 = vmatpush.msra.mxu0 0.0
  %6725 = vmatpush.msra.mxu0 0.0
  %6726 = vmatpush.msra.mxu0 0.0
  %6727 = vmatpush.msra.mxu0 0.0
  %6728 = vmatpush.msra.mxu0 0.0
  %6729 = vmatpush.msra.mxu0 0.0
  %6730 = vmatpush.msra.mxu0 0.0
  %6731 = vmatpush.msra.mxu0 0.0
  %6732 = vmatpush.msra.mxu0 0.0
  %6733 = vmatpush.msra.mxu0 0.0
  %6734 = vmatpush.msra.mxu0 0.0
  %6735 = vmatpush.msra.mxu0 0.0
  %v6736 = vand.u32 %v6566, 4294901760
  %v6737 = vsub.f32 %v6566, %v6736
  %v6738 = vand.u32 %v6737, 4294901760
  %6739 = vmatpush.msra.mxu0 %v6738
  %v6740 = vand.u32 %v6565, 4294901760
  %v6741 = vsub.f32 %v6565, %v6740
  %v6742 = vand.u32 %v6741, 4294901760
  %6743 = vmatpush.msra.mxu0 %v6742
  %v6744 = vand.u32 %v6564, 4294901760
  %v6745 = vsub.f32 %v6564, %v6744
  %v6746 = vand.u32 %v6745, 4294901760
  %6747 = vmatpush.msra.mxu0 %v6746
  %v6748 = vand.u32 %v6563, 4294901760
  %v6749 = vsub.f32 %v6563, %v6748
  %v6750 = vand.u32 %v6749, 4294901760
  %6751 = vmatpush.msra.mxu0 %v6750
  %v6752 = vand.u32 %v6569, 4294901760
  %6753 = vmatmul.f32.gmra.mxu0 %v6752
  %v6754 = vpop.f32.mrf.mxu0
  %v6755 = vadd.f32 %v6716, %v6754
  %v6756 = vand.u32 %v6572, 4294901760
  %6757 = vmatmul.f32.gmra.mxu0 %v6756
  %v6758 = vpop.f32.mrf.mxu0
  %v6759 = vadd.f32 %v6722, %v6758
  %6760 = vdwg.mxu0
  %6761 = vmatpush.msra.mxu0 0.0
  %6762 = vmatpush.msra.mxu0 0.0
  %6763 = vmatpush.msra.mxu0 0.0
  %6764 = vmatpush.msra.mxu0 0.0
  %6765 = vmatpush.msra.mxu0 0.0
  %6766 = vmatpush.msra.mxu0 0.0
  %6767 = vmatpush.msra.mxu0 0.0
  %6768 = vmatpush.msra.mxu0 0.0
  %6769 = vmatpush.msra.mxu0 0.0
  %6770 = vmatpush.msra.mxu0 0.0
  %6771 = vmatpush.msra.mxu0 0.0
  %6772 = vmatpush.msra.mxu0 0.0
  %v6773 = vand.u32 %v6566, 4294901760
  %6774 = vmatpush.msra.mxu0 %v6773
  %v6775 = vand.u32 %v6565, 4294901760
  %6776 = vmatpush.msra.mxu0 %v6775
  %v6777 = vand.u32 %v6564, 4294901760
  %6778 = vmatpush.msra.mxu0 %v6777
  %v6779 = vand.u32 %v6563, 4294901760
  %6780 = vmatpush.msra.mxu0 %v6779
  %v6781 = vand.u32 %v6569, 4294901760
  %6782 = vmatmul.f32.gmra.mxu0 %v6781
  %v6783 = vpop.f32.mrf.mxu0
  %v6784 = vadd.f32 %v6755, %v6783
  %v6785 = vand.u32 %v6572, 4294901760
  %6786 = vmatmul.f32.gmra.mxu0 %v6785
  %v6787 = vpop.f32.mrf.mxu0
  %v6788 = vadd.f32 %v6759, %v6787
  %6789 = vdwg.mxu0
  %v6790 = vadd.f32 %v6360, %v6784
  %v6791 = vadd.f32 %v6361, %v6788
  %v6792 = vperm.slane %v40, 0
  %v6793 = vmul.f32 %v6790, %v6792
  %v6794 = vmul.f32 %v6791, %v6792
  %v6795 = vperm.slane %v40, 1
  %v6796 = vadd.f32 %v6793, %v6795
  %v6797 = vadd.f32 %v6794, %v6795
  %v6798 = vperm.slane %v40, 4
  %v6799 = vmul.f32 %v6796, %v6798
  %v6800 = vmul.f32 %v6797, %v6798
  %v6801 = vperm.slane %v40, 5
  %v6802 = vadd.f32 %v6799, %v6801
  %v6803 = vadd.f32 %v6800, %v6801
  %v6804 = vmax.f32 %v6802, 0.0
  %v6805 = vmax.f32 %v6803, 0.0
  %v6806 = vld [vmem:[%s8] sm:$0xff]
  %v6807 = vld [vmem:[%s8 + $0x8] sm:$0xff]
  %v6808 = vperm.slane %v40, 6
  %v6810 = vsel %vm249, %v6804, 0
  %v6813 = vsel %vm249, %v6805, 0
  %6815 = vmatpush.msra.mxu0 0.0
  %6816 = vmatpush.msra.mxu0 0.0
  %6817 = vmatpush.msra.mxu0 0.0
  %6818 = vmatpush.msra.mxu0 0.0
  %6819 = vmatpush.msra.mxu0 0.0
  %6820 = vmatpush.msra.mxu0 0.0
  %6821 = vmatpush.msra.mxu0 0.0
  %6822 = vmatpush.msra.mxu0 0.0
  %6823 = vmatpush.msra.mxu0 0.0
  %6824 = vmatpush.msra.mxu0 0.0
  %6825 = vmatpush.msra.mxu0 0.0
  %6826 = vmatpush.msra.mxu0 0.0
  %6827 = vmatpush.msra.mxu0 0.0
  %6828 = vmatpush.msra.mxu0 0.0
  %v6829 = vand.u32 %v6807, 4294901760
  %6830 = vmatpush.msra.mxu0 %v6829
  %v6831 = vand.u32 %v6806, 4294901760
  %6832 = vmatpush.msra.mxu0 %v6831
  %v6833 = vand.u32 %v6810, 4294901760
  %v6834 = vsub.f32 %v6810, %v6833
  %v6835 = vand.u32 %v6834, 4294901760
  %v6836 = vsub.f32 %v6834, %v6835
  %v6837 = vand.u32 %v6836, 4294901760
  %6838 = vmatmul.f32.gmra.mxu0 %v6837
  %v6839 = vpop.f32.mrf.mxu0
  %v6840 = vadd.f32 %v6808, %v6839
  %v6841 = vand.u32 %v6813, 4294901760
  %v6842 = vsub.f32 %v6813, %v6841
  %v6843 = vand.u32 %v6842, 4294901760
  %v6844 = vsub.f32 %v6842, %v6843
  %v6845 = vand.u32 %v6844, 4294901760
  %6846 = vmatmul.f32.gmra.mxu0 %v6845
  %v6847 = vpop.f32.mrf.mxu0
  %v6848 = vadd.f32 %v6808, %v6847
  %6849 = vdwg.mxu0
  %6850 = vmatpush.msra.mxu0 0.0
  %6851 = vmatpush.msra.mxu0 0.0
  %6852 = vmatpush.msra.mxu0 0.0
  %6853 = vmatpush.msra.mxu0 0.0
  %6854 = vmatpush.msra.mxu0 0.0
  %6855 = vmatpush.msra.mxu0 0.0
  %6856 = vmatpush.msra.mxu0 0.0
  %6857 = vmatpush.msra.mxu0 0.0
  %6858 = vmatpush.msra.mxu0 0.0
  %6859 = vmatpush.msra.mxu0 0.0
  %6860 = vmatpush.msra.mxu0 0.0
  %6861 = vmatpush.msra.mxu0 0.0
  %6862 = vmatpush.msra.mxu0 0.0
  %6863 = vmatpush.msra.mxu0 0.0
  %v6864 = vand.u32 %v6807, 4294901760
  %v6865 = vsub.f32 %v6807, %v6864
  %v6866 = vand.u32 %v6865, 4294901760
  %v6867 = vsub.f32 %v6865, %v6866
  %v6868 = vand.u32 %v6867, 4294901760
  %6869 = vmatpush.msra.mxu0 %v6868
  %v6870 = vand.u32 %v6806, 4294901760
  %v6871 = vsub.f32 %v6806, %v6870
  %v6872 = vand.u32 %v6871, 4294901760
  %v6873 = vsub.f32 %v6871, %v6872
  %v6874 = vand.u32 %v6873, 4294901760
  %6875 = vmatpush.msra.mxu0 %v6874
  %v6876 = vand.u32 %v6810, 4294901760
  %6877 = vmatmul.f32.gmra.mxu0 %v6876
  %v6878 = vpop.f32.mrf.mxu0
  %v6879 = vadd.f32 %v6840, %v6878
  %v6880 = vand.u32 %v6813, 4294901760
  %6881 = vmatmul.f32.gmra.mxu0 %v6880
  %v6882 = vpop.f32.mrf.mxu0
  %v6883 = vadd.f32 %v6848, %v6882
  %6884 = vdwg.mxu0
  %6885 = vmatpush.msra.mxu0 0.0
  %6886 = vmatpush.msra.mxu0 0.0
  %6887 = vmatpush.msra.mxu0 0.0
  %6888 = vmatpush.msra.mxu0 0.0
  %6889 = vmatpush.msra.mxu0 0.0
  %6890 = vmatpush.msra.mxu0 0.0
  %6891 = vmatpush.msra.mxu0 0.0
  %6892 = vmatpush.msra.mxu0 0.0
  %6893 = vmatpush.msra.mxu0 0.0
  %6894 = vmatpush.msra.mxu0 0.0
  %6895 = vmatpush.msra.mxu0 0.0
  %6896 = vmatpush.msra.mxu0 0.0
  %6897 = vmatpush.msra.mxu0 0.0
  %6898 = vmatpush.msra.mxu0 0.0
  %v6899 = vand.u32 %v6807, 4294901760
  %v6900 = vsub.f32 %v6807, %v6899
  %6901 = vmatpush.msra.mxu0 %v6900
  %v6902 = vand.u32 %v6806, 4294901760
  %v6903 = vsub.f32 %v6806, %v6902
  %6904 = vmatpush.msra.mxu0 %v6903
  %v6905 = vand.u32 %v6810, 4294901760
  %v6906 = vsub.f32 %v6810, %v6905
  %6907 = vmatmul.f32.gmra.mxu0 %v6906
  %v6908 = vpop.f32.mrf.mxu0
  %v6909 = vadd.f32 %v6879, %v6908
  %v6910 = vand.u32 %v6813, 4294901760
  %v6911 = vsub.f32 %v6813, %v6910
  %6912 = vmatmul.f32.gmra.mxu0 %v6911
  %v6913 = vpop.f32.mrf.mxu0
  %v6914 = vadd.f32 %v6883, %v6913
  %6915 = vdwg.mxu0
  %6916 = vmatpush.msra.mxu0 0.0
  %6917 = vmatpush.msra.mxu0 0.0
  %6918 = vmatpush.msra.mxu0 0.0
  %6919 = vmatpush.msra.mxu0 0.0
  %6920 = vmatpush.msra.mxu0 0.0
  %6921 = vmatpush.msra.mxu0 0.0
  %6922 = vmatpush.msra.mxu0 0.0
  %6923 = vmatpush.msra.mxu0 0.0
  %6924 = vmatpush.msra.mxu0 0.0
  %6925 = vmatpush.msra.mxu0 0.0
  %6926 = vmatpush.msra.mxu0 0.0
  %6927 = vmatpush.msra.mxu0 0.0
  %6928 = vmatpush.msra.mxu0 0.0
  %6929 = vmatpush.msra.mxu0 0.0
  %v6930 = vand.u32 %v6807, 4294901760
  %6931 = vmatpush.msra.mxu0 %v6930
  %v6932 = vand.u32 %v6806, 4294901760
  %6933 = vmatpush.msra.mxu0 %v6932
  %v6934 = vand.u32 %v6810, 4294901760
  %v6935 = vsub.f32 %v6810, %v6934
  %v6936 = vand.u32 %v6935, 4294901760
  %6937 = vmatmul.f32.gmra.mxu0 %v6936
  %v6938 = vpop.f32.mrf.mxu0
  %v6939 = vadd.f32 %v6909, %v6938
  %v6940 = vand.u32 %v6813, 4294901760
  %v6941 = vsub.f32 %v6813, %v6940
  %v6942 = vand.u32 %v6941, 4294901760
  %6943 = vmatmul.f32.gmra.mxu0 %v6942
  %v6944 = vpop.f32.mrf.mxu0
  %v6945 = vadd.f32 %v6914, %v6944
  %6946 = vdwg.mxu0
  %6947 = vmatpush.msra.mxu0 0.0
  %6948 = vmatpush.msra.mxu0 0.0
  %6949 = vmatpush.msra.mxu0 0.0
  %6950 = vmatpush.msra.mxu0 0.0
  %6951 = vmatpush.msra.mxu0 0.0
  %6952 = vmatpush.msra.mxu0 0.0
  %6953 = vmatpush.msra.mxu0 0.0
  %6954 = vmatpush.msra.mxu0 0.0
  %6955 = vmatpush.msra.mxu0 0.0
  %6956 = vmatpush.msra.mxu0 0.0
  %6957 = vmatpush.msra.mxu0 0.0
  %6958 = vmatpush.msra.mxu0 0.0
  %6959 = vmatpush.msra.mxu0 0.0
  %6960 = vmatpush.msra.mxu0 0.0
  %v6961 = vand.u32 %v6807, 4294901760
  %v6962 = vsub.f32 %v6807, %v6961
  %v6963 = vand.u32 %v6962, 4294901760
  %6964 = vmatpush.msra.mxu0 %v6963
  %v6965 = vand.u32 %v6806, 4294901760
  %v6966 = vsub.f32 %v6806, %v6965
  %v6967 = vand.u32 %v6966, 4294901760
  %6968 = vmatpush.msra.mxu0 %v6967
  %v6969 = vand.u32 %v6810, 4294901760
  %6970 = vmatmul.f32.gmra.mxu0 %v6969
  %v6971 = vpop.f32.mrf.mxu0
  %v6972 = vadd.f32 %v6939, %v6971
  %v6973 = vand.u32 %v6813, 4294901760
  %6974 = vmatmul.f32.gmra.mxu0 %v6973
  %v6975 = vpop.f32.mrf.mxu0
  %v6976 = vadd.f32 %v6945, %v6975
  %6977 = vdwg.mxu0
  %6978 = vmatpush.msra.mxu0 0.0
  %6979 = vmatpush.msra.mxu0 0.0
  %6980 = vmatpush.msra.mxu0 0.0
  %6981 = vmatpush.msra.mxu0 0.0
  %6982 = vmatpush.msra.mxu0 0.0
  %6983 = vmatpush.msra.mxu0 0.0
  %6984 = vmatpush.msra.mxu0 0.0
  %6985 = vmatpush.msra.mxu0 0.0
  %6986 = vmatpush.msra.mxu0 0.0
  %6987 = vmatpush.msra.mxu0 0.0
  %6988 = vmatpush.msra.mxu0 0.0
  %6989 = vmatpush.msra.mxu0 0.0
  %6990 = vmatpush.msra.mxu0 0.0
  %6991 = vmatpush.msra.mxu0 0.0
  %v6992 = vand.u32 %v6807, 4294901760
  %6993 = vmatpush.msra.mxu0 %v6992
  %v6994 = vand.u32 %v6806, 4294901760
  %6995 = vmatpush.msra.mxu0 %v6994
  %v6996 = vand.u32 %v6810, 4294901760
  %6997 = vmatmul.f32.gmra.mxu0 %v6996
  %v6998 = vpop.f32.mrf.mxu0
  %v6999 = vadd.f32 %v6972, %v6998
  %v7000 = vand.u32 %v6813, 4294901760
  %7001 = vmatmul.f32.gmra.mxu0 %v7000
  %v7002 = vpop.f32.mrf.mxu0
  %v7003 = vadd.f32 %v6976, %v7002
  %7004 = vdwg.mxu0
  %vm7005 = vcmask 31744
  %7006 = vst.msk [vmem:[%s10] sm:$0xff] %vm7005, %v6999
  %vm7007 = vcmask 27648
  %7008 = vst.msk [vmem:[%s10 + $0x8] sm:$0xf] %vm7007, %v7003
  // Predicated region
  $region42: #{gpst_forward.1} parent=0 // pred_check
    _
  $region43: #{gpst_forward.1} parent=0 // pred_check_branch
    %7010 = sbr.rel (0) target = $region45
  $region44: #{gpst_forward.1} parent=0 // pred_region
    _
  $region45: #{gpst_forward.1} parent=0 // pred_fallthru
    _
  // Predicated region
  $region46: #{gpst_forward.1} parent=0 // pred_check
    _
  $region47: #{gpst_forward.1} parent=0 // pred_check_branch
    %7012 = sbr.rel (0) target = $region49
  $region48: #{gpst_forward.1} parent=0 // pred_region
    _
  $region49: #{gpst_forward.1} parent=0 // pred_fallthru
    _

</llo_original>
